<compile_context>
chip_gen: v5e
topology: v5e:2x2
jax: 0.10.0
libtpu: 0.0.40
codegen_flags: <defaults>
</compile_context>

<pallas_src>
import functools

import jax
import jax.numpy as jnp
import numpy as np
from jax.experimental import pallas as pl
from jax.experimental.pallas import tpu as pltpu

# Global toggle so the script can retry without pl.Buffered(1) on jax builds that
# reject the pipeline_mode kwarg (identical math either way).
_CFG = {"buffered_weights": True}


@functools.lru_cache(maxsize=1)
def _vmem_limit_bytes():
    cap = 64 * 1024 * 1024
    try:
        cap = int(getattr(pltpu.get_tpu_info(), "vmem_capacity_bytes", cap))
    except Exception:
        pass
    # ~25% headroom for Mosaic internal scratch; ~96 MiB on 128 MiB chips, ~48 MiB on v7x.
    return max(32 * 1024 * 1024, min(cap * 3 // 4, 100 * 1024 * 1024))


def _cparams(dims):
    return pltpu.CompilerParams(dimension_semantics=dims,
                                vmem_limit_bytes=_vmem_limit_bytes())


def _const_spec(shape):
    """BlockSpec whose block index never changes across the grid (weights / biases)."""
    idx = lambda *_: (0,) * len(shape)
    if _CFG["buffered_weights"]:
        # Single-buffered: the block is DMA'd once, so double-buffering only wastes VMEM.
        return pl.BlockSpec(shape, idx, pipeline_mode=pl.Buffered(1))
    return pl.BlockSpec(shape, idx)


# ----------------------------- shared in-kernel math -----------------------------
def _mm(a, w):
    """MXU matmul: cast the activation to the weight (compute) dtype, f32 accumulation."""
    return jnp.dot(a.astype(w.dtype), w, preferred_element_type=jnp.float32)


def _layer_norm(h, g, b, eps=1e-5):
    mu = jnp.mean(h, axis=-1, keepdims=True)
    var = jnp.mean(jnp.square(h - mu), axis=-1, keepdims=True)
    return (h - mu) * jax.lax.rsqrt(var + eps) * g + b


# ----------------------------- kernel 1: QKV projection -----------------------------
def _qkv_kernel(x_ref, wq_ref, wk_ref, wv_ref, bq_ref, bk_ref, bv_ref,
                q_ref, k_ref, v_ref):
    x2 = x_ref[0]                                                  # (S, H) f32
    q_ref[0] = (_mm(x2, wq_ref[...]) + bq_ref[...]).astype(q_ref.dtype)
    k_ref[0] = (_mm(x2, wk_ref[...]) + bk_ref[...]).astype(k_ref.dtype)
    v_ref[0] = (_mm(x2, wv_ref[...]) + bv_ref[...]).astype(v_ref.dtype)


def qkv_proj(x, wq, wk, wv, bq, bk, bv):
    B, S, H = x.shape
    cdt = wq.dtype
    xspec = pl.BlockSpec((1, S, H), lambda b: (b, 0, 0))
    wspec = _const_spec((H, H))
    bspec = _const_spec((1, H))
    oshape = jax.ShapeDtypeStruct((B, S, H), cdt)
    return pl.pallas_call(
        _qkv_kernel,
        grid=(B,),
        in_specs=[xspec, wspec, wspec, wspec, bspec, bspec, bspec],
        out_specs=[xspec, xspec, xspec],
        out_shape=(oshape, oshape, oshape),
        compiler_params=_cparams(("parallel",)),
    )(x, wq, wk, wv, bq, bk, bv)


# ----------------------------- kernel 2: attention core -----------------------------
def _attn_kernel(q_ref, k_ref, v_ref, pw_ref, ctx_ref, *, scale):
    q = q_ref[0, 0] * scale                                        # (S, hd), scale folded in
    k = k_ref[0, 0]
    v = v_ref[0, 0]
    s = jax.lax.dot_general(q, k,
                            dimension_numbers=(((1,), (1,)), ((), ())),  # q @ k.T, no transpose op
                            preferred_element_type=jnp.float32)          # (S, S) f32
    m = jnp.max(s, axis=-1, keepdims=True)
    e = jnp.exp(s - m)
    p = e / jnp.sum(e, axis=-1, keepdims=True)                     # exact division
    pw_ref[0, 0] = p.astype(pw_ref.dtype)
    ctx = jnp.dot(p.astype(v.dtype), v, preferred_element_type=jnp.float32)
    ctx_ref[0, 0] = ctx.astype(ctx_ref.dtype)


def attention(qh, kh, vh, head_dim, attn_weights_dtype):
    B, nh, S, hd = qh.shape
    scale = 1.0 / float(np.sqrt(head_dim))
    hspec = pl.BlockSpec((1, 1, S, hd), lambda b, h: (b, h, 0, 0))
    pspec = pl.BlockSpec((1, 1, S, S), lambda b, h: (b, h, 0, 0))
    return pl.pallas_call(
        functools.partial(_attn_kernel, scale=scale),
        grid=(B, nh),
        in_specs=[hspec, hspec, hspec],
        out_specs=[pspec, hspec],
        out_shape=(jax.ShapeDtypeStruct((B, nh, S, S), attn_weights_dtype),
                   jax.ShapeDtypeStruct((B, nh, S, hd), qh.dtype)),
        compiler_params=_cparams(("parallel", "parallel")),
    )(qh, kh, vh)


# ----------------- kernel 3: out-proj + LN1 + K-streamed FFN + LN2 -----------------
def _out_ffn_kernel(x_ref, a_ref, wo_ref, bo_ref, g1_ref, be1_ref,
                    w1_ref, b1_ref, w2_ref, b2_ref, g2_ref, be2_ref,
                    o_ref, y_sc, acc_sc):
    k = pl.program_id(1)

    @pl.when(k == 0)
    def _():
        proj = _mm(a_ref[0], wo_ref[...]) + bo_ref[...]            # (S, H) f32
        y_sc[...] = _layer_norm(x_ref[0] + proj, g1_ref[...], be1_ref[...])
        acc_sc[...] = jnp.zeros_like(acc_sc)

    ff = jnp.maximum(_mm(y_sc[...], w1_ref[...]) + b1_ref[...], 0.0)   # (S, tk)
    acc_sc[...] += _mm(ff, w2_ref[...])                                # (S, H) f32

    @pl.when(k == pl.num_programs(1) - 1)
    def _():
        o_ref[0] = _layer_norm(y_sc[...] + acc_sc[...] + b2_ref[...],
                               g2_ref[...], be2_ref[...])


def _ffn_k_tile(Hf):
    for tk in (512, 256):                      # 256-aligned contraction tiles (MXU depth)
        if Hf % tk == 0 and Hf > tk:
            return tk
    return Hf


def out_proj_ffn(x, attn_out, wo, bo, g1, be1, w1, b1, w2, b2, g2, be2):
    B, S, H = x.shape
    Hf = w1.shape[1]
    tk = _ffn_k_tile(Hf)
    nk = Hf // tk
    xspec = pl.BlockSpec((1, S, H), lambda b, k: (b, 0, 0))
    return pl.pallas_call(
        _out_ffn_kernel,
        grid=(B, nk),
        in_specs=[xspec, xspec,
                  _const_spec((H, H)), _const_spec((1, H)),
                  _const_spec((1, H)), _const_spec((1, H)),
                  pl.BlockSpec((H, tk), lambda b, k: (0, k)),
                  pl.BlockSpec((1, tk), lambda b, k: (0, k)),
                  pl.BlockSpec((tk, H), lambda b, k: (k, 0)),
                  _const_spec((1, H)), _const_spec((1, H)), _const_spec((1, H))],
        out_specs=xspec,
        out_shape=jax.ShapeDtypeStruct((B, S, H), jnp.float32),
        scratch_shapes=[pltpu.VMEM((S, H), jnp.float32),    # y (LN1 output), reused over k
                        pltpu.VMEM((S, H), jnp.float32)],   # FFN accumulator
        compiler_params=_cparams(("parallel", "arbitrary")),
    )(x, attn_out, wo, bo, g1, be1, w1, b1, w2, b2, g2, be2)


# ----------------------------- encoder wrapper -----------------------------
def prepare_params(params, compute_dtype=jnp.float32):
    """Cast matmul weights once (outside the per-step forward); biases / LN stay f32."""
    prepped = []
    for p in params:
        q = dict(p)
        for name in ("wq", "wk", "wv", "wo", "w1", "w2"):
            q[name] = p[name].astype(compute_dtype)
        prepped.append(q)
    return prepped


def transformer_encoder_forward(x, params, num_heads, attn_weights_dtype=jnp.float32):
    B, S, H = x.shape
    hd = H // num_heads
    attn_ws = []
    for p in params:
        q, k, v = qkv_proj(x, p["wq"], p["wk"], p["wv"], p["bq"], p["bk"], p["bv"])
        # PyTorch does a *raw* .view(B, nh, S, hd) (no transpose); on contiguous HBM
        # arrays these reshapes are free metadata views, never an in-kernel relayout.
        qh = q.reshape(B, num_heads, S, hd)
        kh = k.reshape(B, num_heads, S, hd)
        vh = v.reshape(B, num_heads, S, hd)
        pw, ctx = attention(qh, kh, vh, hd, attn_weights_dtype)
        attn_out = ctx.reshape(B, S, H)                    # raw view back, also free
        x = out_proj_ffn(x, attn_out, p["wo"], p["bo"], p["g1"], p["be1"],
                         p["w1"], p["b1"], p["w2"], p["b2"], p["g2"], p["be2"])
        attn_ws.append(pw)
    return x, jnp.stack(attn_ws)


# ----------------------------- pure-JAX reference -----------------------------
def reference_forward(x, params, num_heads):
    B, S, H = x.shape
    hd = H // num_heads
    ws = []
    for p in params:
        q = x @ p["wq"] + p["bq"]
        k = x @ p["wk"] + p["bk"]
        v = x @ p["wv"] + p["bv"]
        qh = q.reshape(B, num_heads, S, hd)
        kh = k.reshape(B, num_heads, S, hd)
        vh = v.reshape(B, num_heads, S, hd)
        s = jnp.einsum("bhqd,bhkd->bhqk", qh, kh) / jnp.sqrt(jnp.float32(hd))
        pw = jax.nn.softmax(s, axis=-1)
        ws.append(pw)
        o = jnp.einsum("bhqk,bhkd->bhqd", pw, vh).reshape(B, S, H)
        o = o @ p["wo"] + p["bo"]
        h = x + o
        mu = h.mean(-1, keepdims=True)
        var = ((h - mu) ** 2).mean(-1, keepdims=True)
        y = (h - mu) / jnp.sqrt(var + 1e-5) * p["g1"] + p["be1"]
        ff = jnp.maximum(y @ p["w1"] + p["b1"], 0.0) @ p["w2"] + p["b2"]
        h2 = y + ff
        mu2 = h2.mean(-1, keepdims=True)
        var2 = ((h2 - mu2) ** 2).mean(-1, keepdims=True)
        x = (h2 - mu2) / jnp.sqrt(var2 + 1e-5) * p["g2"] + p["be2"]
    return x, jnp.stack(ws)


def init_params(key, hidden_dim, num_layers):
    params = []
    for _ in range(num_layers):
        key, *sub = jax.random.split(key, 12)
        Hf = 4 * hidden_dim
        s = 0.05
        params.append(dict(
            wq=s * jax.random.normal(sub[0], (hidden_dim, hidden_dim), jnp.float32),
            wk=s * jax.random.normal(sub[1], (hidden_dim, hidden_dim), jnp.float32),
            wv=s * jax.random.normal(sub[2], (hidden_dim, hidden_dim), jnp.float32),
            wo=s * jax.random.normal(sub[3], (hidden_dim, hidden_dim), jnp.float32),
            bq=s * jax.random.normal(sub[4], (1, hidden_dim), jnp.float32),
            bk=s * jax.random.normal(sub[5], (1, hidden_dim), jnp.float32),
            bv=s * jax.random.normal(sub[6], (1, hidden_dim), jnp.float32),
            bo=s * jax.random.normal(sub[7], (1, hidden_dim), jnp.float32),
            w1=s * jax.random.normal(sub[8], (hidden_dim, Hf), jnp.float32),
            b1=s * jax.random.normal(sub[9], (1, Hf), jnp.float32),
            w2=s * jax.random.normal(sub[10], (Hf, hidden_dim), jnp.float32),
            b2=jnp.zeros((1, hidden_dim), jnp.float32),
            g1=jnp.ones((1, hidden_dim), jnp.float32),
            be1=jnp.zeros((1, hidden_dim), jnp.float32),
            g2=jnp.ones((1, hidden_dim), jnp.float32),
            be2=jnp.zeros((1, hidden_dim), jnp.float32),
        ))
    return params


if __name__ == "__main__":
    B, S, H = 2, 8, 32
    num_heads, num_layers = 4, 2

    key = jax.random.PRNGKey(0)
    kx, kp = jax.random.split(key)
    x = jax.random.normal(kx, (B, S, H), jnp.float32)
    params = init_params(kp, H, num_layers)

    ref_out, ref_w = reference_forward(x, params, num_heads)
    ref_out = np.asarray(ref_out)
    ref_w = np.asarray(ref_w)

    def run_and_check(compute_dtype, atol, rtol):
        prepped = prepare_params(params, compute_dtype)        # weight cast hoisted out of fwd
        fwd = jax.jit(functools.partial(transformer_encoder_forward, num_heads=num_heads))
        out, w = fwd(x, prepped)
        out = jax.block_until_ready(out)
        w = jax.block_until_ready(w)
        np.testing.assert_allclose(np.asarray(out), ref_out, atol=atol, rtol=rtol)
        np.testing.assert_allclose(np.asarray(w), ref_w, atol=atol, rtol=rtol)
        return out, w

    # Tolerances cover the difference between the reference's default-precision XLA
    # matmuls and the in-kernel MXU matmuls (softmax itself uses exact division now).
    try:
        out, attn_w = run_and_check(jnp.float32, 1e-2, 1e-2)
    except Exception:
        # jax build without BlockSpec(pipeline_mode=pl.Buffered(1)): retry with the
        # default double-buffered weight specs (identical math, slightly more VMEM).
        _CFG["buffered_weights"] = False
        out, attn_w = run_and_check(jnp.float32, 1e-2, 1e-2)

    run_and_check(jnp.bfloat16, 5e-2, 5e-2)                    # bf16 weights / matmul operands

    assert out.shape == (B, S, H)
    assert attn_w.shape == (num_layers, B, num_heads, S, S)
    print("KERNEL_OK")
</pallas_src>

<mosaic_0001>
module attributes {stable_mosaic.version = 11 : i64} {
  func.func @_attn_kernel(%arg0: i32, %arg1: i32, %arg2: memref<1x1x8x8xf32, #tpu.memory_space<vmem>>, %arg3: memref<1x1x8x8xf32, #tpu.memory_space<vmem>>, %arg4: memref<1x1x8x8xf32, #tpu.memory_space<vmem>>, %arg5: memref<1x1x8x8xf32, #tpu.memory_space<vmem>>, %arg6: memref<1x1x8x8xf32, #tpu.memory_space<vmem>>) attributes {dimension_semantics = [#tpu.dimension_semantics<parallel>, #tpu.dimension_semantics<parallel>], iteration_bounds = array<i64: 2, 4>, scalar_prefetch = 0 : i64, scratch_operands = 0 : i64, tpu.core_type = #tpu.core_type<tc>, window_params = [{transform_indices = @transform_0, window_bounds = array<i64: 1, 1, 8, 8>}, {transform_indices = @transform_1, window_bounds = array<i64: 1, 1, 8, 8>}, {transform_indices = @transform_2, window_bounds = array<i64: 1, 1, 8, 8>}, {transform_indices = @transform_3, window_bounds = array<i64: 1, 1, 8, 8>}, {transform_indices = @transform_4, window_bounds = array<i64: 1, 1, 8, 8>}]} {
    %c0 = arith.constant 0 : index
    %c0_0 = arith.constant 0 : index
    %c0_1 = arith.constant 0 : index
    %c0_2 = arith.constant 0 : index
    %0 = vector.load %arg2[%c0, %c0_0, %c0_1, %c0_2] : memref<1x1x8x8xf32, #tpu.memory_space<vmem>>, vector<1x1x8x8xf32>
    %1 = vector.shape_cast %0 : vector<1x1x8x8xf32> to vector<8x8xf32>
    %cst = arith.constant 0.353553385 : f32
    %2 = vector.broadcast %cst : f32 to vector<8x8xf32>
    %3 = arith.mulf %1, %2 : vector<8x8xf32>
    %c0_3 = arith.constant 0 : index
    %c0_4 = arith.constant 0 : index
    %c0_5 = arith.constant 0 : index
    %c0_6 = arith.constant 0 : index
    %4 = vector.load %arg3[%c0_3, %c0_4, %c0_5, %c0_6] : memref<1x1x8x8xf32, #tpu.memory_space<vmem>>, vector<1x1x8x8xf32>
    %5 = vector.shape_cast %4 : vector<1x1x8x8xf32> to vector<8x8xf32>
    %c0_7 = arith.constant 0 : index
    %c0_8 = arith.constant 0 : index
    %c0_9 = arith.constant 0 : index
    %c0_10 = arith.constant 0 : index
    %6 = vector.load %arg4[%c0_7, %c0_8, %c0_9, %c0_10] : memref<1x1x8x8xf32, #tpu.memory_space<vmem>>, vector<1x1x8x8xf32>
    %7 = vector.shape_cast %6 : vector<1x1x8x8xf32> to vector<8x8xf32>
    %cst_11 = arith.constant dense<0.000000e+00> : vector<8x8xf32>
    %8 = tpu.matmul %3, %5, %cst_11 {dimension_numbers = #tpu.dot_dimension_numbers<[1], [1], [0], [0], [0, 0, 1, 0], [], []>} : vector<8x8xf32>, vector<8x8xf32>, vector<8x8xf32> -> vector<8x8xf32>
    %cst_12 = arith.constant dense<0xFF800000> : vector<8xf32>
    %9 = vector.multi_reduction <maximumf>, %8, %cst_12 [1] : vector<8x8xf32> to vector<8xf32>
    %10 = vector.shape_cast %9 : vector<8xf32> to vector<8x1xf32>
    %11 = vector.broadcast %10 : vector<8x1xf32> to vector<8x8xf32>
    %12 = arith.subf %8, %11 : vector<8x8xf32>
    %13 = math.exp %12 : vector<8x8xf32>
    %cst_13 = arith.constant dense<0.000000e+00> : vector<8xf32>
    %14 = vector.multi_reduction <add>, %13, %cst_13 [1] : vector<8x8xf32> to vector<8xf32>
    %15 = vector.shape_cast %14 : vector<8xf32> to vector<8x1xf32>
    %16 = vector.broadcast %15 : vector<8x1xf32> to vector<8x8xf32>
    %17 = arith.divf %13, %16 : vector<8x8xf32>
    %c0_14 = arith.constant 0 : index
    %c0_15 = arith.constant 0 : index
    %c0_16 = arith.constant 0 : index
    %c0_17 = arith.constant 0 : index
    %18 = vector.load %arg5[%c0_14, %c0_15, %c0_16, %c0_17] : memref<1x1x8x8xf32, #tpu.memory_space<vmem>>, vector<1x1x8x8xf32>
    %19 = vector.shape_cast %18 : vector<1x1x8x8xf32> to vector<8x8xf32>
    %20 = vector.shape_cast %17 : vector<8x8xf32> to vector<1x1x8x8xf32>
    tpu.vector_store %arg5[%c0_14, %c0_15, %c0_16, %c0_17], %20 {strides = array<i32>} : memref<1x1x8x8xf32, #tpu.memory_space<vmem>>, vector<1x1x8x8xf32>,
    %cst_18 = arith.constant dense<0.000000e+00> : vector<8x8xf32>
    %21 = tpu.matmul %17, %7, %cst_18 {dimension_numbers = #tpu.dot_dimension_numbers<[1], [0], [0], [1], [0, 0, 1, 1], [], []>} : vector<8x8xf32>, vector<8x8xf32>, vector<8x8xf32> -> vector<8x8xf32>
    %c0_19 = arith.constant 0 : index
    %c0_20 = arith.constant 0 : index
    %c0_21 = arith.constant 0 : index
    %c0_22 = arith.constant 0 : index
    %22 = vector.load %arg6[%c0_19, %c0_20, %c0_21, %c0_22] : memref<1x1x8x8xf32, #tpu.memory_space<vmem>>, vector<1x1x8x8xf32>
    %23 = vector.shape_cast %22 : vector<1x1x8x8xf32> to vector<8x8xf32>
    %24 = vector.shape_cast %21 : vector<8x8xf32> to vector<1x1x8x8xf32>
    tpu.vector_store %arg6[%c0_19, %c0_20, %c0_21, %c0_22], %24 {strides = array<i32>} : memref<1x1x8x8xf32, #tpu.memory_space<vmem>>, vector<1x1x8x8xf32>,
    return
  }
  func.func @transform_0(%arg0: i32, %arg1: i32) -> (i32, i32, i32, i32) {
    %c0_i32 = arith.constant 0 : i32
    %c0_i32_0 = arith.constant 0 : i32
    %c0_i32_1 = arith.constant 0 : i32
    return %arg0, %arg1, %c0_i32, %c0_i32_0 : i32, i32, i32, i32
  }
  func.func @transform_1(%arg0: i32, %arg1: i32) -> (i32, i32, i32, i32) {
    %c0_i32 = arith.constant 0 : i32
    %c0_i32_0 = arith.constant 0 : i32
    %c0_i32_1 = arith.constant 0 : i32
    return %arg0, %arg1, %c0_i32, %c0_i32_0 : i32, i32, i32, i32
  }
  func.func @transform_2(%arg0: i32, %arg1: i32) -> (i32, i32, i32, i32) {
    %c0_i32 = arith.constant 0 : i32
    %c0_i32_0 = arith.constant 0 : i32
    %c0_i32_1 = arith.constant 0 : i32
    return %arg0, %arg1, %c0_i32, %c0_i32_0 : i32, i32, i32, i32
  }
  func.func @transform_3(%arg0: i32, %arg1: i32) -> (i32, i32, i32, i32) {
    %c0_i32 = arith.constant 0 : i32
    %c0_i32_0 = arith.constant 0 : i32
    %c0_i32_1 = arith.constant 0 : i32
    return %arg0, %arg1, %c0_i32, %c0_i32_0 : i32, i32, i32, i32
  }
  func.func @transform_4(%arg0: i32, %arg1: i32) -> (i32, i32, i32, i32) {
    %c0_i32 = arith.constant 0 : i32
    %c0_i32_0 = arith.constant 0 : i32
    %c0_i32_1 = arith.constant 0 : i32
    return %arg0, %arg1, %c0_i32, %c0_i32_0 : i32, i32, i32, i32
  }
}

module attributes {stable_mosaic.version = 11 : i64} {
  func.func @_qkv_kernel(%arg0: i32, %arg1: memref<1x8x32xf32, #tpu.memory_space<vmem>>, %arg2: memref<32x32xf32, #tpu.memory_space<vmem>>, %arg3: memref<32x32xf32, #tpu.memory_space<vmem>>, %arg4: memref<32x32xf32, #tpu.memory_space<vmem>>, %arg5: memref<1x32xf32, #tpu.memory_space<vmem>>, %arg6: memref<1x32xf32, #tpu.memory_space<vmem>>, %arg7: memref<1x32xf32, #tpu.memory_space<vmem>>, %arg8: memref<1x8x32xf32, #tpu.memory_space<vmem>>, %arg9: memref<1x8x32xf32, #tpu.memory_space<vmem>>, %arg10: memref<1x8x32xf32, #tpu.memory_space<vmem>>) attributes {dimension_semantics = [#tpu.dimension_semantics<parallel>], iteration_bounds = array<i64: 2>, scalar_prefetch = 0 : i64, scratch_operands = 0 : i64, tpu.core_type = #tpu.core_type<tc>, window_params = [{transform_indices = @transform_0, window_bounds = array<i64: 1, 8, 32>}, {pipeline_mode = #tpu.pipeline_mode<synchronous>, transform_indices = @transform_1, window_bounds = array<i64: 32, 32>}, {pipeline_mode = #tpu.pipeline_mode<synchronous>, transform_indices = @transform_2, window_bounds = array<i64: 32, 32>}, {pipeline_mode = #tpu.pipeline_mode<synchronous>, transform_indices = @transform_3, window_bounds = array<i64: 32, 32>}, {pipeline_mode = #tpu.pipeline_mode<synchronous>, transform_indices = @transform_4, window_bounds = array<i64: 1, 32>}, {pipeline_mode = #tpu.pipeline_mode<synchronous>, transform_indices = @transform_5, window_bounds = array<i64: 1, 32>}, {pipeline_mode = #tpu.pipeline_mode<synchronous>, transform_indices = @transform_6, window_bounds = array<i64: 1, 32>}, {transform_indices = @transform_7, window_bounds = array<i64: 1, 8, 32>}, {transform_indices = @transform_8, window_bounds = array<i64: 1, 8, 32>}, {transform_indices = @transform_9, window_bounds = array<i64: 1, 8, 32>}]} {
    %c0 = arith.constant 0 : index
    %c0_0 = arith.constant 0 : index
    %c0_1 = arith.constant 0 : index
    %0 = vector.load %arg1[%c0, %c0_0, %c0_1] : memref<1x8x32xf32, #tpu.memory_space<vmem>>, vector<1x8x32xf32>
    %1 = vector.shape_cast %0 : vector<1x8x32xf32> to vector<8x32xf32>
    %c0_2 = arith.constant 0 : index
    %c0_3 = arith.constant 0 : index
    %2 = vector.load %arg2[%c0_2, %c0_3] : memref<32x32xf32, #tpu.memory_space<vmem>>, vector<32x32xf32>
    %cst = arith.constant dense<0.000000e+00> : vector<8x32xf32>
    %3 = tpu.matmul %1, %2, %cst {dimension_numbers = #tpu.dot_dimension_numbers<[1], [0], [0], [1], [0, 0, 1, 1], [], []>} : vector<8x32xf32>, vector<32x32xf32>, vector<8x32xf32> -> vector<8x32xf32>
    %c0_4 = arith.constant 0 : index
    %c0_5 = arith.constant 0 : index
    %4 = vector.load %arg5[%c0_4, %c0_5] : memref<1x32xf32, #tpu.memory_space<vmem>>, vector<1x32xf32>
    %5 = vector.broadcast %4 : vector<1x32xf32> to vector<8x32xf32>
    %6 = arith.addf %3, %5 : vector<8x32xf32>
    %c0_6 = arith.constant 0 : index
    %c0_7 = arith.constant 0 : index
    %c0_8 = arith.constant 0 : index
    %7 = vector.load %arg8[%c0_6, %c0_7, %c0_8] : memref<1x8x32xf32, #tpu.memory_space<vmem>>, vector<1x8x32xf32>
    %8 = vector.shape_cast %7 : vector<1x8x32xf32> to vector<8x32xf32>
    %9 = vector.shape_cast %6 : vector<8x32xf32> to vector<1x8x32xf32>
    tpu.vector_store %arg8[%c0_6, %c0_7, %c0_8], %9 {strides = array<i32>} : memref<1x8x32xf32, #tpu.memory_space<vmem>>, vector<1x8x32xf32>,
    %c0_9 = arith.constant 0 : index
    %c0_10 = arith.constant 0 : index
    %10 = vector.load %arg3[%c0_9, %c0_10] : memref<32x32xf32, #tpu.memory_space<vmem>>, vector<32x32xf32>
    %cst_11 = arith.constant dense<0.000000e+00> : vector<8x32xf32>
    %11 = tpu.matmul %1, %10, %cst_11 {dimension_numbers = #tpu.dot_dimension_numbers<[1], [0], [0], [1], [0, 0, 1, 1], [], []>} : vector<8x32xf32>, vector<32x32xf32>, vector<8x32xf32> -> vector<8x32xf32>
    %c0_12 = arith.constant 0 : index
    %c0_13 = arith.constant 0 : index
    %12 = vector.load %arg6[%c0_12, %c0_13] : memref<1x32xf32, #tpu.memory_space<vmem>>, vector<1x32xf32>
    %13 = vector.broadcast %12 : vector<1x32xf32> to vector<8x32xf32>
    %14 = arith.addf %11, %13 : vector<8x32xf32>
    %c0_14 = arith.constant 0 : index
    %c0_15 = arith.constant 0 : index
    %c0_16 = arith.constant 0 : index
    %15 = vector.load %arg9[%c0_14, %c0_15, %c0_16] : memref<1x8x32xf32, #tpu.memory_space<vmem>>, vector<1x8x32xf32>
    %16 = vector.shape_cast %15 : vector<1x8x32xf32> to vector<8x32xf32>
    %17 = vector.shape_cast %14 : vector<8x32xf32> to vector<1x8x32xf32>
    tpu.vector_store %arg9[%c0_14, %c0_15, %c0_16], %17 {strides = array<i32>} : memref<1x8x32xf32, #tpu.memory_space<vmem>>, vector<1x8x32xf32>,
    %c0_17 = arith.constant 0 : index
    %c0_18 = arith.constant 0 : index
    %18 = vector.load %arg4[%c0_17, %c0_18] : memref<32x32xf32, #tpu.memory_space<vmem>>, vector<32x32xf32>
    %cst_19 = arith.constant dense<0.000000e+00> : vector<8x32xf32>
    %19 = tpu.matmul %1, %18, %cst_19 {dimension_numbers = #tpu.dot_dimension_numbers<[1], [0], [0], [1], [0, 0, 1, 1], [], []>} : vector<8x32xf32>, vector<32x32xf32>, vector<8x32xf32> -> vector<8x32xf32>
    %c0_20 = arith.constant 0 : index
    %c0_21 = arith.constant 0 : index
    %20 = vector.load %arg7[%c0_20, %c0_21] : memref<1x32xf32, #tpu.memory_space<vmem>>, vector<1x32xf32>
    %21 = vector.broadcast %20 : vector<1x32xf32> to vector<8x32xf32>
    %22 = arith.addf %19, %21 : vector<8x32xf32>
    %c0_22 = arith.constant 0 : index
    %c0_23 = arith.constant 0 : index
    %c0_24 = arith.constant 0 : index
    %23 = vector.load %arg10[%c0_22, %c0_23, %c0_24] : memref<1x8x32xf32, #tpu.memory_space<vmem>>, vector<1x8x32xf32>
    %24 = vector.shape_cast %23 : vector<1x8x32xf32> to vector<8x32xf32>
    %25 = vector.shape_cast %22 : vector<8x32xf32> to vector<1x8x32xf32>
    tpu.vector_store %arg10[%c0_22, %c0_23, %c0_24], %25 {strides = array<i32>} : memref<1x8x32xf32, #tpu.memory_space<vmem>>, vector<1x8x32xf32>,
    return
  }
  func.func @transform_0(%arg0: i32) -> (i32, i32, i32) {
    %c0_i32 = arith.constant 0 : i32
    %c0_i32_0 = arith.constant 0 : i32
    %c0_i32_1 = arith.constant 0 : i32
    return %arg0, %c0_i32, %c0_i32_0 : i32, i32, i32
  }
  func.func @transform_1(%arg0: i32) -> (i32, i32) {
    %c0_i32 = arith.constant 0 : i32
    %c0_i32_0 = arith.constant 0 : i32
    %c0_i32_1 = arith.constant 0 : i32
    return %c0_i32, %c0_i32_0 : i32, i32
  }
  func.func @transform_2(%arg0: i32) -> (i32, i32) {
    %c0_i32 = arith.constant 0 : i32
    %c0_i32_0 = arith.constant 0 : i32
    %c0_i32_1 = arith.constant 0 : i32
    return %c0_i32, %c0_i32_0 : i32, i32
  }
  func.func @transform_3(%arg0: i32) -> (i32, i32) {
    %c0_i32 = arith.constant 0 : i32
    %c0_i32_0 = arith.constant 0 : i32
    %c0_i32_1 = arith.constant 0 : i32
    return %c0_i32, %c0_i32_0 : i32, i32
  }
  func.func @transform_4(%arg0: i32) -> (i32, i32) {
    %c0_i32 = arith.constant 0 : i32
    %c0_i32_0 = arith.constant 0 : i32
    %c0_i32_1 = arith.constant 0 : i32
    return %c0_i32, %c0_i32_0 : i32, i32
  }
  func.func @transform_5(%arg0: i32) -> (i32, i32) {
    %c0_i32 = arith.constant 0 : i32
    %c0_i32_0 = arith.constant 0 : i32
    %c0_i32_1 = arith.constant 0 : i32
    return %c0_i32, %c0_i32_0 : i32, i32
  }
  func.func @transform_6(%arg0: i32) -> (i32, i32) {
    %c0_i32 = arith.constant 0 : i32
    %c0_i32_0 = arith.constant 0 : i32
    %c0_i32_1 = arith.constant 0 : i32
    return %c0_i32, %c0_i32_0 : i32, i32
  }
  func.func @transform_7(%arg0: i32) -> (i32, i32, i32) {
    %c0_i32 = arith.constant 0 : i32
    %c0_i32_0 = arith.constant 0 : i32
    %c0_i32_1 = arith.constant 0 : i32
    return %arg0, %c0_i32, %c0_i32_0 : i32, i32, i32
  }
  func.func @transform_8(%arg0: i32) -> (i32, i32, i32) {
    %c0_i32 = arith.constant 0 : i32
    %c0_i32_0 = arith.constant 0 : i32
    %c0_i32_1 = arith.constant 0 : i32
    return %arg0, %c0_i32, %c0_i32_0 : i32, i32, i32
  }
  func.func @transform_9(%arg0: i32) -> (i32, i32, i32) {
    %c0_i32 = arith.constant 0 : i32
    %c0_i32_0 = arith.constant 0 : i32
    %c0_i32_1 = arith.constant 0 : i32
    return %arg0, %c0_i32, %c0_i32_0 : i32, i32, i32
  }
}

module attributes {stable_mosaic.version = 11 : i64} {
  func.func @_qkv_kernel(%arg0: i32, %arg1: memref<1x8x32xf32, #tpu.memory_space<vmem>>, %arg2: memref<32x32xf32, #tpu.memory_space<vmem>>, %arg3: memref<32x32xf32, #tpu.memory_space<vmem>>, %arg4: memref<32x32xf32, #tpu.memory_space<vmem>>, %arg5: memref<1x32xf32, #tpu.memory_space<vmem>>, %arg6: memref<1x32xf32, #tpu.memory_space<vmem>>, %arg7: memref<1x32xf32, #tpu.memory_space<vmem>>, %arg8: memref<1x8x32xf32, #tpu.memory_space<vmem>>, %arg9: memref<1x8x32xf32, #tpu.memory_space<vmem>>, %arg10: memref<1x8x32xf32, #tpu.memory_space<vmem>>) attributes {dimension_semantics = [#tpu.dimension_semantics<parallel>], iteration_bounds = array<i64: 2>, scalar_prefetch = 0 : i64, scratch_operands = 0 : i64, tpu.core_type = #tpu.core_type<tc>, window_params = [{transform_indices = @transform_0, window_bounds = array<i64: 1, 8, 32>}, {pipeline_mode = #tpu.pipeline_mode<synchronous>, transform_indices = @transform_1, window_bounds = array<i64: 32, 32>}, {pipeline_mode = #tpu.pipeline_mode<synchronous>, transform_indices = @transform_2, window_bounds = array<i64: 32, 32>}, {pipeline_mode = #tpu.pipeline_mode<synchronous>, transform_indices = @transform_3, window_bounds = array<i64: 32, 32>}, {pipeline_mode = #tpu.pipeline_mode<synchronous>, transform_indices = @transform_4, window_bounds = array<i64: 1, 32>}, {pipeline_mode = #tpu.pipeline_mode<synchronous>, transform_indices = @transform_5, window_bounds = array<i64: 1, 32>}, {pipeline_mode = #tpu.pipeline_mode<synchronous>, transform_indices = @transform_6, window_bounds = array<i64: 1, 32>}, {transform_indices = @transform_7, window_bounds = array<i64: 1, 8, 32>}, {transform_indices = @transform_8, window_bounds = array<i64: 1, 8, 32>}, {transform_indices = @transform_9, window_bounds = array<i64: 1, 8, 32>}]} {
    %c0 = arith.constant 0 : index
    %c0_0 = arith.constant 0 : index
    %c0_1 = arith.constant 0 : index
    %0 = vector.load %arg1[%c0, %c0_0, %c0_1] : memref<1x8x32xf32, #tpu.memory_space<vmem>>, vector<1x8x32xf32>
    %1 = vector.shape_cast %0 : vector<1x8x32xf32> to vector<8x32xf32>
    %c0_2 = arith.constant 0 : index
    %c0_3 = arith.constant 0 : index
    %2 = vector.load %arg2[%c0_2, %c0_3] : memref<32x32xf32, #tpu.memory_space<vmem>>, vector<32x32xf32>
    %cst = arith.constant dense<0.000000e+00> : vector<8x32xf32>
    %3 = tpu.matmul %1, %2, %cst {dimension_numbers = #tpu.dot_dimension_numbers<[1], [0], [0], [1], [0, 0, 1, 1], [], []>} : vector<8x32xf32>, vector<32x32xf32>, vector<8x32xf32> -> vector<8x32xf32>
    %c0_4 = arith.constant 0 : index
    %c0_5 = arith.constant 0 : index
    %4 = vector.load %arg5[%c0_4, %c0_5] : memref<1x32xf32, #tpu.memory_space<vmem>>, vector<1x32xf32>
    %5 = vector.broadcast %4 : vector<1x32xf32> to vector<8x32xf32>
    %6 = arith.addf %3, %5 : vector<8x32xf32>
    %c0_6 = arith.constant 0 : index
    %c0_7 = arith.constant 0 : index
    %c0_8 = arith.constant 0 : index
    %7 = vector.load %arg8[%c0_6, %c0_7, %c0_8] : memref<1x8x32xf32, #tpu.memory_space<vmem>>, vector<1x8x32xf32>
    %8 = vector.shape_cast %7 : vector<1x8x32xf32> to vector<8x32xf32>
    %9 = vector.shape_cast %6 : vector<8x32xf32> to vector<1x8x32xf32>
    tpu.vector_store %arg8[%c0_6, %c0_7, %c0_8], %9 {strides = array<i32>} : memref<1x8x32xf32, #tpu.memory_space<vmem>>, vector<1x8x32xf32>,
    %c0_9 = arith.constant 0 : index
    %c0_10 = arith.constant 0 : index
    %10 = vector.load %arg3[%c0_9, %c0_10] : memref<32x32xf32, #tpu.memory_space<vmem>>, vector<32x32xf32>
    %cst_11 = arith.constant dense<0.000000e+00> : vector<8x32xf32>
    %11 = tpu.matmul %1, %10, %cst_11 {dimension_numbers = #tpu.dot_dimension_numbers<[1], [0], [0], [1], [0, 0, 1, 1], [], []>} : vector<8x32xf32>, vector<32x32xf32>, vector<8x32xf32> -> vector<8x32xf32>
    %c0_12 = arith.constant 0 : index
    %c0_13 = arith.constant 0 : index
    %12 = vector.load %arg6[%c0_12, %c0_13] : memref<1x32xf32, #tpu.memory_space<vmem>>, vector<1x32xf32>
    %13 = vector.broadcast %12 : vector<1x32xf32> to vector<8x32xf32>
    %14 = arith.addf %11, %13 : vector<8x32xf32>
    %c0_14 = arith.constant 0 : index
    %c0_15 = arith.constant 0 : index
    %c0_16 = arith.constant 0 : index
    %15 = vector.load %arg9[%c0_14, %c0_15, %c0_16] : memref<1x8x32xf32, #tpu.memory_space<vmem>>, vector<1x8x32xf32>
    %16 = vector.shape_cast %15 : vector<1x8x32xf32> to vector<8x32xf32>
    %17 = vector.shape_cast %14 : vector<8x32xf32> to vector<1x8x32xf32>
    tpu.vector_store %arg9[%c0_14, %c0_15, %c0_16], %17 {strides = array<i32>} : memref<1x8x32xf32, #tpu.memory_space<vmem>>, vector<1x8x32xf32>,
    %c0_17 = arith.constant 0 : index
    %c0_18 = arith.constant 0 : index
    %18 = vector.load %arg4[%c0_17, %c0_18] : memref<32x32xf32, #tpu.memory_space<vmem>>, vector<32x32xf32>
    %cst_19 = arith.constant dense<0.000000e+00> : vector<8x32xf32>
    %19 = tpu.matmul %1, %18, %cst_19 {dimension_numbers = #tpu.dot_dimension_numbers<[1], [0], [0], [1], [0, 0, 1, 1], [], []>} : vector<8x32xf32>, vector<32x32xf32>, vector<8x32xf32> -> vector<8x32xf32>
    %c0_20 = arith.constant 0 : index
    %c0_21 = arith.constant 0 : index
    %20 = vector.load %arg7[%c0_20, %c0_21] : memref<1x32xf32, #tpu.memory_space<vmem>>, vector<1x32xf32>
    %21 = vector.broadcast %20 : vector<1x32xf32> to vector<8x32xf32>
    %22 = arith.addf %19, %21 : vector<8x32xf32>
    %c0_22 = arith.constant 0 : index
    %c0_23 = arith.constant 0 : index
    %c0_24 = arith.constant 0 : index
    %23 = vector.load %arg10[%c0_22, %c0_23, %c0_24] : memref<1x8x32xf32, #tpu.memory_space<vmem>>, vector<1x8x32xf32>
    %24 = vector.shape_cast %23 : vector<1x8x32xf32> to vector<8x32xf32>
    %25 = vector.shape_cast %22 : vector<8x32xf32> to vector<1x8x32xf32>
    tpu.vector_store %arg10[%c0_22, %c0_23, %c0_24], %25 {strides = array<i32>} : memref<1x8x32xf32, #tpu.memory_space<vmem>>, vector<1x8x32xf32>,
    return
  }
  func.func @transform_0(%arg0: i32) -> (i32, i32, i32) {
    %c0_i32 = arith.constant 0 : i32
    %c0_i32_0 = arith.constant 0 : i32
    %c0_i32_1 = arith.constant 0 : i32
    return %arg0, %c0_i32, %c0_i32_0 : i32, i32, i32
  }
  func.func @transform_1(%arg0: i32) -> (i32, i32) {
    %c0_i32 = arith.constant 0 : i32
    %c0_i32_0 = arith.constant 0 : i32
    %c0_i32_1 = arith.constant 0 : i32
    return %c0_i32, %c0_i32_0 : i32, i32
  }
  func.func @transform_2(%arg0: i32) -> (i32, i32) {
    %c0_i32 = arith.constant 0 : i32
    %c0_i32_0 = arith.constant 0 : i32
    %c0_i32_1 = arith.constant 0 : i32
    return %c0_i32, %c0_i32_0 : i32, i32
  }
  func.func @transform_3(%arg0: i32) -> (i32, i32) {
    %c0_i32 = arith.constant 0 : i32
    %c0_i32_0 = arith.constant 0 : i32
    %c0_i32_1 = arith.constant 0 : i32
    return %c0_i32, %c0_i32_0 : i32, i32
  }
  func.func @transform_4(%arg0: i32) -> (i32, i32) {
    %c0_i32 = arith.constant 0 : i32
    %c0_i32_0 = arith.constant 0 : i32
    %c0_i32_1 = arith.constant 0 : i32
    return %c0_i32, %c0_i32_0 : i32, i32
  }
  func.func @transform_5(%arg0: i32) -> (i32, i32) {
    %c0_i32 = arith.constant 0 : i32
    %c0_i32_0 = arith.constant 0 : i32
    %c0_i32_1 = arith.constant 0 : i32
    return %c0_i32, %c0_i32_0 : i32, i32
  }
  func.func @transform_6(%arg0: i32) -> (i32, i32) {
    %c0_i32 = arith.constant 0 : i32
    %c0_i32_0 = arith.constant 0 : i32
    %c0_i32_1 = arith.constant 0 : i32
    return %c0_i32, %c0_i32_0 : i32, i32
  }
  func.func @transform_7(%arg0: i32) -> (i32, i32, i32) {
    %c0_i32 = arith.constant 0 : i32
    %c0_i32_0 = arith.constant 0 : i32
    %c0_i32_1 = arith.constant 0 : i32
    return %arg0, %c0_i32, %c0_i32_0 : i32, i32, i32
  }
  func.func @transform_8(%arg0: i32) -> (i32, i32, i32) {
    %c0_i32 = arith.constant 0 : i32
    %c0_i32_0 = arith.constant 0 : i32
    %c0_i32_1 = arith.constant 0 : i32
    return %arg0, %c0_i32, %c0_i32_0 : i32, i32, i32
  }
  func.func @transform_9(%arg0: i32) -> (i32, i32, i32) {
    %c0_i32 = arith.constant 0 : i32
    %c0_i32_0 = arith.constant 0 : i32
    %c0_i32_1 = arith.constant 0 : i32
    return %arg0, %c0_i32, %c0_i32_0 : i32, i32, i32
  }
}

module attributes {stable_mosaic.version = 11 : i64} {
  func.func @_out_ffn_kernel(%arg0: i32, %arg1: i32, %arg2: memref<1x8x32xf32, #tpu.memory_space<vmem>>, %arg3: memref<1x8x32xf32, #tpu.memory_space<vmem>>, %arg4: memref<32x32xf32, #tpu.memory_space<vmem>>, %arg5: memref<1x32xf32, #tpu.memory_space<vmem>>, %arg6: memref<1x32xf32, #tpu.memory_space<vmem>>, %arg7: memref<1x32xf32, #tpu.memory_space<vmem>>, %arg8: memref<32x128xf32, #tpu.memory_space<vmem>>, %arg9: memref<1x128xf32, #tpu.memory_space<vmem>>, %arg10: memref<128x32xf32, #tpu.memory_space<vmem>>, %arg11: memref<1x32xf32, #tpu.memory_space<vmem>>, %arg12: memref<1x32xf32, #tpu.memory_space<vmem>>, %arg13: memref<1x32xf32, #tpu.memory_space<vmem>>, %arg14: memref<1x8x32xf32, #tpu.memory_space<vmem>>, %arg15: memref<8x32xf32, #tpu.memory_space<vmem>>, %arg16: memref<8x32xf32, #tpu.memory_space<vmem>>) attributes {dimension_semantics = [#tpu.dimension_semantics<parallel>, #tpu.dimension_semantics<arbitrary>], iteration_bounds = array<i64: 2, 1>, scalar_prefetch = 0 : i64, scratch_operands = 2 : i64, tpu.core_type = #tpu.core_type<tc>, window_params = [{transform_indices = @transform_0, window_bounds = array<i64: 1, 8, 32>}, {transform_indices = @transform_1, window_bounds = array<i64: 1, 8, 32>}, {pipeline_mode = #tpu.pipeline_mode<synchronous>, transform_indices = @transform_2, window_bounds = array<i64: 32, 32>}, {pipeline_mode = #tpu.pipeline_mode<synchronous>, transform_indices = @transform_3, window_bounds = array<i64: 1, 32>}, {pipeline_mode = #tpu.pipeline_mode<synchronous>, transform_indices = @transform_4, window_bounds = array<i64: 1, 32>}, {pipeline_mode = #tpu.pipeline_mode<synchronous>, transform_indices = @transform_5, window_bounds = array<i64: 1, 32>}, {transform_indices = @transform_6, window_bounds = array<i64: 32, 128>}, {transform_indices = @transform_7, window_bounds = array<i64: 1, 128>}, {transform_indices = @transform_8, window_bounds = array<i64: 128, 32>}, {pipeline_mode = #tpu.pipeline_mode<synchronous>, transform_indices = @transform_9, window_bounds = array<i64: 1, 32>}, {pipeline_mode = #tpu.pipeline_mode<synchronous>, transform_indices = @transform_10, window_bounds = array<i64: 1, 32>}, {pipeline_mode = #tpu.pipeline_mode<synchronous>, transform_indices = @transform_11, window_bounds = array<i64: 1, 32>}, {transform_indices = @transform_12, window_bounds = array<i64: 1, 8, 32>}]} {
    %c0_i32 = arith.constant 0 : i32
    %0 = arith.cmpi eq, %arg1, %c0_i32 : i32
    %1 = arith.extui %0 : i1 to i32
    %c0_i32_0 = arith.constant 0 : i32
    %2 = arith.cmpi ne, %1, %c0_i32_0 : i32
    scf.if %2 {
      %c0_16 = arith.constant 0 : index
      %c0_17 = arith.constant 0 : index
      %c0_18 = arith.constant 0 : index
      %19 = vector.load %arg3[%c0_16, %c0_17, %c0_18] : memref<1x8x32xf32, #tpu.memory_space<vmem>>, vector<1x8x32xf32>
      %20 = vector.shape_cast %19 : vector<1x8x32xf32> to vector<8x32xf32>
      %c0_19 = arith.constant 0 : index
      %c0_20 = arith.constant 0 : index
      %21 = vector.load %arg4[%c0_19, %c0_20] : memref<32x32xf32, #tpu.memory_space<vmem>>, vector<32x32xf32>
      %cst_21 = arith.constant dense<0.000000e+00> : vector<8x32xf32>
      %22 = tpu.matmul %20, %21, %cst_21 {dimension_numbers = #tpu.dot_dimension_numbers<[1], [0], [0], [1], [0, 0, 1, 1], [], []>} : vector<8x32xf32>, vector<32x32xf32>, vector<8x32xf32> -> vector<8x32xf32>
      %c0_22 = arith.constant 0 : index
      %c0_23 = arith.constant 0 : index
      %23 = vector.load %arg5[%c0_22, %c0_23] : memref<1x32xf32, #tpu.memory_space<vmem>>, vector<1x32xf32>
      %24 = vector.broadcast %23 : vector<1x32xf32> to vector<8x32xf32>
      %25 = arith.addf %22, %24 : vector<8x32xf32>
      %c0_24 = arith.constant 0 : index
      %c0_25 = arith.constant 0 : index
      %c0_26 = arith.constant 0 : index
      %26 = vector.load %arg2[%c0_24, %c0_25, %c0_26] : memref<1x8x32xf32, #tpu.memory_space<vmem>>, vector<1x8x32xf32>
      %27 = vector.shape_cast %26 : vector<1x8x32xf32> to vector<8x32xf32>
      %28 = arith.addf %27, %25 : vector<8x32xf32>
      %c0_27 = arith.constant 0 : index
      %c0_28 = arith.constant 0 : index
      %29 = vector.load %arg6[%c0_27, %c0_28] : memref<1x32xf32, #tpu.memory_space<vmem>>, vector<1x32xf32>
      %c0_29 = arith.constant 0 : index
      %c0_30 = arith.constant 0 : index
      %30 = vector.load %arg7[%c0_29, %c0_30] : memref<1x32xf32, #tpu.memory_space<vmem>>, vector<1x32xf32>
      %cst_31 = arith.constant dense<0.000000e+00> : vector<8xf32>
      %31 = vector.multi_reduction <add>, %28, %cst_31 [1] : vector<8x32xf32> to vector<8xf32>
      %32 = vector.shape_cast %31 : vector<8xf32> to vector<8x1xf32>
      %cst_32 = arith.constant 3.200000e+01 : f32
      %33 = vector.broadcast %cst_32 : f32 to vector<8x1xf32>
      %34 = arith.divf %32, %33 : vector<8x1xf32>
      %35 = vector.broadcast %34 : vector<8x1xf32> to vector<8x32xf32>
      %36 = arith.subf %28, %35 : vector<8x32xf32>
      %37 = arith.mulf %36, %36 : vector<8x32xf32>
      %cst_33 = arith.constant dense<0.000000e+00> : vector<8xf32>
      %38 = vector.multi_reduction <add>, %37, %cst_33 [1] : vector<8x32xf32> to vector<8xf32>
      %39 = vector.shape_cast %38 : vector<8xf32> to vector<8x1xf32>
      %cst_34 = arith.constant 3.200000e+01 : f32
      %40 = vector.broadcast %cst_34 : f32 to vector<8x1xf32>
      %41 = arith.divf %39, %40 : vector<8x1xf32>
      %42 = vector.broadcast %34 : vector<8x1xf32> to vector<8x32xf32>
      %43 = arith.subf %28, %42 : vector<8x32xf32>
      %cst_35 = arith.constant 9.99999974E-6 : f32
      %44 = vector.broadcast %cst_35 : f32 to vector<8x1xf32>
      %45 = arith.addf %41, %44 : vector<8x1xf32>
      %46 = math.rsqrt %45 : vector<8x1xf32>
      %47 = vector.broadcast %46 : vector<8x1xf32> to vector<8x32xf32>
      %48 = arith.mulf %43, %47 : vector<8x32xf32>
      %49 = vector.broadcast %29 : vector<1x32xf32> to vector<8x32xf32>
      %50 = arith.mulf %48, %49 : vector<8x32xf32>
      %51 = vector.broadcast %30 : vector<1x32xf32> to vector<8x32xf32>
      %52 = arith.addf %50, %51 : vector<8x32xf32>
      %c0_36 = arith.constant 0 : index
      %c0_37 = arith.constant 0 : index
      %53 = vector.load %arg15[%c0_36, %c0_37] : memref<8x32xf32, #tpu.memory_space<vmem>>, vector<8x32xf32>
      tpu.vector_store %arg15[%c0_36, %c0_37], %52 {strides = array<i32>} : memref<8x32xf32, #tpu.memory_space<vmem>>, vector<8x32xf32>,
      %cst_38 = arith.constant 0.000000e+00 : f32
      %54 = vector.broadcast %cst_38 : f32 to vector<8x32xf32>
      %c0_39 = arith.constant 0 : index
      %c0_40 = arith.constant 0 : index
      %55 = vector.load %arg16[%c0_39, %c0_40] : memref<8x32xf32, #tpu.memory_space<vmem>>, vector<8x32xf32>
      tpu.vector_store %arg16[%c0_39, %c0_40], %54 {strides = array<i32>} : memref<8x32xf32, #tpu.memory_space<vmem>>, vector<8x32xf32>,
    } else {
    }
    %c0 = arith.constant 0 : index
    %c0_1 = arith.constant 0 : index
    %3 = vector.load %arg15[%c0, %c0_1] : memref<8x32xf32, #tpu.memory_space<vmem>>, vector<8x32xf32>
    %c0_2 = arith.constant 0 : index
    %c0_3 = arith.constant 0 : index
    %4 = vector.load %arg8[%c0_2, %c0_3] : memref<32x128xf32, #tpu.memory_space<vmem>>, vector<32x128xf32>
    %cst = arith.constant dense<0.000000e+00> : vector<8x128xf32>
    %5 = tpu.matmul %3, %4, %cst {dimension_numbers = #tpu.dot_dimension_numbers<[1], [0], [0], [1], [0, 0, 1, 1], [], []>} : vector<8x32xf32>, vector<32x128xf32>, vector<8x128xf32> -> vector<8x128xf32>
    %c0_4 = arith.constant 0 : index
    %c0_5 = arith.constant 0 : index
    %6 = vector.load %arg9[%c0_4, %c0_5] : memref<1x128xf32, #tpu.memory_space<vmem>>, vector<1x128xf32>
    %7 = vector.broadcast %6 : vector<1x128xf32> to vector<8x128xf32>
    %8 = arith.addf %5, %7 : vector<8x128xf32>
    %cst_6 = arith.constant 0.000000e+00 : f32
    %9 = vector.broadcast %cst_6 : f32 to vector<8x128xf32>
    %10 = arith.maximumf %8, %9 : vector<8x128xf32>
    %c0_7 = arith.constant 0 : index
    %c0_8 = arith.constant 0 : index
    %11 = vector.load %arg16[%c0_7, %c0_8] : memref<8x32xf32, #tpu.memory_space<vmem>>, vector<8x32xf32>
    %c0_9 = arith.constant 0 : index
    %c0_10 = arith.constant 0 : index
    %12 = vector.load %arg10[%c0_9, %c0_10] : memref<128x32xf32, #tpu.memory_space<vmem>>, vector<128x32xf32>
    %cst_11 = arith.constant dense<0.000000e+00> : vector<8x32xf32>
    %13 = tpu.matmul %10, %12, %cst_11 {dimension_numbers = #tpu.dot_dimension_numbers<[1], [0], [0], [1], [0, 0, 1, 1], [], []>} : vector<8x128xf32>, vector<128x32xf32>, vector<8x32xf32> -> vector<8x32xf32>
    %14 = arith.addf %11, %13 : vector<8x32xf32>
    %c0_12 = arith.constant 0 : index
    %c0_13 = arith.constant 0 : index
    %15 = vector.load %arg16[%c0_12, %c0_13] : memref<8x32xf32, #tpu.memory_space<vmem>>, vector<8x32xf32>
    tpu.vector_store %arg16[%c0_12, %c0_13], %14 {strides = array<i32>} : memref<8x32xf32, #tpu.memory_space<vmem>>, vector<8x32xf32>,
    %c0_i32_14 = arith.constant 0 : i32
    %16 = arith.cmpi eq, %arg1, %c0_i32_14 : i32
    %17 = arith.extui %16 : i1 to i32
    %c0_i32_15 = arith.constant 0 : i32
    %18 = arith.cmpi ne, %17, %c0_i32_15 : i32
    scf.if %18 {
      %c0_16 = arith.constant 0 : index
      %c0_17 = arith.constant 0 : index
      %19 = vector.load %arg15[%c0_16, %c0_17] : memref<8x32xf32, #tpu.memory_space<vmem>>, vector<8x32xf32>
      %c0_18 = arith.constant 0 : index
      %c0_19 = arith.constant 0 : index
      %20 = vector.load %arg16[%c0_18, %c0_19] : memref<8x32xf32, #tpu.memory_space<vmem>>, vector<8x32xf32>
      %21 = arith.addf %19, %20 : vector<8x32xf32>
      %c0_20 = arith.constant 0 : index
      %c0_21 = arith.constant 0 : index
      %22 = vector.load %arg11[%c0_20, %c0_21] : memref<1x32xf32, #tpu.memory_space<vmem>>, vector<1x32xf32>
      %23 = vector.broadcast %22 : vector<1x32xf32> to vector<8x32xf32>
      %24 = arith.addf %21, %23 : vector<8x32xf32>
      %c0_22 = arith.constant 0 : index
      %c0_23 = arith.constant 0 : index
      %25 = vector.load %arg12[%c0_22, %c0_23] : memref<1x32xf32, #tpu.memory_space<vmem>>, vector<1x32xf32>
      %c0_24 = arith.constant 0 : index
      %c0_25 = arith.constant 0 : index
      %26 = vector.load %arg13[%c0_24, %c0_25] : memref<1x32xf32, #tpu.memory_space<vmem>>, vector<1x32xf32>
      %cst_26 = arith.constant dense<0.000000e+00> : vector<8xf32>
      %27 = vector.multi_reduction <add>, %24, %cst_26 [1] : vector<8x32xf32> to vector<8xf32>
      %28 = vector.shape_cast %27 : vector<8xf32> to vector<8x1xf32>
      %cst_27 = arith.constant 3.200000e+01 : f32
      %29 = vector.broadcast %cst_27 : f32 to vector<8x1xf32>
      %30 = arith.divf %28, %29 : vector<8x1xf32>
      %31 = vector.broadcast %30 : vector<8x1xf32> to vector<8x32xf32>
      %32 = arith.subf %24, %31 : vector<8x32xf32>
      %33 = arith.mulf %32, %32 : vector<8x32xf32>
      %cst_28 = arith.constant dense<0.000000e+00> : vector<8xf32>
      %34 = vector.multi_reduction <add>, %33, %cst_28 [1] : vector<8x32xf32> to vector<8xf32>
      %35 = vector.shape_cast %34 : vector<8xf32> to vector<8x1xf32>
      %cst_29 = arith.constant 3.200000e+01 : f32
      %36 = vector.broadcast %cst_29 : f32 to vector<8x1xf32>
      %37 = arith.divf %35, %36 : vector<8x1xf32>
      %38 = vector.broadcast %30 : vector<8x1xf32> to vector<8x32xf32>
      %39 = arith.subf %24, %38 : vector<8x32xf32>
      %cst_30 = arith.constant 9.99999974E-6 : f32
      %40 = vector.broadcast %cst_30 : f32 to vector<8x1xf32>
      %41 = arith.addf %37, %40 : vector<8x1xf32>
      %42 = math.rsqrt %41 : vector<8x1xf32>
      %43 = vector.broadcast %42 : vector<8x1xf32> to vector<8x32xf32>
      %44 = arith.mulf %39, %43 : vector<8x32xf32>
      %45 = vector.broadcast %25 : vector<1x32xf32> to vector<8x32xf32>
      %46 = arith.mulf %44, %45 : vector<8x32xf32>
      %47 = vector.broadcast %26 : vector<1x32xf32> to vector<8x32xf32>
      %48 = arith.addf %46, %47 : vector<8x32xf32>
      %c0_31 = arith.constant 0 : index
      %c0_32 = arith.constant 0 : index
      %c0_33 = arith.constant 0 : index
      %49 = vector.load %arg14[%c0_31, %c0_32, %c0_33] : memref<1x8x32xf32, #tpu.memory_space<vmem>>, vector<1x8x32xf32>
      %50 = vector.shape_cast %49 : vector<1x8x32xf32> to vector<8x32xf32>
      %51 = vector.shape_cast %48 : vector<8x32xf32> to vector<1x8x32xf32>
      tpu.vector_store %arg14[%c0_31, %c0_32, %c0_33], %51 {strides = array<i32>} : memref<1x8x32xf32, #tpu.memory_space<vmem>>, vector<1x8x32xf32>,
    } else {
    }
    return
  }
  func.func @transform_0(%arg0: i32, %arg1: i32) -> (i32, i32, i32) {
    %c0_i32 = arith.constant 0 : i32
    %c0_i32_0 = arith.constant 0 : i32
    %c0_i32_1 = arith.constant 0 : i32
    return %arg0, %c0_i32, %c0_i32_0 : i32, i32, i32
  }
  func.func @transform_1(%arg0: i32, %arg1: i32) -> (i32, i32, i32) {
    %c0_i32 = arith.constant 0 : i32
    %c0_i32_0 = arith.constant 0 : i32
    %c0_i32_1 = arith.constant 0 : i32
    return %arg0, %c0_i32, %c0_i32_0 : i32, i32, i32
  }
  func.func @transform_2(%arg0: i32, %arg1: i32) -> (i32, i32) {
    %c0_i32 = arith.constant 0 : i32
    %c0_i32_0 = arith.constant 0 : i32
    %c0_i32_1 = arith.constant 0 : i32
    return %c0_i32, %c0_i32_0 : i32, i32
  }
  func.func @transform_3(%arg0: i32, %arg1: i32) -> (i32, i32) {
    %c0_i32 = arith.constant 0 : i32
    %c0_i32_0 = arith.constant 0 : i32
    %c0_i32_1 = arith.constant 0 : i32
    return %c0_i32, %c0_i32_0 : i32, i32
  }
  func.func @transform_4(%arg0: i32, %arg1: i32) -> (i32, i32) {
    %c0_i32 = arith.constant 0 : i32
    %c0_i32_0 = arith.constant 0 : i32
    %c0_i32_1 = arith.constant 0 : i32
    return %c0_i32, %c0_i32_0 : i32, i32
  }
  func.func @transform_5(%arg0: i32, %arg1: i32) -> (i32, i32) {
    %c0_i32 = arith.constant 0 : i32
    %c0_i32_0 = arith.constant 0 : i32
    %c0_i32_1 = arith.constant 0 : i32
    return %c0_i32, %c0_i32_0 : i32, i32
  }
  func.func @transform_6(%arg0: i32, %arg1: i32) -> (i32, i32) {
    %c0_i32 = arith.constant 0 : i32
    %c0_i32_0 = arith.constant 0 : i32
    return %c0_i32, %arg1 : i32, i32
  }
  func.func @transform_7(%arg0: i32, %arg1: i32) -> (i32, i32) {
    %c0_i32 = arith.constant 0 : i32
    %c0_i32_0 = arith.constant 0 : i32
    return %c0_i32, %arg1 : i32, i32
  }
  func.func @transform_8(%arg0: i32, %arg1: i32) -> (i32, i32) {
    %c0_i32 = arith.constant 0 : i32
    %c0_i32_0 = arith.constant 0 : i32
    return %arg1, %c0_i32 : i32, i32
  }
  func.func @transform_9(%arg0: i32, %arg1: i32) -> (i32, i32) {
    %c0_i32 = arith.constant 0 : i32
    %c0_i32_0 = arith.constant 0 : i32
    %c0_i32_1 = arith.constant 0 : i32
    return %c0_i32, %c0_i32_0 : i32, i32
  }
  func.func @transform_10(%arg0: i32, %arg1: i32) -> (i32, i32) {
    %c0_i32 = arith.constant 0 : i32
    %c0_i32_0 = arith.constant 0 : i32
    %c0_i32_1 = arith.constant 0 : i32
    return %c0_i32, %c0_i32_0 : i32, i32
  }
  func.func @transform_11(%arg0: i32, %arg1: i32) -> (i32, i32) {
    %c0_i32 = arith.constant 0 : i32
    %c0_i32_0 = arith.constant 0 : i32
    %c0_i32_1 = arith.constant 0 : i32
    return %c0_i32, %c0_i32_0 : i32, i32
  }
  func.func @transform_12(%arg0: i32, %arg1: i32) -> (i32, i32, i32) {
    %c0_i32 = arith.constant 0 : i32
    %c0_i32_0 = arith.constant 0 : i32
    %c0_i32_1 = arith.constant 0 : i32
    return %arg0, %c0_i32, %c0_i32_0 : i32, i32, i32
  }
}

module attributes {stable_mosaic.version = 11 : i64} {
  func.func @_out_ffn_kernel(%arg0: i32, %arg1: i32, %arg2: memref<1x8x32xf32, #tpu.memory_space<vmem>>, %arg3: memref<1x8x32xf32, #tpu.memory_space<vmem>>, %arg4: memref<32x32xf32, #tpu.memory_space<vmem>>, %arg5: memref<1x32xf32, #tpu.memory_space<vmem>>, %arg6: memref<1x32xf32, #tpu.memory_space<vmem>>, %arg7: memref<1x32xf32, #tpu.memory_space<vmem>>, %arg8: memref<32x128xf32, #tpu.memory_space<vmem>>, %arg9: memref<1x128xf32, #tpu.memory_space<vmem>>, %arg10: memref<128x32xf32, #tpu.memory_space<vmem>>, %arg11: memref<1x32xf32, #tpu.memory_space<vmem>>, %arg12: memref<1x32xf32, #tpu.memory_space<vmem>>, %arg13: memref<1x32xf32, #tpu.memory_space<vmem>>, %arg14: memref<1x8x32xf32, #tpu.memory_space<vmem>>, %arg15: memref<8x32xf32, #tpu.memory_space<vmem>>, %arg16: memref<8x32xf32, #tpu.memory_space<vmem>>) attributes {dimension_semantics = [#tpu.dimension_semantics<parallel>, #tpu.dimension_semantics<arbitrary>], iteration_bounds = array<i64: 2, 1>, scalar_prefetch = 0 : i64, scratch_operands = 2 : i64, tpu.core_type = #tpu.core_type<tc>, window_params = [{transform_indices = @transform_0, window_bounds = array<i64: 1, 8, 32>}, {transform_indices = @transform_1, window_bounds = array<i64: 1, 8, 32>}, {pipeline_mode = #tpu.pipeline_mode<synchronous>, transform_indices = @transform_2, window_bounds = array<i64: 32, 32>}, {pipeline_mode = #tpu.pipeline_mode<synchronous>, transform_indices = @transform_3, window_bounds = array<i64: 1, 32>}, {pipeline_mode = #tpu.pipeline_mode<synchronous>, transform_indices = @transform_4, window_bounds = array<i64: 1, 32>}, {pipeline_mode = #tpu.pipeline_mode<synchronous>, transform_indices = @transform_5, window_bounds = array<i64: 1, 32>}, {transform_indices = @transform_6, window_bounds = array<i64: 32, 128>}, {transform_indices = @transform_7, window_bounds = array<i64: 1, 128>}, {transform_indices = @transform_8, window_bounds = array<i64: 128, 32>}, {pipeline_mode = #tpu.pipeline_mode<synchronous>, transform_indices = @transform_9, window_bounds = array<i64: 1, 32>}, {pipeline_mode = #tpu.pipeline_mode<synchronous>, transform_indices = @transform_10, window_bounds = array<i64: 1, 32>}, {pipeline_mode = #tpu.pipeline_mode<synchronous>, transform_indices = @transform_11, window_bounds = array<i64: 1, 32>}, {transform_indices = @transform_12, window_bounds = array<i64: 1, 8, 32>}]} {
    %c0_i32 = arith.constant 0 : i32
    %0 = arith.cmpi eq, %arg1, %c0_i32 : i32
    %1 = arith.extui %0 : i1 to i32
    %c0_i32_0 = arith.constant 0 : i32
    %2 = arith.cmpi ne, %1, %c0_i32_0 : i32
    scf.if %2 {
      %c0_16 = arith.constant 0 : index
      %c0_17 = arith.constant 0 : index
      %c0_18 = arith.constant 0 : index
      %19 = vector.load %arg3[%c0_16, %c0_17, %c0_18] : memref<1x8x32xf32, #tpu.memory_space<vmem>>, vector<1x8x32xf32>
      %20 = vector.shape_cast %19 : vector<1x8x32xf32> to vector<8x32xf32>
      %c0_19 = arith.constant 0 : index
      %c0_20 = arith.constant 0 : index
      %21 = vector.load %arg4[%c0_19, %c0_20] : memref<32x32xf32, #tpu.memory_space<vmem>>, vector<32x32xf32>
      %cst_21 = arith.constant dense<0.000000e+00> : vector<8x32xf32>
      %22 = tpu.matmul %20, %21, %cst_21 {dimension_numbers = #tpu.dot_dimension_numbers<[1], [0], [0], [1], [0, 0, 1, 1], [], []>} : vector<8x32xf32>, vector<32x32xf32>, vector<8x32xf32> -> vector<8x32xf32>
      %c0_22 = arith.constant 0 : index
      %c0_23 = arith.constant 0 : index
      %23 = vector.load %arg5[%c0_22, %c0_23] : memref<1x32xf32, #tpu.memory_space<vmem>>, vector<1x32xf32>
      %24 = vector.broadcast %23 : vector<1x32xf32> to vector<8x32xf32>
      %25 = arith.addf %22, %24 : vector<8x32xf32>
      %c0_24 = arith.constant 0 : index
      %c0_25 = arith.constant 0 : index
      %c0_26 = arith.constant 0 : index
      %26 = vector.load %arg2[%c0_24, %c0_25, %c0_26] : memref<1x8x32xf32, #tpu.memory_space<vmem>>, vector<1x8x32xf32>
      %27 = vector.shape_cast %26 : vector<1x8x32xf32> to vector<8x32xf32>
      %28 = arith.addf %27, %25 : vector<8x32xf32>
      %c0_27 = arith.constant 0 : index
      %c0_28 = arith.constant 0 : index
      %29 = vector.load %arg6[%c0_27, %c0_28] : memref<1x32xf32, #tpu.memory_space<vmem>>, vector<1x32xf32>
      %c0_29 = arith.constant 0 : index
      %c0_30 = arith.constant 0 : index
      %30 = vector.load %arg7[%c0_29, %c0_30] : memref<1x32xf32, #tpu.memory_space<vmem>>, vector<1x32xf32>
      %cst_31 = arith.constant dense<0.000000e+00> : vector<8xf32>
      %31 = vector.multi_reduction <add>, %28, %cst_31 [1] : vector<8x32xf32> to vector<8xf32>
      %32 = vector.shape_cast %31 : vector<8xf32> to vector<8x1xf32>
      %cst_32 = arith.constant 3.200000e+01 : f32
      %33 = vector.broadcast %cst_32 : f32 to vector<8x1xf32>
      %34 = arith.divf %32, %33 : vector<8x1xf32>
      %35 = vector.broadcast %34 : vector<8x1xf32> to vector<8x32xf32>
      %36 = arith.subf %28, %35 : vector<8x32xf32>
      %37 = arith.mulf %36, %36 : vector<8x32xf32>
      %cst_33 = arith.constant dense<0.000000e+00> : vector<8xf32>
      %38 = vector.multi_reduction <add>, %37, %cst_33 [1] : vector<8x32xf32> to vector<8xf32>
      %39 = vector.shape_cast %38 : vector<8xf32> to vector<8x1xf32>
      %cst_34 = arith.constant 3.200000e+01 : f32
      %40 = vector.broadcast %cst_34 : f32 to vector<8x1xf32>
      %41 = arith.divf %39, %40 : vector<8x1xf32>
      %42 = vector.broadcast %34 : vector<8x1xf32> to vector<8x32xf32>
      %43 = arith.subf %28, %42 : vector<8x32xf32>
      %cst_35 = arith.constant 9.99999974E-6 : f32
      %44 = vector.broadcast %cst_35 : f32 to vector<8x1xf32>
      %45 = arith.addf %41, %44 : vector<8x1xf32>
      %46 = math.rsqrt %45 : vector<8x1xf32>
      %47 = vector.broadcast %46 : vector<8x1xf32> to vector<8x32xf32>
      %48 = arith.mulf %43, %47 : vector<8x32xf32>
      %49 = vector.broadcast %29 : vector<1x32xf32> to vector<8x32xf32>
      %50 = arith.mulf %48, %49 : vector<8x32xf32>
      %51 = vector.broadcast %30 : vector<1x32xf32> to vector<8x32xf32>
      %52 = arith.addf %50, %51 : vector<8x32xf32>
      %c0_36 = arith.constant 0 : index
      %c0_37 = arith.constant 0 : index
      %53 = vector.load %arg15[%c0_36, %c0_37] : memref<8x32xf32, #tpu.memory_space<vmem>>, vector<8x32xf32>
      tpu.vector_store %arg15[%c0_36, %c0_37], %52 {strides = array<i32>} : memref<8x32xf32, #tpu.memory_space<vmem>>, vector<8x32xf32>,
      %cst_38 = arith.constant 0.000000e+00 : f32
      %54 = vector.broadcast %cst_38 : f32 to vector<8x32xf32>
      %c0_39 = arith.constant 0 : index
      %c0_40 = arith.constant 0 : index
      %55 = vector.load %arg16[%c0_39, %c0_40] : memref<8x32xf32, #tpu.memory_space<vmem>>, vector<8x32xf32>
      tpu.vector_store %arg16[%c0_39, %c0_40], %54 {strides = array<i32>} : memref<8x32xf32, #tpu.memory_space<vmem>>, vector<8x32xf32>,
    } else {
    }
    %c0 = arith.constant 0 : index
    %c0_1 = arith.constant 0 : index
    %3 = vector.load %arg15[%c0, %c0_1] : memref<8x32xf32, #tpu.memory_space<vmem>>, vector<8x32xf32>
    %c0_2 = arith.constant 0 : index
    %c0_3 = arith.constant 0 : index
    %4 = vector.load %arg8[%c0_2, %c0_3] : memref<32x128xf32, #tpu.memory_space<vmem>>, vector<32x128xf32>
    %cst = arith.constant dense<0.000000e+00> : vector<8x128xf32>
    %5 = tpu.matmul %3, %4, %cst {dimension_numbers = #tpu.dot_dimension_numbers<[1], [0], [0], [1], [0, 0, 1, 1], [], []>} : vector<8x32xf32>, vector<32x128xf32>, vector<8x128xf32> -> vector<8x128xf32>
    %c0_4 = arith.constant 0 : index
    %c0_5 = arith.constant 0 : index
    %6 = vector.load %arg9[%c0_4, %c0_5] : memref<1x128xf32, #tpu.memory_space<vmem>>, vector<1x128xf32>
    %7 = vector.broadcast %6 : vector<1x128xf32> to vector<8x128xf32>
    %8 = arith.addf %5, %7 : vector<8x128xf32>
    %cst_6 = arith.constant 0.000000e+00 : f32
    %9 = vector.broadcast %cst_6 : f32 to vector<8x128xf32>
    %10 = arith.maximumf %8, %9 : vector<8x128xf32>
    %c0_7 = arith.constant 0 : index
    %c0_8 = arith.constant 0 : index
    %11 = vector.load %arg16[%c0_7, %c0_8] : memref<8x32xf32, #tpu.memory_space<vmem>>, vector<8x32xf32>
    %c0_9 = arith.constant 0 : index
    %c0_10 = arith.constant 0 : index
    %12 = vector.load %arg10[%c0_9, %c0_10] : memref<128x32xf32, #tpu.memory_space<vmem>>, vector<128x32xf32>
    %cst_11 = arith.constant dense<0.000000e+00> : vector<8x32xf32>
    %13 = tpu.matmul %10, %12, %cst_11 {dimension_numbers = #tpu.dot_dimension_numbers<[1], [0], [0], [1], [0, 0, 1, 1], [], []>} : vector<8x128xf32>, vector<128x32xf32>, vector<8x32xf32> -> vector<8x32xf32>
    %14 = arith.addf %11, %13 : vector<8x32xf32>
    %c0_12 = arith.constant 0 : index
    %c0_13 = arith.constant 0 : index
    %15 = vector.load %arg16[%c0_12, %c0_13] : memref<8x32xf32, #tpu.memory_space<vmem>>, vector<8x32xf32>
    tpu.vector_store %arg16[%c0_12, %c0_13], %14 {strides = array<i32>} : memref<8x32xf32, #tpu.memory_space<vmem>>, vector<8x32xf32>,
    %c0_i32_14 = arith.constant 0 : i32
    %16 = arith.cmpi eq, %arg1, %c0_i32_14 : i32
    %17 = arith.extui %16 : i1 to i32
    %c0_i32_15 = arith.constant 0 : i32
    %18 = arith.cmpi ne, %17, %c0_i32_15 : i32
    scf.if %18 {
      %c0_16 = arith.constant 0 : index
      %c0_17 = arith.constant 0 : index
      %19 = vector.load %arg15[%c0_16, %c0_17] : memref<8x32xf32, #tpu.memory_space<vmem>>, vector<8x32xf32>
      %c0_18 = arith.constant 0 : index
      %c0_19 = arith.constant 0 : index
      %20 = vector.load %arg16[%c0_18, %c0_19] : memref<8x32xf32, #tpu.memory_space<vmem>>, vector<8x32xf32>
      %21 = arith.addf %19, %20 : vector<8x32xf32>
      %c0_20 = arith.constant 0 : index
      %c0_21 = arith.constant 0 : index
      %22 = vector.load %arg11[%c0_20, %c0_21] : memref<1x32xf32, #tpu.memory_space<vmem>>, vector<1x32xf32>
      %23 = vector.broadcast %22 : vector<1x32xf32> to vector<8x32xf32>
      %24 = arith.addf %21, %23 : vector<8x32xf32>
      %c0_22 = arith.constant 0 : index
      %c0_23 = arith.constant 0 : index
      %25 = vector.load %arg12[%c0_22, %c0_23] : memref<1x32xf32, #tpu.memory_space<vmem>>, vector<1x32xf32>
      %c0_24 = arith.constant 0 : index
      %c0_25 = arith.constant 0 : index
      %26 = vector.load %arg13[%c0_24, %c0_25] : memref<1x32xf32, #tpu.memory_space<vmem>>, vector<1x32xf32>
      %cst_26 = arith.constant dense<0.000000e+00> : vector<8xf32>
      %27 = vector.multi_reduction <add>, %24, %cst_26 [1] : vector<8x32xf32> to vector<8xf32>
      %28 = vector.shape_cast %27 : vector<8xf32> to vector<8x1xf32>
      %cst_27 = arith.constant 3.200000e+01 : f32
      %29 = vector.broadcast %cst_27 : f32 to vector<8x1xf32>
      %30 = arith.divf %28, %29 : vector<8x1xf32>
      %31 = vector.broadcast %30 : vector<8x1xf32> to vector<8x32xf32>
      %32 = arith.subf %24, %31 : vector<8x32xf32>
      %33 = arith.mulf %32, %32 : vector<8x32xf32>
      %cst_28 = arith.constant dense<0.000000e+00> : vector<8xf32>
      %34 = vector.multi_reduction <add>, %33, %cst_28 [1] : vector<8x32xf32> to vector<8xf32>
      %35 = vector.shape_cast %34 : vector<8xf32> to vector<8x1xf32>
      %cst_29 = arith.constant 3.200000e+01 : f32
      %36 = vector.broadcast %cst_29 : f32 to vector<8x1xf32>
      %37 = arith.divf %35, %36 : vector<8x1xf32>
      %38 = vector.broadcast %30 : vector<8x1xf32> to vector<8x32xf32>
      %39 = arith.subf %24, %38 : vector<8x32xf32>
      %cst_30 = arith.constant 9.99999974E-6 : f32
      %40 = vector.broadcast %cst_30 : f32 to vector<8x1xf32>
      %41 = arith.addf %37, %40 : vector<8x1xf32>
      %42 = math.rsqrt %41 : vector<8x1xf32>
      %43 = vector.broadcast %42 : vector<8x1xf32> to vector<8x32xf32>
      %44 = arith.mulf %39, %43 : vector<8x32xf32>
      %45 = vector.broadcast %25 : vector<1x32xf32> to vector<8x32xf32>
      %46 = arith.mulf %44, %45 : vector<8x32xf32>
      %47 = vector.broadcast %26 : vector<1x32xf32> to vector<8x32xf32>
      %48 = arith.addf %46, %47 : vector<8x32xf32>
      %c0_31 = arith.constant 0 : index
      %c0_32 = arith.constant 0 : index
      %c0_33 = arith.constant 0 : index
      %49 = vector.load %arg14[%c0_31, %c0_32, %c0_33] : memref<1x8x32xf32, #tpu.memory_space<vmem>>, vector<1x8x32xf32>
      %50 = vector.shape_cast %49 : vector<1x8x32xf32> to vector<8x32xf32>
      %51 = vector.shape_cast %48 : vector<8x32xf32> to vector<1x8x32xf32>
      tpu.vector_store %arg14[%c0_31, %c0_32, %c0_33], %51 {strides = array<i32>} : memref<1x8x32xf32, #tpu.memory_space<vmem>>, vector<1x8x32xf32>,
    } else {
    }
    return
  }
  func.func @transform_0(%arg0: i32, %arg1: i32) -> (i32, i32, i32) {
    %c0_i32 = arith.constant 0 : i32
    %c0_i32_0 = arith.constant 0 : i32
    %c0_i32_1 = arith.constant 0 : i32
    return %arg0, %c0_i32, %c0_i32_0 : i32, i32, i32
  }
  func.func @transform_1(%arg0: i32, %arg1: i32) -> (i32, i32, i32) {
    %c0_i32 = arith.constant 0 : i32
    %c0_i32_0 = arith.constant 0 : i32
    %c0_i32_1 = arith.constant 0 : i32
    return %arg0, %c0_i32, %c0_i32_0 : i32, i32, i32
  }
  func.func @transform_2(%arg0: i32, %arg1: i32) -> (i32, i32) {
    %c0_i32 = arith.constant 0 : i32
    %c0_i32_0 = arith.constant 0 : i32
    %c0_i32_1 = arith.constant 0 : i32
    return %c0_i32, %c0_i32_0 : i32, i32
  }
  func.func @transform_3(%arg0: i32, %arg1: i32) -> (i32, i32) {
    %c0_i32 = arith.constant 0 : i32
    %c0_i32_0 = arith.constant 0 : i32
    %c0_i32_1 = arith.constant 0 : i32
    return %c0_i32, %c0_i32_0 : i32, i32
  }
  func.func @transform_4(%arg0: i32, %arg1: i32) -> (i32, i32) {
    %c0_i32 = arith.constant 0 : i32
    %c0_i32_0 = arith.constant 0 : i32
    %c0_i32_1 = arith.constant 0 : i32
    return %c0_i32, %c0_i32_0 : i32, i32
  }
  func.func @transform_5(%arg0: i32, %arg1: i32) -> (i32, i32) {
    %c0_i32 = arith.constant 0 : i32
    %c0_i32_0 = arith.constant 0 : i32
    %c0_i32_1 = arith.constant 0 : i32
    return %c0_i32, %c0_i32_0 : i32, i32
  }
  func.func @transform_6(%arg0: i32, %arg1: i32) -> (i32, i32) {
    %c0_i32 = arith.constant 0 : i32
    %c0_i32_0 = arith.constant 0 : i32
    return %c0_i32, %arg1 : i32, i32
  }
  func.func @transform_7(%arg0: i32, %arg1: i32) -> (i32, i32) {
    %c0_i32 = arith.constant 0 : i32
    %c0_i32_0 = arith.constant 0 : i32
    return %c0_i32, %arg1 : i32, i32
  }
  func.func @transform_8(%arg0: i32, %arg1: i32) -> (i32, i32) {
    %c0_i32 = arith.constant 0 : i32
    %c0_i32_0 = arith.constant 0 : i32
    return %arg1, %c0_i32 : i32, i32
  }
  func.func @transform_9(%arg0: i32, %arg1: i32) -> (i32, i32) {
    %c0_i32 = arith.constant 0 : i32
    %c0_i32_0 = arith.constant 0 : i32
    %c0_i32_1 = arith.constant 0 : i32
    return %c0_i32, %c0_i32_0 : i32, i32
  }
  func.func @transform_10(%arg0: i32, %arg1: i32) -> (i32, i32) {
    %c0_i32 = arith.constant 0 : i32
    %c0_i32_0 = arith.constant 0 : i32
    %c0_i32_1 = arith.constant 0 : i32
    return %c0_i32, %c0_i32_0 : i32, i32
  }
  func.func @transform_11(%arg0: i32, %arg1: i32) -> (i32, i32) {
    %c0_i32 = arith.constant 0 : i32
    %c0_i32_0 = arith.constant 0 : i32
    %c0_i32_1 = arith.constant 0 : i32
    return %c0_i32, %c0_i32_0 : i32, i32
  }
  func.func @transform_12(%arg0: i32, %arg1: i32) -> (i32, i32, i32) {
    %c0_i32 = arith.constant 0 : i32
    %c0_i32_0 = arith.constant 0 : i32
    %c0_i32_1 = arith.constant 0 : i32
    return %arg0, %c0_i32, %c0_i32_0 : i32, i32, i32
  }
}

module attributes {stable_mosaic.version = 11 : i64} {
  func.func @_attn_kernel(%arg0: i32, %arg1: i32, %arg2: memref<1x1x8x8xf32, #tpu.memory_space<vmem>>, %arg3: memref<1x1x8x8xf32, #tpu.memory_space<vmem>>, %arg4: memref<1x1x8x8xf32, #tpu.memory_space<vmem>>, %arg5: memref<1x1x8x8xf32, #tpu.memory_space<vmem>>, %arg6: memref<1x1x8x8xf32, #tpu.memory_space<vmem>>) attributes {dimension_semantics = [#tpu.dimension_semantics<parallel>, #tpu.dimension_semantics<parallel>], iteration_bounds = array<i64: 2, 4>, scalar_prefetch = 0 : i64, scratch_operands = 0 : i64, tpu.core_type = #tpu.core_type<tc>, window_params = [{transform_indices = @transform_0, window_bounds = array<i64: 1, 1, 8, 8>}, {transform_indices = @transform_1, window_bounds = array<i64: 1, 1, 8, 8>}, {transform_indices = @transform_2, window_bounds = array<i64: 1, 1, 8, 8>}, {transform_indices = @transform_3, window_bounds = array<i64: 1, 1, 8, 8>}, {transform_indices = @transform_4, window_bounds = array<i64: 1, 1, 8, 8>}]} {
    %c0 = arith.constant 0 : index
    %c0_0 = arith.constant 0 : index
    %c0_1 = arith.constant 0 : index
    %c0_2 = arith.constant 0 : index
    %0 = vector.load %arg2[%c0, %c0_0, %c0_1, %c0_2] : memref<1x1x8x8xf32, #tpu.memory_space<vmem>>, vector<1x1x8x8xf32>
    %1 = vector.shape_cast %0 : vector<1x1x8x8xf32> to vector<8x8xf32>
    %cst = arith.constant 0.353553385 : f32
    %2 = vector.broadcast %cst : f32 to vector<8x8xf32>
    %3 = arith.mulf %1, %2 : vector<8x8xf32>
    %c0_3 = arith.constant 0 : index
    %c0_4 = arith.constant 0 : index
    %c0_5 = arith.constant 0 : index
    %c0_6 = arith.constant 0 : index
    %4 = vector.load %arg3[%c0_3, %c0_4, %c0_5, %c0_6] : memref<1x1x8x8xf32, #tpu.memory_space<vmem>>, vector<1x1x8x8xf32>
    %5 = vector.shape_cast %4 : vector<1x1x8x8xf32> to vector<8x8xf32>
    %c0_7 = arith.constant 0 : index
    %c0_8 = arith.constant 0 : index
    %c0_9 = arith.constant 0 : index
    %c0_10 = arith.constant 0 : index
    %6 = vector.load %arg4[%c0_7, %c0_8, %c0_9, %c0_10] : memref<1x1x8x8xf32, #tpu.memory_space<vmem>>, vector<1x1x8x8xf32>
    %7 = vector.shape_cast %6 : vector<1x1x8x8xf32> to vector<8x8xf32>
    %cst_11 = arith.constant dense<0.000000e+00> : vector<8x8xf32>
    %8 = tpu.matmul %3, %5, %cst_11 {dimension_numbers = #tpu.dot_dimension_numbers<[1], [1], [0], [0], [0, 0, 1, 0], [], []>} : vector<8x8xf32>, vector<8x8xf32>, vector<8x8xf32> -> vector<8x8xf32>
    %cst_12 = arith.constant dense<0xFF800000> : vector<8xf32>
    %9 = vector.multi_reduction <maximumf>, %8, %cst_12 [1] : vector<8x8xf32> to vector<8xf32>
    %10 = vector.shape_cast %9 : vector<8xf32> to vector<8x1xf32>
    %11 = vector.broadcast %10 : vector<8x1xf32> to vector<8x8xf32>
    %12 = arith.subf %8, %11 : vector<8x8xf32>
    %13 = math.exp %12 : vector<8x8xf32>
    %cst_13 = arith.constant dense<0.000000e+00> : vector<8xf32>
    %14 = vector.multi_reduction <add>, %13, %cst_13 [1] : vector<8x8xf32> to vector<8xf32>
    %15 = vector.shape_cast %14 : vector<8xf32> to vector<8x1xf32>
    %16 = vector.broadcast %15 : vector<8x1xf32> to vector<8x8xf32>
    %17 = arith.divf %13, %16 : vector<8x8xf32>
    %c0_14 = arith.constant 0 : index
    %c0_15 = arith.constant 0 : index
    %c0_16 = arith.constant 0 : index
    %c0_17 = arith.constant 0 : index
    %18 = vector.load %arg5[%c0_14, %c0_15, %c0_16, %c0_17] : memref<1x1x8x8xf32, #tpu.memory_space<vmem>>, vector<1x1x8x8xf32>
    %19 = vector.shape_cast %18 : vector<1x1x8x8xf32> to vector<8x8xf32>
    %20 = vector.shape_cast %17 : vector<8x8xf32> to vector<1x1x8x8xf32>
    tpu.vector_store %arg5[%c0_14, %c0_15, %c0_16, %c0_17], %20 {strides = array<i32>} : memref<1x1x8x8xf32, #tpu.memory_space<vmem>>, vector<1x1x8x8xf32>,
    %cst_18 = arith.constant dense<0.000000e+00> : vector<8x8xf32>
    %21 = tpu.matmul %17, %7, %cst_18 {dimension_numbers = #tpu.dot_dimension_numbers<[1], [0], [0], [1], [0, 0, 1, 1], [], []>} : vector<8x8xf32>, vector<8x8xf32>, vector<8x8xf32> -> vector<8x8xf32>
    %c0_19 = arith.constant 0 : index
    %c0_20 = arith.constant 0 : index
    %c0_21 = arith.constant 0 : index
    %c0_22 = arith.constant 0 : index
    %22 = vector.load %arg6[%c0_19, %c0_20, %c0_21, %c0_22] : memref<1x1x8x8xf32, #tpu.memory_space<vmem>>, vector<1x1x8x8xf32>
    %23 = vector.shape_cast %22 : vector<1x1x8x8xf32> to vector<8x8xf32>
    %24 = vector.shape_cast %21 : vector<8x8xf32> to vector<1x1x8x8xf32>
    tpu.vector_store %arg6[%c0_19, %c0_20, %c0_21, %c0_22], %24 {strides = array<i32>} : memref<1x1x8x8xf32, #tpu.memory_space<vmem>>, vector<1x1x8x8xf32>,
    return
  }
  func.func @transform_0(%arg0: i32, %arg1: i32) -> (i32, i32, i32, i32) {
    %c0_i32 = arith.constant 0 : i32
    %c0_i32_0 = arith.constant 0 : i32
    %c0_i32_1 = arith.constant 0 : i32
    return %arg0, %arg1, %c0_i32, %c0_i32_0 : i32, i32, i32, i32
  }
  func.func @transform_1(%arg0: i32, %arg1: i32) -> (i32, i32, i32, i32) {
    %c0_i32 = arith.constant 0 : i32
    %c0_i32_0 = arith.constant 0 : i32
    %c0_i32_1 = arith.constant 0 : i32
    return %arg0, %arg1, %c0_i32, %c0_i32_0 : i32, i32, i32, i32
  }
  func.func @transform_2(%arg0: i32, %arg1: i32) -> (i32, i32, i32, i32) {
    %c0_i32 = arith.constant 0 : i32
    %c0_i32_0 = arith.constant 0 : i32
    %c0_i32_1 = arith.constant 0 : i32
    return %arg0, %arg1, %c0_i32, %c0_i32_0 : i32, i32, i32, i32
  }
  func.func @transform_3(%arg0: i32, %arg1: i32) -> (i32, i32, i32, i32) {
    %c0_i32 = arith.constant 0 : i32
    %c0_i32_0 = arith.constant 0 : i32
    %c0_i32_1 = arith.constant 0 : i32
    return %arg0, %arg1, %c0_i32, %c0_i32_0 : i32, i32, i32, i32
  }
  func.func @transform_4(%arg0: i32, %arg1: i32) -> (i32, i32, i32, i32) {
    %c0_i32 = arith.constant 0 : i32
    %c0_i32_0 = arith.constant 0 : i32
    %c0_i32_1 = arith.constant 0 : i32
    return %arg0, %arg1, %c0_i32, %c0_i32_0 : i32, i32, i32, i32
  }
}

module attributes {stable_mosaic.version = 11 : i64} {
  func.func @_qkv_kernel(%arg0: i32, %arg1: memref<1x8x32xf32, #tpu.memory_space<vmem>>, %arg2: memref<32x32xf32, #tpu.memory_space<vmem>>, %arg3: memref<32x32xf32, #tpu.memory_space<vmem>>, %arg4: memref<32x32xf32, #tpu.memory_space<vmem>>, %arg5: memref<1x32xf32, #tpu.memory_space<vmem>>, %arg6: memref<1x32xf32, #tpu.memory_space<vmem>>, %arg7: memref<1x32xf32, #tpu.memory_space<vmem>>, %arg8: memref<1x8x32xf32, #tpu.memory_space<vmem>>, %arg9: memref<1x8x32xf32, #tpu.memory_space<vmem>>, %arg10: memref<1x8x32xf32, #tpu.memory_space<vmem>>) attributes {dimension_semantics = [#tpu.dimension_semantics<parallel>], iteration_bounds = array<i64: 2>, scalar_prefetch = 0 : i64, scratch_operands = 0 : i64, tpu.core_type = #tpu.core_type<tc>, window_params = [{transform_indices = @transform_0, window_bounds = array<i64: 1, 8, 32>}, {pipeline_mode = #tpu.pipeline_mode<synchronous>, transform_indices = @transform_1, window_bounds = array<i64: 32, 32>}, {pipeline_mode = #tpu.pipeline_mode<synchronous>, transform_indices = @transform_2, window_bounds = array<i64: 32, 32>}, {pipeline_mode = #tpu.pipeline_mode<synchronous>, transform_indices = @transform_3, window_bounds = array<i64: 32, 32>}, {pipeline_mode = #tpu.pipeline_mode<synchronous>, transform_indices = @transform_4, window_bounds = array<i64: 1, 32>}, {pipeline_mode = #tpu.pipeline_mode<synchronous>, transform_indices = @transform_5, window_bounds = array<i64: 1, 32>}, {pipeline_mode = #tpu.pipeline_mode<synchronous>, transform_indices = @transform_6, window_bounds = array<i64: 1, 32>}, {transform_indices = @transform_7, window_bounds = array<i64: 1, 8, 32>}, {transform_indices = @transform_8, window_bounds = array<i64: 1, 8, 32>}, {transform_indices = @transform_9, window_bounds = array<i64: 1, 8, 32>}]} {
    %c0 = arith.constant 0 : index
    %c0_0 = arith.constant 0 : index
    %c0_1 = arith.constant 0 : index
    %0 = vector.load %arg1[%c0, %c0_0, %c0_1] : memref<1x8x32xf32, #tpu.memory_space<vmem>>, vector<1x8x32xf32>
    %1 = vector.shape_cast %0 : vector<1x8x32xf32> to vector<8x32xf32>
    %c0_2 = arith.constant 0 : index
    %c0_3 = arith.constant 0 : index
    %2 = vector.load %arg2[%c0_2, %c0_3] : memref<32x32xf32, #tpu.memory_space<vmem>>, vector<32x32xf32>
    %cst = arith.constant dense<0.000000e+00> : vector<8x32xf32>
    %3 = tpu.matmul %1, %2, %cst {dimension_numbers = #tpu.dot_dimension_numbers<[1], [0], [0], [1], [0, 0, 1, 1], [], []>} : vector<8x32xf32>, vector<32x32xf32>, vector<8x32xf32> -> vector<8x32xf32>
    %c0_4 = arith.constant 0 : index
    %c0_5 = arith.constant 0 : index
    %4 = vector.load %arg5[%c0_4, %c0_5] : memref<1x32xf32, #tpu.memory_space<vmem>>, vector<1x32xf32>
    %5 = vector.broadcast %4 : vector<1x32xf32> to vector<8x32xf32>
    %6 = arith.addf %3, %5 : vector<8x32xf32>
    %c0_6 = arith.constant 0 : index
    %c0_7 = arith.constant 0 : index
    %c0_8 = arith.constant 0 : index
    %7 = vector.load %arg8[%c0_6, %c0_7, %c0_8] : memref<1x8x32xf32, #tpu.memory_space<vmem>>, vector<1x8x32xf32>
    %8 = vector.shape_cast %7 : vector<1x8x32xf32> to vector<8x32xf32>
    %9 = vector.shape_cast %6 : vector<8x32xf32> to vector<1x8x32xf32>
    tpu.vector_store %arg8[%c0_6, %c0_7, %c0_8], %9 {strides = array<i32>} : memref<1x8x32xf32, #tpu.memory_space<vmem>>, vector<1x8x32xf32>,
    %c0_9 = arith.constant 0 : index
    %c0_10 = arith.constant 0 : index
    %10 = vector.load %arg3[%c0_9, %c0_10] : memref<32x32xf32, #tpu.memory_space<vmem>>, vector<32x32xf32>
    %cst_11 = arith.constant dense<0.000000e+00> : vector<8x32xf32>
    %11 = tpu.matmul %1, %10, %cst_11 {dimension_numbers = #tpu.dot_dimension_numbers<[1], [0], [0], [1], [0, 0, 1, 1], [], []>} : vector<8x32xf32>, vector<32x32xf32>, vector<8x32xf32> -> vector<8x32xf32>
    %c0_12 = arith.constant 0 : index
    %c0_13 = arith.constant 0 : index
    %12 = vector.load %arg6[%c0_12, %c0_13] : memref<1x32xf32, #tpu.memory_space<vmem>>, vector<1x32xf32>
    %13 = vector.broadcast %12 : vector<1x32xf32> to vector<8x32xf32>
    %14 = arith.addf %11, %13 : vector<8x32xf32>
    %c0_14 = arith.constant 0 : index
    %c0_15 = arith.constant 0 : index
    %c0_16 = arith.constant 0 : index
    %15 = vector.load %arg9[%c0_14, %c0_15, %c0_16] : memref<1x8x32xf32, #tpu.memory_space<vmem>>, vector<1x8x32xf32>
    %16 = vector.shape_cast %15 : vector<1x8x32xf32> to vector<8x32xf32>
    %17 = vector.shape_cast %14 : vector<8x32xf32> to vector<1x8x32xf32>
    tpu.vector_store %arg9[%c0_14, %c0_15, %c0_16], %17 {strides = array<i32>} : memref<1x8x32xf32, #tpu.memory_space<vmem>>, vector<1x8x32xf32>,
    %c0_17 = arith.constant 0 : index
    %c0_18 = arith.constant 0 : index
    %18 = vector.load %arg4[%c0_17, %c0_18] : memref<32x32xf32, #tpu.memory_space<vmem>>, vector<32x32xf32>
    %cst_19 = arith.constant dense<0.000000e+00> : vector<8x32xf32>
    %19 = tpu.matmul %1, %18, %cst_19 {dimension_numbers = #tpu.dot_dimension_numbers<[1], [0], [0], [1], [0, 0, 1, 1], [], []>} : vector<8x32xf32>, vector<32x32xf32>, vector<8x32xf32> -> vector<8x32xf32>
    %c0_20 = arith.constant 0 : index
    %c0_21 = arith.constant 0 : index
    %20 = vector.load %arg7[%c0_20, %c0_21] : memref<1x32xf32, #tpu.memory_space<vmem>>, vector<1x32xf32>
    %21 = vector.broadcast %20 : vector<1x32xf32> to vector<8x32xf32>
    %22 = arith.addf %19, %21 : vector<8x32xf32>
    %c0_22 = arith.constant 0 : index
    %c0_23 = arith.constant 0 : index
    %c0_24 = arith.constant 0 : index
    %23 = vector.load %arg10[%c0_22, %c0_23, %c0_24] : memref<1x8x32xf32, #tpu.memory_space<vmem>>, vector<1x8x32xf32>
    %24 = vector.shape_cast %23 : vector<1x8x32xf32> to vector<8x32xf32>
    %25 = vector.shape_cast %22 : vector<8x32xf32> to vector<1x8x32xf32>
    tpu.vector_store %arg10[%c0_22, %c0_23, %c0_24], %25 {strides = array<i32>} : memref<1x8x32xf32, #tpu.memory_space<vmem>>, vector<1x8x32xf32>,
    return
  }
  func.func @transform_0(%arg0: i32) -> (i32, i32, i32) {
    %c0_i32 = arith.constant 0 : i32
    %c0_i32_0 = arith.constant 0 : i32
    %c0_i32_1 = arith.constant 0 : i32
    return %arg0, %c0_i32, %c0_i32_0 : i32, i32, i32
  }
  func.func @transform_1(%arg0: i32) -> (i32, i32) {
    %c0_i32 = arith.constant 0 : i32
    %c0_i32_0 = arith.constant 0 : i32
    %c0_i32_1 = arith.constant 0 : i32
    return %c0_i32, %c0_i32_0 : i32, i32
  }
  func.func @transform_2(%arg0: i32) -> (i32, i32) {
    %c0_i32 = arith.constant 0 : i32
    %c0_i32_0 = arith.constant 0 : i32
    %c0_i32_1 = arith.constant 0 : i32
    return %c0_i32, %c0_i32_0 : i32, i32
  }
  func.func @transform_3(%arg0: i32) -> (i32, i32) {
    %c0_i32 = arith.constant 0 : i32
    %c0_i32_0 = arith.constant 0 : i32
    %c0_i32_1 = arith.constant 0 : i32
    return %c0_i32, %c0_i32_0 : i32, i32
  }
  func.func @transform_4(%arg0: i32) -> (i32, i32) {
    %c0_i32 = arith.constant 0 : i32
    %c0_i32_0 = arith.constant 0 : i32
    %c0_i32_1 = arith.constant 0 : i32
    return %c0_i32, %c0_i32_0 : i32, i32
  }
  func.func @transform_5(%arg0: i32) -> (i32, i32) {
    %c0_i32 = arith.constant 0 : i32
    %c0_i32_0 = arith.constant 0 : i32
    %c0_i32_1 = arith.constant 0 : i32
    return %c0_i32, %c0_i32_0 : i32, i32
  }
  func.func @transform_6(%arg0: i32) -> (i32, i32) {
    %c0_i32 = arith.constant 0 : i32
    %c0_i32_0 = arith.constant 0 : i32
    %c0_i32_1 = arith.constant 0 : i32
    return %c0_i32, %c0_i32_0 : i32, i32
  }
  func.func @transform_7(%arg0: i32) -> (i32, i32, i32) {
    %c0_i32 = arith.constant 0 : i32
    %c0_i32_0 = arith.constant 0 : i32
    %c0_i32_1 = arith.constant 0 : i32
    return %arg0, %c0_i32, %c0_i32_0 : i32, i32, i32
  }
  func.func @transform_8(%arg0: i32) -> (i32, i32, i32) {
    %c0_i32 = arith.constant 0 : i32
    %c0_i32_0 = arith.constant 0 : i32
    %c0_i32_1 = arith.constant 0 : i32
    return %arg0, %c0_i32, %c0_i32_0 : i32, i32, i32
  }
  func.func @transform_9(%arg0: i32) -> (i32, i32, i32) {
    %c0_i32 = arith.constant 0 : i32
    %c0_i32_0 = arith.constant 0 : i32
    %c0_i32_1 = arith.constant 0 : i32
    return %arg0, %c0_i32, %c0_i32_0 : i32, i32, i32
  }
}

module attributes {stable_mosaic.version = 11 : i64} {
  func.func @_out_ffn_kernel(%arg0: i32, %arg1: i32, %arg2: memref<1x8x32xf32, #tpu.memory_space<vmem>>, %arg3: memref<1x8x32xf32, #tpu.memory_space<vmem>>, %arg4: memref<32x32xf32, #tpu.memory_space<vmem>>, %arg5: memref<1x32xf32, #tpu.memory_space<vmem>>, %arg6: memref<1x32xf32, #tpu.memory_space<vmem>>, %arg7: memref<1x32xf32, #tpu.memory_space<vmem>>, %arg8: memref<32x128xf32, #tpu.memory_space<vmem>>, %arg9: memref<1x128xf32, #tpu.memory_space<vmem>>, %arg10: memref<128x32xf32, #tpu.memory_space<vmem>>, %arg11: memref<1x32xf32, #tpu.memory_space<vmem>>, %arg12: memref<1x32xf32, #tpu.memory_space<vmem>>, %arg13: memref<1x32xf32, #tpu.memory_space<vmem>>, %arg14: memref<1x8x32xf32, #tpu.memory_space<vmem>>, %arg15: memref<8x32xf32, #tpu.memory_space<vmem>>, %arg16: memref<8x32xf32, #tpu.memory_space<vmem>>) attributes {dimension_semantics = [#tpu.dimension_semantics<parallel>, #tpu.dimension_semantics<arbitrary>], iteration_bounds = array<i64: 2, 1>, scalar_prefetch = 0 : i64, scratch_operands = 2 : i64, tpu.core_type = #tpu.core_type<tc>, window_params = [{transform_indices = @transform_0, window_bounds = array<i64: 1, 8, 32>}, {transform_indices = @transform_1, window_bounds = array<i64: 1, 8, 32>}, {pipeline_mode = #tpu.pipeline_mode<synchronous>, transform_indices = @transform_2, window_bounds = array<i64: 32, 32>}, {pipeline_mode = #tpu.pipeline_mode<synchronous>, transform_indices = @transform_3, window_bounds = array<i64: 1, 32>}, {pipeline_mode = #tpu.pipeline_mode<synchronous>, transform_indices = @transform_4, window_bounds = array<i64: 1, 32>}, {pipeline_mode = #tpu.pipeline_mode<synchronous>, transform_indices = @transform_5, window_bounds = array<i64: 1, 32>}, {transform_indices = @transform_6, window_bounds = array<i64: 32, 128>}, {transform_indices = @transform_7, window_bounds = array<i64: 1, 128>}, {transform_indices = @transform_8, window_bounds = array<i64: 128, 32>}, {pipeline_mode = #tpu.pipeline_mode<synchronous>, transform_indices = @transform_9, window_bounds = array<i64: 1, 32>}, {pipeline_mode = #tpu.pipeline_mode<synchronous>, transform_indices = @transform_10, window_bounds = array<i64: 1, 32>}, {pipeline_mode = #tpu.pipeline_mode<synchronous>, transform_indices = @transform_11, window_bounds = array<i64: 1, 32>}, {transform_indices = @transform_12, window_bounds = array<i64: 1, 8, 32>}]} {
    %c0_i32 = arith.constant 0 : i32
    %0 = arith.cmpi eq, %arg1, %c0_i32 : i32
    %1 = arith.extui %0 : i1 to i32
    %c0_i32_0 = arith.constant 0 : i32
    %2 = arith.cmpi ne, %1, %c0_i32_0 : i32
    scf.if %2 {
      %c0_16 = arith.constant 0 : index
      %c0_17 = arith.constant 0 : index
      %c0_18 = arith.constant 0 : index
      %19 = vector.load %arg3[%c0_16, %c0_17, %c0_18] : memref<1x8x32xf32, #tpu.memory_space<vmem>>, vector<1x8x32xf32>
      %20 = vector.shape_cast %19 : vector<1x8x32xf32> to vector<8x32xf32>
      %c0_19 = arith.constant 0 : index
      %c0_20 = arith.constant 0 : index
      %21 = vector.load %arg4[%c0_19, %c0_20] : memref<32x32xf32, #tpu.memory_space<vmem>>, vector<32x32xf32>
      %cst_21 = arith.constant dense<0.000000e+00> : vector<8x32xf32>
      %22 = tpu.matmul %20, %21, %cst_21 {dimension_numbers = #tpu.dot_dimension_numbers<[1], [0], [0], [1], [0, 0, 1, 1], [], []>} : vector<8x32xf32>, vector<32x32xf32>, vector<8x32xf32> -> vector<8x32xf32>
      %c0_22 = arith.constant 0 : index
      %c0_23 = arith.constant 0 : index
      %23 = vector.load %arg5[%c0_22, %c0_23] : memref<1x32xf32, #tpu.memory_space<vmem>>, vector<1x32xf32>
      %24 = vector.broadcast %23 : vector<1x32xf32> to vector<8x32xf32>
      %25 = arith.addf %22, %24 : vector<8x32xf32>
      %c0_24 = arith.constant 0 : index
      %c0_25 = arith.constant 0 : index
      %c0_26 = arith.constant 0 : index
      %26 = vector.load %arg2[%c0_24, %c0_25, %c0_26] : memref<1x8x32xf32, #tpu.memory_space<vmem>>, vector<1x8x32xf32>
      %27 = vector.shape_cast %26 : vector<1x8x32xf32> to vector<8x32xf32>
      %28 = arith.addf %27, %25 : vector<8x32xf32>
      %c0_27 = arith.constant 0 : index
      %c0_28 = arith.constant 0 : index
      %29 = vector.load %arg6[%c0_27, %c0_28] : memref<1x32xf32, #tpu.memory_space<vmem>>, vector<1x32xf32>
      %c0_29 = arith.constant 0 : index
      %c0_30 = arith.constant 0 : index
      %30 = vector.load %arg7[%c0_29, %c0_30] : memref<1x32xf32, #tpu.memory_space<vmem>>, vector<1x32xf32>
      %cst_31 = arith.constant dense<0.000000e+00> : vector<8xf32>
      %31 = vector.multi_reduction <add>, %28, %cst_31 [1] : vector<8x32xf32> to vector<8xf32>
      %32 = vector.shape_cast %31 : vector<8xf32> to vector<8x1xf32>
      %cst_32 = arith.constant 3.200000e+01 : f32
      %33 = vector.broadcast %cst_32 : f32 to vector<8x1xf32>
      %34 = arith.divf %32, %33 : vector<8x1xf32>
      %35 = vector.broadcast %34 : vector<8x1xf32> to vector<8x32xf32>
      %36 = arith.subf %28, %35 : vector<8x32xf32>
      %37 = arith.mulf %36, %36 : vector<8x32xf32>
      %cst_33 = arith.constant dense<0.000000e+00> : vector<8xf32>
      %38 = vector.multi_reduction <add>, %37, %cst_33 [1] : vector<8x32xf32> to vector<8xf32>
      %39 = vector.shape_cast %38 : vector<8xf32> to vector<8x1xf32>
      %cst_34 = arith.constant 3.200000e+01 : f32
      %40 = vector.broadcast %cst_34 : f32 to vector<8x1xf32>
      %41 = arith.divf %39, %40 : vector<8x1xf32>
      %42 = vector.broadcast %34 : vector<8x1xf32> to vector<8x32xf32>
      %43 = arith.subf %28, %42 : vector<8x32xf32>
      %cst_35 = arith.constant 9.99999974E-6 : f32
      %44 = vector.broadcast %cst_35 : f32 to vector<8x1xf32>
      %45 = arith.addf %41, %44 : vector<8x1xf32>
      %46 = math.rsqrt %45 : vector<8x1xf32>
      %47 = vector.broadcast %46 : vector<8x1xf32> to vector<8x32xf32>
      %48 = arith.mulf %43, %47 : vector<8x32xf32>
      %49 = vector.broadcast %29 : vector<1x32xf32> to vector<8x32xf32>
      %50 = arith.mulf %48, %49 : vector<8x32xf32>
      %51 = vector.broadcast %30 : vector<1x32xf32> to vector<8x32xf32>
      %52 = arith.addf %50, %51 : vector<8x32xf32>
      %c0_36 = arith.constant 0 : index
      %c0_37 = arith.constant 0 : index
      %53 = vector.load %arg15[%c0_36, %c0_37] : memref<8x32xf32, #tpu.memory_space<vmem>>, vector<8x32xf32>
      tpu.vector_store %arg15[%c0_36, %c0_37], %52 {strides = array<i32>} : memref<8x32xf32, #tpu.memory_space<vmem>>, vector<8x32xf32>,
      %cst_38 = arith.constant 0.000000e+00 : f32
      %54 = vector.broadcast %cst_38 : f32 to vector<8x32xf32>
      %c0_39 = arith.constant 0 : index
      %c0_40 = arith.constant 0 : index
      %55 = vector.load %arg16[%c0_39, %c0_40] : memref<8x32xf32, #tpu.memory_space<vmem>>, vector<8x32xf32>
      tpu.vector_store %arg16[%c0_39, %c0_40], %54 {strides = array<i32>} : memref<8x32xf32, #tpu.memory_space<vmem>>, vector<8x32xf32>,
    } else {
    }
    %c0 = arith.constant 0 : index
    %c0_1 = arith.constant 0 : index
    %3 = vector.load %arg15[%c0, %c0_1] : memref<8x32xf32, #tpu.memory_space<vmem>>, vector<8x32xf32>
    %c0_2 = arith.constant 0 : index
    %c0_3 = arith.constant 0 : index
    %4 = vector.load %arg8[%c0_2, %c0_3] : memref<32x128xf32, #tpu.memory_space<vmem>>, vector<32x128xf32>
    %cst = arith.constant dense<0.000000e+00> : vector<8x128xf32>
    %5 = tpu.matmul %3, %4, %cst {dimension_numbers = #tpu.dot_dimension_numbers<[1], [0], [0], [1], [0, 0, 1, 1], [], []>} : vector<8x32xf32>, vector<32x128xf32>, vector<8x128xf32> -> vector<8x128xf32>
    %c0_4 = arith.constant 0 : index
    %c0_5 = arith.constant 0 : index
    %6 = vector.load %arg9[%c0_4, %c0_5] : memref<1x128xf32, #tpu.memory_space<vmem>>, vector<1x128xf32>
    %7 = vector.broadcast %6 : vector<1x128xf32> to vector<8x128xf32>
    %8 = arith.addf %5, %7 : vector<8x128xf32>
    %cst_6 = arith.constant 0.000000e+00 : f32
    %9 = vector.broadcast %cst_6 : f32 to vector<8x128xf32>
    %10 = arith.maximumf %8, %9 : vector<8x128xf32>
    %c0_7 = arith.constant 0 : index
    %c0_8 = arith.constant 0 : index
    %11 = vector.load %arg16[%c0_7, %c0_8] : memref<8x32xf32, #tpu.memory_space<vmem>>, vector<8x32xf32>
    %c0_9 = arith.constant 0 : index
    %c0_10 = arith.constant 0 : index
    %12 = vector.load %arg10[%c0_9, %c0_10] : memref<128x32xf32, #tpu.memory_space<vmem>>, vector<128x32xf32>
    %cst_11 = arith.constant dense<0.000000e+00> : vector<8x32xf32>
    %13 = tpu.matmul %10, %12, %cst_11 {dimension_numbers = #tpu.dot_dimension_numbers<[1], [0], [0], [1], [0, 0, 1, 1], [], []>} : vector<8x128xf32>, vector<128x32xf32>, vector<8x32xf32> -> vector<8x32xf32>
    %14 = arith.addf %11, %13 : vector<8x32xf32>
    %c0_12 = arith.constant 0 : index
    %c0_13 = arith.constant 0 : index
    %15 = vector.load %arg16[%c0_12, %c0_13] : memref<8x32xf32, #tpu.memory_space<vmem>>, vector<8x32xf32>
    tpu.vector_store %arg16[%c0_12, %c0_13], %14 {strides = array<i32>} : memref<8x32xf32, #tpu.memory_space<vmem>>, vector<8x32xf32>,
    %c0_i32_14 = arith.constant 0 : i32
    %16 = arith.cmpi eq, %arg1, %c0_i32_14 : i32
    %17 = arith.extui %16 : i1 to i32
    %c0_i32_15 = arith.constant 0 : i32
    %18 = arith.cmpi ne, %17, %c0_i32_15 : i32
    scf.if %18 {
      %c0_16 = arith.constant 0 : index
      %c0_17 = arith.constant 0 : index
      %19 = vector.load %arg15[%c0_16, %c0_17] : memref<8x32xf32, #tpu.memory_space<vmem>>, vector<8x32xf32>
      %c0_18 = arith.constant 0 : index
      %c0_19 = arith.constant 0 : index
      %20 = vector.load %arg16[%c0_18, %c0_19] : memref<8x32xf32, #tpu.memory_space<vmem>>, vector<8x32xf32>
      %21 = arith.addf %19, %20 : vector<8x32xf32>
      %c0_20 = arith.constant 0 : index
      %c0_21 = arith.constant 0 : index
      %22 = vector.load %arg11[%c0_20, %c0_21] : memref<1x32xf32, #tpu.memory_space<vmem>>, vector<1x32xf32>
      %23 = vector.broadcast %22 : vector<1x32xf32> to vector<8x32xf32>
      %24 = arith.addf %21, %23 : vector<8x32xf32>
      %c0_22 = arith.constant 0 : index
      %c0_23 = arith.constant 0 : index
      %25 = vector.load %arg12[%c0_22, %c0_23] : memref<1x32xf32, #tpu.memory_space<vmem>>, vector<1x32xf32>
      %c0_24 = arith.constant 0 : index
      %c0_25 = arith.constant 0 : index
      %26 = vector.load %arg13[%c0_24, %c0_25] : memref<1x32xf32, #tpu.memory_space<vmem>>, vector<1x32xf32>
      %cst_26 = arith.constant dense<0.000000e+00> : vector<8xf32>
      %27 = vector.multi_reduction <add>, %24, %cst_26 [1] : vector<8x32xf32> to vector<8xf32>
      %28 = vector.shape_cast %27 : vector<8xf32> to vector<8x1xf32>
      %cst_27 = arith.constant 3.200000e+01 : f32
      %29 = vector.broadcast %cst_27 : f32 to vector<8x1xf32>
      %30 = arith.divf %28, %29 : vector<8x1xf32>
      %31 = vector.broadcast %30 : vector<8x1xf32> to vector<8x32xf32>
      %32 = arith.subf %24, %31 : vector<8x32xf32>
      %33 = arith.mulf %32, %32 : vector<8x32xf32>
      %cst_28 = arith.constant dense<0.000000e+00> : vector<8xf32>
      %34 = vector.multi_reduction <add>, %33, %cst_28 [1] : vector<8x32xf32> to vector<8xf32>
      %35 = vector.shape_cast %34 : vector<8xf32> to vector<8x1xf32>
      %cst_29 = arith.constant 3.200000e+01 : f32
      %36 = vector.broadcast %cst_29 : f32 to vector<8x1xf32>
      %37 = arith.divf %35, %36 : vector<8x1xf32>
      %38 = vector.broadcast %30 : vector<8x1xf32> to vector<8x32xf32>
      %39 = arith.subf %24, %38 : vector<8x32xf32>
      %cst_30 = arith.constant 9.99999974E-6 : f32
      %40 = vector.broadcast %cst_30 : f32 to vector<8x1xf32>
      %41 = arith.addf %37, %40 : vector<8x1xf32>
      %42 = math.rsqrt %41 : vector<8x1xf32>
      %43 = vector.broadcast %42 : vector<8x1xf32> to vector<8x32xf32>
      %44 = arith.mulf %39, %43 : vector<8x32xf32>
      %45 = vector.broadcast %25 : vector<1x32xf32> to vector<8x32xf32>
      %46 = arith.mulf %44, %45 : vector<8x32xf32>
      %47 = vector.broadcast %26 : vector<1x32xf32> to vector<8x32xf32>
      %48 = arith.addf %46, %47 : vector<8x32xf32>
      %c0_31 = arith.constant 0 : index
      %c0_32 = arith.constant 0 : index
      %c0_33 = arith.constant 0 : index
      %49 = vector.load %arg14[%c0_31, %c0_32, %c0_33] : memref<1x8x32xf32, #tpu.memory_space<vmem>>, vector<1x8x32xf32>
      %50 = vector.shape_cast %49 : vector<1x8x32xf32> to vector<8x32xf32>
      %51 = vector.shape_cast %48 : vector<8x32xf32> to vector<1x8x32xf32>
      tpu.vector_store %arg14[%c0_31, %c0_32, %c0_33], %51 {strides = array<i32>} : memref<1x8x32xf32, #tpu.memory_space<vmem>>, vector<1x8x32xf32>,
    } else {
    }
    return
  }
  func.func @transform_0(%arg0: i32, %arg1: i32) -> (i32, i32, i32) {
    %c0_i32 = arith.constant 0 : i32
    %c0_i32_0 = arith.constant 0 : i32
    %c0_i32_1 = arith.constant 0 : i32
    return %arg0, %c0_i32, %c0_i32_0 : i32, i32, i32
  }
  func.func @transform_1(%arg0: i32, %arg1: i32) -> (i32, i32, i32) {
    %c0_i32 = arith.constant 0 : i32
    %c0_i32_0 = arith.constant 0 : i32
    %c0_i32_1 = arith.constant 0 : i32
    return %arg0, %c0_i32, %c0_i32_0 : i32, i32, i32
  }
  func.func @transform_2(%arg0: i32, %arg1: i32) -> (i32, i32) {
    %c0_i32 = arith.constant 0 : i32
    %c0_i32_0 = arith.constant 0 : i32
    %c0_i32_1 = arith.constant 0 : i32
    return %c0_i32, %c0_i32_0 : i32, i32
  }
  func.func @transform_3(%arg0: i32, %arg1: i32) -> (i32, i32) {
    %c0_i32 = arith.constant 0 : i32
    %c0_i32_0 = arith.constant 0 : i32
    %c0_i32_1 = arith.constant 0 : i32
    return %c0_i32, %c0_i32_0 : i32, i32
  }
  func.func @transform_4(%arg0: i32, %arg1: i32) -> (i32, i32) {
    %c0_i32 = arith.constant 0 : i32
    %c0_i32_0 = arith.constant 0 : i32
    %c0_i32_1 = arith.constant 0 : i32
    return %c0_i32, %c0_i32_0 : i32, i32
  }
  func.func @transform_5(%arg0: i32, %arg1: i32) -> (i32, i32) {
    %c0_i32 = arith.constant 0 : i32
    %c0_i32_0 = arith.constant 0 : i32
    %c0_i32_1 = arith.constant 0 : i32
    return %c0_i32, %c0_i32_0 : i32, i32
  }
  func.func @transform_6(%arg0: i32, %arg1: i32) -> (i32, i32) {
    %c0_i32 = arith.constant 0 : i32
    %c0_i32_0 = arith.constant 0 : i32
    return %c0_i32, %arg1 : i32, i32
  }
  func.func @transform_7(%arg0: i32, %arg1: i32) -> (i32, i32) {
    %c0_i32 = arith.constant 0 : i32
    %c0_i32_0 = arith.constant 0 : i32
    return %c0_i32, %arg1 : i32, i32
  }
  func.func @transform_8(%arg0: i32, %arg1: i32) -> (i32, i32) {
    %c0_i32 = arith.constant 0 : i32
    %c0_i32_0 = arith.constant 0 : i32
    return %arg1, %c0_i32 : i32, i32
  }
  func.func @transform_9(%arg0: i32, %arg1: i32) -> (i32, i32) {
    %c0_i32 = arith.constant 0 : i32
    %c0_i32_0 = arith.constant 0 : i32
    %c0_i32_1 = arith.constant 0 : i32
    return %c0_i32, %c0_i32_0 : i32, i32
  }
  func.func @transform_10(%arg0: i32, %arg1: i32) -> (i32, i32) {
    %c0_i32 = arith.constant 0 : i32
    %c0_i32_0 = arith.constant 0 : i32
    %c0_i32_1 = arith.constant 0 : i32
    return %c0_i32, %c0_i32_0 : i32, i32
  }
  func.func @transform_11(%arg0: i32, %arg1: i32) -> (i32, i32) {
    %c0_i32 = arith.constant 0 : i32
    %c0_i32_0 = arith.constant 0 : i32
    %c0_i32_1 = arith.constant 0 : i32
    return %c0_i32, %c0_i32_0 : i32, i32
  }
  func.func @transform_12(%arg0: i32, %arg1: i32) -> (i32, i32, i32) {
    %c0_i32 = arith.constant 0 : i32
    %c0_i32_0 = arith.constant 0 : i32
    %c0_i32_1 = arith.constant 0 : i32
    return %arg0, %c0_i32, %c0_i32_0 : i32, i32, i32
  }
}

module attributes {stable_mosaic.version = 11 : i64} {
  func.func @_qkv_kernel(%arg0: i32, %arg1: memref<1x8x32xf32, #tpu.memory_space<vmem>>, %arg2: memref<32x32xf32, #tpu.memory_space<vmem>>, %arg3: memref<32x32xf32, #tpu.memory_space<vmem>>, %arg4: memref<32x32xf32, #tpu.memory_space<vmem>>, %arg5: memref<1x32xf32, #tpu.memory_space<vmem>>, %arg6: memref<1x32xf32, #tpu.memory_space<vmem>>, %arg7: memref<1x32xf32, #tpu.memory_space<vmem>>, %arg8: memref<1x8x32xf32, #tpu.memory_space<vmem>>, %arg9: memref<1x8x32xf32, #tpu.memory_space<vmem>>, %arg10: memref<1x8x32xf32, #tpu.memory_space<vmem>>) attributes {dimension_semantics = [#tpu.dimension_semantics<parallel>], iteration_bounds = array<i64: 2>, scalar_prefetch = 0 : i64, scratch_operands = 0 : i64, tpu.core_type = #tpu.core_type<tc>, window_params = [{transform_indices = @transform_0, window_bounds = array<i64: 1, 8, 32>}, {pipeline_mode = #tpu.pipeline_mode<synchronous>, transform_indices = @transform_1, window_bounds = array<i64: 32, 32>}, {pipeline_mode = #tpu.pipeline_mode<synchronous>, transform_indices = @transform_2, window_bounds = array<i64: 32, 32>}, {pipeline_mode = #tpu.pipeline_mode<synchronous>, transform_indices = @transform_3, window_bounds = array<i64: 32, 32>}, {pipeline_mode = #tpu.pipeline_mode<synchronous>, transform_indices = @transform_4, window_bounds = array<i64: 1, 32>}, {pipeline_mode = #tpu.pipeline_mode<synchronous>, transform_indices = @transform_5, window_bounds = array<i64: 1, 32>}, {pipeline_mode = #tpu.pipeline_mode<synchronous>, transform_indices = @transform_6, window_bounds = array<i64: 1, 32>}, {transform_indices = @transform_7, window_bounds = array<i64: 1, 8, 32>}, {transform_indices = @transform_8, window_bounds = array<i64: 1, 8, 32>}, {transform_indices = @transform_9, window_bounds = array<i64: 1, 8, 32>}]} {
    %c0 = arith.constant 0 : index
    %c0_0 = arith.constant 0 : index
    %c0_1 = arith.constant 0 : index
    %0 = vector.load %arg1[%c0, %c0_0, %c0_1] : memref<1x8x32xf32, #tpu.memory_space<vmem>>, vector<1x8x32xf32>
    %1 = vector.shape_cast %0 : vector<1x8x32xf32> to vector<8x32xf32>
    %c0_2 = arith.constant 0 : index
    %c0_3 = arith.constant 0 : index
    %2 = vector.load %arg2[%c0_2, %c0_3] : memref<32x32xf32, #tpu.memory_space<vmem>>, vector<32x32xf32>
    %cst = arith.constant dense<0.000000e+00> : vector<8x32xf32>
    %3 = tpu.matmul %1, %2, %cst {dimension_numbers = #tpu.dot_dimension_numbers<[1], [0], [0], [1], [0, 0, 1, 1], [], []>} : vector<8x32xf32>, vector<32x32xf32>, vector<8x32xf32> -> vector<8x32xf32>
    %c0_4 = arith.constant 0 : index
    %c0_5 = arith.constant 0 : index
    %4 = vector.load %arg5[%c0_4, %c0_5] : memref<1x32xf32, #tpu.memory_space<vmem>>, vector<1x32xf32>
    %5 = vector.broadcast %4 : vector<1x32xf32> to vector<8x32xf32>
    %6 = arith.addf %3, %5 : vector<8x32xf32>
    %c0_6 = arith.constant 0 : index
    %c0_7 = arith.constant 0 : index
    %c0_8 = arith.constant 0 : index
    %7 = vector.load %arg8[%c0_6, %c0_7, %c0_8] : memref<1x8x32xf32, #tpu.memory_space<vmem>>, vector<1x8x32xf32>
    %8 = vector.shape_cast %7 : vector<1x8x32xf32> to vector<8x32xf32>
    %9 = vector.shape_cast %6 : vector<8x32xf32> to vector<1x8x32xf32>
    tpu.vector_store %arg8[%c0_6, %c0_7, %c0_8], %9 {strides = array<i32>} : memref<1x8x32xf32, #tpu.memory_space<vmem>>, vector<1x8x32xf32>,
    %c0_9 = arith.constant 0 : index
    %c0_10 = arith.constant 0 : index
    %10 = vector.load %arg3[%c0_9, %c0_10] : memref<32x32xf32, #tpu.memory_space<vmem>>, vector<32x32xf32>
    %cst_11 = arith.constant dense<0.000000e+00> : vector<8x32xf32>
    %11 = tpu.matmul %1, %10, %cst_11 {dimension_numbers = #tpu.dot_dimension_numbers<[1], [0], [0], [1], [0, 0, 1, 1], [], []>} : vector<8x32xf32>, vector<32x32xf32>, vector<8x32xf32> -> vector<8x32xf32>
    %c0_12 = arith.constant 0 : index
    %c0_13 = arith.constant 0 : index
    %12 = vector.load %arg6[%c0_12, %c0_13] : memref<1x32xf32, #tpu.memory_space<vmem>>, vector<1x32xf32>
    %13 = vector.broadcast %12 : vector<1x32xf32> to vector<8x32xf32>
    %14 = arith.addf %11, %13 : vector<8x32xf32>
    %c0_14 = arith.constant 0 : index
    %c0_15 = arith.constant 0 : index
    %c0_16 = arith.constant 0 : index
    %15 = vector.load %arg9[%c0_14, %c0_15, %c0_16] : memref<1x8x32xf32, #tpu.memory_space<vmem>>, vector<1x8x32xf32>
    %16 = vector.shape_cast %15 : vector<1x8x32xf32> to vector<8x32xf32>
    %17 = vector.shape_cast %14 : vector<8x32xf32> to vector<1x8x32xf32>
    tpu.vector_store %arg9[%c0_14, %c0_15, %c0_16], %17 {strides = array<i32>} : memref<1x8x32xf32, #tpu.memory_space<vmem>>, vector<1x8x32xf32>,
    %c0_17 = arith.constant 0 : index
    %c0_18 = arith.constant 0 : index
    %18 = vector.load %arg4[%c0_17, %c0_18] : memref<32x32xf32, #tpu.memory_space<vmem>>, vector<32x32xf32>
    %cst_19 = arith.constant dense<0.000000e+00> : vector<8x32xf32>
    %19 = tpu.matmul %1, %18, %cst_19 {dimension_numbers = #tpu.dot_dimension_numbers<[1], [0], [0], [1], [0, 0, 1, 1], [], []>} : vector<8x32xf32>, vector<32x32xf32>, vector<8x32xf32> -> vector<8x32xf32>
    %c0_20 = arith.constant 0 : index
    %c0_21 = arith.constant 0 : index
    %20 = vector.load %arg7[%c0_20, %c0_21] : memref<1x32xf32, #tpu.memory_space<vmem>>, vector<1x32xf32>
    %21 = vector.broadcast %20 : vector<1x32xf32> to vector<8x32xf32>
    %22 = arith.addf %19, %21 : vector<8x32xf32>
    %c0_22 = arith.constant 0 : index
    %c0_23 = arith.constant 0 : index
    %c0_24 = arith.constant 0 : index
    %23 = vector.load %arg10[%c0_22, %c0_23, %c0_24] : memref<1x8x32xf32, #tpu.memory_space<vmem>>, vector<1x8x32xf32>
    %24 = vector.shape_cast %23 : vector<1x8x32xf32> to vector<8x32xf32>
    %25 = vector.shape_cast %22 : vector<8x32xf32> to vector<1x8x32xf32>
    tpu.vector_store %arg10[%c0_22, %c0_23, %c0_24], %25 {strides = array<i32>} : memref<1x8x32xf32, #tpu.memory_space<vmem>>, vector<1x8x32xf32>,
    return
  }
  func.func @transform_0(%arg0: i32) -> (i32, i32, i32) {
    %c0_i32 = arith.constant 0 : i32
    %c0_i32_0 = arith.constant 0 : i32
    %c0_i32_1 = arith.constant 0 : i32
    return %arg0, %c0_i32, %c0_i32_0 : i32, i32, i32
  }
  func.func @transform_1(%arg0: i32) -> (i32, i32) {
    %c0_i32 = arith.constant 0 : i32
    %c0_i32_0 = arith.constant 0 : i32
    %c0_i32_1 = arith.constant 0 : i32
    return %c0_i32, %c0_i32_0 : i32, i32
  }
  func.func @transform_2(%arg0: i32) -> (i32, i32) {
    %c0_i32 = arith.constant 0 : i32
    %c0_i32_0 = arith.constant 0 : i32
    %c0_i32_1 = arith.constant 0 : i32
    return %c0_i32, %c0_i32_0 : i32, i32
  }
  func.func @transform_3(%arg0: i32) -> (i32, i32) {
    %c0_i32 = arith.constant 0 : i32
    %c0_i32_0 = arith.constant 0 : i32
    %c0_i32_1 = arith.constant 0 : i32
    return %c0_i32, %c0_i32_0 : i32, i32
  }
  func.func @transform_4(%arg0: i32) -> (i32, i32) {
    %c0_i32 = arith.constant 0 : i32
    %c0_i32_0 = arith.constant 0 : i32
    %c0_i32_1 = arith.constant 0 : i32
    return %c0_i32, %c0_i32_0 : i32, i32
  }
  func.func @transform_5(%arg0: i32) -> (i32, i32) {
    %c0_i32 = arith.constant 0 : i32
    %c0_i32_0 = arith.constant 0 : i32
    %c0_i32_1 = arith.constant 0 : i32
    return %c0_i32, %c0_i32_0 : i32, i32
  }
  func.func @transform_6(%arg0: i32) -> (i32, i32) {
    %c0_i32 = arith.constant 0 : i32
    %c0_i32_0 = arith.constant 0 : i32
    %c0_i32_1 = arith.constant 0 : i32
    return %c0_i32, %c0_i32_0 : i32, i32
  }
  func.func @transform_7(%arg0: i32) -> (i32, i32, i32) {
    %c0_i32 = arith.constant 0 : i32
    %c0_i32_0 = arith.constant 0 : i32
    %c0_i32_1 = arith.constant 0 : i32
    return %arg0, %c0_i32, %c0_i32_0 : i32, i32, i32
  }
  func.func @transform_8(%arg0: i32) -> (i32, i32, i32) {
    %c0_i32 = arith.constant 0 : i32
    %c0_i32_0 = arith.constant 0 : i32
    %c0_i32_1 = arith.constant 0 : i32
    return %arg0, %c0_i32, %c0_i32_0 : i32, i32, i32
  }
  func.func @transform_9(%arg0: i32) -> (i32, i32, i32) {
    %c0_i32 = arith.constant 0 : i32
    %c0_i32_0 = arith.constant 0 : i32
    %c0_i32_1 = arith.constant 0 : i32
    return %arg0, %c0_i32, %c0_i32_0 : i32, i32, i32
  }
}

module attributes {stable_mosaic.version = 11 : i64} {
  func.func @_out_ffn_kernel(%arg0: i32, %arg1: i32, %arg2: memref<1x8x32xf32, #tpu.memory_space<vmem>>, %arg3: memref<1x8x32xf32, #tpu.memory_space<vmem>>, %arg4: memref<32x32xf32, #tpu.memory_space<vmem>>, %arg5: memref<1x32xf32, #tpu.memory_space<vmem>>, %arg6: memref<1x32xf32, #tpu.memory_space<vmem>>, %arg7: memref<1x32xf32, #tpu.memory_space<vmem>>, %arg8: memref<32x128xf32, #tpu.memory_space<vmem>>, %arg9: memref<1x128xf32, #tpu.memory_space<vmem>>, %arg10: memref<128x32xf32, #tpu.memory_space<vmem>>, %arg11: memref<1x32xf32, #tpu.memory_space<vmem>>, %arg12: memref<1x32xf32, #tpu.memory_space<vmem>>, %arg13: memref<1x32xf32, #tpu.memory_space<vmem>>, %arg14: memref<1x8x32xf32, #tpu.memory_space<vmem>>, %arg15: memref<8x32xf32, #tpu.memory_space<vmem>>, %arg16: memref<8x32xf32, #tpu.memory_space<vmem>>) attributes {dimension_semantics = [#tpu.dimension_semantics<parallel>, #tpu.dimension_semantics<arbitrary>], iteration_bounds = array<i64: 2, 1>, scalar_prefetch = 0 : i64, scratch_operands = 2 : i64, tpu.core_type = #tpu.core_type<tc>, window_params = [{transform_indices = @transform_0, window_bounds = array<i64: 1, 8, 32>}, {transform_indices = @transform_1, window_bounds = array<i64: 1, 8, 32>}, {pipeline_mode = #tpu.pipeline_mode<synchronous>, transform_indices = @transform_2, window_bounds = array<i64: 32, 32>}, {pipeline_mode = #tpu.pipeline_mode<synchronous>, transform_indices = @transform_3, window_bounds = array<i64: 1, 32>}, {pipeline_mode = #tpu.pipeline_mode<synchronous>, transform_indices = @transform_4, window_bounds = array<i64: 1, 32>}, {pipeline_mode = #tpu.pipeline_mode<synchronous>, transform_indices = @transform_5, window_bounds = array<i64: 1, 32>}, {transform_indices = @transform_6, window_bounds = array<i64: 32, 128>}, {transform_indices = @transform_7, window_bounds = array<i64: 1, 128>}, {transform_indices = @transform_8, window_bounds = array<i64: 128, 32>}, {pipeline_mode = #tpu.pipeline_mode<synchronous>, transform_indices = @transform_9, window_bounds = array<i64: 1, 32>}, {pipeline_mode = #tpu.pipeline_mode<synchronous>, transform_indices = @transform_10, window_bounds = array<i64: 1, 32>}, {pipeline_mode = #tpu.pipeline_mode<synchronous>, transform_indices = @transform_11, window_bounds = array<i64: 1, 32>}, {transform_indices = @transform_12, window_bounds = array<i64: 1, 8, 32>}]} {
    %c0_i32 = arith.constant 0 : i32
    %0 = arith.cmpi eq, %arg1, %c0_i32 : i32
    %1 = arith.extui %0 : i1 to i32
    %c0_i32_0 = arith.constant 0 : i32
    %2 = arith.cmpi ne, %1, %c0_i32_0 : i32
    scf.if %2 {
      %c0_16 = arith.constant 0 : index
      %c0_17 = arith.constant 0 : index
      %c0_18 = arith.constant 0 : index
      %19 = vector.load %arg3[%c0_16, %c0_17, %c0_18] : memref<1x8x32xf32, #tpu.memory_space<vmem>>, vector<1x8x32xf32>
      %20 = vector.shape_cast %19 : vector<1x8x32xf32> to vector<8x32xf32>
      %c0_19 = arith.constant 0 : index
      %c0_20 = arith.constant 0 : index
      %21 = vector.load %arg4[%c0_19, %c0_20] : memref<32x32xf32, #tpu.memory_space<vmem>>, vector<32x32xf32>
      %cst_21 = arith.constant dense<0.000000e+00> : vector<8x32xf32>
      %22 = tpu.matmul %20, %21, %cst_21 {dimension_numbers = #tpu.dot_dimension_numbers<[1], [0], [0], [1], [0, 0, 1, 1], [], []>} : vector<8x32xf32>, vector<32x32xf32>, vector<8x32xf32> -> vector<8x32xf32>
      %c0_22 = arith.constant 0 : index
      %c0_23 = arith.constant 0 : index
      %23 = vector.load %arg5[%c0_22, %c0_23] : memref<1x32xf32, #tpu.memory_space<vmem>>, vector<1x32xf32>
      %24 = vector.broadcast %23 : vector<1x32xf32> to vector<8x32xf32>
      %25 = arith.addf %22, %24 : vector<8x32xf32>
      %c0_24 = arith.constant 0 : index
      %c0_25 = arith.constant 0 : index
      %c0_26 = arith.constant 0 : index
      %26 = vector.load %arg2[%c0_24, %c0_25, %c0_26] : memref<1x8x32xf32, #tpu.memory_space<vmem>>, vector<1x8x32xf32>
      %27 = vector.shape_cast %26 : vector<1x8x32xf32> to vector<8x32xf32>
      %28 = arith.addf %27, %25 : vector<8x32xf32>
      %c0_27 = arith.constant 0 : index
      %c0_28 = arith.constant 0 : index
      %29 = vector.load %arg6[%c0_27, %c0_28] : memref<1x32xf32, #tpu.memory_space<vmem>>, vector<1x32xf32>
      %c0_29 = arith.constant 0 : index
      %c0_30 = arith.constant 0 : index
      %30 = vector.load %arg7[%c0_29, %c0_30] : memref<1x32xf32, #tpu.memory_space<vmem>>, vector<1x32xf32>
      %cst_31 = arith.constant dense<0.000000e+00> : vector<8xf32>
      %31 = vector.multi_reduction <add>, %28, %cst_31 [1] : vector<8x32xf32> to vector<8xf32>
      %32 = vector.shape_cast %31 : vector<8xf32> to vector<8x1xf32>
      %cst_32 = arith.constant 3.200000e+01 : f32
      %33 = vector.broadcast %cst_32 : f32 to vector<8x1xf32>
      %34 = arith.divf %32, %33 : vector<8x1xf32>
      %35 = vector.broadcast %34 : vector<8x1xf32> to vector<8x32xf32>
      %36 = arith.subf %28, %35 : vector<8x32xf32>
      %37 = arith.mulf %36, %36 : vector<8x32xf32>
      %cst_33 = arith.constant dense<0.000000e+00> : vector<8xf32>
      %38 = vector.multi_reduction <add>, %37, %cst_33 [1] : vector<8x32xf32> to vector<8xf32>
      %39 = vector.shape_cast %38 : vector<8xf32> to vector<8x1xf32>
      %cst_34 = arith.constant 3.200000e+01 : f32
      %40 = vector.broadcast %cst_34 : f32 to vector<8x1xf32>
      %41 = arith.divf %39, %40 : vector<8x1xf32>
      %42 = vector.broadcast %34 : vector<8x1xf32> to vector<8x32xf32>
      %43 = arith.subf %28, %42 : vector<8x32xf32>
      %cst_35 = arith.constant 9.99999974E-6 : f32
      %44 = vector.broadcast %cst_35 : f32 to vector<8x1xf32>
      %45 = arith.addf %41, %44 : vector<8x1xf32>
      %46 = math.rsqrt %45 : vector<8x1xf32>
      %47 = vector.broadcast %46 : vector<8x1xf32> to vector<8x32xf32>
      %48 = arith.mulf %43, %47 : vector<8x32xf32>
      %49 = vector.broadcast %29 : vector<1x32xf32> to vector<8x32xf32>
      %50 = arith.mulf %48, %49 : vector<8x32xf32>
      %51 = vector.broadcast %30 : vector<1x32xf32> to vector<8x32xf32>
      %52 = arith.addf %50, %51 : vector<8x32xf32>
      %c0_36 = arith.constant 0 : index
      %c0_37 = arith.constant 0 : index
      %53 = vector.load %arg15[%c0_36, %c0_37] : memref<8x32xf32, #tpu.memory_space<vmem>>, vector<8x32xf32>
      tpu.vector_store %arg15[%c0_36, %c0_37], %52 {strides = array<i32>} : memref<8x32xf32, #tpu.memory_space<vmem>>, vector<8x32xf32>,
      %cst_38 = arith.constant 0.000000e+00 : f32
      %54 = vector.broadcast %cst_38 : f32 to vector<8x32xf32>
      %c0_39 = arith.constant 0 : index
      %c0_40 = arith.constant 0 : index
      %55 = vector.load %arg16[%c0_39, %c0_40] : memref<8x32xf32, #tpu.memory_space<vmem>>, vector<8x32xf32>
      tpu.vector_store %arg16[%c0_39, %c0_40], %54 {strides = array<i32>} : memref<8x32xf32, #tpu.memory_space<vmem>>, vector<8x32xf32>,
    } else {
    }
    %c0 = arith.constant 0 : index
    %c0_1 = arith.constant 0 : index
    %3 = vector.load %arg15[%c0, %c0_1] : memref<8x32xf32, #tpu.memory_space<vmem>>, vector<8x32xf32>
    %c0_2 = arith.constant 0 : index
    %c0_3 = arith.constant 0 : index
    %4 = vector.load %arg8[%c0_2, %c0_3] : memref<32x128xf32, #tpu.memory_space<vmem>>, vector<32x128xf32>
    %cst = arith.constant dense<0.000000e+00> : vector<8x128xf32>
    %5 = tpu.matmul %3, %4, %cst {dimension_numbers = #tpu.dot_dimension_numbers<[1], [0], [0], [1], [0, 0, 1, 1], [], []>} : vector<8x32xf32>, vector<32x128xf32>, vector<8x128xf32> -> vector<8x128xf32>
    %c0_4 = arith.constant 0 : index
    %c0_5 = arith.constant 0 : index
    %6 = vector.load %arg9[%c0_4, %c0_5] : memref<1x128xf32, #tpu.memory_space<vmem>>, vector<1x128xf32>
    %7 = vector.broadcast %6 : vector<1x128xf32> to vector<8x128xf32>
    %8 = arith.addf %5, %7 : vector<8x128xf32>
    %cst_6 = arith.constant 0.000000e+00 : f32
    %9 = vector.broadcast %cst_6 : f32 to vector<8x128xf32>
    %10 = arith.maximumf %8, %9 : vector<8x128xf32>
    %c0_7 = arith.constant 0 : index
    %c0_8 = arith.constant 0 : index
    %11 = vector.load %arg16[%c0_7, %c0_8] : memref<8x32xf32, #tpu.memory_space<vmem>>, vector<8x32xf32>
    %c0_9 = arith.constant 0 : index
    %c0_10 = arith.constant 0 : index
    %12 = vector.load %arg10[%c0_9, %c0_10] : memref<128x32xf32, #tpu.memory_space<vmem>>, vector<128x32xf32>
    %cst_11 = arith.constant dense<0.000000e+00> : vector<8x32xf32>
    %13 = tpu.matmul %10, %12, %cst_11 {dimension_numbers = #tpu.dot_dimension_numbers<[1], [0], [0], [1], [0, 0, 1, 1], [], []>} : vector<8x128xf32>, vector<128x32xf32>, vector<8x32xf32> -> vector<8x32xf32>
    %14 = arith.addf %11, %13 : vector<8x32xf32>
    %c0_12 = arith.constant 0 : index
    %c0_13 = arith.constant 0 : index
    %15 = vector.load %arg16[%c0_12, %c0_13] : memref<8x32xf32, #tpu.memory_space<vmem>>, vector<8x32xf32>
    tpu.vector_store %arg16[%c0_12, %c0_13], %14 {strides = array<i32>} : memref<8x32xf32, #tpu.memory_space<vmem>>, vector<8x32xf32>,
    %c0_i32_14 = arith.constant 0 : i32
    %16 = arith.cmpi eq, %arg1, %c0_i32_14 : i32
    %17 = arith.extui %16 : i1 to i32
    %c0_i32_15 = arith.constant 0 : i32
    %18 = arith.cmpi ne, %17, %c0_i32_15 : i32
    scf.if %18 {
      %c0_16 = arith.constant 0 : index
      %c0_17 = arith.constant 0 : index
      %19 = vector.load %arg15[%c0_16, %c0_17] : memref<8x32xf32, #tpu.memory_space<vmem>>, vector<8x32xf32>
      %c0_18 = arith.constant 0 : index
      %c0_19 = arith.constant 0 : index
      %20 = vector.load %arg16[%c0_18, %c0_19] : memref<8x32xf32, #tpu.memory_space<vmem>>, vector<8x32xf32>
      %21 = arith.addf %19, %20 : vector<8x32xf32>
      %c0_20 = arith.constant 0 : index
      %c0_21 = arith.constant 0 : index
      %22 = vector.load %arg11[%c0_20, %c0_21] : memref<1x32xf32, #tpu.memory_space<vmem>>, vector<1x32xf32>
      %23 = vector.broadcast %22 : vector<1x32xf32> to vector<8x32xf32>
      %24 = arith.addf %21, %23 : vector<8x32xf32>
      %c0_22 = arith.constant 0 : index
      %c0_23 = arith.constant 0 : index
      %25 = vector.load %arg12[%c0_22, %c0_23] : memref<1x32xf32, #tpu.memory_space<vmem>>, vector<1x32xf32>
      %c0_24 = arith.constant 0 : index
      %c0_25 = arith.constant 0 : index
      %26 = vector.load %arg13[%c0_24, %c0_25] : memref<1x32xf32, #tpu.memory_space<vmem>>, vector<1x32xf32>
      %cst_26 = arith.constant dense<0.000000e+00> : vector<8xf32>
      %27 = vector.multi_reduction <add>, %24, %cst_26 [1] : vector<8x32xf32> to vector<8xf32>
      %28 = vector.shape_cast %27 : vector<8xf32> to vector<8x1xf32>
      %cst_27 = arith.constant 3.200000e+01 : f32
      %29 = vector.broadcast %cst_27 : f32 to vector<8x1xf32>
      %30 = arith.divf %28, %29 : vector<8x1xf32>
      %31 = vector.broadcast %30 : vector<8x1xf32> to vector<8x32xf32>
      %32 = arith.subf %24, %31 : vector<8x32xf32>
      %33 = arith.mulf %32, %32 : vector<8x32xf32>
      %cst_28 = arith.constant dense<0.000000e+00> : vector<8xf32>
      %34 = vector.multi_reduction <add>, %33, %cst_28 [1] : vector<8x32xf32> to vector<8xf32>
      %35 = vector.shape_cast %34 : vector<8xf32> to vector<8x1xf32>
      %cst_29 = arith.constant 3.200000e+01 : f32
      %36 = vector.broadcast %cst_29 : f32 to vector<8x1xf32>
      %37 = arith.divf %35, %36 : vector<8x1xf32>
      %38 = vector.broadcast %30 : vector<8x1xf32> to vector<8x32xf32>
      %39 = arith.subf %24, %38 : vector<8x32xf32>
      %cst_30 = arith.constant 9.99999974E-6 : f32
      %40 = vector.broadcast %cst_30 : f32 to vector<8x1xf32>
      %41 = arith.addf %37, %40 : vector<8x1xf32>
      %42 = math.rsqrt %41 : vector<8x1xf32>
      %43 = vector.broadcast %42 : vector<8x1xf32> to vector<8x32xf32>
      %44 = arith.mulf %39, %43 : vector<8x32xf32>
      %45 = vector.broadcast %25 : vector<1x32xf32> to vector<8x32xf32>
      %46 = arith.mulf %44, %45 : vector<8x32xf32>
      %47 = vector.broadcast %26 : vector<1x32xf32> to vector<8x32xf32>
      %48 = arith.addf %46, %47 : vector<8x32xf32>
      %c0_31 = arith.constant 0 : index
      %c0_32 = arith.constant 0 : index
      %c0_33 = arith.constant 0 : index
      %49 = vector.load %arg14[%c0_31, %c0_32, %c0_33] : memref<1x8x32xf32, #tpu.memory_space<vmem>>, vector<1x8x32xf32>
      %50 = vector.shape_cast %49 : vector<1x8x32xf32> to vector<8x32xf32>
      %51 = vector.shape_cast %48 : vector<8x32xf32> to vector<1x8x32xf32>
      tpu.vector_store %arg14[%c0_31, %c0_32, %c0_33], %51 {strides = array<i32>} : memref<1x8x32xf32, #tpu.memory_space<vmem>>, vector<1x8x32xf32>,
    } else {
    }
    return
  }
  func.func @transform_0(%arg0: i32, %arg1: i32) -> (i32, i32, i32) {
    %c0_i32 = arith.constant 0 : i32
    %c0_i32_0 = arith.constant 0 : i32
    %c0_i32_1 = arith.constant 0 : i32
    return %arg0, %c0_i32, %c0_i32_0 : i32, i32, i32
  }
  func.func @transform_1(%arg0: i32, %arg1: i32) -> (i32, i32, i32) {
    %c0_i32 = arith.constant 0 : i32
    %c0_i32_0 = arith.constant 0 : i32
    %c0_i32_1 = arith.constant 0 : i32
    return %arg0, %c0_i32, %c0_i32_0 : i32, i32, i32
  }
  func.func @transform_2(%arg0: i32, %arg1: i32) -> (i32, i32) {
    %c0_i32 = arith.constant 0 : i32
    %c0_i32_0 = arith.constant 0 : i32
    %c0_i32_1 = arith.constant 0 : i32
    return %c0_i32, %c0_i32_0 : i32, i32
  }
  func.func @transform_3(%arg0: i32, %arg1: i32) -> (i32, i32) {
    %c0_i32 = arith.constant 0 : i32
    %c0_i32_0 = arith.constant 0 : i32
    %c0_i32_1 = arith.constant 0 : i32
    return %c0_i32, %c0_i32_0 : i32, i32
  }
  func.func @transform_4(%arg0: i32, %arg1: i32) -> (i32, i32) {
    %c0_i32 = arith.constant 0 : i32
    %c0_i32_0 = arith.constant 0 : i32
    %c0_i32_1 = arith.constant 0 : i32
    return %c0_i32, %c0_i32_0 : i32, i32
  }
  func.func @transform_5(%arg0: i32, %arg1: i32) -> (i32, i32) {
    %c0_i32 = arith.constant 0 : i32
    %c0_i32_0 = arith.constant 0 : i32
    %c0_i32_1 = arith.constant 0 : i32
    return %c0_i32, %c0_i32_0 : i32, i32
  }
  func.func @transform_6(%arg0: i32, %arg1: i32) -> (i32, i32) {
    %c0_i32 = arith.constant 0 : i32
    %c0_i32_0 = arith.constant 0 : i32
    return %c0_i32, %arg1 : i32, i32
  }
  func.func @transform_7(%arg0: i32, %arg1: i32) -> (i32, i32) {
    %c0_i32 = arith.constant 0 : i32
    %c0_i32_0 = arith.constant 0 : i32
    return %c0_i32, %arg1 : i32, i32
  }
  func.func @transform_8(%arg0: i32, %arg1: i32) -> (i32, i32) {
    %c0_i32 = arith.constant 0 : i32
    %c0_i32_0 = arith.constant 0 : i32
    return %arg1, %c0_i32 : i32, i32
  }
  func.func @transform_9(%arg0: i32, %arg1: i32) -> (i32, i32) {
    %c0_i32 = arith.constant 0 : i32
    %c0_i32_0 = arith.constant 0 : i32
    %c0_i32_1 = arith.constant 0 : i32
    return %c0_i32, %c0_i32_0 : i32, i32
  }
  func.func @transform_10(%arg0: i32, %arg1: i32) -> (i32, i32) {
    %c0_i32 = arith.constant 0 : i32
    %c0_i32_0 = arith.constant 0 : i32
    %c0_i32_1 = arith.constant 0 : i32
    return %c0_i32, %c0_i32_0 : i32, i32
  }
  func.func @transform_11(%arg0: i32, %arg1: i32) -> (i32, i32) {
    %c0_i32 = arith.constant 0 : i32
    %c0_i32_0 = arith.constant 0 : i32
    %c0_i32_1 = arith.constant 0 : i32
    return %c0_i32, %c0_i32_0 : i32, i32
  }
  func.func @transform_12(%arg0: i32, %arg1: i32) -> (i32, i32, i32) {
    %c0_i32 = arith.constant 0 : i32
    %c0_i32_0 = arith.constant 0 : i32
    %c0_i32_1 = arith.constant 0 : i32
    return %arg0, %c0_i32, %c0_i32_0 : i32, i32, i32
  }
}

</mosaic_0001>

<llo_original>
// kernel: transformer_encoder_forward.7
$region0: #{transformer_encoder_forward.7}
  #allocation0 [shape = 'u32[]', space=smem, size = 0x4, offset = 0x4, fixed_abs, tag = 'smem constant byte address 0x4 - core index']
  #allocation1 [shape = 'u32[72,128]{1,0:T(1,128)}', space=vmem, size = 0x9000, scoped, tag = 'internal scratch']
  %s0 = inlined_call_operand.vmem [shape: f32[2,4,8,8], index: 0, kind: input, shape index: {}]
  %s1 = inlined_call_operand.vmem [shape: f32[2,4,8,8], index: 1, kind: input, shape index: {}]
  %s2 = inlined_call_operand.vmem [shape: f32[2,4,8,8], index: 2, kind: input, shape index: {}]
  %s3 = inlined_call_operand.vmem [shape: f32[2,4,8,8], index: 3, kind: output, shape index: {0}]
  %s4 = inlined_call_operand.vmem [shape: f32[2,4,8,8], index: 4, kind: output, shape index: {1}]
  %5 = xla_tuple %s3, %s4
  %s6 = sld [smem:[#allocation0]]
  $region53: #{transformer_encoder_forward.7} parent=0
    _
  %s8 = ssub.s32 1, %s6
  %s9 = scalar_select 0, %s8, %s6
  loop: start=0, step=1, limit=10
  $region2: #{transformer_encoder_forward.7} parent=0 // loop_pre_header
    _
  $region3: #{transformer_encoder_forward.7} parent=0 // loop_header
    %s11 = sphi 0, %s15
    %p12 = scmp.ge.s32.totalorder %s11, 10
    %s18 = sphi 0, %s30
    %s19 = sphi 0, %s26
    %s20 = sphi 0, %s18
    %s21 = sphi 0, %s19
    %s22 = sphi 0, %s20
    %s23 = sphi 0, %s21
    %s35 = sphi 0, %s37
    %s38 = sphi 0, %s35
    %s39 = sphi 0, %s38
    %s55 = sphi 0, %s39
    %s63 = sphi 0, %s65
    %s66 = sphi 0, %s63
    %s67 = sphi 0, %s66
    %s83 = sphi 0, %s67
    %s91 = sphi 0, %s93
    %s94 = sphi 0, %s91
    %s95 = sphi 0, %s94
    %s111 = sphi 0, %s95
    %s119 = sphi 0, %s121
    %s122 = sphi 0, %s119
    %s123 = sphi 0, %s122
    %s139 = sphi 0, %s123
    %s147 = sphi 0, %s149
    %s150 = sphi 0, %s147
    %s151 = sphi 0, %s150
    %s167 = sphi 0, %s151
  $region4: #{transformer_encoder_forward.7} parent=0 // loop_header_branch
    %14 = sbr.rel (%p12) target = $region8
  $region5: #{transformer_encoder_forward.7} parent=0 // loop_body
    %s16 = ssub.s32 %s11, 1
    %s17 = ssub.s32 %s11, 2
    %s24 = sadd.s32 1, %s19
    %p25 = scmp.ge.s32.totalorder %s24, 4
    %s26 = scalar_select %p25, 0, %s24
    %s27 = sadd.s32 1, %s18
    %s28 = scalar_select %p25, %s27, %s18
    %p29 = scmp.ge.s32.totalorder %s28, 2
    %s30 = scalar_select %p29, 0, %s28
    %s31 = ssub.s32 %s18, %s30
    %s32 = ssub.s32 %s19, %s26
    %s33 = sor.u32 %s31, %s32
    %p34 = scmp.eq.s32.totalorder %s33, 0
    %s36 = sadd.s32 %s35, 1
    %s37 = scalar_select %p34, %s35, %s36
    %p40 = pneg %p34
    %p41 = scmp.eq.s32.totalorder %s11, 7
    %p42 = por %p40, %p41
    %p43 = scmp.ne.s32.totalorder %s35, %s38
    %p44 = scmp.eq.s32.totalorder %s11, 0
    %p45 = por %p43, %p44
    %p46 = scmp.ne.s32.totalorder %s35, %s38
    %p47 = scmp.eq.s32.totalorder %s16, 7
    %p48 = por %p46, %p47
    %p49 = scmp.ne.s32.totalorder %s38, %s39
    %p50 = scmp.eq.s32.totalorder %s16, 0
    %p51 = por %p49, %p50
    %p52 = scmp.ne.s32.totalorder %s38, %s39
    %p53 = scmp.eq.s32.totalorder %s17, 7
    %p54 = por %p52, %p53
    %p56 = scmp.ne.s32.totalorder %s39, %s55
    %p57 = scmp.eq.s32.totalorder %s17, 0
    %p58 = por %p56, %p57
    %s59 = ssub.s32 %s18, %s30
    %s60 = ssub.s32 %s19, %s26
    %s61 = sor.u32 %s59, %s60
    %p62 = scmp.eq.s32.totalorder %s61, 0
    %s64 = sadd.s32 %s63, 1
    %s65 = scalar_select %p62, %s63, %s64
    %p68 = pneg %p62
    %p69 = scmp.eq.s32.totalorder %s11, 7
    %p70 = por %p68, %p69
    %p71 = scmp.ne.s32.totalorder %s63, %s66
    %p72 = scmp.eq.s32.totalorder %s11, 0
    %p73 = por %p71, %p72
    %p74 = scmp.ne.s32.totalorder %s63, %s66
    %p75 = scmp.eq.s32.totalorder %s16, 7
    %p76 = por %p74, %p75
    %p77 = scmp.ne.s32.totalorder %s66, %s67
    %p78 = scmp.eq.s32.totalorder %s16, 0
    %p79 = por %p77, %p78
    %p80 = scmp.ne.s32.totalorder %s66, %s67
    %p81 = scmp.eq.s32.totalorder %s17, 7
    %p82 = por %p80, %p81
    %p84 = scmp.ne.s32.totalorder %s67, %s83
    %p85 = scmp.eq.s32.totalorder %s17, 0
    %p86 = por %p84, %p85
    %s87 = ssub.s32 %s18, %s30
    %s88 = ssub.s32 %s19, %s26
    %s89 = sor.u32 %s87, %s88
    %p90 = scmp.eq.s32.totalorder %s89, 0
    %s92 = sadd.s32 %s91, 1
    %s93 = scalar_select %p90, %s91, %s92
    %p96 = pneg %p90
    %p97 = scmp.eq.s32.totalorder %s11, 7
    %p98 = por %p96, %p97
    %p99 = scmp.ne.s32.totalorder %s91, %s94
    %p100 = scmp.eq.s32.totalorder %s11, 0
    %p101 = por %p99, %p100
    %p102 = scmp.ne.s32.totalorder %s91, %s94
    %p103 = scmp.eq.s32.totalorder %s16, 7
    %p104 = por %p102, %p103
    %p105 = scmp.ne.s32.totalorder %s94, %s95
    %p106 = scmp.eq.s32.totalorder %s16, 0
    %p107 = por %p105, %p106
    %p108 = scmp.ne.s32.totalorder %s94, %s95
    %p109 = scmp.eq.s32.totalorder %s17, 7
    %p110 = por %p108, %p109
    %p112 = scmp.ne.s32.totalorder %s95, %s111
    %p113 = scmp.eq.s32.totalorder %s17, 0
    %p114 = por %p112, %p113
    %s115 = ssub.s32 %s18, %s30
    %s116 = ssub.s32 %s19, %s26
    %s117 = sor.u32 %s115, %s116
    %p118 = scmp.eq.s32.totalorder %s117, 0
    %s120 = sadd.s32 %s119, 1
    %s121 = scalar_select %p118, %s119, %s120
    %p124 = pneg %p118
    %p125 = scmp.eq.s32.totalorder %s11, 7
    %p126 = por %p124, %p125
    %p127 = scmp.ne.s32.totalorder %s119, %s122
    %p128 = scmp.eq.s32.totalorder %s11, 0
    %p129 = por %p127, %p128
    %p130 = scmp.ne.s32.totalorder %s119, %s122
    %p131 = scmp.eq.s32.totalorder %s16, 7
    %p132 = por %p130, %p131
    %p133 = scmp.ne.s32.totalorder %s122, %s123
    %p134 = scmp.eq.s32.totalorder %s16, 0
    %p135 = por %p133, %p134
    %p136 = scmp.ne.s32.totalorder %s122, %s123
    %p137 = scmp.eq.s32.totalorder %s17, 7
    %p138 = por %p136, %p137
    %p140 = scmp.ne.s32.totalorder %s123, %s139
    %p141 = scmp.eq.s32.totalorder %s17, 0
    %p142 = por %p140, %p141
    %s143 = ssub.s32 %s18, %s30
    %s144 = ssub.s32 %s19, %s26
    %s145 = sor.u32 %s143, %s144
    %p146 = scmp.eq.s32.totalorder %s145, 0
    %s148 = sadd.s32 %s147, 1
    %s149 = scalar_select %p146, %s147, %s148
    %p152 = pneg %p146
    %p153 = scmp.eq.s32.totalorder %s11, 7
    %p154 = por %p152, %p153
    %p155 = scmp.ne.s32.totalorder %s147, %s150
    %p156 = scmp.eq.s32.totalorder %s11, 0
    %p157 = por %p155, %p156
    %p158 = scmp.ne.s32.totalorder %s147, %s150
    %p159 = scmp.eq.s32.totalorder %s16, 7
    %p160 = por %p158, %p159
    %p161 = scmp.ne.s32.totalorder %s150, %s151
    %p162 = scmp.eq.s32.totalorder %s16, 0
    %p163 = por %p161, %p162
    %p164 = scmp.ne.s32.totalorder %s150, %s151
    %p165 = scmp.eq.s32.totalorder %s17, 7
    %p166 = por %p164, %p165
    %p168 = scmp.ne.s32.totalorder %s151, %s167
    %p169 = scmp.eq.s32.totalorder %s17, 0
    %p170 = por %p168, %p169
    %p171 = scmp.le.s32.totalorder 1, %s11
    %p172 = scmp.lt.s32.totalorder %s11, 9
    %p173 = pnand %p171, %p172
    %p174 = pneg %p173
    // Predicated region
    $region9: #{transformer_encoder_forward.7} parent=5 // pred_check
      _
    $region10: #{transformer_encoder_forward.7} parent=5 // pred_check_branch
      %176 = sbr.rel (%p173) target = $region12
    $region11: #{transformer_encoder_forward.7} parent=5 // pred_region
      %s177 = ssub.s32 %s11, 1
    $region12: #{transformer_encoder_forward.7} parent=5 // pred_fallthru
      _
    %p178 = scmp.lt.s32.totalorder %s11, 8
    // Predicated region
    $region13: #{transformer_encoder_forward.7} parent=5 // pred_check
      %p179 = pneg %p178
    $region14: #{transformer_encoder_forward.7} parent=5 // pred_check_branch
      %181 = sbr.rel (%p179) target = $region16
    $region15: #{transformer_encoder_forward.7} parent=5 // pred_region
      // Predicated region
      $region17: #{transformer_encoder_forward.7} parent=15 // pred_check
        %p182 = pneg %p45
      $region18: #{transformer_encoder_forward.7} parent=15 // pred_check_branch
        %184 = sbr.rel (%p182) target = $region20
      $region19: #{transformer_encoder_forward.7} parent=15 // pred_region
        %p185 = scmp.lt.s32.totalorder %s18, 1
        %s186 = scalar_select %p185, %s18, 1
        %p187 = scmp.lt.s32.totalorder %s19, 3
        %s188 = scalar_select %p187, %s19, 3
        %s189 = smul.addr %s186, 4
        %s190 = sadd.s32 %s188, %s189
        %s191 = smul.addr %s190, 8
        %s192 = scalar_lea.vmem %s0, %s191
      $region20: #{transformer_encoder_forward.7} parent=15 // pred_fallthru
        _
      // Predicated region
      $region21: #{transformer_encoder_forward.7} parent=15 // pred_check
        %p193 = pneg %p73
      $region22: #{transformer_encoder_forward.7} parent=15 // pred_check_branch
        %195 = sbr.rel (%p193) target = $region24
      $region23: #{transformer_encoder_forward.7} parent=15 // pred_region
        %p196 = scmp.lt.s32.totalorder %s18, 1
        %s197 = scalar_select %p196, %s18, 1
        %p198 = scmp.lt.s32.totalorder %s19, 3
        %s199 = scalar_select %p198, %s19, 3
        %s200 = smul.addr %s197, 4
        %s201 = sadd.s32 %s199, %s200
        %s202 = smul.addr %s201, 8
        %s203 = scalar_lea.vmem %s1, %s202
      $region24: #{transformer_encoder_forward.7} parent=15 // pred_fallthru
        _
      // Predicated region
      $region25: #{transformer_encoder_forward.7} parent=15 // pred_check
        %p204 = pneg %p101
      $region26: #{transformer_encoder_forward.7} parent=15 // pred_check_branch
        %206 = sbr.rel (%p204) target = $region28
      $region27: #{transformer_encoder_forward.7} parent=15 // pred_region
        %p207 = scmp.lt.s32.totalorder %s18, 1
        %s208 = scalar_select %p207, %s18, 1
        %p209 = scmp.lt.s32.totalorder %s19, 3
        %s210 = scalar_select %p209, %s19, 3
        %s211 = smul.addr %s208, 4
        %s212 = sadd.s32 %s210, %s211
        %s213 = smul.addr %s212, 8
        %s214 = scalar_lea.vmem %s2, %s213
      $region28: #{transformer_encoder_forward.7} parent=15 // pred_fallthru
        _
    $region16: #{transformer_encoder_forward.7} parent=5 // pred_fallthru
      _
    %p215 = scmp.le.s32.totalorder 1, %s11
    %p216 = scmp.lt.s32.totalorder %s11, 9
    %p217 = pnand %p215, %p216
    %p218 = pneg %p217
    // Predicated region
    $region29: #{transformer_encoder_forward.7} parent=5 // pred_check
      _
    $region30: #{transformer_encoder_forward.7} parent=5 // pred_check_branch
      %220 = sbr.rel (%p217) target = $region32
    $region31: #{transformer_encoder_forward.7} parent=5 // pred_region
      %s221 = ssub.s32 %s11, 1
      %p222 = scmp.lt.s32.totalorder %s20, 1
      %s223 = scalar_select %p222, %s20, 1
      %p224 = scmp.lt.s32.totalorder %s21, 3
      %s225 = scalar_select %p224, %s21, 3
      %s226 = smul.addr %s223, 4
      %s227 = sadd.s32 %s225, %s226
      %s228 = smul.addr %s227, 8
      %s229 = scalar_lea.vmem %s0, %s228
      %p230 = pneg %p51
      %p231 = pneg %p48
      %p232 = scmp.lt.s32.totalorder %s20, 1
      %s233 = scalar_select %p232, %s20, 1
      %p234 = scmp.lt.s32.totalorder %s21, 3
      %s235 = scalar_select %p234, %s21, 3
      %s236 = smul.addr %s233, 4
      %s237 = sadd.s32 %s235, %s236
      %s238 = smul.addr %s237, 8
      %s239 = scalar_lea.vmem %s1, %s238
      %p240 = pneg %p79
      %p241 = pneg %p76
      %p242 = scmp.lt.s32.totalorder %s20, 1
      %s243 = scalar_select %p242, %s20, 1
      %p244 = scmp.lt.s32.totalorder %s21, 3
      %s245 = scalar_select %p244, %s21, 3
      %s246 = smul.addr %s243, 4
      %s247 = sadd.s32 %s245, %s246
      %s248 = smul.addr %s247, 8
      %s249 = scalar_lea.vmem %s2, %s248
      %p250 = pneg %p107
      %p251 = pneg %p104
      %p252 = pneg %p135
      %p253 = pneg %p132
      %p254 = scmp.lt.s32.totalorder %s20, 1
      %s255 = scalar_select %p254, %s20, 1
      %p256 = scmp.lt.s32.totalorder %s21, 3
      %s257 = scalar_select %p256, %s21, 3
      %s258 = smul.addr %s255, 4
      %s259 = sadd.s32 %s257, %s258
      %s260 = smul.addr %s259, 8
      %s261 = scalar_lea.vmem %s3, %s260
      %p262 = pneg %p163
      %p263 = pneg %p160
      %p264 = scmp.lt.s32.totalorder %s20, 1
      %s265 = scalar_select %p264, %s20, 1
      %p266 = scmp.lt.s32.totalorder %s21, 3
      %s267 = scalar_select %p266, %s21, 3
      %s268 = smul.addr %s265, 4
      %s269 = sadd.s32 %s267, %s268
      %s270 = smul.addr %s269, 8
      %s271 = scalar_lea.vmem %s4, %s270
      %p272 = scmp.lt.s32.totalorder %s20, 1
      %s273 = scalar_select %p272, %s20, 1
      %p274 = scmp.lt.s32.totalorder %s21, 3
      %s275 = scalar_select %p274, %s21, 3
      %s276 = smul.addr %s273, 4
      %s277 = sadd.s32 %s275, %s276
      %s278 = smul.addr %s277, 8
      %s279 = scalar_lea.vmem %s0, %s278
      %p280 = scmp.lt.s32.totalorder %s20, 1
      %s281 = scalar_select %p280, %s20, 1
      %p282 = scmp.lt.s32.totalorder %s21, 3
      %s283 = scalar_select %p282, %s21, 3
      %s284 = smul.addr %s281, 4
      %s285 = sadd.s32 %s283, %s284
      %s286 = smul.addr %s285, 8
      %s287 = scalar_lea.vmem %s1, %s286
      %p288 = scmp.lt.s32.totalorder %s20, 1
      %s289 = scalar_select %p288, %s20, 1
      %p290 = scmp.lt.s32.totalorder %s21, 3
      %s291 = scalar_select %p290, %s21, 3
      %s292 = smul.addr %s289, 4
      %s293 = sadd.s32 %s291, %s292
      %s294 = smul.addr %s293, 8
      %s295 = scalar_lea.vmem %s2, %s294
      %p296 = scmp.lt.s32.totalorder %s20, 1
      %s297 = scalar_select %p296, %s20, 1
      %p298 = scmp.lt.s32.totalorder %s21, 3
      %s299 = scalar_select %p298, %s21, 3
      %s300 = smul.addr %s297, 4
      %s301 = sadd.s32 %s299, %s300
      %s302 = smul.addr %s301, 8
      %s303 = scalar_lea.vmem %s3, %s302
      %p304 = scmp.lt.s32.totalorder %s20, 1
      %s305 = scalar_select %p304, %s20, 1
      %p306 = scmp.lt.s32.totalorder %s21, 3
      %s307 = scalar_select %p306, %s21, 3
      %s308 = smul.addr %s305, 4
      %s309 = sadd.s32 %s307, %s308
      %s310 = smul.addr %s309, 8
      %s311 = scalar_lea.vmem %s4, %s310
      %v312 = vld [vmem:[%s279] sm:$0xff]
      %v313 = vmul.f32 %v312, 0.35355338
      %v314 = vld [vmem:[%s287] sm:$0xff]
      %v315 = vld [vmem:[%s295] sm:$0xff]
      %vm316 = vcmask 64512
      %v318 = vsel %vm316, %v313, 0
      %v321 = vsel %vm316, %v314, 0
      %323 = vmatpush.xpose.msra.mxu0 0.0
      %324 = vmatpush.xpose.msra.mxu0 0.0
      %325 = vmatpush.xpose.msra.mxu0 0.0
      %326 = vmatpush.xpose.msra.mxu0 0.0
      %327 = vmatpush.xpose.msra.mxu0 0.0
      %328 = vmatpush.xpose.msra.mxu0 0.0
      %329 = vmatpush.xpose.msra.mxu0 0.0
      %330 = vmatpush.xpose.msra.mxu0 0.0
      %331 = vmatpush.xpose.msra.mxu0 0.0
      %332 = vmatpush.xpose.msra.mxu0 0.0
      %333 = vmatpush.xpose.msra.mxu0 0.0
      %334 = vmatpush.xpose.msra.mxu0 0.0
      %335 = vmatpush.xpose.msra.mxu0 0.0
      %336 = vmatpush.xpose.msra.mxu0 0.0
      %337 = vmatpush.xpose.msra.mxu0 0.0
      %338 = vmatpush.xpose.msra.mxu0 %v321
      %339 = vmatmul.f32.gmra.mxu0 %v318
      %v340 = vpop.f32.mrf.mxu0
      %v341 = vadd.f32 0.0, %v340
      %342 = vdwg.mxu0
      %v343 = vsel %vm316, %v341, -inf
      %344 = vmax.xlane.f32.xlu0 %v343
      %v345 = vpop.xlane.xlu0 %344
      %v346 = vsub.f32 %v341, %v345
      %v347 = vmul.f32 %v346, 1.442695
      %v348 = vpow.pop %v347
      %v349 = vsel %vm316, %v348, 0.0
      %350 = vadd.xlane.f32.xlu0 %v349
      %v351 = vpop.xlane.xlu0 %350
      %v352 = vrcp.pop %v351
      %v353 = vmul.f32 %v351, %v352
      %v354 = vsub.f32 1.0, %v353
      %v355 = vmul.f32 %v352, %v354
      %v356 = vadd.f32 %v352, %v355
      %vm357 = vweird.f32 %v351
      %vm358 = vweird.f32 %v352
      %vm359 = vmor %vm357, %vm358
      %v360 = vsel %vm359, %v352, %v356
      %v361 = vand.u32 2147483647, %v351
      %vm362 = vcmp.eq.f32.partialorder %v361, 8.507059e+37
      %v363 = vand.u32 %v351, 2147483648
      %v364 = vor.u32 1.1754944e-38, %v363
      %v365 = vsel %vm362, %v364, %v360
      %v366 = vmul.f32 %v348, %v365
      %367 = vst.msk [vmem:[%s303] sm:$0xff] %vm316, %v366
      %v369 = vsel %vm316, %v366, 0
      %371 = vmatpush.msra.mxu0 0.0
      %372 = vmatpush.msra.mxu0 0.0
      %373 = vmatpush.msra.mxu0 0.0
      %374 = vmatpush.msra.mxu0 0.0
      %375 = vmatpush.msra.mxu0 0.0
      %376 = vmatpush.msra.mxu0 0.0
      %377 = vmatpush.msra.mxu0 0.0
      %378 = vmatpush.msra.mxu0 0.0
      %379 = vmatpush.msra.mxu0 0.0
      %380 = vmatpush.msra.mxu0 0.0
      %381 = vmatpush.msra.mxu0 0.0
      %382 = vmatpush.msra.mxu0 0.0
      %383 = vmatpush.msra.mxu0 0.0
      %384 = vmatpush.msra.mxu0 0.0
      %385 = vmatpush.msra.mxu0 0.0
      %386 = vmatpush.msra.mxu0 %v315
      %387 = vmatmul.f32.gmra.mxu0 %v369
      %v388 = vpop.f32.mrf.mxu0
      %v389 = vadd.f32 0.0, %v388
      %390 = vdwg.mxu0
      %391 = vst.msk [vmem:[%s311] sm:$0xff] %vm316, %v389
      %p392 = scmp.lt.s32.totalorder %s20, 1
      %s393 = scalar_select %p392, %s20, 1
      %p394 = scmp.lt.s32.totalorder %s21, 3
      %s395 = scalar_select %p394, %s21, 3
      %s396 = smul.addr %s393, 4
      %s397 = sadd.s32 %s395, %s396
      %s398 = smul.addr %s397, 8
      %s399 = scalar_lea.vmem %s3, %s398
      %p400 = scmp.lt.s32.totalorder %s20, 1
      %s401 = scalar_select %p400, %s20, 1
      %p402 = scmp.lt.s32.totalorder %s21, 3
      %s403 = scalar_select %p402, %s21, 3
      %s404 = smul.addr %s401, 4
      %s405 = sadd.s32 %s403, %s404
      %s406 = smul.addr %s405, 8
      %s407 = scalar_lea.vmem %s4, %s406
      // Predicated region
      $region33: #{transformer_encoder_forward.7} parent=31 // pred_check
        %p408 = pneg %p132
      $region34: #{transformer_encoder_forward.7} parent=31 // pred_check_branch
        %410 = sbr.rel (%p408) target = $region36
      $region35: #{transformer_encoder_forward.7} parent=31 // pred_region
        _
      $region36: #{transformer_encoder_forward.7} parent=31 // pred_fallthru
        _
      // Predicated region
      $region37: #{transformer_encoder_forward.7} parent=31 // pred_check
        %p411 = pneg %p160
      $region38: #{transformer_encoder_forward.7} parent=31 // pred_check_branch
        %413 = sbr.rel (%p411) target = $region40
      $region39: #{transformer_encoder_forward.7} parent=31 // pred_region
        _
      $region40: #{transformer_encoder_forward.7} parent=31 // pred_fallthru
        _
    $region32: #{transformer_encoder_forward.7} parent=5 // pred_fallthru
      _
    %p414 = scmp.le.s32.totalorder 2, %s11
    // Predicated region
    $region41: #{transformer_encoder_forward.7} parent=5 // pred_check
      %p415 = pneg %p414
    $region42: #{transformer_encoder_forward.7} parent=5 // pred_check_branch
      %417 = sbr.rel (%p415) target = $region44
    $region43: #{transformer_encoder_forward.7} parent=5 // pred_region
      %s418 = ssub.s32 %s11, 2
      // Predicated region
      $region45: #{transformer_encoder_forward.7} parent=43 // pred_check
        %p419 = pneg %p138
      $region46: #{transformer_encoder_forward.7} parent=43 // pred_check_branch
        %421 = sbr.rel (%p419) target = $region48
      $region47: #{transformer_encoder_forward.7} parent=43 // pred_region
        %p422 = scmp.lt.s32.totalorder %s22, 1
        %s423 = scalar_select %p422, %s22, 1
        %p424 = scmp.lt.s32.totalorder %s23, 3
        %s425 = scalar_select %p424, %s23, 3
        %s426 = smul.addr %s423, 4
        %s427 = sadd.s32 %s425, %s426
        %s428 = smul.addr %s427, 8
        %s429 = scalar_lea.vmem %s3, %s428
      $region48: #{transformer_encoder_forward.7} parent=43 // pred_fallthru
        _
      // Predicated region
      $region49: #{transformer_encoder_forward.7} parent=43 // pred_check
        %p430 = pneg %p166
      $region50: #{transformer_encoder_forward.7} parent=43 // pred_check_branch
        %432 = sbr.rel (%p430) target = $region52
      $region51: #{transformer_encoder_forward.7} parent=43 // pred_region
        %p433 = scmp.lt.s32.totalorder %s22, 1
        %s434 = scalar_select %p433, %s22, 1
        %p435 = scmp.lt.s32.totalorder %s23, 3
        %s436 = scalar_select %p435, %s23, 3
        %s437 = smul.addr %s434, 4
        %s438 = sadd.s32 %s436, %s437
        %s439 = smul.addr %s438, 8
        %s440 = scalar_lea.vmem %s4, %s439
      $region52: #{transformer_encoder_forward.7} parent=43 // pred_fallthru
        _
    $region44: #{transformer_encoder_forward.7} parent=5 // pred_fallthru
      _
  $region6: #{transformer_encoder_forward.7} parent=0 // loop_footer
    %s15 = sadd.s32 1, %s11
  $region7: #{transformer_encoder_forward.7} parent=0 // loop_footer_branch
    %10 = sbr.rel target = $region3
  $region8: #{transformer_encoder_forward.7} parent=0 // loop_exit
    _

// kernel: transformer_encoder_forward.6
$region0: #{transformer_encoder_forward.6}
  #allocation0 [shape = 'u32[]', space=smem, size = 0x4, offset = 0x4, fixed_abs, tag = 'smem constant byte address 0x4 - core index']
  #allocation1 [shape = 'u32[72,128]{1,0:T(1,128)}', space=vmem, size = 0x9000, scoped, tag = 'internal scratch']
  %s0 = inlined_call_operand.vmem [shape: f32[2,8,32], index: 0, kind: input, shape index: {}]
  %s1 = inlined_call_operand.hbm [shape: f32[32,32], index: 1, kind: input, shape index: {}]
  %s2 = inlined_call_operand.hbm [shape: f32[32,32], index: 2, kind: input, shape index: {}]
  %s3 = inlined_call_operand.hbm [shape: f32[32,32], index: 3, kind: input, shape index: {}]
  %s4 = inlined_call_operand.vmem [shape: f32[1,32], index: 4, kind: input, shape index: {}]
  %s5 = inlined_call_operand.vmem [shape: f32[1,32], index: 5, kind: input, shape index: {}]
  %s6 = inlined_call_operand.vmem [shape: f32[1,32], index: 6, kind: input, shape index: {}]
  %s7 = inlined_call_operand.vmem [shape: f32[2,8,32], index: 7, kind: output, shape index: {0}]
  %s8 = inlined_call_operand.vmem [shape: f32[2,8,32], index: 8, kind: output, shape index: {1}]
  %s9 = inlined_call_operand.vmem [shape: f32[2,8,32], index: 9, kind: output, shape index: {2}]
  %10 = xla_tuple %s7, %s8, %s9
  %s11 = sld [smem:[#allocation0]]
  $region89: #{transformer_encoder_forward.6} parent=0
    _
  %s13 = ssub.s32 1, %s11
  %s14 = scalar_select 0, %s13, %s11
  $region1: #{transformer_encoder_forward.6} parent=0
    #allocation2 [shape = 'u8[16384]{0}', space=vmem, size = 0x4000, scoped, tag = 'input window, operand 1, single buffered']
    #allocation3 [shape = 's32[2]{0}', space=sflag, size = 0x8, scoped, tag = 'scoped memory for transformer_encoder_forward.6']
    #allocation4 [shape = 'u8[16384]{0}', space=vmem, size = 0x4000, scoped, tag = 'input window, operand 2, single buffered']
    #allocation5 [shape = 's32[1]{0}', space=sflag, size = 0x4, scoped, tag = 'scoped memory for transformer_encoder_forward.6']
    #allocation6 [shape = 'u8[16384]{0}', space=vmem, size = 0x4000, scoped, tag = 'input window, operand 3, single buffered']
    %15 = vsyncpa [#allocation3], 0
    %16 = vsyncpa [#allocation5], 0
    loop: start=0, step=1, limit=4
    $region2: #{transformer_encoder_forward.6} parent=1 // loop_pre_header
      _
    $region3: #{transformer_encoder_forward.6} parent=1 // loop_header
      %s18 = sphi 0, %s22
      %p19 = scmp.ge.s32.totalorder %s18, 4
      %s28 = sphi 0, %s30
      %s31 = sphi 0, %s28
      %s32 = sphi 0, %s31
      %s48 = sphi 0, %s32
      %s52 = sphi 0, %s52
      %s54 = sphi 0, %s52
      %s55 = sphi 0, %s54
      %s69 = sphi 0, %s55
      %s73 = sphi 0, %s73
      %s75 = sphi 0, %s73
      %s76 = sphi 0, %s75
      %s90 = sphi 0, %s76
      %s94 = sphi 0, %s94
      %s96 = sphi 0, %s94
      %s97 = sphi 0, %s96
      %s111 = sphi 0, %s97
      %s115 = sphi 0, %s115
      %s117 = sphi 0, %s115
      %s118 = sphi 0, %s117
      %s132 = sphi 0, %s118
      %s136 = sphi 0, %s136
      %s138 = sphi 0, %s136
      %s139 = sphi 0, %s138
      %s153 = sphi 0, %s139
      %s157 = sphi 0, %s157
      %s159 = sphi 0, %s157
      %s160 = sphi 0, %s159
      %s174 = sphi 0, %s160
      %s180 = sphi 0, %s182
      %s183 = sphi 0, %s180
      %s184 = sphi 0, %s183
      %s200 = sphi 0, %s184
      %s206 = sphi 0, %s208
      %s209 = sphi 0, %s206
      %s210 = sphi 0, %s209
      %s226 = sphi 0, %s210
      %s232 = sphi 0, %s234
      %s235 = sphi 0, %s232
      %s236 = sphi 0, %s235
      %s252 = sphi 0, %s236
    $region4: #{transformer_encoder_forward.6} parent=1 // loop_header_branch
      %21 = sbr.rel (%p19) target = $region8
    $region5: #{transformer_encoder_forward.6} parent=1 // loop_body
      %s23 = ssub.s32 %s18, 1
      %s24 = ssub.s32 %s18, 2
      %s25 = sadd.s32 %s18, 1
      %s26 = ssub.s32 %s18, %s25
      %p27 = scmp.eq.s32.totalorder %s26, 0
      %s29 = sadd.s32 %s28, 1
      %s30 = scalar_select %p27, %s28, %s29
      %p33 = pneg %p27
      %p34 = scmp.eq.s32.totalorder %s18, 1
      %p35 = por %p33, %p34
      %p36 = scmp.ne.s32.totalorder %s28, %s31
      %p37 = scmp.eq.s32.totalorder %s18, 0
      %p38 = por %p36, %p37
      %p39 = scmp.ne.s32.totalorder %s28, %s31
      %p40 = scmp.eq.s32.totalorder %s23, 1
      %p41 = por %p39, %p40
      %p42 = scmp.ne.s32.totalorder %s31, %s32
      %p43 = scmp.eq.s32.totalorder %s23, 0
      %p44 = por %p42, %p43
      %p45 = scmp.ne.s32.totalorder %s31, %s32
      %p46 = scmp.eq.s32.totalorder %s24, 1
      %p47 = por %p45, %p46
      %p49 = scmp.ne.s32.totalorder %s32, %s48
      %p50 = scmp.eq.s32.totalorder %s24, 0
      %p51 = por %p49, %p50
      %s53 = sadd.s32 %s52, 1
      %p56 = scmp.eq.s32.totalorder %s18, 1
      %p57 = scmp.ne.s32.totalorder %s52, %s54
      %p58 = scmp.eq.s32.totalorder %s18, 0
      %p59 = por %p57, %p58
      %p60 = scmp.ne.s32.totalorder %s52, %s54
      %p61 = scmp.eq.s32.totalorder %s23, 1
      %p62 = por %p60, %p61
      %p63 = scmp.ne.s32.totalorder %s54, %s55
      %p64 = scmp.eq.s32.totalorder %s23, 0
      %p65 = por %p63, %p64
      %p66 = scmp.ne.s32.totalorder %s54, %s55
      %p67 = scmp.eq.s32.totalorder %s24, 1
      %p68 = por %p66, %p67
      %p70 = scmp.ne.s32.totalorder %s55, %s69
      %p71 = scmp.eq.s32.totalorder %s24, 0
      %p72 = por %p70, %p71
      %s74 = sadd.s32 %s73, 1
      %p77 = scmp.eq.s32.totalorder %s18, 1
      %p78 = scmp.ne.s32.totalorder %s73, %s75
      %p79 = scmp.eq.s32.totalorder %s18, 0
      %p80 = por %p78, %p79
      %p81 = scmp.ne.s32.totalorder %s73, %s75
      %p82 = scmp.eq.s32.totalorder %s23, 1
      %p83 = por %p81, %p82
      %p84 = scmp.ne.s32.totalorder %s75, %s76
      %p85 = scmp.eq.s32.totalorder %s23, 0
      %p86 = por %p84, %p85
      %p87 = scmp.ne.s32.totalorder %s75, %s76
      %p88 = scmp.eq.s32.totalorder %s24, 1
      %p89 = por %p87, %p88
      %p91 = scmp.ne.s32.totalorder %s76, %s90
      %p92 = scmp.eq.s32.totalorder %s24, 0
      %p93 = por %p91, %p92
      %s95 = sadd.s32 %s94, 1
      %p98 = scmp.eq.s32.totalorder %s18, 1
      %p99 = scmp.ne.s32.totalorder %s94, %s96
      %p100 = scmp.eq.s32.totalorder %s18, 0
      %p101 = por %p99, %p100
      %p102 = scmp.ne.s32.totalorder %s94, %s96
      %p103 = scmp.eq.s32.totalorder %s23, 1
      %p104 = por %p102, %p103
      %p105 = scmp.ne.s32.totalorder %s96, %s97
      %p106 = scmp.eq.s32.totalorder %s23, 0
      %p107 = por %p105, %p106
      %p108 = scmp.ne.s32.totalorder %s96, %s97
      %p109 = scmp.eq.s32.totalorder %s24, 1
      %p110 = por %p108, %p109
      %p112 = scmp.ne.s32.totalorder %s97, %s111
      %p113 = scmp.eq.s32.totalorder %s24, 0
      %p114 = por %p112, %p113
      %s116 = sadd.s32 %s115, 1
      %p119 = scmp.eq.s32.totalorder %s18, 1
      %p120 = scmp.ne.s32.totalorder %s115, %s117
      %p121 = scmp.eq.s32.totalorder %s18, 0
      %p122 = por %p120, %p121
      %p123 = scmp.ne.s32.totalorder %s115, %s117
      %p124 = scmp.eq.s32.totalorder %s23, 1
      %p125 = por %p123, %p124
      %p126 = scmp.ne.s32.totalorder %s117, %s118
      %p127 = scmp.eq.s32.totalorder %s23, 0
      %p128 = por %p126, %p127
      %p129 = scmp.ne.s32.totalorder %s117, %s118
      %p130 = scmp.eq.s32.totalorder %s24, 1
      %p131 = por %p129, %p130
      %p133 = scmp.ne.s32.totalorder %s118, %s132
      %p134 = scmp.eq.s32.totalorder %s24, 0
      %p135 = por %p133, %p134
      %s137 = sadd.s32 %s136, 1
      %p140 = scmp.eq.s32.totalorder %s18, 1
      %p141 = scmp.ne.s32.totalorder %s136, %s138
      %p142 = scmp.eq.s32.totalorder %s18, 0
      %p143 = por %p141, %p142
      %p144 = scmp.ne.s32.totalorder %s136, %s138
      %p145 = scmp.eq.s32.totalorder %s23, 1
      %p146 = por %p144, %p145
      %p147 = scmp.ne.s32.totalorder %s138, %s139
      %p148 = scmp.eq.s32.totalorder %s23, 0
      %p149 = por %p147, %p148
      %p150 = scmp.ne.s32.totalorder %s138, %s139
      %p151 = scmp.eq.s32.totalorder %s24, 1
      %p152 = por %p150, %p151
      %p154 = scmp.ne.s32.totalorder %s139, %s153
      %p155 = scmp.eq.s32.totalorder %s24, 0
      %p156 = por %p154, %p155
      %s158 = sadd.s32 %s157, 1
      %p161 = scmp.eq.s32.totalorder %s18, 1
      %p162 = scmp.ne.s32.totalorder %s157, %s159
      %p163 = scmp.eq.s32.totalorder %s18, 0
      %p164 = por %p162, %p163
      %p165 = scmp.ne.s32.totalorder %s157, %s159
      %p166 = scmp.eq.s32.totalorder %s23, 1
      %p167 = por %p165, %p166
      %p168 = scmp.ne.s32.totalorder %s159, %s160
      %p169 = scmp.eq.s32.totalorder %s23, 0
      %p170 = por %p168, %p169
      %p171 = scmp.ne.s32.totalorder %s159, %s160
      %p172 = scmp.eq.s32.totalorder %s24, 1
      %p173 = por %p171, %p172
      %p175 = scmp.ne.s32.totalorder %s160, %s174
      %p176 = scmp.eq.s32.totalorder %s24, 0
      %p177 = por %p175, %p176
      %s178 = ssub.s32 %s18, %s25
      %p179 = scmp.eq.s32.totalorder %s178, 0
      %s181 = sadd.s32 %s180, 1
      %s182 = scalar_select %p179, %s180, %s181
      %p185 = pneg %p179
      %p186 = scmp.eq.s32.totalorder %s18, 1
      %p187 = por %p185, %p186
      %p188 = scmp.ne.s32.totalorder %s180, %s183
      %p189 = scmp.eq.s32.totalorder %s18, 0
      %p190 = por %p188, %p189
      %p191 = scmp.ne.s32.totalorder %s180, %s183
      %p192 = scmp.eq.s32.totalorder %s23, 1
      %p193 = por %p191, %p192
      %p194 = scmp.ne.s32.totalorder %s183, %s184
      %p195 = scmp.eq.s32.totalorder %s23, 0
      %p196 = por %p194, %p195
      %p197 = scmp.ne.s32.totalorder %s183, %s184
      %p198 = scmp.eq.s32.totalorder %s24, 1
      %p199 = por %p197, %p198
      %p201 = scmp.ne.s32.totalorder %s184, %s200
      %p202 = scmp.eq.s32.totalorder %s24, 0
      %p203 = por %p201, %p202
      %s204 = ssub.s32 %s18, %s25
      %p205 = scmp.eq.s32.totalorder %s204, 0
      %s207 = sadd.s32 %s206, 1
      %s208 = scalar_select %p205, %s206, %s207
      %p211 = pneg %p205
      %p212 = scmp.eq.s32.totalorder %s18, 1
      %p213 = por %p211, %p212
      %p214 = scmp.ne.s32.totalorder %s206, %s209
      %p215 = scmp.eq.s32.totalorder %s18, 0
      %p216 = por %p214, %p215
      %p217 = scmp.ne.s32.totalorder %s206, %s209
      %p218 = scmp.eq.s32.totalorder %s23, 1
      %p219 = por %p217, %p218
      %p220 = scmp.ne.s32.totalorder %s209, %s210
      %p221 = scmp.eq.s32.totalorder %s23, 0
      %p222 = por %p220, %p221
      %p223 = scmp.ne.s32.totalorder %s209, %s210
      %p224 = scmp.eq.s32.totalorder %s24, 1
      %p225 = por %p223, %p224
      %p227 = scmp.ne.s32.totalorder %s210, %s226
      %p228 = scmp.eq.s32.totalorder %s24, 0
      %p229 = por %p227, %p228
      %s230 = ssub.s32 %s18, %s25
      %p231 = scmp.eq.s32.totalorder %s230, 0
      %s233 = sadd.s32 %s232, 1
      %s234 = scalar_select %p231, %s232, %s233
      %p237 = pneg %p231
      %p238 = scmp.eq.s32.totalorder %s18, 1
      %p239 = por %p237, %p238
      %p240 = scmp.ne.s32.totalorder %s232, %s235
      %p241 = scmp.eq.s32.totalorder %s18, 0
      %p242 = por %p240, %p241
      %p243 = scmp.ne.s32.totalorder %s232, %s235
      %p244 = scmp.eq.s32.totalorder %s23, 1
      %p245 = por %p243, %p244
      %p246 = scmp.ne.s32.totalorder %s235, %s236
      %p247 = scmp.eq.s32.totalorder %s23, 0
      %p248 = por %p246, %p247
      %p249 = scmp.ne.s32.totalorder %s235, %s236
      %p250 = scmp.eq.s32.totalorder %s24, 1
      %p251 = por %p249, %p250
      %p253 = scmp.ne.s32.totalorder %s236, %s252
      %p254 = scmp.eq.s32.totalorder %s24, 0
      %p255 = por %p253, %p254
      %p256 = scmp.le.s32.totalorder 1, %s18
      %p257 = scmp.lt.s32.totalorder %s18, 3
      %p258 = pnand %p256, %p257
      %p259 = pneg %p258
      // Predicated region
      $region9: #{transformer_encoder_forward.6} parent=5 // pred_check
        _
      $region10: #{transformer_encoder_forward.6} parent=5 // pred_check_branch
        %261 = sbr.rel (%p258) target = $region12
      $region11: #{transformer_encoder_forward.6} parent=5 // pred_region
        %s262 = ssub.s32 %s18, 1
        // Predicated region
        $region13: #{transformer_encoder_forward.6} parent=11 // pred_check
          %p263 = pneg %p65
        $region14: #{transformer_encoder_forward.6} parent=11 // pred_check_branch
          %265 = sbr.rel (%p263) target = $region16
        $region15: #{transformer_encoder_forward.6} parent=11 // pred_region
          %267 = vsyncadd [#allocation3], 0
          %s268 = sshll.u32 %s1, 4
          %s269 = int_to_ptr.hbm [resolvable:$true] %s268
          %s270 = sshll.u32 [#allocation2], 4
          %s271 = int_to_ptr.vmem [resolvable:$true] %s270
          %276 = dma.hbm_to_vmem [thread:$0]  %s269, 512, %s271, [#allocation3], 128, 128, 8
        $region16: #{transformer_encoder_forward.6} parent=11 // pred_fallthru
          _
        // Predicated region
        $region17: #{transformer_encoder_forward.6} parent=11 // pred_check
          %p277 = pneg %p86
        $region18: #{transformer_encoder_forward.6} parent=11 // pred_check_branch
          %279 = sbr.rel (%p277) target = $region20
        $region19: #{transformer_encoder_forward.6} parent=11 // pred_region
          %281 = vsyncadd [#allocation5], 0
          %s282 = sshll.u32 %s2, 4
          %s283 = int_to_ptr.hbm [resolvable:$true] %s282
          %s284 = sshll.u32 [#allocation4], 4
          %s285 = int_to_ptr.vmem [resolvable:$true] %s284
          %290 = dma.hbm_to_vmem [thread:$0]  %s283, 512, %s285, [#allocation5], 128, 128, 8
        $region20: #{transformer_encoder_forward.6} parent=11 // pred_fallthru
          _
        // Predicated region
        $region21: #{transformer_encoder_forward.6} parent=11 // pred_check
          %p291 = pneg %p107
        $region22: #{transformer_encoder_forward.6} parent=11 // pred_check_branch
          %293 = sbr.rel (%p291) target = $region24
        $region23: #{transformer_encoder_forward.6} parent=11 // pred_region
          %295 = vsyncadd [#allocation5], 0
          %s296 = sshll.u32 %s3, 4
          %s297 = int_to_ptr.hbm [resolvable:$true] %s296
          %s298 = sshll.u32 [#allocation6], 4
          %s299 = int_to_ptr.vmem [resolvable:$true] %s298
          %304 = dma.hbm_to_vmem [thread:$0]  %s297, 512, %s299, [#allocation5], 128, 128, 8
        $region24: #{transformer_encoder_forward.6} parent=11 // pred_fallthru
          _
        // Predicated region
        $region25: #{transformer_encoder_forward.6} parent=11 // pred_check
          %p305 = pneg %p128
        $region26: #{transformer_encoder_forward.6} parent=11 // pred_check_branch
          %307 = sbr.rel (%p305) target = $region28
        $region27: #{transformer_encoder_forward.6} parent=11 // pred_region
          _
        $region28: #{transformer_encoder_forward.6} parent=11 // pred_fallthru
          _
        // Predicated region
        $region29: #{transformer_encoder_forward.6} parent=11 // pred_check
          %p308 = pneg %p149
        $region30: #{transformer_encoder_forward.6} parent=11 // pred_check_branch
          %310 = sbr.rel (%p308) target = $region32
        $region31: #{transformer_encoder_forward.6} parent=11 // pred_region
          _
        $region32: #{transformer_encoder_forward.6} parent=11 // pred_fallthru
          _
        // Predicated region
        $region33: #{transformer_encoder_forward.6} parent=11 // pred_check
          %p311 = pneg %p170
        $region34: #{transformer_encoder_forward.6} parent=11 // pred_check_branch
          %313 = sbr.rel (%p311) target = $region36
        $region35: #{transformer_encoder_forward.6} parent=11 // pred_region
          _
        $region36: #{transformer_encoder_forward.6} parent=11 // pred_fallthru
          _
      $region12: #{transformer_encoder_forward.6} parent=5 // pred_fallthru
        _
      %p314 = scmp.lt.s32.totalorder %s18, 2
      // Predicated region
      $region37: #{transformer_encoder_forward.6} parent=5 // pred_check
        %p315 = pneg %p314
      $region38: #{transformer_encoder_forward.6} parent=5 // pred_check_branch
        %317 = sbr.rel (%p315) target = $region40
      $region39: #{transformer_encoder_forward.6} parent=5 // pred_region
        // Predicated region
        $region41: #{transformer_encoder_forward.6} parent=39 // pred_check
          %p318 = pneg %p38
        $region42: #{transformer_encoder_forward.6} parent=39 // pred_check_branch
          %320 = sbr.rel (%p318) target = $region44
        $region43: #{transformer_encoder_forward.6} parent=39 // pred_region
          %p321 = scmp.lt.s32.totalorder %s18, 1
          %s322 = scalar_select %p321, %s18, 1
          %s323 = smul.addr %s322, 8
          %s324 = scalar_lea.vmem %s0, %s323
        $region44: #{transformer_encoder_forward.6} parent=39 // pred_fallthru
          _
      $region40: #{transformer_encoder_forward.6} parent=5 // pred_fallthru
        _
      %p325 = scmp.le.s32.totalorder 1, %s18
      %p326 = scmp.lt.s32.totalorder %s18, 3
      %p327 = pnand %p325, %p326
      %p328 = pneg %p327
      // Predicated region
      $region45: #{transformer_encoder_forward.6} parent=5 // pred_check
        _
      $region46: #{transformer_encoder_forward.6} parent=5 // pred_check_branch
        %330 = sbr.rel (%p327) target = $region48
      $region47: #{transformer_encoder_forward.6} parent=5 // pred_region
        %s331 = ssub.s32 %s18, 1
        // Predicated region
        $region49: #{transformer_encoder_forward.6} parent=47 // pred_check
          %p332 = pneg %p65
        $region50: #{transformer_encoder_forward.6} parent=47 // pred_check_branch
          %334 = sbr.rel (%p332) target = $region52
        $region51: #{transformer_encoder_forward.6} parent=47 // pred_region
          %336 = dma.done [#allocation3], 512
        $region52: #{transformer_encoder_forward.6} parent=47 // pred_fallthru
          _
        // Predicated region
        $region53: #{transformer_encoder_forward.6} parent=47 // pred_check
          %p337 = pneg %p86
        $region54: #{transformer_encoder_forward.6} parent=47 // pred_check_branch
          %339 = sbr.rel (%p337) target = $region56
        $region55: #{transformer_encoder_forward.6} parent=47 // pred_region
          %341 = dma.done [#allocation5], 512
        $region56: #{transformer_encoder_forward.6} parent=47 // pred_fallthru
          _
        // Predicated region
        $region57: #{transformer_encoder_forward.6} parent=47 // pred_check
          %p342 = pneg %p107
        $region58: #{transformer_encoder_forward.6} parent=47 // pred_check_branch
          %344 = sbr.rel (%p342) target = $region60
        $region59: #{transformer_encoder_forward.6} parent=47 // pred_region
          %346 = dma.done [#allocation5], 512
        $region60: #{transformer_encoder_forward.6} parent=47 // pred_fallthru
          _
        %p347 = scmp.lt.s32.totalorder %s23, 1
        %s348 = scalar_select %p347, %s23, 1
        %s349 = smul.addr %s348, 8
        %s350 = scalar_lea.vmem %s0, %s349
        %p351 = pneg %p44
        %p352 = pneg %p41
        %p353 = pneg %p65
        %p354 = pneg %p62
        %p355 = pneg %p86
        %p356 = pneg %p83
        %p357 = pneg %p107
        %p358 = pneg %p104
        %p359 = pneg %p128
        %p360 = pneg %p125
        %p361 = pneg %p149
        %p362 = pneg %p146
        %p363 = pneg %p170
        %p364 = pneg %p167
        %p365 = pneg %p196
        %p366 = pneg %p193
        %p367 = scmp.lt.s32.totalorder %s23, 1
        %s368 = scalar_select %p367, %s23, 1
        %s369 = smul.addr %s368, 8
        %s370 = scalar_lea.vmem %s7, %s369
        %p371 = pneg %p222
        %p372 = pneg %p219
        %p373 = scmp.lt.s32.totalorder %s23, 1
        %s374 = scalar_select %p373, %s23, 1
        %s375 = smul.addr %s374, 8
        %s376 = scalar_lea.vmem %s8, %s375
        %p377 = pneg %p248
        %p378 = pneg %p245
        %p379 = scmp.lt.s32.totalorder %s23, 1
        %s380 = scalar_select %p379, %s23, 1
        %s381 = smul.addr %s380, 8
        %s382 = scalar_lea.vmem %s9, %s381
        %p383 = scmp.lt.s32.totalorder %s23, 1
        %s384 = scalar_select %p383, %s23, 1
        %s385 = smul.addr %s384, 8
        %s386 = scalar_lea.vmem %s0, %s385
        %p387 = scmp.lt.s32.totalorder %s23, 1
        %s388 = scalar_select %p387, %s23, 1
        %s389 = smul.addr %s388, 8
        %s390 = scalar_lea.vmem %s7, %s389
        %p391 = scmp.lt.s32.totalorder %s23, 1
        %s392 = scalar_select %p391, %s23, 1
        %s393 = smul.addr %s392, 8
        %s394 = scalar_lea.vmem %s8, %s393
        %p395 = scmp.lt.s32.totalorder %s23, 1
        %s396 = scalar_select %p395, %s23, 1
        %s397 = smul.addr %s396, 8
        %s398 = scalar_lea.vmem %s9, %s397
        %v399 = vld [vmem:[%s386] sm:$0xff]
        %v400 = vld [vmem:[#allocation2] sm:$0xff]
        %v401 = vld [vmem:[#allocation2 + $0x8] sm:$0xff]
        %v402 = vld [vmem:[#allocation2 + $0x10] sm:$0xff]
        %v403 = vld [vmem:[#allocation2 + $0x18] sm:$0xff]
        %v404 = vld [vmem:[%s4] sm:$0x1]
        %v406 = vperm.slane %v404, 0
        %vm408 = vcmask 261120
        %v410 = vsel %vm408, %v399, 0
        %412 = vmatpush.msra.mxu0 0.0
        %413 = vmatpush.msra.mxu0 0.0
        %414 = vmatpush.msra.mxu0 0.0
        %415 = vmatpush.msra.mxu0 0.0
        %416 = vmatpush.msra.mxu0 0.0
        %417 = vmatpush.msra.mxu0 0.0
        %418 = vmatpush.msra.mxu0 0.0
        %419 = vmatpush.msra.mxu0 0.0
        %420 = vmatpush.msra.mxu0 0.0
        %421 = vmatpush.msra.mxu0 0.0
        %422 = vmatpush.msra.mxu0 0.0
        %423 = vmatpush.msra.mxu0 0.0
        %424 = vmatpush.msra.mxu0 %v403
        %425 = vmatpush.msra.mxu0 %v402
        %426 = vmatpush.msra.mxu0 %v401
        %427 = vmatpush.msra.mxu0 %v400
        %428 = vmatmul.f32.gmra.mxu0 %v410
        %v429 = vpop.f32.mrf.mxu0
        %v430 = vadd.f32 %v406, %v429
        %431 = vdwg.mxu0
        %432 = vst.msk [vmem:[%s390] sm:$0xff] %vm408, %v430
        %v433 = vld [vmem:[#allocation4] sm:$0xff]
        %v434 = vld [vmem:[#allocation4 + $0x8] sm:$0xff]
        %v435 = vld [vmem:[#allocation4 + $0x10] sm:$0xff]
        %v436 = vld [vmem:[#allocation4 + $0x18] sm:$0xff]
        %v437 = vld [vmem:[%s5] sm:$0x1]
        %v439 = vperm.slane %v437, 0
        %441 = vmatpush.msra.mxu0 0.0
        %442 = vmatpush.msra.mxu0 0.0
        %443 = vmatpush.msra.mxu0 0.0
        %444 = vmatpush.msra.mxu0 0.0
        %445 = vmatpush.msra.mxu0 0.0
        %446 = vmatpush.msra.mxu0 0.0
        %447 = vmatpush.msra.mxu0 0.0
        %448 = vmatpush.msra.mxu0 0.0
        %449 = vmatpush.msra.mxu0 0.0
        %450 = vmatpush.msra.mxu0 0.0
        %451 = vmatpush.msra.mxu0 0.0
        %452 = vmatpush.msra.mxu0 0.0
        %453 = vmatpush.msra.mxu0 %v436
        %454 = vmatpush.msra.mxu0 %v435
        %455 = vmatpush.msra.mxu0 %v434
        %456 = vmatpush.msra.mxu0 %v433
        %457 = vmatmul.f32.gmra.mxu0 %v410
        %v458 = vpop.f32.mrf.mxu0
        %v459 = vadd.f32 %v439, %v458
        %460 = vdwg.mxu0
        %461 = vst.msk [vmem:[%s394] sm:$0xff] %vm408, %v459
        %v462 = vld [vmem:[#allocation6] sm:$0xff]
        %v463 = vld [vmem:[#allocation6 + $0x8] sm:$0xff]
        %v464 = vld [vmem:[#allocation6 + $0x10] sm:$0xff]
        %v465 = vld [vmem:[#allocation6 + $0x18] sm:$0xff]
        %v466 = vld [vmem:[%s6] sm:$0x1]
        %v468 = vperm.slane %v466, 0
        %470 = vmatpush.msra.mxu0 0.0
        %471 = vmatpush.msra.mxu0 0.0
        %472 = vmatpush.msra.mxu0 0.0
        %473 = vmatpush.msra.mxu0 0.0
        %474 = vmatpush.msra.mxu0 0.0
        %475 = vmatpush.msra.mxu0 0.0
        %476 = vmatpush.msra.mxu0 0.0
        %477 = vmatpush.msra.mxu0 0.0
        %478 = vmatpush.msra.mxu0 0.0
        %479 = vmatpush.msra.mxu0 0.0
        %480 = vmatpush.msra.mxu0 0.0
        %481 = vmatpush.msra.mxu0 0.0
        %482 = vmatpush.msra.mxu0 %v465
        %483 = vmatpush.msra.mxu0 %v464
        %484 = vmatpush.msra.mxu0 %v463
        %485 = vmatpush.msra.mxu0 %v462
        %486 = vmatmul.f32.gmra.mxu0 %v410
        %v487 = vpop.f32.mrf.mxu0
        %v488 = vadd.f32 %v468, %v487
        %489 = vdwg.mxu0
        %490 = vst.msk [vmem:[%s398] sm:$0xff] %vm408, %v488
        %p491 = scmp.lt.s32.totalorder %s23, 1
        %s492 = scalar_select %p491, %s23, 1
        %s493 = smul.addr %s492, 8
        %s494 = scalar_lea.vmem %s7, %s493
        %p495 = scmp.lt.s32.totalorder %s23, 1
        %s496 = scalar_select %p495, %s23, 1
        %s497 = smul.addr %s496, 8
        %s498 = scalar_lea.vmem %s8, %s497
        %p499 = scmp.lt.s32.totalorder %s23, 1
        %s500 = scalar_select %p499, %s23, 1
        %s501 = smul.addr %s500, 8
        %s502 = scalar_lea.vmem %s9, %s501
        // Predicated region
        $region61: #{transformer_encoder_forward.6} parent=47 // pred_check
          %p503 = pneg %p193
        $region62: #{transformer_encoder_forward.6} parent=47 // pred_check_branch
          %505 = sbr.rel (%p503) target = $region64
        $region63: #{transformer_encoder_forward.6} parent=47 // pred_region
          _
        $region64: #{transformer_encoder_forward.6} parent=47 // pred_fallthru
          _
        // Predicated region
        $region65: #{transformer_encoder_forward.6} parent=47 // pred_check
          %p506 = pneg %p219
        $region66: #{transformer_encoder_forward.6} parent=47 // pred_check_branch
          %508 = sbr.rel (%p506) target = $region68
        $region67: #{transformer_encoder_forward.6} parent=47 // pred_region
          _
        $region68: #{transformer_encoder_forward.6} parent=47 // pred_fallthru
          _
        // Predicated region
        $region69: #{transformer_encoder_forward.6} parent=47 // pred_check
          %p509 = pneg %p245
        $region70: #{transformer_encoder_forward.6} parent=47 // pred_check_branch
          %511 = sbr.rel (%p509) target = $region72
        $region71: #{transformer_encoder_forward.6} parent=47 // pred_region
          _
        $region72: #{transformer_encoder_forward.6} parent=47 // pred_fallthru
          _
      $region48: #{transformer_encoder_forward.6} parent=5 // pred_fallthru
        _
      %p512 = scmp.le.s32.totalorder 2, %s18
      // Predicated region
      $region73: #{transformer_encoder_forward.6} parent=5 // pred_check
        %p513 = pneg %p512
      $region74: #{transformer_encoder_forward.6} parent=5 // pred_check_branch
        %515 = sbr.rel (%p513) target = $region76
      $region75: #{transformer_encoder_forward.6} parent=5 // pred_region
        %s516 = ssub.s32 %s18, 2
        // Predicated region
        $region77: #{transformer_encoder_forward.6} parent=75 // pred_check
          %p517 = pneg %p199
        $region78: #{transformer_encoder_forward.6} parent=75 // pred_check_branch
          %519 = sbr.rel (%p517) target = $region80
        $region79: #{transformer_encoder_forward.6} parent=75 // pred_region
          %p520 = scmp.lt.s32.totalorder %s24, 1
          %s521 = scalar_select %p520, %s24, 1
          %s522 = smul.addr %s521, 8
          %s523 = scalar_lea.vmem %s7, %s522
        $region80: #{transformer_encoder_forward.6} parent=75 // pred_fallthru
          _
        // Predicated region
        $region81: #{transformer_encoder_forward.6} parent=75 // pred_check
          %p524 = pneg %p225
        $region82: #{transformer_encoder_forward.6} parent=75 // pred_check_branch
          %526 = sbr.rel (%p524) target = $region84
        $region83: #{transformer_encoder_forward.6} parent=75 // pred_region
          %p527 = scmp.lt.s32.totalorder %s24, 1
          %s528 = scalar_select %p527, %s24, 1
          %s529 = smul.addr %s528, 8
          %s530 = scalar_lea.vmem %s8, %s529
        $region84: #{transformer_encoder_forward.6} parent=75 // pred_fallthru
          _
        // Predicated region
        $region85: #{transformer_encoder_forward.6} parent=75 // pred_check
          %p531 = pneg %p251
        $region86: #{transformer_encoder_forward.6} parent=75 // pred_check_branch
          %533 = sbr.rel (%p531) target = $region88
        $region87: #{transformer_encoder_forward.6} parent=75 // pred_region
          %p534 = scmp.lt.s32.totalorder %s24, 1
          %s535 = scalar_select %p534, %s24, 1
          %s536 = smul.addr %s535, 8
          %s537 = scalar_lea.vmem %s9, %s536
        $region88: #{transformer_encoder_forward.6} parent=75 // pred_fallthru
          _
      $region76: #{transformer_encoder_forward.6} parent=5 // pred_fallthru
        _
    $region6: #{transformer_encoder_forward.6} parent=1 // loop_footer
      %s22 = sadd.s32 1, %s18
    $region7: #{transformer_encoder_forward.6} parent=1 // loop_footer_branch
      %17 = sbr.rel target = $region3
    $region8: #{transformer_encoder_forward.6} parent=1 // loop_exit
      _
    %538 = vsyncpa [#allocation3], 1
    %s539 = scalar_lea.sflag [#allocation3], 1
    %540 = vsyncpa %s539, 1
    %541 = vsyncpa [#allocation5], 1

// kernel: transformer_encoder_forward.9
$region0: #{transformer_encoder_forward.9}
  #allocation0 [shape = 'u32[]', space=smem, size = 0x4, offset = 0x4, fixed_abs, tag = 'smem constant byte address 0x4 - core index']
  #allocation1 [shape = 'u32[72,128]{1,0:T(1,128)}', space=vmem, size = 0x9000, scoped, tag = 'internal scratch']
  %s0 = inlined_call_operand.vmem [shape: f32[2,8,32], index: 0, kind: input, shape index: {}]
  %s1 = inlined_call_operand.vmem [shape: f32[32,32], index: 1, kind: input, shape index: {}]
  %s2 = inlined_call_operand.vmem [shape: f32[32,32], index: 2, kind: input, shape index: {}]
  %s3 = inlined_call_operand.vmem [shape: f32[32,32], index: 3, kind: input, shape index: {}]
  %s4 = inlined_call_operand.vmem [shape: f32[1,32], index: 4, kind: input, shape index: {}]
  %s5 = inlined_call_operand.vmem [shape: f32[1,32], index: 5, kind: input, shape index: {}]
  %s6 = inlined_call_operand.vmem [shape: f32[1,32], index: 6, kind: input, shape index: {}]
  %s7 = inlined_call_operand.vmem [shape: f32[2,8,32], index: 7, kind: output, shape index: {0}]
  %s8 = inlined_call_operand.vmem [shape: f32[2,8,32], index: 8, kind: output, shape index: {1}]
  %s9 = inlined_call_operand.vmem [shape: f32[2,8,32], index: 9, kind: output, shape index: {2}]
  %10 = xla_tuple %s7, %s8, %s9
  %s11 = sld [smem:[#allocation0]]
  $region77: #{transformer_encoder_forward.9} parent=0
    _
  %s13 = ssub.s32 1, %s11
  %s14 = scalar_select 0, %s13, %s11
  loop: start=0, step=1, limit=4
  $region2: #{transformer_encoder_forward.9} parent=0 // loop_pre_header
    _
  $region3: #{transformer_encoder_forward.9} parent=0 // loop_header
    %s16 = sphi 0, %s20
    %p17 = scmp.ge.s32.totalorder %s16, 4
    %s26 = sphi 0, %s28
    %s29 = sphi 0, %s26
    %s30 = sphi 0, %s29
    %s46 = sphi 0, %s30
    %s50 = sphi 0, %s50
    %s52 = sphi 0, %s50
    %s53 = sphi 0, %s52
    %s67 = sphi 0, %s53
    %s71 = sphi 0, %s71
    %s73 = sphi 0, %s71
    %s74 = sphi 0, %s73
    %s88 = sphi 0, %s74
    %s92 = sphi 0, %s92
    %s94 = sphi 0, %s92
    %s95 = sphi 0, %s94
    %s109 = sphi 0, %s95
    %s113 = sphi 0, %s113
    %s115 = sphi 0, %s113
    %s116 = sphi 0, %s115
    %s130 = sphi 0, %s116
    %s134 = sphi 0, %s134
    %s136 = sphi 0, %s134
    %s137 = sphi 0, %s136
    %s151 = sphi 0, %s137
    %s155 = sphi 0, %s155
    %s157 = sphi 0, %s155
    %s158 = sphi 0, %s157
    %s172 = sphi 0, %s158
    %s178 = sphi 0, %s180
    %s181 = sphi 0, %s178
    %s182 = sphi 0, %s181
    %s198 = sphi 0, %s182
    %s204 = sphi 0, %s206
    %s207 = sphi 0, %s204
    %s208 = sphi 0, %s207
    %s224 = sphi 0, %s208
    %s230 = sphi 0, %s232
    %s233 = sphi 0, %s230
    %s234 = sphi 0, %s233
    %s250 = sphi 0, %s234
  $region4: #{transformer_encoder_forward.9} parent=0 // loop_header_branch
    %19 = sbr.rel (%p17) target = $region8
  $region5: #{transformer_encoder_forward.9} parent=0 // loop_body
    %s21 = ssub.s32 %s16, 1
    %s22 = ssub.s32 %s16, 2
    %s23 = sadd.s32 %s16, 1
    %s24 = ssub.s32 %s16, %s23
    %p25 = scmp.eq.s32.totalorder %s24, 0
    %s27 = sadd.s32 %s26, 1
    %s28 = scalar_select %p25, %s26, %s27
    %p31 = pneg %p25
    %p32 = scmp.eq.s32.totalorder %s16, 1
    %p33 = por %p31, %p32
    %p34 = scmp.ne.s32.totalorder %s26, %s29
    %p35 = scmp.eq.s32.totalorder %s16, 0
    %p36 = por %p34, %p35
    %p37 = scmp.ne.s32.totalorder %s26, %s29
    %p38 = scmp.eq.s32.totalorder %s21, 1
    %p39 = por %p37, %p38
    %p40 = scmp.ne.s32.totalorder %s29, %s30
    %p41 = scmp.eq.s32.totalorder %s21, 0
    %p42 = por %p40, %p41
    %p43 = scmp.ne.s32.totalorder %s29, %s30
    %p44 = scmp.eq.s32.totalorder %s22, 1
    %p45 = por %p43, %p44
    %p47 = scmp.ne.s32.totalorder %s30, %s46
    %p48 = scmp.eq.s32.totalorder %s22, 0
    %p49 = por %p47, %p48
    %s51 = sadd.s32 %s50, 1
    %p54 = scmp.eq.s32.totalorder %s16, 1
    %p55 = scmp.ne.s32.totalorder %s50, %s52
    %p56 = scmp.eq.s32.totalorder %s16, 0
    %p57 = por %p55, %p56
    %p58 = scmp.ne.s32.totalorder %s50, %s52
    %p59 = scmp.eq.s32.totalorder %s21, 1
    %p60 = por %p58, %p59
    %p61 = scmp.ne.s32.totalorder %s52, %s53
    %p62 = scmp.eq.s32.totalorder %s21, 0
    %p63 = por %p61, %p62
    %p64 = scmp.ne.s32.totalorder %s52, %s53
    %p65 = scmp.eq.s32.totalorder %s22, 1
    %p66 = por %p64, %p65
    %p68 = scmp.ne.s32.totalorder %s53, %s67
    %p69 = scmp.eq.s32.totalorder %s22, 0
    %p70 = por %p68, %p69
    %s72 = sadd.s32 %s71, 1
    %p75 = scmp.eq.s32.totalorder %s16, 1
    %p76 = scmp.ne.s32.totalorder %s71, %s73
    %p77 = scmp.eq.s32.totalorder %s16, 0
    %p78 = por %p76, %p77
    %p79 = scmp.ne.s32.totalorder %s71, %s73
    %p80 = scmp.eq.s32.totalorder %s21, 1
    %p81 = por %p79, %p80
    %p82 = scmp.ne.s32.totalorder %s73, %s74
    %p83 = scmp.eq.s32.totalorder %s21, 0
    %p84 = por %p82, %p83
    %p85 = scmp.ne.s32.totalorder %s73, %s74
    %p86 = scmp.eq.s32.totalorder %s22, 1
    %p87 = por %p85, %p86
    %p89 = scmp.ne.s32.totalorder %s74, %s88
    %p90 = scmp.eq.s32.totalorder %s22, 0
    %p91 = por %p89, %p90
    %s93 = sadd.s32 %s92, 1
    %p96 = scmp.eq.s32.totalorder %s16, 1
    %p97 = scmp.ne.s32.totalorder %s92, %s94
    %p98 = scmp.eq.s32.totalorder %s16, 0
    %p99 = por %p97, %p98
    %p100 = scmp.ne.s32.totalorder %s92, %s94
    %p101 = scmp.eq.s32.totalorder %s21, 1
    %p102 = por %p100, %p101
    %p103 = scmp.ne.s32.totalorder %s94, %s95
    %p104 = scmp.eq.s32.totalorder %s21, 0
    %p105 = por %p103, %p104
    %p106 = scmp.ne.s32.totalorder %s94, %s95
    %p107 = scmp.eq.s32.totalorder %s22, 1
    %p108 = por %p106, %p107
    %p110 = scmp.ne.s32.totalorder %s95, %s109
    %p111 = scmp.eq.s32.totalorder %s22, 0
    %p112 = por %p110, %p111
    %s114 = sadd.s32 %s113, 1
    %p117 = scmp.eq.s32.totalorder %s16, 1
    %p118 = scmp.ne.s32.totalorder %s113, %s115
    %p119 = scmp.eq.s32.totalorder %s16, 0
    %p120 = por %p118, %p119
    %p121 = scmp.ne.s32.totalorder %s113, %s115
    %p122 = scmp.eq.s32.totalorder %s21, 1
    %p123 = por %p121, %p122
    %p124 = scmp.ne.s32.totalorder %s115, %s116
    %p125 = scmp.eq.s32.totalorder %s21, 0
    %p126 = por %p124, %p125
    %p127 = scmp.ne.s32.totalorder %s115, %s116
    %p128 = scmp.eq.s32.totalorder %s22, 1
    %p129 = por %p127, %p128
    %p131 = scmp.ne.s32.totalorder %s116, %s130
    %p132 = scmp.eq.s32.totalorder %s22, 0
    %p133 = por %p131, %p132
    %s135 = sadd.s32 %s134, 1
    %p138 = scmp.eq.s32.totalorder %s16, 1
    %p139 = scmp.ne.s32.totalorder %s134, %s136
    %p140 = scmp.eq.s32.totalorder %s16, 0
    %p141 = por %p139, %p140
    %p142 = scmp.ne.s32.totalorder %s134, %s136
    %p143 = scmp.eq.s32.totalorder %s21, 1
    %p144 = por %p142, %p143
    %p145 = scmp.ne.s32.totalorder %s136, %s137
    %p146 = scmp.eq.s32.totalorder %s21, 0
    %p147 = por %p145, %p146
    %p148 = scmp.ne.s32.totalorder %s136, %s137
    %p149 = scmp.eq.s32.totalorder %s22, 1
    %p150 = por %p148, %p149
    %p152 = scmp.ne.s32.totalorder %s137, %s151
    %p153 = scmp.eq.s32.totalorder %s22, 0
    %p154 = por %p152, %p153
    %s156 = sadd.s32 %s155, 1
    %p159 = scmp.eq.s32.totalorder %s16, 1
    %p160 = scmp.ne.s32.totalorder %s155, %s157
    %p161 = scmp.eq.s32.totalorder %s16, 0
    %p162 = por %p160, %p161
    %p163 = scmp.ne.s32.totalorder %s155, %s157
    %p164 = scmp.eq.s32.totalorder %s21, 1
    %p165 = por %p163, %p164
    %p166 = scmp.ne.s32.totalorder %s157, %s158
    %p167 = scmp.eq.s32.totalorder %s21, 0
    %p168 = por %p166, %p167
    %p169 = scmp.ne.s32.totalorder %s157, %s158
    %p170 = scmp.eq.s32.totalorder %s22, 1
    %p171 = por %p169, %p170
    %p173 = scmp.ne.s32.totalorder %s158, %s172
    %p174 = scmp.eq.s32.totalorder %s22, 0
    %p175 = por %p173, %p174
    %s176 = ssub.s32 %s16, %s23
    %p177 = scmp.eq.s32.totalorder %s176, 0
    %s179 = sadd.s32 %s178, 1
    %s180 = scalar_select %p177, %s178, %s179
    %p183 = pneg %p177
    %p184 = scmp.eq.s32.totalorder %s16, 1
    %p185 = por %p183, %p184
    %p186 = scmp.ne.s32.totalorder %s178, %s181
    %p187 = scmp.eq.s32.totalorder %s16, 0
    %p188 = por %p186, %p187
    %p189 = scmp.ne.s32.totalorder %s178, %s181
    %p190 = scmp.eq.s32.totalorder %s21, 1
    %p191 = por %p189, %p190
    %p192 = scmp.ne.s32.totalorder %s181, %s182
    %p193 = scmp.eq.s32.totalorder %s21, 0
    %p194 = por %p192, %p193
    %p195 = scmp.ne.s32.totalorder %s181, %s182
    %p196 = scmp.eq.s32.totalorder %s22, 1
    %p197 = por %p195, %p196
    %p199 = scmp.ne.s32.totalorder %s182, %s198
    %p200 = scmp.eq.s32.totalorder %s22, 0
    %p201 = por %p199, %p200
    %s202 = ssub.s32 %s16, %s23
    %p203 = scmp.eq.s32.totalorder %s202, 0
    %s205 = sadd.s32 %s204, 1
    %s206 = scalar_select %p203, %s204, %s205
    %p209 = pneg %p203
    %p210 = scmp.eq.s32.totalorder %s16, 1
    %p211 = por %p209, %p210
    %p212 = scmp.ne.s32.totalorder %s204, %s207
    %p213 = scmp.eq.s32.totalorder %s16, 0
    %p214 = por %p212, %p213
    %p215 = scmp.ne.s32.totalorder %s204, %s207
    %p216 = scmp.eq.s32.totalorder %s21, 1
    %p217 = por %p215, %p216
    %p218 = scmp.ne.s32.totalorder %s207, %s208
    %p219 = scmp.eq.s32.totalorder %s21, 0
    %p220 = por %p218, %p219
    %p221 = scmp.ne.s32.totalorder %s207, %s208
    %p222 = scmp.eq.s32.totalorder %s22, 1
    %p223 = por %p221, %p222
    %p225 = scmp.ne.s32.totalorder %s208, %s224
    %p226 = scmp.eq.s32.totalorder %s22, 0
    %p227 = por %p225, %p226
    %s228 = ssub.s32 %s16, %s23
    %p229 = scmp.eq.s32.totalorder %s228, 0
    %s231 = sadd.s32 %s230, 1
    %s232 = scalar_select %p229, %s230, %s231
    %p235 = pneg %p229
    %p236 = scmp.eq.s32.totalorder %s16, 1
    %p237 = por %p235, %p236
    %p238 = scmp.ne.s32.totalorder %s230, %s233
    %p239 = scmp.eq.s32.totalorder %s16, 0
    %p240 = por %p238, %p239
    %p241 = scmp.ne.s32.totalorder %s230, %s233
    %p242 = scmp.eq.s32.totalorder %s21, 1
    %p243 = por %p241, %p242
    %p244 = scmp.ne.s32.totalorder %s233, %s234
    %p245 = scmp.eq.s32.totalorder %s21, 0
    %p246 = por %p244, %p245
    %p247 = scmp.ne.s32.totalorder %s233, %s234
    %p248 = scmp.eq.s32.totalorder %s22, 1
    %p249 = por %p247, %p248
    %p251 = scmp.ne.s32.totalorder %s234, %s250
    %p252 = scmp.eq.s32.totalorder %s22, 0
    %p253 = por %p251, %p252
    %p254 = scmp.le.s32.totalorder 1, %s16
    %p255 = scmp.lt.s32.totalorder %s16, 3
    %p256 = pnand %p254, %p255
    %p257 = pneg %p256
    // Predicated region
    $region9: #{transformer_encoder_forward.9} parent=5 // pred_check
      _
    $region10: #{transformer_encoder_forward.9} parent=5 // pred_check_branch
      %259 = sbr.rel (%p256) target = $region12
    $region11: #{transformer_encoder_forward.9} parent=5 // pred_region
      %s260 = ssub.s32 %s16, 1
      // Predicated region
      $region13: #{transformer_encoder_forward.9} parent=11 // pred_check
        %p261 = pneg %p63
      $region14: #{transformer_encoder_forward.9} parent=11 // pred_check_branch
        %263 = sbr.rel (%p261) target = $region16
      $region15: #{transformer_encoder_forward.9} parent=11 // pred_region
        _
      $region16: #{transformer_encoder_forward.9} parent=11 // pred_fallthru
        _
      // Predicated region
      $region17: #{transformer_encoder_forward.9} parent=11 // pred_check
        %p264 = pneg %p84
      $region18: #{transformer_encoder_forward.9} parent=11 // pred_check_branch
        %266 = sbr.rel (%p264) target = $region20
      $region19: #{transformer_encoder_forward.9} parent=11 // pred_region
        _
      $region20: #{transformer_encoder_forward.9} parent=11 // pred_fallthru
        _
      // Predicated region
      $region21: #{transformer_encoder_forward.9} parent=11 // pred_check
        %p267 = pneg %p105
      $region22: #{transformer_encoder_forward.9} parent=11 // pred_check_branch
        %269 = sbr.rel (%p267) target = $region24
      $region23: #{transformer_encoder_forward.9} parent=11 // pred_region
        _
      $region24: #{transformer_encoder_forward.9} parent=11 // pred_fallthru
        _
      // Predicated region
      $region25: #{transformer_encoder_forward.9} parent=11 // pred_check
        %p270 = pneg %p126
      $region26: #{transformer_encoder_forward.9} parent=11 // pred_check_branch
        %272 = sbr.rel (%p270) target = $region28
      $region27: #{transformer_encoder_forward.9} parent=11 // pred_region
        _
      $region28: #{transformer_encoder_forward.9} parent=11 // pred_fallthru
        _
      // Predicated region
      $region29: #{transformer_encoder_forward.9} parent=11 // pred_check
        %p273 = pneg %p147
      $region30: #{transformer_encoder_forward.9} parent=11 // pred_check_branch
        %275 = sbr.rel (%p273) target = $region32
      $region31: #{transformer_encoder_forward.9} parent=11 // pred_region
        _
      $region32: #{transformer_encoder_forward.9} parent=11 // pred_fallthru
        _
      // Predicated region
      $region33: #{transformer_encoder_forward.9} parent=11 // pred_check
        %p276 = pneg %p168
      $region34: #{transformer_encoder_forward.9} parent=11 // pred_check_branch
        %278 = sbr.rel (%p276) target = $region36
      $region35: #{transformer_encoder_forward.9} parent=11 // pred_region
        _
      $region36: #{transformer_encoder_forward.9} parent=11 // pred_fallthru
        _
    $region12: #{transformer_encoder_forward.9} parent=5 // pred_fallthru
      _
    %p279 = scmp.lt.s32.totalorder %s16, 2
    // Predicated region
    $region37: #{transformer_encoder_forward.9} parent=5 // pred_check
      %p280 = pneg %p279
    $region38: #{transformer_encoder_forward.9} parent=5 // pred_check_branch
      %282 = sbr.rel (%p280) target = $region40
    $region39: #{transformer_encoder_forward.9} parent=5 // pred_region
      // Predicated region
      $region41: #{transformer_encoder_forward.9} parent=39 // pred_check
        %p283 = pneg %p36
      $region42: #{transformer_encoder_forward.9} parent=39 // pred_check_branch
        %285 = sbr.rel (%p283) target = $region44
      $region43: #{transformer_encoder_forward.9} parent=39 // pred_region
        %p286 = scmp.lt.s32.totalorder %s16, 1
        %s287 = scalar_select %p286, %s16, 1
        %s288 = smul.addr %s287, 8
        %s289 = scalar_lea.vmem %s0, %s288
      $region44: #{transformer_encoder_forward.9} parent=39 // pred_fallthru
        _
    $region40: #{transformer_encoder_forward.9} parent=5 // pred_fallthru
      _
    %p290 = scmp.le.s32.totalorder 1, %s16
    %p291 = scmp.lt.s32.totalorder %s16, 3
    %p292 = pnand %p290, %p291
    %p293 = pneg %p292
    // Predicated region
    $region45: #{transformer_encoder_forward.9} parent=5 // pred_check
      _
    $region46: #{transformer_encoder_forward.9} parent=5 // pred_check_branch
      %295 = sbr.rel (%p292) target = $region48
    $region47: #{transformer_encoder_forward.9} parent=5 // pred_region
      %s296 = ssub.s32 %s16, 1
      %p297 = scmp.lt.s32.totalorder %s21, 1
      %s298 = scalar_select %p297, %s21, 1
      %s299 = smul.addr %s298, 8
      %s300 = scalar_lea.vmem %s0, %s299
      %p301 = pneg %p42
      %p302 = pneg %p39
      %p303 = pneg %p63
      %p304 = pneg %p60
      %p305 = pneg %p84
      %p306 = pneg %p81
      %p307 = pneg %p105
      %p308 = pneg %p102
      %p309 = pneg %p126
      %p310 = pneg %p123
      %p311 = pneg %p147
      %p312 = pneg %p144
      %p313 = pneg %p168
      %p314 = pneg %p165
      %p315 = pneg %p194
      %p316 = pneg %p191
      %p317 = scmp.lt.s32.totalorder %s21, 1
      %s318 = scalar_select %p317, %s21, 1
      %s319 = smul.addr %s318, 8
      %s320 = scalar_lea.vmem %s7, %s319
      %p321 = pneg %p220
      %p322 = pneg %p217
      %p323 = scmp.lt.s32.totalorder %s21, 1
      %s324 = scalar_select %p323, %s21, 1
      %s325 = smul.addr %s324, 8
      %s326 = scalar_lea.vmem %s8, %s325
      %p327 = pneg %p246
      %p328 = pneg %p243
      %p329 = scmp.lt.s32.totalorder %s21, 1
      %s330 = scalar_select %p329, %s21, 1
      %s331 = smul.addr %s330, 8
      %s332 = scalar_lea.vmem %s9, %s331
      %p333 = scmp.lt.s32.totalorder %s21, 1
      %s334 = scalar_select %p333, %s21, 1
      %s335 = smul.addr %s334, 8
      %s336 = scalar_lea.vmem %s0, %s335
      %p337 = scmp.lt.s32.totalorder %s21, 1
      %s338 = scalar_select %p337, %s21, 1
      %s339 = smul.addr %s338, 8
      %s340 = scalar_lea.vmem %s7, %s339
      %p341 = scmp.lt.s32.totalorder %s21, 1
      %s342 = scalar_select %p341, %s21, 1
      %s343 = smul.addr %s342, 8
      %s344 = scalar_lea.vmem %s8, %s343
      %p345 = scmp.lt.s32.totalorder %s21, 1
      %s346 = scalar_select %p345, %s21, 1
      %s347 = smul.addr %s346, 8
      %s348 = scalar_lea.vmem %s9, %s347
      %v349 = vld [vmem:[%s336] sm:$0xff]
      %v350 = vld [vmem:[%s1] sm:$0xff]
      %v351 = vld [vmem:[%s1 + $0x8] sm:$0xff]
      %v352 = vld [vmem:[%s1 + $0x10] sm:$0xff]
      %v353 = vld [vmem:[%s1 + $0x18] sm:$0xff]
      %v354 = vld [vmem:[%s4] sm:$0x1]
      %v356 = vperm.slane %v354, 0
      %vm358 = vcmask 261120
      %v360 = vsel %vm358, %v349, 0
      %362 = vmatpush.msra.mxu0 0.0
      %363 = vmatpush.msra.mxu0 0.0
      %364 = vmatpush.msra.mxu0 0.0
      %365 = vmatpush.msra.mxu0 0.0
      %366 = vmatpush.msra.mxu0 0.0
      %367 = vmatpush.msra.mxu0 0.0
      %368 = vmatpush.msra.mxu0 0.0
      %369 = vmatpush.msra.mxu0 0.0
      %370 = vmatpush.msra.mxu0 0.0
      %371 = vmatpush.msra.mxu0 0.0
      %372 = vmatpush.msra.mxu0 0.0
      %373 = vmatpush.msra.mxu0 0.0
      %374 = vmatpush.msra.mxu0 %v353
      %375 = vmatpush.msra.mxu0 %v352
      %376 = vmatpush.msra.mxu0 %v351
      %377 = vmatpush.msra.mxu0 %v350
      %378 = vmatmul.f32.gmra.mxu0 %v360
      %v379 = vpop.f32.mrf.mxu0
      %v380 = vadd.f32 %v356, %v379
      %381 = vdwg.mxu0
      %382 = vst.msk [vmem:[%s340] sm:$0xff] %vm358, %v380
      %v383 = vld [vmem:[%s2] sm:$0xff]
      %v384 = vld [vmem:[%s2 + $0x8] sm:$0xff]
      %v385 = vld [vmem:[%s2 + $0x10] sm:$0xff]
      %v386 = vld [vmem:[%s2 + $0x18] sm:$0xff]
      %v387 = vld [vmem:[%s5] sm:$0x1]
      %v389 = vperm.slane %v387, 0
      %391 = vmatpush.msra.mxu0 0.0
      %392 = vmatpush.msra.mxu0 0.0
      %393 = vmatpush.msra.mxu0 0.0
      %394 = vmatpush.msra.mxu0 0.0
      %395 = vmatpush.msra.mxu0 0.0
      %396 = vmatpush.msra.mxu0 0.0
      %397 = vmatpush.msra.mxu0 0.0
      %398 = vmatpush.msra.mxu0 0.0
      %399 = vmatpush.msra.mxu0 0.0
      %400 = vmatpush.msra.mxu0 0.0
      %401 = vmatpush.msra.mxu0 0.0
      %402 = vmatpush.msra.mxu0 0.0
      %403 = vmatpush.msra.mxu0 %v386
      %404 = vmatpush.msra.mxu0 %v385
      %405 = vmatpush.msra.mxu0 %v384
      %406 = vmatpush.msra.mxu0 %v383
      %407 = vmatmul.f32.gmra.mxu0 %v360
      %v408 = vpop.f32.mrf.mxu0
      %v409 = vadd.f32 %v389, %v408
      %410 = vdwg.mxu0
      %411 = vst.msk [vmem:[%s344] sm:$0xff] %vm358, %v409
      %v412 = vld [vmem:[%s3] sm:$0xff]
      %v413 = vld [vmem:[%s3 + $0x8] sm:$0xff]
      %v414 = vld [vmem:[%s3 + $0x10] sm:$0xff]
      %v415 = vld [vmem:[%s3 + $0x18] sm:$0xff]
      %v416 = vld [vmem:[%s6] sm:$0x1]
      %v418 = vperm.slane %v416, 0
      %420 = vmatpush.msra.mxu0 0.0
      %421 = vmatpush.msra.mxu0 0.0
      %422 = vmatpush.msra.mxu0 0.0
      %423 = vmatpush.msra.mxu0 0.0
      %424 = vmatpush.msra.mxu0 0.0
      %425 = vmatpush.msra.mxu0 0.0
      %426 = vmatpush.msra.mxu0 0.0
      %427 = vmatpush.msra.mxu0 0.0
      %428 = vmatpush.msra.mxu0 0.0
      %429 = vmatpush.msra.mxu0 0.0
      %430 = vmatpush.msra.mxu0 0.0
      %431 = vmatpush.msra.mxu0 0.0
      %432 = vmatpush.msra.mxu0 %v415
      %433 = vmatpush.msra.mxu0 %v414
      %434 = vmatpush.msra.mxu0 %v413
      %435 = vmatpush.msra.mxu0 %v412
      %436 = vmatmul.f32.gmra.mxu0 %v360
      %v437 = vpop.f32.mrf.mxu0
      %v438 = vadd.f32 %v418, %v437
      %439 = vdwg.mxu0
      %440 = vst.msk [vmem:[%s348] sm:$0xff] %vm358, %v438
      %p441 = scmp.lt.s32.totalorder %s21, 1
      %s442 = scalar_select %p441, %s21, 1
      %s443 = smul.addr %s442, 8
      %s444 = scalar_lea.vmem %s7, %s443
      %p445 = scmp.lt.s32.totalorder %s21, 1
      %s446 = scalar_select %p445, %s21, 1
      %s447 = smul.addr %s446, 8
      %s448 = scalar_lea.vmem %s8, %s447
      %p449 = scmp.lt.s32.totalorder %s21, 1
      %s450 = scalar_select %p449, %s21, 1
      %s451 = smul.addr %s450, 8
      %s452 = scalar_lea.vmem %s9, %s451
      // Predicated region
      $region49: #{transformer_encoder_forward.9} parent=47 // pred_check
        %p453 = pneg %p191
      $region50: #{transformer_encoder_forward.9} parent=47 // pred_check_branch
        %455 = sbr.rel (%p453) target = $region52
      $region51: #{transformer_encoder_forward.9} parent=47 // pred_region
        _
      $region52: #{transformer_encoder_forward.9} parent=47 // pred_fallthru
        _
      // Predicated region
      $region53: #{transformer_encoder_forward.9} parent=47 // pred_check
        %p456 = pneg %p217
      $region54: #{transformer_encoder_forward.9} parent=47 // pred_check_branch
        %458 = sbr.rel (%p456) target = $region56
      $region55: #{transformer_encoder_forward.9} parent=47 // pred_region
        _
      $region56: #{transformer_encoder_forward.9} parent=47 // pred_fallthru
        _
      // Predicated region
      $region57: #{transformer_encoder_forward.9} parent=47 // pred_check
        %p459 = pneg %p243
      $region58: #{transformer_encoder_forward.9} parent=47 // pred_check_branch
        %461 = sbr.rel (%p459) target = $region60
      $region59: #{transformer_encoder_forward.9} parent=47 // pred_region
        _
      $region60: #{transformer_encoder_forward.9} parent=47 // pred_fallthru
        _
    $region48: #{transformer_encoder_forward.9} parent=5 // pred_fallthru
      _
    %p462 = scmp.le.s32.totalorder 2, %s16
    // Predicated region
    $region61: #{transformer_encoder_forward.9} parent=5 // pred_check
      %p463 = pneg %p462
    $region62: #{transformer_encoder_forward.9} parent=5 // pred_check_branch
      %465 = sbr.rel (%p463) target = $region64
    $region63: #{transformer_encoder_forward.9} parent=5 // pred_region
      %s466 = ssub.s32 %s16, 2
      // Predicated region
      $region65: #{transformer_encoder_forward.9} parent=63 // pred_check
        %p467 = pneg %p197
      $region66: #{transformer_encoder_forward.9} parent=63 // pred_check_branch
        %469 = sbr.rel (%p467) target = $region68
      $region67: #{transformer_encoder_forward.9} parent=63 // pred_region
        %p470 = scmp.lt.s32.totalorder %s22, 1
        %s471 = scalar_select %p470, %s22, 1
        %s472 = smul.addr %s471, 8
        %s473 = scalar_lea.vmem %s7, %s472
      $region68: #{transformer_encoder_forward.9} parent=63 // pred_fallthru
        _
      // Predicated region
      $region69: #{transformer_encoder_forward.9} parent=63 // pred_check
        %p474 = pneg %p223
      $region70: #{transformer_encoder_forward.9} parent=63 // pred_check_branch
        %476 = sbr.rel (%p474) target = $region72
      $region71: #{transformer_encoder_forward.9} parent=63 // pred_region
        %p477 = scmp.lt.s32.totalorder %s22, 1
        %s478 = scalar_select %p477, %s22, 1
        %s479 = smul.addr %s478, 8
        %s480 = scalar_lea.vmem %s8, %s479
      $region72: #{transformer_encoder_forward.9} parent=63 // pred_fallthru
        _
      // Predicated region
      $region73: #{transformer_encoder_forward.9} parent=63 // pred_check
        %p481 = pneg %p249
      $region74: #{transformer_encoder_forward.9} parent=63 // pred_check_branch
        %483 = sbr.rel (%p481) target = $region76
      $region75: #{transformer_encoder_forward.9} parent=63 // pred_region
        %p484 = scmp.lt.s32.totalorder %s22, 1
        %s485 = scalar_select %p484, %s22, 1
        %s486 = smul.addr %s485, 8
        %s487 = scalar_lea.vmem %s9, %s486
      $region76: #{transformer_encoder_forward.9} parent=63 // pred_fallthru
        _
    $region64: #{transformer_encoder_forward.9} parent=5 // pred_fallthru
      _
  $region6: #{transformer_encoder_forward.9} parent=0 // loop_footer
    %s20 = sadd.s32 1, %s16
  $region7: #{transformer_encoder_forward.9} parent=0 // loop_footer_branch
    %15 = sbr.rel target = $region3
  $region8: #{transformer_encoder_forward.9} parent=0 // loop_exit
    _

// kernel: transformer_encoder_forward.8
$region0: #{transformer_encoder_forward.8}
  #allocation0 [shape = 'u32[]', space=smem, size = 0x4, offset = 0x4, fixed_abs, tag = 'smem constant byte address 0x4 - core index']
  #allocation1 [shape = 'u32[72,128]{1,0:T(1,128)}', space=vmem, size = 0x9000, scoped, tag = 'internal scratch']
  #allocation2 [shape = 'f32[8,32]{1,0:T(8,128)}', space=vmem, size = 0x1000, scoped, tag = 'scratch operand']
  #allocation3 [shape = 'f32[8,32]{1,0:T(8,128)}', space=vmem, size = 0x1000, scoped, tag = 'scratch operand']
  %s0 = inlined_call_operand.vmem [shape: f32[2,8,32], index: 0, kind: input, shape index: {}]
  %s1 = inlined_call_operand.vmem [shape: f32[2,8,32], index: 1, kind: input, shape index: {}]
  %s2 = inlined_call_operand.vmem [shape: f32[32,32], index: 2, kind: input, shape index: {}]
  %s3 = inlined_call_operand.vmem [shape: f32[1,32], index: 3, kind: input, shape index: {}]
  %s4 = inlined_call_operand.vmem [shape: f32[1,32], index: 4, kind: input, shape index: {}]
  %s5 = inlined_call_operand.vmem [shape: f32[1,32], index: 5, kind: input, shape index: {}]
  %s6 = inlined_call_operand.vmem [shape: f32[32,128], index: 6, kind: input, shape index: {}]
  %s7 = inlined_call_operand.vmem [shape: f32[1,128], index: 7, kind: input, shape index: {}]
  %s8 = inlined_call_operand.vmem [shape: f32[128,32], index: 8, kind: input, shape index: {}]
  %s9 = inlined_call_operand.vmem [shape: f32[1,32], index: 9, kind: input, shape index: {}]
  %s10 = inlined_call_operand.vmem [shape: f32[1,32], index: 10, kind: input, shape index: {}]
  %s11 = inlined_call_operand.vmem [shape: f32[1,32], index: 11, kind: input, shape index: {}]
  %s12 = inlined_call_operand.vmem [shape: f32[2,8,32], index: 12, kind: output, shape index: {}]
  %s13 = sld [smem:[#allocation0]]
  $region89: #{transformer_encoder_forward.8} parent=0
    _
  %s15 = ssub.s32 1, %s13
  %s16 = scalar_select 0, %s15, %s13
  loop: start=0, step=1, limit=4
  $region2: #{transformer_encoder_forward.8} parent=0 // loop_pre_header
    _
  $region3: #{transformer_encoder_forward.8} parent=0 // loop_header
    %s18 = sphi 0, %s22
    %p19 = scmp.ge.s32.totalorder %s18, 4
    %s25 = sphi 0, %s37
    %s26 = sphi 0, %s33
    %s27 = sphi 0, %s25
    %s28 = sphi 0, %s26
    %s29 = sphi 0, %s27
    %s30 = sphi 0, %s28
    %s40 = sphi 0, %s42
    %s43 = sphi 0, %s40
    %s44 = sphi 0, %s43
    %s60 = sphi 0, %s44
    %s66 = sphi 0, %s68
    %s69 = sphi 0, %s66
    %s70 = sphi 0, %s69
    %s86 = sphi 0, %s70
    %s90 = sphi 0, %s90
    %s92 = sphi 0, %s90
    %s93 = sphi 0, %s92
    %s107 = sphi 0, %s93
    %s111 = sphi 0, %s111
    %s113 = sphi 0, %s111
    %s114 = sphi 0, %s113
    %s128 = sphi 0, %s114
    %s132 = sphi 0, %s132
    %s134 = sphi 0, %s132
    %s135 = sphi 0, %s134
    %s149 = sphi 0, %s135
    %s153 = sphi 0, %s153
    %s155 = sphi 0, %s153
    %s156 = sphi 0, %s155
    %s170 = sphi 0, %s156
    %s176 = sphi 0, %s178
    %s179 = sphi 0, %s176
    %s180 = sphi 0, %s179
    %s196 = sphi 0, %s180
    %s202 = sphi 0, %s204
    %s205 = sphi 0, %s202
    %s206 = sphi 0, %s205
    %s222 = sphi 0, %s206
    %s228 = sphi 0, %s230
    %s231 = sphi 0, %s228
    %s232 = sphi 0, %s231
    %s248 = sphi 0, %s232
    %s252 = sphi 0, %s252
    %s254 = sphi 0, %s252
    %s255 = sphi 0, %s254
    %s269 = sphi 0, %s255
    %s273 = sphi 0, %s273
    %s275 = sphi 0, %s273
    %s276 = sphi 0, %s275
    %s290 = sphi 0, %s276
    %s294 = sphi 0, %s294
    %s296 = sphi 0, %s294
    %s297 = sphi 0, %s296
    %s311 = sphi 0, %s297
    %s317 = sphi 0, %s319
    %s320 = sphi 0, %s317
    %s321 = sphi 0, %s320
    %s337 = sphi 0, %s321
  $region4: #{transformer_encoder_forward.8} parent=0 // loop_header_branch
    %21 = sbr.rel (%p19) target = $region8
  $region5: #{transformer_encoder_forward.8} parent=0 // loop_body
    %s23 = ssub.s32 %s18, 1
    %s24 = ssub.s32 %s18, 2
    %s31 = sadd.s32 1, %s26
    %p32 = scmp.ge.s32.totalorder %s31, 1
    %s33 = scalar_select %p32, 0, %s31
    %s34 = sadd.s32 1, %s25
    %s35 = scalar_select %p32, %s34, %s25
    %p36 = scmp.ge.s32.totalorder %s35, 2
    %s37 = scalar_select %p36, 0, %s35
    %s38 = ssub.s32 %s25, %s37
    %p39 = scmp.eq.s32.totalorder %s38, 0
    %s41 = sadd.s32 %s40, 1
    %s42 = scalar_select %p39, %s40, %s41
    %p45 = pneg %p39
    %p46 = scmp.eq.s32.totalorder %s18, 1
    %p47 = por %p45, %p46
    %p48 = scmp.ne.s32.totalorder %s40, %s43
    %p49 = scmp.eq.s32.totalorder %s18, 0
    %p50 = por %p48, %p49
    %p51 = scmp.ne.s32.totalorder %s40, %s43
    %p52 = scmp.eq.s32.totalorder %s23, 1
    %p53 = por %p51, %p52
    %p54 = scmp.ne.s32.totalorder %s43, %s44
    %p55 = scmp.eq.s32.totalorder %s23, 0
    %p56 = por %p54, %p55
    %p57 = scmp.ne.s32.totalorder %s43, %s44
    %p58 = scmp.eq.s32.totalorder %s24, 1
    %p59 = por %p57, %p58
    %p61 = scmp.ne.s32.totalorder %s44, %s60
    %p62 = scmp.eq.s32.totalorder %s24, 0
    %p63 = por %p61, %p62
    %s64 = ssub.s32 %s25, %s37
    %p65 = scmp.eq.s32.totalorder %s64, 0
    %s67 = sadd.s32 %s66, 1
    %s68 = scalar_select %p65, %s66, %s67
    %p71 = pneg %p65
    %p72 = scmp.eq.s32.totalorder %s18, 1
    %p73 = por %p71, %p72
    %p74 = scmp.ne.s32.totalorder %s66, %s69
    %p75 = scmp.eq.s32.totalorder %s18, 0
    %p76 = por %p74, %p75
    %p77 = scmp.ne.s32.totalorder %s66, %s69
    %p78 = scmp.eq.s32.totalorder %s23, 1
    %p79 = por %p77, %p78
    %p80 = scmp.ne.s32.totalorder %s69, %s70
    %p81 = scmp.eq.s32.totalorder %s23, 0
    %p82 = por %p80, %p81
    %p83 = scmp.ne.s32.totalorder %s69, %s70
    %p84 = scmp.eq.s32.totalorder %s24, 1
    %p85 = por %p83, %p84
    %p87 = scmp.ne.s32.totalorder %s70, %s86
    %p88 = scmp.eq.s32.totalorder %s24, 0
    %p89 = por %p87, %p88
    %s91 = sadd.s32 %s90, 1
    %p94 = scmp.eq.s32.totalorder %s18, 1
    %p95 = scmp.ne.s32.totalorder %s90, %s92
    %p96 = scmp.eq.s32.totalorder %s18, 0
    %p97 = por %p95, %p96
    %p98 = scmp.ne.s32.totalorder %s90, %s92
    %p99 = scmp.eq.s32.totalorder %s23, 1
    %p100 = por %p98, %p99
    %p101 = scmp.ne.s32.totalorder %s92, %s93
    %p102 = scmp.eq.s32.totalorder %s23, 0
    %p103 = por %p101, %p102
    %p104 = scmp.ne.s32.totalorder %s92, %s93
    %p105 = scmp.eq.s32.totalorder %s24, 1
    %p106 = por %p104, %p105
    %p108 = scmp.ne.s32.totalorder %s93, %s107
    %p109 = scmp.eq.s32.totalorder %s24, 0
    %p110 = por %p108, %p109
    %s112 = sadd.s32 %s111, 1
    %p115 = scmp.eq.s32.totalorder %s18, 1
    %p116 = scmp.ne.s32.totalorder %s111, %s113
    %p117 = scmp.eq.s32.totalorder %s18, 0
    %p118 = por %p116, %p117
    %p119 = scmp.ne.s32.totalorder %s111, %s113
    %p120 = scmp.eq.s32.totalorder %s23, 1
    %p121 = por %p119, %p120
    %p122 = scmp.ne.s32.totalorder %s113, %s114
    %p123 = scmp.eq.s32.totalorder %s23, 0
    %p124 = por %p122, %p123
    %p125 = scmp.ne.s32.totalorder %s113, %s114
    %p126 = scmp.eq.s32.totalorder %s24, 1
    %p127 = por %p125, %p126
    %p129 = scmp.ne.s32.totalorder %s114, %s128
    %p130 = scmp.eq.s32.totalorder %s24, 0
    %p131 = por %p129, %p130
    %s133 = sadd.s32 %s132, 1
    %p136 = scmp.eq.s32.totalorder %s18, 1
    %p137 = scmp.ne.s32.totalorder %s132, %s134
    %p138 = scmp.eq.s32.totalorder %s18, 0
    %p139 = por %p137, %p138
    %p140 = scmp.ne.s32.totalorder %s132, %s134
    %p141 = scmp.eq.s32.totalorder %s23, 1
    %p142 = por %p140, %p141
    %p143 = scmp.ne.s32.totalorder %s134, %s135
    %p144 = scmp.eq.s32.totalorder %s23, 0
    %p145 = por %p143, %p144
    %p146 = scmp.ne.s32.totalorder %s134, %s135
    %p147 = scmp.eq.s32.totalorder %s24, 1
    %p148 = por %p146, %p147
    %p150 = scmp.ne.s32.totalorder %s135, %s149
    %p151 = scmp.eq.s32.totalorder %s24, 0
    %p152 = por %p150, %p151
    %s154 = sadd.s32 %s153, 1
    %p157 = scmp.eq.s32.totalorder %s18, 1
    %p158 = scmp.ne.s32.totalorder %s153, %s155
    %p159 = scmp.eq.s32.totalorder %s18, 0
    %p160 = por %p158, %p159
    %p161 = scmp.ne.s32.totalorder %s153, %s155
    %p162 = scmp.eq.s32.totalorder %s23, 1
    %p163 = por %p161, %p162
    %p164 = scmp.ne.s32.totalorder %s155, %s156
    %p165 = scmp.eq.s32.totalorder %s23, 0
    %p166 = por %p164, %p165
    %p167 = scmp.ne.s32.totalorder %s155, %s156
    %p168 = scmp.eq.s32.totalorder %s24, 1
    %p169 = por %p167, %p168
    %p171 = scmp.ne.s32.totalorder %s156, %s170
    %p172 = scmp.eq.s32.totalorder %s24, 0
    %p173 = por %p171, %p172
    %s174 = ssub.s32 %s26, %s33
    %p175 = scmp.eq.s32.totalorder %s174, 0
    %s177 = sadd.s32 %s176, 1
    %s178 = scalar_select %p175, %s176, %s177
    %p181 = pneg %p175
    %p182 = scmp.eq.s32.totalorder %s18, 1
    %p183 = por %p181, %p182
    %p184 = scmp.ne.s32.totalorder %s176, %s179
    %p185 = scmp.eq.s32.totalorder %s18, 0
    %p186 = por %p184, %p185
    %p187 = scmp.ne.s32.totalorder %s176, %s179
    %p188 = scmp.eq.s32.totalorder %s23, 1
    %p189 = por %p187, %p188
    %p190 = scmp.ne.s32.totalorder %s179, %s180
    %p191 = scmp.eq.s32.totalorder %s23, 0
    %p192 = por %p190, %p191
    %p193 = scmp.ne.s32.totalorder %s179, %s180
    %p194 = scmp.eq.s32.totalorder %s24, 1
    %p195 = por %p193, %p194
    %p197 = scmp.ne.s32.totalorder %s180, %s196
    %p198 = scmp.eq.s32.totalorder %s24, 0
    %p199 = por %p197, %p198
    %s200 = ssub.s32 %s26, %s33
    %p201 = scmp.eq.s32.totalorder %s200, 0
    %s203 = sadd.s32 %s202, 1
    %s204 = scalar_select %p201, %s202, %s203
    %p207 = pneg %p201
    %p208 = scmp.eq.s32.totalorder %s18, 1
    %p209 = por %p207, %p208
    %p210 = scmp.ne.s32.totalorder %s202, %s205
    %p211 = scmp.eq.s32.totalorder %s18, 0
    %p212 = por %p210, %p211
    %p213 = scmp.ne.s32.totalorder %s202, %s205
    %p214 = scmp.eq.s32.totalorder %s23, 1
    %p215 = por %p213, %p214
    %p216 = scmp.ne.s32.totalorder %s205, %s206
    %p217 = scmp.eq.s32.totalorder %s23, 0
    %p218 = por %p216, %p217
    %p219 = scmp.ne.s32.totalorder %s205, %s206
    %p220 = scmp.eq.s32.totalorder %s24, 1
    %p221 = por %p219, %p220
    %p223 = scmp.ne.s32.totalorder %s206, %s222
    %p224 = scmp.eq.s32.totalorder %s24, 0
    %p225 = por %p223, %p224
    %s226 = ssub.s32 %s26, %s33
    %p227 = scmp.eq.s32.totalorder %s226, 0
    %s229 = sadd.s32 %s228, 1
    %s230 = scalar_select %p227, %s228, %s229
    %p233 = pneg %p227
    %p234 = scmp.eq.s32.totalorder %s18, 1
    %p235 = por %p233, %p234
    %p236 = scmp.ne.s32.totalorder %s228, %s231
    %p237 = scmp.eq.s32.totalorder %s18, 0
    %p238 = por %p236, %p237
    %p239 = scmp.ne.s32.totalorder %s228, %s231
    %p240 = scmp.eq.s32.totalorder %s23, 1
    %p241 = por %p239, %p240
    %p242 = scmp.ne.s32.totalorder %s231, %s232
    %p243 = scmp.eq.s32.totalorder %s23, 0
    %p244 = por %p242, %p243
    %p245 = scmp.ne.s32.totalorder %s231, %s232
    %p246 = scmp.eq.s32.totalorder %s24, 1
    %p247 = por %p245, %p246
    %p249 = scmp.ne.s32.totalorder %s232, %s248
    %p250 = scmp.eq.s32.totalorder %s24, 0
    %p251 = por %p249, %p250
    %s253 = sadd.s32 %s252, 1
    %p256 = scmp.eq.s32.totalorder %s18, 1
    %p257 = scmp.ne.s32.totalorder %s252, %s254
    %p258 = scmp.eq.s32.totalorder %s18, 0
    %p259 = por %p257, %p258
    %p260 = scmp.ne.s32.totalorder %s252, %s254
    %p261 = scmp.eq.s32.totalorder %s23, 1
    %p262 = por %p260, %p261
    %p263 = scmp.ne.s32.totalorder %s254, %s255
    %p264 = scmp.eq.s32.totalorder %s23, 0
    %p265 = por %p263, %p264
    %p266 = scmp.ne.s32.totalorder %s254, %s255
    %p267 = scmp.eq.s32.totalorder %s24, 1
    %p268 = por %p266, %p267
    %p270 = scmp.ne.s32.totalorder %s255, %s269
    %p271 = scmp.eq.s32.totalorder %s24, 0
    %p272 = por %p270, %p271
    %s274 = sadd.s32 %s273, 1
    %p277 = scmp.eq.s32.totalorder %s18, 1
    %p278 = scmp.ne.s32.totalorder %s273, %s275
    %p279 = scmp.eq.s32.totalorder %s18, 0
    %p280 = por %p278, %p279
    %p281 = scmp.ne.s32.totalorder %s273, %s275
    %p282 = scmp.eq.s32.totalorder %s23, 1
    %p283 = por %p281, %p282
    %p284 = scmp.ne.s32.totalorder %s275, %s276
    %p285 = scmp.eq.s32.totalorder %s23, 0
    %p286 = por %p284, %p285
    %p287 = scmp.ne.s32.totalorder %s275, %s276
    %p288 = scmp.eq.s32.totalorder %s24, 1
    %p289 = por %p287, %p288
    %p291 = scmp.ne.s32.totalorder %s276, %s290
    %p292 = scmp.eq.s32.totalorder %s24, 0
    %p293 = por %p291, %p292
    %s295 = sadd.s32 %s294, 1
    %p298 = scmp.eq.s32.totalorder %s18, 1
    %p299 = scmp.ne.s32.totalorder %s294, %s296
    %p300 = scmp.eq.s32.totalorder %s18, 0
    %p301 = por %p299, %p300
    %p302 = scmp.ne.s32.totalorder %s294, %s296
    %p303 = scmp.eq.s32.totalorder %s23, 1
    %p304 = por %p302, %p303
    %p305 = scmp.ne.s32.totalorder %s296, %s297
    %p306 = scmp.eq.s32.totalorder %s23, 0
    %p307 = por %p305, %p306
    %p308 = scmp.ne.s32.totalorder %s296, %s297
    %p309 = scmp.eq.s32.totalorder %s24, 1
    %p310 = por %p308, %p309
    %p312 = scmp.ne.s32.totalorder %s297, %s311
    %p313 = scmp.eq.s32.totalorder %s24, 0
    %p314 = por %p312, %p313
    %s315 = ssub.s32 %s25, %s37
    %p316 = scmp.eq.s32.totalorder %s315, 0
    %s318 = sadd.s32 %s317, 1
    %s319 = scalar_select %p316, %s317, %s318
    %p322 = pneg %p316
    %p323 = scmp.eq.s32.totalorder %s18, 1
    %p324 = por %p322, %p323
    %p325 = scmp.ne.s32.totalorder %s317, %s320
    %p326 = scmp.eq.s32.totalorder %s18, 0
    %p327 = por %p325, %p326
    %p328 = scmp.ne.s32.totalorder %s317, %s320
    %p329 = scmp.eq.s32.totalorder %s23, 1
    %p330 = por %p328, %p329
    %p331 = scmp.ne.s32.totalorder %s320, %s321
    %p332 = scmp.eq.s32.totalorder %s23, 0
    %p333 = por %p331, %p332
    %p334 = scmp.ne.s32.totalorder %s320, %s321
    %p335 = scmp.eq.s32.totalorder %s24, 1
    %p336 = por %p334, %p335
    %p338 = scmp.ne.s32.totalorder %s321, %s337
    %p339 = scmp.eq.s32.totalorder %s24, 0
    %p340 = por %p338, %p339
    %p341 = scmp.le.s32.totalorder 1, %s18
    %p342 = scmp.lt.s32.totalorder %s18, 3
    %p343 = pnand %p341, %p342
    %p344 = pneg %p343
    // Predicated region
    $region9: #{transformer_encoder_forward.8} parent=5 // pred_check
      _
    $region10: #{transformer_encoder_forward.8} parent=5 // pred_check_branch
      %346 = sbr.rel (%p343) target = $region12
    $region11: #{transformer_encoder_forward.8} parent=5 // pred_region
      %s347 = ssub.s32 %s18, 1
      // Predicated region
      $region13: #{transformer_encoder_forward.8} parent=11 // pred_check
        %p348 = pneg %p103
      $region14: #{transformer_encoder_forward.8} parent=11 // pred_check_branch
        %350 = sbr.rel (%p348) target = $region16
      $region15: #{transformer_encoder_forward.8} parent=11 // pred_region
        _
      $region16: #{transformer_encoder_forward.8} parent=11 // pred_fallthru
        _
      // Predicated region
      $region17: #{transformer_encoder_forward.8} parent=11 // pred_check
        %p351 = pneg %p124
      $region18: #{transformer_encoder_forward.8} parent=11 // pred_check_branch
        %353 = sbr.rel (%p351) target = $region20
      $region19: #{transformer_encoder_forward.8} parent=11 // pred_region
        _
      $region20: #{transformer_encoder_forward.8} parent=11 // pred_fallthru
        _
      // Predicated region
      $region21: #{transformer_encoder_forward.8} parent=11 // pred_check
        %p354 = pneg %p145
      $region22: #{transformer_encoder_forward.8} parent=11 // pred_check_branch
        %356 = sbr.rel (%p354) target = $region24
      $region23: #{transformer_encoder_forward.8} parent=11 // pred_region
        _
      $region24: #{transformer_encoder_forward.8} parent=11 // pred_fallthru
        _
      // Predicated region
      $region25: #{transformer_encoder_forward.8} parent=11 // pred_check
        %p357 = pneg %p166
      $region26: #{transformer_encoder_forward.8} parent=11 // pred_check_branch
        %359 = sbr.rel (%p357) target = $region28
      $region27: #{transformer_encoder_forward.8} parent=11 // pred_region
        _
      $region28: #{transformer_encoder_forward.8} parent=11 // pred_fallthru
        _
      // Predicated region
      $region29: #{transformer_encoder_forward.8} parent=11 // pred_check
        %p360 = pneg %p192
      $region30: #{transformer_encoder_forward.8} parent=11 // pred_check_branch
        %362 = sbr.rel (%p360) target = $region32
      $region31: #{transformer_encoder_forward.8} parent=11 // pred_region
        %p363 = scmp.lt.s32.totalorder %s28, 0
        %s364 = scalar_select %p363, %s28, 0
        %s365 = smul.addr %s364, 8
        %s366 = scalar_lea.vmem %s6, %s365
      $region32: #{transformer_encoder_forward.8} parent=11 // pred_fallthru
        _
      // Predicated region
      $region33: #{transformer_encoder_forward.8} parent=11 // pred_check
        %p367 = pneg %p218
      $region34: #{transformer_encoder_forward.8} parent=11 // pred_check_branch
        %369 = sbr.rel (%p367) target = $region36
      $region35: #{transformer_encoder_forward.8} parent=11 // pred_region
        %p370 = scmp.lt.s32.totalorder %s28, 0
        %s371 = scalar_select %p370, %s28, 0
        %s372 = scalar_lea.vmem %s7, %s371
      $region36: #{transformer_encoder_forward.8} parent=11 // pred_fallthru
        _
      // Predicated region
      $region37: #{transformer_encoder_forward.8} parent=11 // pred_check
        %p373 = pneg %p244
      $region38: #{transformer_encoder_forward.8} parent=11 // pred_check_branch
        %375 = sbr.rel (%p373) target = $region40
      $region39: #{transformer_encoder_forward.8} parent=11 // pred_region
        %s376 = smul.u32 16, %s28
        %p377 = scmp.lt.s32.totalorder %s376, 15
        %s378 = scalar_select %p377, %s376, 15
        %s379 = smul.addr %s378, 8
        %s380 = scalar_lea.vmem %s8, %s379
        %s381 = smul.u32 16, %s28
      $region40: #{transformer_encoder_forward.8} parent=11 // pred_fallthru
        _
      // Predicated region
      $region41: #{transformer_encoder_forward.8} parent=11 // pred_check
        %p382 = pneg %p265
      $region42: #{transformer_encoder_forward.8} parent=11 // pred_check_branch
        %384 = sbr.rel (%p382) target = $region44
      $region43: #{transformer_encoder_forward.8} parent=11 // pred_region
        _
      $region44: #{transformer_encoder_forward.8} parent=11 // pred_fallthru
        _
      // Predicated region
      $region45: #{transformer_encoder_forward.8} parent=11 // pred_check
        %p385 = pneg %p286
      $region46: #{transformer_encoder_forward.8} parent=11 // pred_check_branch
        %387 = sbr.rel (%p385) target = $region48
      $region47: #{transformer_encoder_forward.8} parent=11 // pred_region
        _
      $region48: #{transformer_encoder_forward.8} parent=11 // pred_fallthru
        _
      // Predicated region
      $region49: #{transformer_encoder_forward.8} parent=11 // pred_check
        %p388 = pneg %p307
      $region50: #{transformer_encoder_forward.8} parent=11 // pred_check_branch
        %390 = sbr.rel (%p388) target = $region52
      $region51: #{transformer_encoder_forward.8} parent=11 // pred_region
        _
      $region52: #{transformer_encoder_forward.8} parent=11 // pred_fallthru
        _
    $region12: #{transformer_encoder_forward.8} parent=5 // pred_fallthru
      _
    %p391 = scmp.lt.s32.totalorder %s18, 2
    // Predicated region
    $region53: #{transformer_encoder_forward.8} parent=5 // pred_check
      %p392 = pneg %p391
    $region54: #{transformer_encoder_forward.8} parent=5 // pred_check_branch
      %394 = sbr.rel (%p392) target = $region56
    $region55: #{transformer_encoder_forward.8} parent=5 // pred_region
      // Predicated region
      $region57: #{transformer_encoder_forward.8} parent=55 // pred_check
        %p395 = pneg %p50
      $region58: #{transformer_encoder_forward.8} parent=55 // pred_check_branch
        %397 = sbr.rel (%p395) target = $region60
      $region59: #{transformer_encoder_forward.8} parent=55 // pred_region
        %p398 = scmp.lt.s32.totalorder %s25, 1
        %s399 = scalar_select %p398, %s25, 1
        %s400 = smul.addr %s399, 8
        %s401 = scalar_lea.vmem %s0, %s400
      $region60: #{transformer_encoder_forward.8} parent=55 // pred_fallthru
        _
      // Predicated region
      $region61: #{transformer_encoder_forward.8} parent=55 // pred_check
        %p402 = pneg %p76
      $region62: #{transformer_encoder_forward.8} parent=55 // pred_check_branch
        %404 = sbr.rel (%p402) target = $region64
      $region63: #{transformer_encoder_forward.8} parent=55 // pred_region
        %p405 = scmp.lt.s32.totalorder %s25, 1
        %s406 = scalar_select %p405, %s25, 1
        %s407 = smul.addr %s406, 8
        %s408 = scalar_lea.vmem %s1, %s407
      $region64: #{transformer_encoder_forward.8} parent=55 // pred_fallthru
        _
    $region56: #{transformer_encoder_forward.8} parent=5 // pred_fallthru
      _
    %p409 = scmp.le.s32.totalorder 1, %s18
    %p410 = scmp.lt.s32.totalorder %s18, 3
    %p411 = pnand %p409, %p410
    %p412 = pneg %p411
    // Predicated region
    $region65: #{transformer_encoder_forward.8} parent=5 // pred_check
      _
    $region66: #{transformer_encoder_forward.8} parent=5 // pred_check_branch
      %414 = sbr.rel (%p411) target = $region68
    $region67: #{transformer_encoder_forward.8} parent=5 // pred_region
      %s415 = ssub.s32 %s18, 1
      %p416 = scmp.lt.s32.totalorder %s27, 1
      %s417 = scalar_select %p416, %s27, 1
      %s418 = smul.addr %s417, 8
      %s419 = scalar_lea.vmem %s0, %s418
      %p420 = pneg %p56
      %p421 = pneg %p53
      %p422 = scmp.lt.s32.totalorder %s27, 1
      %s423 = scalar_select %p422, %s27, 1
      %s424 = smul.addr %s423, 8
      %s425 = scalar_lea.vmem %s1, %s424
      %p426 = pneg %p82
      %p427 = pneg %p79
      %p428 = pneg %p103
      %p429 = pneg %p100
      %p430 = pneg %p124
      %p431 = pneg %p121
      %p432 = pneg %p145
      %p433 = pneg %p142
      %p434 = pneg %p166
      %p435 = pneg %p163
      %p436 = scmp.lt.s32.totalorder %s28, 0
      %s437 = scalar_select %p436, %s28, 0
      %s438 = smul.addr %s437, 8
      %s439 = scalar_lea.vmem %s6, %s438
      %p440 = pneg %p192
      %p441 = pneg %p189
      %p442 = scmp.lt.s32.totalorder %s28, 0
      %s443 = scalar_select %p442, %s28, 0
      %s444 = scalar_lea.vmem %s7, %s443
      %p445 = pneg %p218
      %p446 = pneg %p215
      %s447 = smul.u32 16, %s28
      %p448 = scmp.lt.s32.totalorder %s447, 15
      %s449 = scalar_select %p448, %s447, 15
      %s450 = smul.addr %s449, 8
      %s451 = scalar_lea.vmem %s8, %s450
      %p452 = pneg %p244
      %p453 = pneg %p241
      %p454 = pneg %p265
      %p455 = pneg %p262
      %p456 = pneg %p286
      %p457 = pneg %p283
      %p458 = pneg %p307
      %p459 = pneg %p304
      %p460 = pneg %p333
      %p461 = pneg %p330
      %p462 = scmp.lt.s32.totalorder %s27, 1
      %s463 = scalar_select %p462, %s27, 1
      %s464 = smul.addr %s463, 8
      %s465 = scalar_lea.vmem %s12, %s464
      %p466 = scmp.lt.s32.totalorder %s27, 1
      %s467 = scalar_select %p466, %s27, 1
      %s468 = smul.addr %s467, 8
      %s469 = scalar_lea.vmem %s0, %s468
      %p470 = scmp.lt.s32.totalorder %s27, 1
      %s471 = scalar_select %p470, %s27, 1
      %s472 = smul.addr %s471, 8
      %s473 = scalar_lea.vmem %s1, %s472
      %p474 = scmp.lt.s32.totalorder %s28, 0
      %s475 = scalar_select %p474, %s28, 0
      %s476 = smul.addr %s475, 8
      %s477 = scalar_lea.vmem %s6, %s476
      %p478 = scmp.lt.s32.totalorder %s28, 0
      %s479 = scalar_select %p478, %s28, 0
      %s480 = scalar_lea.vmem %s7, %s479
      %s481 = smul.u32 16, %s28
      %p482 = scmp.lt.s32.totalorder %s481, 15
      %s483 = scalar_select %p482, %s481, 15
      %s484 = smul.addr %s483, 8
      %s485 = scalar_lea.vmem %s8, %s484
      %s486 = smul.u32 16, %s28
      %p487 = scmp.lt.s32.totalorder %s27, 1
      %s488 = scalar_select %p487, %s27, 1
      %s489 = smul.addr %s488, 8
      %s490 = scalar_lea.vmem %s12, %s489
      %p491 = scmp.eq.s32.totalorder %s28, 0
      // Predicated region
      $region69: #{transformer_encoder_forward.8} parent=67 // pred_check
        %p492 = pneg %p491
      $region70: #{transformer_encoder_forward.8} parent=67 // pred_check_branch
        %494 = sbr.rel (%p492) target = $region72
      $region71: #{transformer_encoder_forward.8} parent=67 // pred_region
        %v495 = vld [vmem:[%s473] sm:$0xff]
        %v496 = vld [vmem:[%s2] sm:$0xff]
        %v497 = vld [vmem:[%s2 + $0x8] sm:$0xff]
        %v498 = vld [vmem:[%s2 + $0x10] sm:$0xff]
        %v499 = vld [vmem:[%s2 + $0x18] sm:$0xff]
        %v500 = vld [vmem:[%s3] sm:$0x1]
        %v502 = vperm.slane %v500, 0
        %vm504 = vcmask 261120
        %v506 = vsel %vm504, %v495, 0
        %508 = vmatpush.msra.mxu0 0.0
        %509 = vmatpush.msra.mxu0 0.0
        %510 = vmatpush.msra.mxu0 0.0
        %511 = vmatpush.msra.mxu0 0.0
        %512 = vmatpush.msra.mxu0 0.0
        %513 = vmatpush.msra.mxu0 0.0
        %514 = vmatpush.msra.mxu0 0.0
        %515 = vmatpush.msra.mxu0 0.0
        %516 = vmatpush.msra.mxu0 0.0
        %517 = vmatpush.msra.mxu0 0.0
        %518 = vmatpush.msra.mxu0 0.0
        %519 = vmatpush.msra.mxu0 0.0
        %520 = vmatpush.msra.mxu0 %v499
        %521 = vmatpush.msra.mxu0 %v498
        %522 = vmatpush.msra.mxu0 %v497
        %523 = vmatpush.msra.mxu0 %v496
        %524 = vmatmul.f32.gmra.mxu0 %v506
        %v525 = vpop.f32.mrf.mxu0
        %v526 = vadd.f32 %v502, %v525
        %527 = vdwg.mxu0
        %v528 = vld [vmem:[%s469] sm:$0xff]
        %v529 = vadd.f32 %v528, %v526
        %v530 = vld [vmem:[%s4] sm:$0x1]
        %v531 = vld [vmem:[%s5] sm:$0x1]
        %v532 = vsel %vm504, %v529, 0.0
        %533 = vadd.xlane.f32.xlu0 %v532
        %v534 = vpop.xlane.xlu0 %533
        %v535 = vrcp.pop 32.0
        %v536 = vmul.f32 32.0, %v535
        %v537 = vsub.f32 1.0, %v536
        %v538 = vmul.f32 %v535, %v537
        %v539 = vadd.f32 %v535, %v538
        %vm540 = vweird.f32 %v535
        %v541 = vsel %vm540, %v535, %v539
        %v542 = vmul.f32 %v534, %v541
        %v543 = vsub.f32 %v529, %v542
        %v544 = vmul.f32 %v543, %v543
        %v545 = vsel %vm504, %v544, 0.0
        %546 = vadd.xlane.f32.xlu0 %v545
        %v547 = vpop.xlane.xlu0 %546
        %v548 = vmul.f32 %v547, %v541
        %v549 = vadd.f32 %v548, 1e-05
        %v550 = vrsqrt.pop %v549
        %v551 = vmul.f32 %v550, %v549
        %v552 = vmul.f32 %v551, %v550
        %v553 = vmul.f32 0.5, %v552
        %v554 = vsub.f32 1.5, %v553
        %v555 = vmul.f32 %v550, %v554
        %vm556 = vweird.f32 %v549
        %vm557 = vweird.f32 %v550
        %vm558 = vmor %vm556, %vm557
        %v559 = vsel %vm558, %v550, %v555
        %v560 = vmul.f32 %v543, %v559
        %v562 = vperm.slane %v530, 0
        %v564 = vmul.f32 %v560, %v562
        %v566 = vperm.slane %v531, 0
        %v568 = vadd.f32 %v564, %v566
        %569 = vst.msk [vmem:[#allocation2] sm:$0xff] %vm504, %v568
        %570 = vst.msk [vmem:[#allocation3] sm:$0xff] %vm504, 0.0
      $region72: #{transformer_encoder_forward.8} parent=67 // pred_fallthru
        _
      %v571 = vld [vmem:[#allocation2] sm:$0xff]
      %v572 = vld [vmem:[%s477] sm:$0xff]
      %v573 = vld [vmem:[%s477 + $0x8] sm:$0xff]
      %v574 = vld [vmem:[%s477 + $0x10] sm:$0xff]
      %v575 = vld [vmem:[%s477 + $0x18] sm:$0xff]
      %v576 = vld [vmem:[%s480] sm:$0x1]
      %v578 = vperm.slane %v576, 0
      %vm580 = vcmask 261120
      %v582 = vsel %vm580, %v571, 0
      %584 = vmatpush.msra.mxu0 0.0
      %585 = vmatpush.msra.mxu0 0.0
      %586 = vmatpush.msra.mxu0 0.0
      %587 = vmatpush.msra.mxu0 0.0
      %588 = vmatpush.msra.mxu0 0.0
      %589 = vmatpush.msra.mxu0 0.0
      %590 = vmatpush.msra.mxu0 0.0
      %591 = vmatpush.msra.mxu0 0.0
      %592 = vmatpush.msra.mxu0 0.0
      %593 = vmatpush.msra.mxu0 0.0
      %594 = vmatpush.msra.mxu0 0.0
      %595 = vmatpush.msra.mxu0 0.0
      %596 = vmatpush.msra.mxu0 %v575
      %597 = vmatpush.msra.mxu0 %v574
      %598 = vmatpush.msra.mxu0 %v573
      %599 = vmatpush.msra.mxu0 %v572
      %600 = vmatmul.f32.gmra.mxu0 %v582
      %v601 = vpop.f32.mrf.mxu0
      %v602 = vadd.f32 %v578, %v601
      %603 = vdwg.mxu0
      %v604 = vmax.f32 %v602, 0.0
      %v605 = vld [vmem:[#allocation3] sm:$0xff]
      %v606 = vld [vmem:[%s485] sm:$0xff]
      %v607 = vld [vmem:[%s485 + $0x8] sm:$0xff]
      %v608 = vld [vmem:[%s485 + $0x10] sm:$0xff]
      %v609 = vld [vmem:[%s485 + $0x18] sm:$0xff]
      %v610 = vld [vmem:[%s485 + $0x20] sm:$0xff]
      %v611 = vld [vmem:[%s485 + $0x28] sm:$0xff]
      %v612 = vld [vmem:[%s485 + $0x30] sm:$0xff]
      %v613 = vld [vmem:[%s485 + $0x38] sm:$0xff]
      %v614 = vld [vmem:[%s485 + $0x40] sm:$0xff]
      %v615 = vld [vmem:[%s485 + $0x48] sm:$0xff]
      %v616 = vld [vmem:[%s485 + $0x50] sm:$0xff]
      %v617 = vld [vmem:[%s485 + $0x58] sm:$0xff]
      %v618 = vld [vmem:[%s485 + $0x60] sm:$0xff]
      %v619 = vld [vmem:[%s485 + $0x68] sm:$0xff]
      %v620 = vld [vmem:[%s485 + $0x70] sm:$0xff]
      %v621 = vld [vmem:[%s485 + $0x78] sm:$0xff]
      %622 = vmatpush.msra.mxu0 %v621
      %623 = vmatpush.msra.mxu0 %v620
      %624 = vmatpush.msra.mxu0 %v619
      %625 = vmatpush.msra.mxu0 %v618
      %626 = vmatpush.msra.mxu0 %v617
      %627 = vmatpush.msra.mxu0 %v616
      %628 = vmatpush.msra.mxu0 %v615
      %629 = vmatpush.msra.mxu0 %v614
      %630 = vmatpush.msra.mxu0 %v613
      %631 = vmatpush.msra.mxu0 %v612
      %632 = vmatpush.msra.mxu0 %v611
      %633 = vmatpush.msra.mxu0 %v610
      %634 = vmatpush.msra.mxu0 %v609
      %635 = vmatpush.msra.mxu0 %v608
      %636 = vmatpush.msra.mxu0 %v607
      %637 = vmatpush.msra.mxu0 %v606
      %638 = vmatmul.f32.gmra.mxu0 %v604
      %v639 = vpop.f32.mrf.mxu0
      %v640 = vadd.f32 0.0, %v639
      %641 = vdwg.mxu0
      %v642 = vadd.f32 %v605, %v640
      %643 = vst.msk [vmem:[#allocation3] sm:$0xff] %vm580, %v642
      // Predicated region
      $region73: #{transformer_encoder_forward.8} parent=67 // pred_check
        %p644 = pneg %p491
      $region74: #{transformer_encoder_forward.8} parent=67 // pred_check_branch
        %646 = sbr.rel (%p644) target = $region76
      $region75: #{transformer_encoder_forward.8} parent=67 // pred_region
        %v647 = vld [vmem:[#allocation2] sm:$0xff]
        %v648 = vld [vmem:[#allocation3] sm:$0xff]
        %v649 = vadd.f32 %v647, %v648
        %v650 = vld [vmem:[%s9] sm:$0x1]
        %v652 = vperm.slane %v650, 0
        %v654 = vadd.f32 %v649, %v652
        %v655 = vld [vmem:[%s10] sm:$0x1]
        %v656 = vld [vmem:[%s11] sm:$0x1]
        %v657 = vsel %vm580, %v654, 0.0
        %658 = vadd.xlane.f32.xlu0 %v657
        %v659 = vpop.xlane.xlu0 %658
        %v660 = vrcp.pop 32.0
        %v661 = vmul.f32 32.0, %v660
        %v662 = vsub.f32 1.0, %v661
        %v663 = vmul.f32 %v660, %v662
        %v664 = vadd.f32 %v660, %v663
        %vm665 = vweird.f32 %v660
        %v666 = vsel %vm665, %v660, %v664
        %v667 = vmul.f32 %v659, %v666
        %v668 = vsub.f32 %v654, %v667
        %v669 = vmul.f32 %v668, %v668
        %v670 = vsel %vm580, %v669, 0.0
        %671 = vadd.xlane.f32.xlu0 %v670
        %v672 = vpop.xlane.xlu0 %671
        %v673 = vmul.f32 %v672, %v666
        %v674 = vadd.f32 %v673, 1e-05
        %v675 = vrsqrt.pop %v674
        %v676 = vmul.f32 %v675, %v674
        %v677 = vmul.f32 %v676, %v675
        %v678 = vmul.f32 0.5, %v677
        %v679 = vsub.f32 1.5, %v678
        %v680 = vmul.f32 %v675, %v679
        %vm681 = vweird.f32 %v674
        %vm682 = vweird.f32 %v675
        %vm683 = vmor %vm681, %vm682
        %v684 = vsel %vm683, %v675, %v680
        %v685 = vmul.f32 %v668, %v684
        %v687 = vperm.slane %v655, 0
        %v689 = vmul.f32 %v685, %v687
        %v691 = vperm.slane %v656, 0
        %v693 = vadd.f32 %v689, %v691
        %694 = vst.msk [vmem:[%s490] sm:$0xff] %vm580, %v693
      $region76: #{transformer_encoder_forward.8} parent=67 // pred_fallthru
        _
      %p695 = scmp.lt.s32.totalorder %s27, 1
      %s696 = scalar_select %p695, %s27, 1
      %s697 = smul.addr %s696, 8
      %s698 = scalar_lea.vmem %s12, %s697
      // Predicated region
      $region77: #{transformer_encoder_forward.8} parent=67 // pred_check
        %p699 = pneg %p330
      $region78: #{transformer_encoder_forward.8} parent=67 // pred_check_branch
        %701 = sbr.rel (%p699) target = $region80
      $region79: #{transformer_encoder_forward.8} parent=67 // pred_region
        _
      $region80: #{transformer_encoder_forward.8} parent=67 // pred_fallthru
        _
    $region68: #{transformer_encoder_forward.8} parent=5 // pred_fallthru
      _
    %p702 = scmp.le.s32.totalorder 2, %s18
    // Predicated region
    $region81: #{transformer_encoder_forward.8} parent=5 // pred_check
      %p703 = pneg %p702
    $region82: #{transformer_encoder_forward.8} parent=5 // pred_check_branch
      %705 = sbr.rel (%p703) target = $region84
    $region83: #{transformer_encoder_forward.8} parent=5 // pred_region
      %s706 = ssub.s32 %s18, 2
      // Predicated region
      $region85: #{transformer_encoder_forward.8} parent=83 // pred_check
        %p707 = pneg %p336
      $region86: #{transformer_encoder_forward.8} parent=83 // pred_check_branch
        %709 = sbr.rel (%p707) target = $region88
      $region87: #{transformer_encoder_forward.8} parent=83 // pred_region
        %p710 = scmp.lt.s32.totalorder %s29, 1
        %s711 = scalar_select %p710, %s29, 1
        %s712 = smul.addr %s711, 8
        %s713 = scalar_lea.vmem %s12, %s712
      $region88: #{transformer_encoder_forward.8} parent=83 // pred_fallthru
        _
    $region84: #{transformer_encoder_forward.8} parent=5 // pred_fallthru
      _
  $region6: #{transformer_encoder_forward.8} parent=0 // loop_footer
    %s22 = sadd.s32 1, %s18
  $region7: #{transformer_encoder_forward.8} parent=0 // loop_footer_branch
    %17 = sbr.rel target = $region3
  $region8: #{transformer_encoder_forward.8} parent=0 // loop_exit
    _

// kernel: transformer_encoder_forward.11
$region0: #{transformer_encoder_forward.11}
  #allocation0 [shape = 'u32[]', space=smem, size = 0x4, offset = 0x4, fixed_abs, tag = 'smem constant byte address 0x4 - core index']
  #allocation1 [shape = 'u32[72,128]{1,0:T(1,128)}', space=vmem, size = 0x9000, scoped, tag = 'internal scratch']
  #allocation2 [shape = 'f32[8,32]{1,0:T(8,128)}', space=vmem, size = 0x1000, scoped, tag = 'scratch operand']
  #allocation3 [shape = 'f32[8,32]{1,0:T(8,128)}', space=vmem, size = 0x1000, scoped, tag = 'scratch operand']
  %s0 = inlined_call_operand.vmem [shape: f32[2,8,32], index: 0, kind: input, shape index: {}]
  %s1 = inlined_call_operand.vmem [shape: f32[2,8,32], index: 1, kind: input, shape index: {}]
  %s2 = inlined_call_operand.vmem [shape: f32[32,32], index: 2, kind: input, shape index: {}]
  %s3 = inlined_call_operand.vmem [shape: f32[1,32], index: 3, kind: input, shape index: {}]
  %s4 = inlined_call_operand.vmem [shape: f32[1,32], index: 4, kind: input, shape index: {}]
  %s5 = inlined_call_operand.vmem [shape: f32[1,32], index: 5, kind: input, shape index: {}]
  %s6 = inlined_call_operand.vmem [shape: f32[32,128], index: 6, kind: input, shape index: {}]
  %s7 = inlined_call_operand.vmem [shape: f32[1,128], index: 7, kind: input, shape index: {}]
  %s8 = inlined_call_operand.vmem [shape: f32[128,32], index: 8, kind: input, shape index: {}]
  %s9 = inlined_call_operand.vmem [shape: f32[1,32], index: 9, kind: input, shape index: {}]
  %s10 = inlined_call_operand.vmem [shape: f32[1,32], index: 10, kind: input, shape index: {}]
  %s11 = inlined_call_operand.vmem [shape: f32[1,32], index: 11, kind: input, shape index: {}]
  %s12 = inlined_call_operand.hbm [shape: f32[2,8,32], index: 12, kind: output, shape index: {}]
  %s13 = sld [smem:[#allocation0]]
  $region89: #{transformer_encoder_forward.11} parent=0
    _
  %s15 = ssub.s32 1, %s13
  %s16 = scalar_select 0, %s15, %s13
  $region1: #{transformer_encoder_forward.11} parent=0
    #allocation4 [shape = 'u8[8192]{0}', space=vmem, size = 0x2000, scoped, tag = 'output window, operand 0']
    #allocation5 [shape = 's32[2]{0}', space=sflag, size = 0x8, scoped, tag = 'scoped memory for transformer_encoder_forward.11']
    %17 = vsyncpa [#allocation5], 0
    %s18 = scalar_lea.sflag [#allocation5], 1
    %19 = vsyncpa %s18, 0
    loop: start=0, step=1, limit=4
    $region2: #{transformer_encoder_forward.11} parent=1 // loop_pre_header
      _
    $region3: #{transformer_encoder_forward.11} parent=1 // loop_header
      %s21 = sphi 0, %s25
      %p22 = scmp.ge.s32.totalorder %s21, 4
      %s28 = sphi 0, %s40
      %s29 = sphi 0, %s36
      %s30 = sphi 0, %s28
      %s31 = sphi 0, %s29
      %s32 = sphi 0, %s30
      %s33 = sphi 0, %s31
      %s43 = sphi 0, %s45
      %s46 = sphi 0, %s43
      %s47 = sphi 0, %s46
      %s63 = sphi 0, %s47
      %s69 = sphi 0, %s71
      %s72 = sphi 0, %s69
      %s73 = sphi 0, %s72
      %s89 = sphi 0, %s73
      %s93 = sphi 0, %s93
      %s95 = sphi 0, %s93
      %s96 = sphi 0, %s95
      %s110 = sphi 0, %s96
      %s114 = sphi 0, %s114
      %s116 = sphi 0, %s114
      %s117 = sphi 0, %s116
      %s131 = sphi 0, %s117
      %s135 = sphi 0, %s135
      %s137 = sphi 0, %s135
      %s138 = sphi 0, %s137
      %s152 = sphi 0, %s138
      %s156 = sphi 0, %s156
      %s158 = sphi 0, %s156
      %s159 = sphi 0, %s158
      %s173 = sphi 0, %s159
      %s179 = sphi 0, %s181
      %s182 = sphi 0, %s179
      %s183 = sphi 0, %s182
      %s199 = sphi 0, %s183
      %s205 = sphi 0, %s207
      %s208 = sphi 0, %s205
      %s209 = sphi 0, %s208
      %s225 = sphi 0, %s209
      %s231 = sphi 0, %s233
      %s234 = sphi 0, %s231
      %s235 = sphi 0, %s234
      %s251 = sphi 0, %s235
      %s255 = sphi 0, %s255
      %s257 = sphi 0, %s255
      %s258 = sphi 0, %s257
      %s272 = sphi 0, %s258
      %s276 = sphi 0, %s276
      %s278 = sphi 0, %s276
      %s279 = sphi 0, %s278
      %s293 = sphi 0, %s279
      %s297 = sphi 0, %s297
      %s299 = sphi 0, %s297
      %s300 = sphi 0, %s299
      %s314 = sphi 0, %s300
      %s320 = sphi 0, %s322
      %s323 = sphi 0, %s320
      %s324 = sphi 0, %s323
      %s340 = sphi 0, %s324
    $region4: #{transformer_encoder_forward.11} parent=1 // loop_header_branch
      %24 = sbr.rel (%p22) target = $region8
    $region5: #{transformer_encoder_forward.11} parent=1 // loop_body
      %s26 = ssub.s32 %s21, 1
      %s27 = ssub.s32 %s21, 2
      %s34 = sadd.s32 1, %s29
      %p35 = scmp.ge.s32.totalorder %s34, 1
      %s36 = scalar_select %p35, 0, %s34
      %s37 = sadd.s32 1, %s28
      %s38 = scalar_select %p35, %s37, %s28
      %p39 = scmp.ge.s32.totalorder %s38, 2
      %s40 = scalar_select %p39, 0, %s38
      %s41 = ssub.s32 %s28, %s40
      %p42 = scmp.eq.s32.totalorder %s41, 0
      %s44 = sadd.s32 %s43, 1
      %s45 = scalar_select %p42, %s43, %s44
      %p48 = pneg %p42
      %p49 = scmp.eq.s32.totalorder %s21, 1
      %p50 = por %p48, %p49
      %p51 = scmp.ne.s32.totalorder %s43, %s46
      %p52 = scmp.eq.s32.totalorder %s21, 0
      %p53 = por %p51, %p52
      %p54 = scmp.ne.s32.totalorder %s43, %s46
      %p55 = scmp.eq.s32.totalorder %s26, 1
      %p56 = por %p54, %p55
      %p57 = scmp.ne.s32.totalorder %s46, %s47
      %p58 = scmp.eq.s32.totalorder %s26, 0
      %p59 = por %p57, %p58
      %p60 = scmp.ne.s32.totalorder %s46, %s47
      %p61 = scmp.eq.s32.totalorder %s27, 1
      %p62 = por %p60, %p61
      %p64 = scmp.ne.s32.totalorder %s47, %s63
      %p65 = scmp.eq.s32.totalorder %s27, 0
      %p66 = por %p64, %p65
      %s67 = ssub.s32 %s28, %s40
      %p68 = scmp.eq.s32.totalorder %s67, 0
      %s70 = sadd.s32 %s69, 1
      %s71 = scalar_select %p68, %s69, %s70
      %p74 = pneg %p68
      %p75 = scmp.eq.s32.totalorder %s21, 1
      %p76 = por %p74, %p75
      %p77 = scmp.ne.s32.totalorder %s69, %s72
      %p78 = scmp.eq.s32.totalorder %s21, 0
      %p79 = por %p77, %p78
      %p80 = scmp.ne.s32.totalorder %s69, %s72
      %p81 = scmp.eq.s32.totalorder %s26, 1
      %p82 = por %p80, %p81
      %p83 = scmp.ne.s32.totalorder %s72, %s73
      %p84 = scmp.eq.s32.totalorder %s26, 0
      %p85 = por %p83, %p84
      %p86 = scmp.ne.s32.totalorder %s72, %s73
      %p87 = scmp.eq.s32.totalorder %s27, 1
      %p88 = por %p86, %p87
      %p90 = scmp.ne.s32.totalorder %s73, %s89
      %p91 = scmp.eq.s32.totalorder %s27, 0
      %p92 = por %p90, %p91
      %s94 = sadd.s32 %s93, 1
      %p97 = scmp.eq.s32.totalorder %s21, 1
      %p98 = scmp.ne.s32.totalorder %s93, %s95
      %p99 = scmp.eq.s32.totalorder %s21, 0
      %p100 = por %p98, %p99
      %p101 = scmp.ne.s32.totalorder %s93, %s95
      %p102 = scmp.eq.s32.totalorder %s26, 1
      %p103 = por %p101, %p102
      %p104 = scmp.ne.s32.totalorder %s95, %s96
      %p105 = scmp.eq.s32.totalorder %s26, 0
      %p106 = por %p104, %p105
      %p107 = scmp.ne.s32.totalorder %s95, %s96
      %p108 = scmp.eq.s32.totalorder %s27, 1
      %p109 = por %p107, %p108
      %p111 = scmp.ne.s32.totalorder %s96, %s110
      %p112 = scmp.eq.s32.totalorder %s27, 0
      %p113 = por %p111, %p112
      %s115 = sadd.s32 %s114, 1
      %p118 = scmp.eq.s32.totalorder %s21, 1
      %p119 = scmp.ne.s32.totalorder %s114, %s116
      %p120 = scmp.eq.s32.totalorder %s21, 0
      %p121 = por %p119, %p120
      %p122 = scmp.ne.s32.totalorder %s114, %s116
      %p123 = scmp.eq.s32.totalorder %s26, 1
      %p124 = por %p122, %p123
      %p125 = scmp.ne.s32.totalorder %s116, %s117
      %p126 = scmp.eq.s32.totalorder %s26, 0
      %p127 = por %p125, %p126
      %p128 = scmp.ne.s32.totalorder %s116, %s117
      %p129 = scmp.eq.s32.totalorder %s27, 1
      %p130 = por %p128, %p129
      %p132 = scmp.ne.s32.totalorder %s117, %s131
      %p133 = scmp.eq.s32.totalorder %s27, 0
      %p134 = por %p132, %p133
      %s136 = sadd.s32 %s135, 1
      %p139 = scmp.eq.s32.totalorder %s21, 1
      %p140 = scmp.ne.s32.totalorder %s135, %s137
      %p141 = scmp.eq.s32.totalorder %s21, 0
      %p142 = por %p140, %p141
      %p143 = scmp.ne.s32.totalorder %s135, %s137
      %p144 = scmp.eq.s32.totalorder %s26, 1
      %p145 = por %p143, %p144
      %p146 = scmp.ne.s32.totalorder %s137, %s138
      %p147 = scmp.eq.s32.totalorder %s26, 0
      %p148 = por %p146, %p147
      %p149 = scmp.ne.s32.totalorder %s137, %s138
      %p150 = scmp.eq.s32.totalorder %s27, 1
      %p151 = por %p149, %p150
      %p153 = scmp.ne.s32.totalorder %s138, %s152
      %p154 = scmp.eq.s32.totalorder %s27, 0
      %p155 = por %p153, %p154
      %s157 = sadd.s32 %s156, 1
      %p160 = scmp.eq.s32.totalorder %s21, 1
      %p161 = scmp.ne.s32.totalorder %s156, %s158
      %p162 = scmp.eq.s32.totalorder %s21, 0
      %p163 = por %p161, %p162
      %p164 = scmp.ne.s32.totalorder %s156, %s158
      %p165 = scmp.eq.s32.totalorder %s26, 1
      %p166 = por %p164, %p165
      %p167 = scmp.ne.s32.totalorder %s158, %s159
      %p168 = scmp.eq.s32.totalorder %s26, 0
      %p169 = por %p167, %p168
      %p170 = scmp.ne.s32.totalorder %s158, %s159
      %p171 = scmp.eq.s32.totalorder %s27, 1
      %p172 = por %p170, %p171
      %p174 = scmp.ne.s32.totalorder %s159, %s173
      %p175 = scmp.eq.s32.totalorder %s27, 0
      %p176 = por %p174, %p175
      %s177 = ssub.s32 %s29, %s36
      %p178 = scmp.eq.s32.totalorder %s177, 0
      %s180 = sadd.s32 %s179, 1
      %s181 = scalar_select %p178, %s179, %s180
      %p184 = pneg %p178
      %p185 = scmp.eq.s32.totalorder %s21, 1
      %p186 = por %p184, %p185
      %p187 = scmp.ne.s32.totalorder %s179, %s182
      %p188 = scmp.eq.s32.totalorder %s21, 0
      %p189 = por %p187, %p188
      %p190 = scmp.ne.s32.totalorder %s179, %s182
      %p191 = scmp.eq.s32.totalorder %s26, 1
      %p192 = por %p190, %p191
      %p193 = scmp.ne.s32.totalorder %s182, %s183
      %p194 = scmp.eq.s32.totalorder %s26, 0
      %p195 = por %p193, %p194
      %p196 = scmp.ne.s32.totalorder %s182, %s183
      %p197 = scmp.eq.s32.totalorder %s27, 1
      %p198 = por %p196, %p197
      %p200 = scmp.ne.s32.totalorder %s183, %s199
      %p201 = scmp.eq.s32.totalorder %s27, 0
      %p202 = por %p200, %p201
      %s203 = ssub.s32 %s29, %s36
      %p204 = scmp.eq.s32.totalorder %s203, 0
      %s206 = sadd.s32 %s205, 1
      %s207 = scalar_select %p204, %s205, %s206
      %p210 = pneg %p204
      %p211 = scmp.eq.s32.totalorder %s21, 1
      %p212 = por %p210, %p211
      %p213 = scmp.ne.s32.totalorder %s205, %s208
      %p214 = scmp.eq.s32.totalorder %s21, 0
      %p215 = por %p213, %p214
      %p216 = scmp.ne.s32.totalorder %s205, %s208
      %p217 = scmp.eq.s32.totalorder %s26, 1
      %p218 = por %p216, %p217
      %p219 = scmp.ne.s32.totalorder %s208, %s209
      %p220 = scmp.eq.s32.totalorder %s26, 0
      %p221 = por %p219, %p220
      %p222 = scmp.ne.s32.totalorder %s208, %s209
      %p223 = scmp.eq.s32.totalorder %s27, 1
      %p224 = por %p222, %p223
      %p226 = scmp.ne.s32.totalorder %s209, %s225
      %p227 = scmp.eq.s32.totalorder %s27, 0
      %p228 = por %p226, %p227
      %s229 = ssub.s32 %s29, %s36
      %p230 = scmp.eq.s32.totalorder %s229, 0
      %s232 = sadd.s32 %s231, 1
      %s233 = scalar_select %p230, %s231, %s232
      %p236 = pneg %p230
      %p237 = scmp.eq.s32.totalorder %s21, 1
      %p238 = por %p236, %p237
      %p239 = scmp.ne.s32.totalorder %s231, %s234
      %p240 = scmp.eq.s32.totalorder %s21, 0
      %p241 = por %p239, %p240
      %p242 = scmp.ne.s32.totalorder %s231, %s234
      %p243 = scmp.eq.s32.totalorder %s26, 1
      %p244 = por %p242, %p243
      %p245 = scmp.ne.s32.totalorder %s234, %s235
      %p246 = scmp.eq.s32.totalorder %s26, 0
      %p247 = por %p245, %p246
      %p248 = scmp.ne.s32.totalorder %s234, %s235
      %p249 = scmp.eq.s32.totalorder %s27, 1
      %p250 = por %p248, %p249
      %p252 = scmp.ne.s32.totalorder %s235, %s251
      %p253 = scmp.eq.s32.totalorder %s27, 0
      %p254 = por %p252, %p253
      %s256 = sadd.s32 %s255, 1
      %p259 = scmp.eq.s32.totalorder %s21, 1
      %p260 = scmp.ne.s32.totalorder %s255, %s257
      %p261 = scmp.eq.s32.totalorder %s21, 0
      %p262 = por %p260, %p261
      %p263 = scmp.ne.s32.totalorder %s255, %s257
      %p264 = scmp.eq.s32.totalorder %s26, 1
      %p265 = por %p263, %p264
      %p266 = scmp.ne.s32.totalorder %s257, %s258
      %p267 = scmp.eq.s32.totalorder %s26, 0
      %p268 = por %p266, %p267
      %p269 = scmp.ne.s32.totalorder %s257, %s258
      %p270 = scmp.eq.s32.totalorder %s27, 1
      %p271 = por %p269, %p270
      %p273 = scmp.ne.s32.totalorder %s258, %s272
      %p274 = scmp.eq.s32.totalorder %s27, 0
      %p275 = por %p273, %p274
      %s277 = sadd.s32 %s276, 1
      %p280 = scmp.eq.s32.totalorder %s21, 1
      %p281 = scmp.ne.s32.totalorder %s276, %s278
      %p282 = scmp.eq.s32.totalorder %s21, 0
      %p283 = por %p281, %p282
      %p284 = scmp.ne.s32.totalorder %s276, %s278
      %p285 = scmp.eq.s32.totalorder %s26, 1
      %p286 = por %p284, %p285
      %p287 = scmp.ne.s32.totalorder %s278, %s279
      %p288 = scmp.eq.s32.totalorder %s26, 0
      %p289 = por %p287, %p288
      %p290 = scmp.ne.s32.totalorder %s278, %s279
      %p291 = scmp.eq.s32.totalorder %s27, 1
      %p292 = por %p290, %p291
      %p294 = scmp.ne.s32.totalorder %s279, %s293
      %p295 = scmp.eq.s32.totalorder %s27, 0
      %p296 = por %p294, %p295
      %s298 = sadd.s32 %s297, 1
      %p301 = scmp.eq.s32.totalorder %s21, 1
      %p302 = scmp.ne.s32.totalorder %s297, %s299
      %p303 = scmp.eq.s32.totalorder %s21, 0
      %p304 = por %p302, %p303
      %p305 = scmp.ne.s32.totalorder %s297, %s299
      %p306 = scmp.eq.s32.totalorder %s26, 1
      %p307 = por %p305, %p306
      %p308 = scmp.ne.s32.totalorder %s299, %s300
      %p309 = scmp.eq.s32.totalorder %s26, 0
      %p310 = por %p308, %p309
      %p311 = scmp.ne.s32.totalorder %s299, %s300
      %p312 = scmp.eq.s32.totalorder %s27, 1
      %p313 = por %p311, %p312
      %p315 = scmp.ne.s32.totalorder %s300, %s314
      %p316 = scmp.eq.s32.totalorder %s27, 0
      %p317 = por %p315, %p316
      %s318 = ssub.s32 %s28, %s40
      %p319 = scmp.eq.s32.totalorder %s318, 0
      %s321 = sadd.s32 %s320, 1
      %s322 = scalar_select %p319, %s320, %s321
      %p325 = pneg %p319
      %p326 = scmp.eq.s32.totalorder %s21, 1
      %p327 = por %p325, %p326
      %p328 = scmp.ne.s32.totalorder %s320, %s323
      %p329 = scmp.eq.s32.totalorder %s21, 0
      %p330 = por %p328, %p329
      %p331 = scmp.ne.s32.totalorder %s320, %s323
      %p332 = scmp.eq.s32.totalorder %s26, 1
      %p333 = por %p331, %p332
      %p334 = scmp.ne.s32.totalorder %s323, %s324
      %p335 = scmp.eq.s32.totalorder %s26, 0
      %p336 = por %p334, %p335
      %p337 = scmp.ne.s32.totalorder %s323, %s324
      %p338 = scmp.eq.s32.totalorder %s27, 1
      %p339 = por %p337, %p338
      %p341 = scmp.ne.s32.totalorder %s324, %s340
      %p342 = scmp.eq.s32.totalorder %s27, 0
      %p343 = por %p341, %p342
      %p344 = scmp.le.s32.totalorder 1, %s21
      %p345 = scmp.lt.s32.totalorder %s21, 3
      %p346 = pnand %p344, %p345
      %p347 = pneg %p346
      // Predicated region
      $region9: #{transformer_encoder_forward.11} parent=5 // pred_check
        _
      $region10: #{transformer_encoder_forward.11} parent=5 // pred_check_branch
        %349 = sbr.rel (%p346) target = $region12
      $region11: #{transformer_encoder_forward.11} parent=5 // pred_region
        %s350 = ssub.s32 %s21, 1
        // Predicated region
        $region13: #{transformer_encoder_forward.11} parent=11 // pred_check
          %p351 = pneg %p106
        $region14: #{transformer_encoder_forward.11} parent=11 // pred_check_branch
          %353 = sbr.rel (%p351) target = $region16
        $region15: #{transformer_encoder_forward.11} parent=11 // pred_region
          _
        $region16: #{transformer_encoder_forward.11} parent=11 // pred_fallthru
          _
        // Predicated region
        $region17: #{transformer_encoder_forward.11} parent=11 // pred_check
          %p354 = pneg %p127
        $region18: #{transformer_encoder_forward.11} parent=11 // pred_check_branch
          %356 = sbr.rel (%p354) target = $region20
        $region19: #{transformer_encoder_forward.11} parent=11 // pred_region
          _
        $region20: #{transformer_encoder_forward.11} parent=11 // pred_fallthru
          _
        // Predicated region
        $region21: #{transformer_encoder_forward.11} parent=11 // pred_check
          %p357 = pneg %p148
        $region22: #{transformer_encoder_forward.11} parent=11 // pred_check_branch
          %359 = sbr.rel (%p357) target = $region24
        $region23: #{transformer_encoder_forward.11} parent=11 // pred_region
          _
        $region24: #{transformer_encoder_forward.11} parent=11 // pred_fallthru
          _
        // Predicated region
        $region25: #{transformer_encoder_forward.11} parent=11 // pred_check
          %p360 = pneg %p169
        $region26: #{transformer_encoder_forward.11} parent=11 // pred_check_branch
          %362 = sbr.rel (%p360) target = $region28
        $region27: #{transformer_encoder_forward.11} parent=11 // pred_region
          _
        $region28: #{transformer_encoder_forward.11} parent=11 // pred_fallthru
          _
        // Predicated region
        $region29: #{transformer_encoder_forward.11} parent=11 // pred_check
          %p363 = pneg %p195
        $region30: #{transformer_encoder_forward.11} parent=11 // pred_check_branch
          %365 = sbr.rel (%p363) target = $region32
        $region31: #{transformer_encoder_forward.11} parent=11 // pred_region
          %p366 = scmp.lt.s32.totalorder %s31, 0
          %s367 = scalar_select %p366, %s31, 0
          %s368 = smul.addr %s367, 8
          %s369 = scalar_lea.vmem %s6, %s368
        $region32: #{transformer_encoder_forward.11} parent=11 // pred_fallthru
          _
        // Predicated region
        $region33: #{transformer_encoder_forward.11} parent=11 // pred_check
          %p370 = pneg %p221
        $region34: #{transformer_encoder_forward.11} parent=11 // pred_check_branch
          %372 = sbr.rel (%p370) target = $region36
        $region35: #{transformer_encoder_forward.11} parent=11 // pred_region
          %p373 = scmp.lt.s32.totalorder %s31, 0
          %s374 = scalar_select %p373, %s31, 0
          %s375 = scalar_lea.vmem %s7, %s374
        $region36: #{transformer_encoder_forward.11} parent=11 // pred_fallthru
          _
        // Predicated region
        $region37: #{transformer_encoder_forward.11} parent=11 // pred_check
          %p376 = pneg %p247
        $region38: #{transformer_encoder_forward.11} parent=11 // pred_check_branch
          %378 = sbr.rel (%p376) target = $region40
        $region39: #{transformer_encoder_forward.11} parent=11 // pred_region
          %s379 = smul.u32 16, %s31
          %p380 = scmp.lt.s32.totalorder %s379, 15
          %s381 = scalar_select %p380, %s379, 15
          %s382 = smul.addr %s381, 8
          %s383 = scalar_lea.vmem %s8, %s382
          %s384 = smul.u32 16, %s31
        $region40: #{transformer_encoder_forward.11} parent=11 // pred_fallthru
          _
        // Predicated region
        $region41: #{transformer_encoder_forward.11} parent=11 // pred_check
          %p385 = pneg %p268
        $region42: #{transformer_encoder_forward.11} parent=11 // pred_check_branch
          %387 = sbr.rel (%p385) target = $region44
        $region43: #{transformer_encoder_forward.11} parent=11 // pred_region
          _
        $region44: #{transformer_encoder_forward.11} parent=11 // pred_fallthru
          _
        // Predicated region
        $region45: #{transformer_encoder_forward.11} parent=11 // pred_check
          %p388 = pneg %p289
        $region46: #{transformer_encoder_forward.11} parent=11 // pred_check_branch
          %390 = sbr.rel (%p388) target = $region48
        $region47: #{transformer_encoder_forward.11} parent=11 // pred_region
          _
        $region48: #{transformer_encoder_forward.11} parent=11 // pred_fallthru
          _
        // Predicated region
        $region49: #{transformer_encoder_forward.11} parent=11 // pred_check
          %p391 = pneg %p310
        $region50: #{transformer_encoder_forward.11} parent=11 // pred_check_branch
          %393 = sbr.rel (%p391) target = $region52
        $region51: #{transformer_encoder_forward.11} parent=11 // pred_region
          _
        $region52: #{transformer_encoder_forward.11} parent=11 // pred_fallthru
          _
      $region12: #{transformer_encoder_forward.11} parent=5 // pred_fallthru
        _
      %p394 = scmp.lt.s32.totalorder %s21, 2
      // Predicated region
      $region53: #{transformer_encoder_forward.11} parent=5 // pred_check
        %p395 = pneg %p394
      $region54: #{transformer_encoder_forward.11} parent=5 // pred_check_branch
        %397 = sbr.rel (%p395) target = $region56
      $region55: #{transformer_encoder_forward.11} parent=5 // pred_region
        // Predicated region
        $region57: #{transformer_encoder_forward.11} parent=55 // pred_check
          %p398 = pneg %p53
        $region58: #{transformer_encoder_forward.11} parent=55 // pred_check_branch
          %400 = sbr.rel (%p398) target = $region60
        $region59: #{transformer_encoder_forward.11} parent=55 // pred_region
          %p401 = scmp.lt.s32.totalorder %s28, 1
          %s402 = scalar_select %p401, %s28, 1
          %s403 = smul.addr %s402, 8
          %s404 = scalar_lea.vmem %s0, %s403
        $region60: #{transformer_encoder_forward.11} parent=55 // pred_fallthru
          _
        // Predicated region
        $region61: #{transformer_encoder_forward.11} parent=55 // pred_check
          %p405 = pneg %p79
        $region62: #{transformer_encoder_forward.11} parent=55 // pred_check_branch
          %407 = sbr.rel (%p405) target = $region64
        $region63: #{transformer_encoder_forward.11} parent=55 // pred_region
          %p408 = scmp.lt.s32.totalorder %s28, 1
          %s409 = scalar_select %p408, %s28, 1
          %s410 = smul.addr %s409, 8
          %s411 = scalar_lea.vmem %s1, %s410
        $region64: #{transformer_encoder_forward.11} parent=55 // pred_fallthru
          _
      $region56: #{transformer_encoder_forward.11} parent=5 // pred_fallthru
        _
      %p412 = scmp.le.s32.totalorder 1, %s21
      %p413 = scmp.lt.s32.totalorder %s21, 3
      %p414 = pnand %p412, %p413
      %p415 = pneg %p414
      // Predicated region
      $region65: #{transformer_encoder_forward.11} parent=5 // pred_check
        _
      $region66: #{transformer_encoder_forward.11} parent=5 // pred_check_branch
        %417 = sbr.rel (%p414) target = $region68
      $region67: #{transformer_encoder_forward.11} parent=5 // pred_region
        %s418 = ssub.s32 %s21, 1
        %p419 = scmp.lt.s32.totalorder %s30, 1
        %s420 = scalar_select %p419, %s30, 1
        %s421 = smul.addr %s420, 8
        %s422 = scalar_lea.vmem %s0, %s421
        %p423 = pneg %p59
        %p424 = pneg %p56
        %p425 = scmp.lt.s32.totalorder %s30, 1
        %s426 = scalar_select %p425, %s30, 1
        %s427 = smul.addr %s426, 8
        %s428 = scalar_lea.vmem %s1, %s427
        %p429 = pneg %p85
        %p430 = pneg %p82
        %p431 = pneg %p106
        %p432 = pneg %p103
        %p433 = pneg %p127
        %p434 = pneg %p124
        %p435 = pneg %p148
        %p436 = pneg %p145
        %p437 = pneg %p169
        %p438 = pneg %p166
        %p439 = scmp.lt.s32.totalorder %s31, 0
        %s440 = scalar_select %p439, %s31, 0
        %s441 = smul.addr %s440, 8
        %s442 = scalar_lea.vmem %s6, %s441
        %p443 = pneg %p195
        %p444 = pneg %p192
        %p445 = scmp.lt.s32.totalorder %s31, 0
        %s446 = scalar_select %p445, %s31, 0
        %s447 = scalar_lea.vmem %s7, %s446
        %p448 = pneg %p221
        %p449 = pneg %p218
        %s450 = smul.u32 16, %s31
        %p451 = scmp.lt.s32.totalorder %s450, 15
        %s452 = scalar_select %p451, %s450, 15
        %s453 = smul.addr %s452, 8
        %s454 = scalar_lea.vmem %s8, %s453
        %p455 = pneg %p247
        %p456 = pneg %p244
        %p457 = pneg %p268
        %p458 = pneg %p265
        %p459 = pneg %p289
        %p460 = pneg %p286
        %p461 = pneg %p310
        %p462 = pneg %p307
        %p463 = pneg %p336
        %p464 = pneg %p333
        %s465 = sand.u32 %s323, 1
        %s466 = scalar_lea.sflag [#allocation5], %s465
        %s467 = sand.u32 %s323, 1
        %s468 = smul.addr %s467, 8
        %s469 = scalar_lea.vmem [#allocation4], %s468
        %p470 = scmp.lt.s32.totalorder %s30, 1
        %s471 = scalar_select %p470, %s30, 1
        %s472 = smul.addr %s471, 8
        %s473 = scalar_lea.vmem %s0, %s472
        %p474 = scmp.lt.s32.totalorder %s30, 1
        %s475 = scalar_select %p474, %s30, 1
        %s476 = smul.addr %s475, 8
        %s477 = scalar_lea.vmem %s1, %s476
        %p478 = scmp.lt.s32.totalorder %s31, 0
        %s479 = scalar_select %p478, %s31, 0
        %s480 = smul.addr %s479, 8
        %s481 = scalar_lea.vmem %s6, %s480
        %p482 = scmp.lt.s32.totalorder %s31, 0
        %s483 = scalar_select %p482, %s31, 0
        %s484 = scalar_lea.vmem %s7, %s483
        %s485 = smul.u32 16, %s31
        %p486 = scmp.lt.s32.totalorder %s485, 15
        %s487 = scalar_select %p486, %s485, 15
        %s488 = smul.addr %s487, 8
        %s489 = scalar_lea.vmem %s8, %s488
        %s490 = smul.u32 16, %s31
        %p491 = scmp.eq.s32.totalorder %s31, 0
        // Predicated region
        $region69: #{transformer_encoder_forward.11} parent=67 // pred_check
          %p492 = pneg %p491
        $region70: #{transformer_encoder_forward.11} parent=67 // pred_check_branch
          %494 = sbr.rel (%p492) target = $region72
        $region71: #{transformer_encoder_forward.11} parent=67 // pred_region
          %v495 = vld [vmem:[%s477] sm:$0xff]
          %v496 = vld [vmem:[%s2] sm:$0xff]
          %v497 = vld [vmem:[%s2 + $0x8] sm:$0xff]
          %v498 = vld [vmem:[%s2 + $0x10] sm:$0xff]
          %v499 = vld [vmem:[%s2 + $0x18] sm:$0xff]
          %v500 = vld [vmem:[%s3] sm:$0x1]
          %v502 = vperm.slane %v500, 0
          %vm504 = vcmask 261120
          %v506 = vsel %vm504, %v495, 0
          %508 = vmatpush.msra.mxu0 0.0
          %509 = vmatpush.msra.mxu0 0.0
          %510 = vmatpush.msra.mxu0 0.0
          %511 = vmatpush.msra.mxu0 0.0
          %512 = vmatpush.msra.mxu0 0.0
          %513 = vmatpush.msra.mxu0 0.0
          %514 = vmatpush.msra.mxu0 0.0
          %515 = vmatpush.msra.mxu0 0.0
          %516 = vmatpush.msra.mxu0 0.0
          %517 = vmatpush.msra.mxu0 0.0
          %518 = vmatpush.msra.mxu0 0.0
          %519 = vmatpush.msra.mxu0 0.0
          %520 = vmatpush.msra.mxu0 %v499
          %521 = vmatpush.msra.mxu0 %v498
          %522 = vmatpush.msra.mxu0 %v497
          %523 = vmatpush.msra.mxu0 %v496
          %524 = vmatmul.f32.gmra.mxu0 %v506
          %v525 = vpop.f32.mrf.mxu0
          %v526 = vadd.f32 %v502, %v525
          %527 = vdwg.mxu0
          %v528 = vld [vmem:[%s473] sm:$0xff]
          %v529 = vadd.f32 %v528, %v526
          %v530 = vld [vmem:[%s4] sm:$0x1]
          %v531 = vld [vmem:[%s5] sm:$0x1]
          %v532 = vsel %vm504, %v529, 0.0
          %533 = vadd.xlane.f32.xlu0 %v532
          %v534 = vpop.xlane.xlu0 %533
          %v535 = vrcp.pop 32.0
          %v536 = vmul.f32 32.0, %v535
          %v537 = vsub.f32 1.0, %v536
          %v538 = vmul.f32 %v535, %v537
          %v539 = vadd.f32 %v535, %v538
          %vm540 = vweird.f32 %v535
          %v541 = vsel %vm540, %v535, %v539
          %v542 = vmul.f32 %v534, %v541
          %v543 = vsub.f32 %v529, %v542
          %v544 = vmul.f32 %v543, %v543
          %v545 = vsel %vm504, %v544, 0.0
          %546 = vadd.xlane.f32.xlu0 %v545
          %v547 = vpop.xlane.xlu0 %546
          %v548 = vmul.f32 %v547, %v541
          %v549 = vadd.f32 %v548, 1e-05
          %v550 = vrsqrt.pop %v549
          %v551 = vmul.f32 %v550, %v549
          %v552 = vmul.f32 %v551, %v550
          %v553 = vmul.f32 0.5, %v552
          %v554 = vsub.f32 1.5, %v553
          %v555 = vmul.f32 %v550, %v554
          %vm556 = vweird.f32 %v549
          %vm557 = vweird.f32 %v550
          %vm558 = vmor %vm556, %vm557
          %v559 = vsel %vm558, %v550, %v555
          %v560 = vmul.f32 %v543, %v559
          %v562 = vperm.slane %v530, 0
          %v564 = vmul.f32 %v560, %v562
          %v566 = vperm.slane %v531, 0
          %v568 = vadd.f32 %v564, %v566
          %569 = vst.msk [vmem:[#allocation2] sm:$0xff] %vm504, %v568
          %570 = vst.msk [vmem:[#allocation3] sm:$0xff] %vm504, 0.0
        $region72: #{transformer_encoder_forward.11} parent=67 // pred_fallthru
          _
        %v571 = vld [vmem:[#allocation2] sm:$0xff]
        %v572 = vld [vmem:[%s481] sm:$0xff]
        %v573 = vld [vmem:[%s481 + $0x8] sm:$0xff]
        %v574 = vld [vmem:[%s481 + $0x10] sm:$0xff]
        %v575 = vld [vmem:[%s481 + $0x18] sm:$0xff]
        %v576 = vld [vmem:[%s484] sm:$0x1]
        %v578 = vperm.slane %v576, 0
        %vm580 = vcmask 261120
        %v582 = vsel %vm580, %v571, 0
        %584 = vmatpush.msra.mxu0 0.0
        %585 = vmatpush.msra.mxu0 0.0
        %586 = vmatpush.msra.mxu0 0.0
        %587 = vmatpush.msra.mxu0 0.0
        %588 = vmatpush.msra.mxu0 0.0
        %589 = vmatpush.msra.mxu0 0.0
        %590 = vmatpush.msra.mxu0 0.0
        %591 = vmatpush.msra.mxu0 0.0
        %592 = vmatpush.msra.mxu0 0.0
        %593 = vmatpush.msra.mxu0 0.0
        %594 = vmatpush.msra.mxu0 0.0
        %595 = vmatpush.msra.mxu0 0.0
        %596 = vmatpush.msra.mxu0 %v575
        %597 = vmatpush.msra.mxu0 %v574
        %598 = vmatpush.msra.mxu0 %v573
        %599 = vmatpush.msra.mxu0 %v572
        %600 = vmatmul.f32.gmra.mxu0 %v582
        %v601 = vpop.f32.mrf.mxu0
        %v602 = vadd.f32 %v578, %v601
        %603 = vdwg.mxu0
        %v604 = vmax.f32 %v602, 0.0
        %v605 = vld [vmem:[#allocation3] sm:$0xff]
        %v606 = vld [vmem:[%s489] sm:$0xff]
        %v607 = vld [vmem:[%s489 + $0x8] sm:$0xff]
        %v608 = vld [vmem:[%s489 + $0x10] sm:$0xff]
        %v609 = vld [vmem:[%s489 + $0x18] sm:$0xff]
        %v610 = vld [vmem:[%s489 + $0x20] sm:$0xff]
        %v611 = vld [vmem:[%s489 + $0x28] sm:$0xff]
        %v612 = vld [vmem:[%s489 + $0x30] sm:$0xff]
        %v613 = vld [vmem:[%s489 + $0x38] sm:$0xff]
        %v614 = vld [vmem:[%s489 + $0x40] sm:$0xff]
        %v615 = vld [vmem:[%s489 + $0x48] sm:$0xff]
        %v616 = vld [vmem:[%s489 + $0x50] sm:$0xff]
        %v617 = vld [vmem:[%s489 + $0x58] sm:$0xff]
        %v618 = vld [vmem:[%s489 + $0x60] sm:$0xff]
        %v619 = vld [vmem:[%s489 + $0x68] sm:$0xff]
        %v620 = vld [vmem:[%s489 + $0x70] sm:$0xff]
        %v621 = vld [vmem:[%s489 + $0x78] sm:$0xff]
        %622 = vmatpush.msra.mxu0 %v621
        %623 = vmatpush.msra.mxu0 %v620
        %624 = vmatpush.msra.mxu0 %v619
        %625 = vmatpush.msra.mxu0 %v618
        %626 = vmatpush.msra.mxu0 %v617
        %627 = vmatpush.msra.mxu0 %v616
        %628 = vmatpush.msra.mxu0 %v615
        %629 = vmatpush.msra.mxu0 %v614
        %630 = vmatpush.msra.mxu0 %v613
        %631 = vmatpush.msra.mxu0 %v612
        %632 = vmatpush.msra.mxu0 %v611
        %633 = vmatpush.msra.mxu0 %v610
        %634 = vmatpush.msra.mxu0 %v609
        %635 = vmatpush.msra.mxu0 %v608
        %636 = vmatpush.msra.mxu0 %v607
        %637 = vmatpush.msra.mxu0 %v606
        %638 = vmatmul.f32.gmra.mxu0 %v604
        %v639 = vpop.f32.mrf.mxu0
        %v640 = vadd.f32 0.0, %v639
        %641 = vdwg.mxu0
        %v642 = vadd.f32 %v605, %v640
        %643 = vst.msk [vmem:[#allocation3] sm:$0xff] %vm580, %v642
        // Predicated region
        $region73: #{transformer_encoder_forward.11} parent=67 // pred_check
          %p644 = pneg %p491
        $region74: #{transformer_encoder_forward.11} parent=67 // pred_check_branch
          %646 = sbr.rel (%p644) target = $region76
        $region75: #{transformer_encoder_forward.11} parent=67 // pred_region
          %v647 = vld [vmem:[#allocation2] sm:$0xff]
          %v648 = vld [vmem:[#allocation3] sm:$0xff]
          %v649 = vadd.f32 %v647, %v648
          %v650 = vld [vmem:[%s9] sm:$0x1]
          %v652 = vperm.slane %v650, 0
          %v654 = vadd.f32 %v649, %v652
          %v655 = vld [vmem:[%s10] sm:$0x1]
          %v656 = vld [vmem:[%s11] sm:$0x1]
          %v657 = vsel %vm580, %v654, 0.0
          %658 = vadd.xlane.f32.xlu0 %v657
          %v659 = vpop.xlane.xlu0 %658
          %v660 = vrcp.pop 32.0
          %v661 = vmul.f32 32.0, %v660
          %v662 = vsub.f32 1.0, %v661
          %v663 = vmul.f32 %v660, %v662
          %v664 = vadd.f32 %v660, %v663
          %vm665 = vweird.f32 %v660
          %v666 = vsel %vm665, %v660, %v664
          %v667 = vmul.f32 %v659, %v666
          %v668 = vsub.f32 %v654, %v667
          %v669 = vmul.f32 %v668, %v668
          %v670 = vsel %vm580, %v669, 0.0
          %671 = vadd.xlane.f32.xlu0 %v670
          %v672 = vpop.xlane.xlu0 %671
          %v673 = vmul.f32 %v672, %v666
          %v674 = vadd.f32 %v673, 1e-05
          %v675 = vrsqrt.pop %v674
          %v676 = vmul.f32 %v675, %v674
          %v677 = vmul.f32 %v676, %v675
          %v678 = vmul.f32 0.5, %v677
          %v679 = vsub.f32 1.5, %v678
          %v680 = vmul.f32 %v675, %v679
          %vm681 = vweird.f32 %v674
          %vm682 = vweird.f32 %v675
          %vm683 = vmor %vm681, %vm682
          %v684 = vsel %vm683, %v675, %v680
          %v685 = vmul.f32 %v668, %v684
          %v687 = vperm.slane %v655, 0
          %v689 = vmul.f32 %v685, %v687
          %v691 = vperm.slane %v656, 0
          %v693 = vadd.f32 %v689, %v691
          %694 = vst.msk [vmem:[%s469] sm:$0xff] %vm580, %v693
        $region76: #{transformer_encoder_forward.11} parent=67 // pred_fallthru
          _
        %s695 = sand.u32 %s323, 1
        %s696 = scalar_lea.sflag [#allocation5], %s695
        %s697 = sand.u32 %s323, 1
        %s698 = smul.addr %s697, 8
        %s699 = scalar_lea.vmem [#allocation4], %s698
        // Predicated region
        $region77: #{transformer_encoder_forward.11} parent=67 // pred_check
          %p700 = pneg %p333
        $region78: #{transformer_encoder_forward.11} parent=67 // pred_check_branch
          %702 = sbr.rel (%p700) target = $region80
        $region79: #{transformer_encoder_forward.11} parent=67 // pred_region
          %704 = vsyncadd %s696, 0
          %s705 = smul.addr %s30, 8
          %s706 = scalar_lea.hbm %s12, %s705
          %s708 = sshll.u32 %s699, 4
          %s709 = int_to_ptr.vmem [resolvable:$true] %s708
          %s710 = sshll.u32 %s706, 4
          %s711 = int_to_ptr.hbm [resolvable:$true] %s710
          %713 = dma.vmem_to_hbm [thread:$0]  %s709, 128, %s711, %s696
        $region80: #{transformer_encoder_forward.11} parent=67 // pred_fallthru
          _
      $region68: #{transformer_encoder_forward.11} parent=5 // pred_fallthru
        _
      %p714 = scmp.le.s32.totalorder 2, %s21
      // Predicated region
      $region81: #{transformer_encoder_forward.11} parent=5 // pred_check
        %p715 = pneg %p714
      $region82: #{transformer_encoder_forward.11} parent=5 // pred_check_branch
        %717 = sbr.rel (%p715) target = $region84
      $region83: #{transformer_encoder_forward.11} parent=5 // pred_region
        %s718 = ssub.s32 %s21, 2
        // Predicated region
        $region85: #{transformer_encoder_forward.11} parent=83 // pred_check
          %p719 = pneg %p339
        $region86: #{transformer_encoder_forward.11} parent=83 // pred_check_branch
          %721 = sbr.rel (%p719) target = $region88
        $region87: #{transformer_encoder_forward.11} parent=83 // pred_region
          %s722 = sand.u32 %s324, 1
          %s723 = scalar_lea.sflag [#allocation5], %s722
          %s724 = sand.u32 %s324, 1
          %s725 = smul.addr %s724, 8
          %s726 = scalar_lea.vmem [#allocation4], %s725
          %728 = dma.done %s723, 128
        $region88: #{transformer_encoder_forward.11} parent=83 // pred_fallthru
          _
      $region84: #{transformer_encoder_forward.11} parent=5 // pred_fallthru
        _
    $region6: #{transformer_encoder_forward.11} parent=1 // loop_footer
      %s25 = sadd.s32 1, %s21
    $region7: #{transformer_encoder_forward.11} parent=1 // loop_footer_branch
      %20 = sbr.rel target = $region3
    $region8: #{transformer_encoder_forward.11} parent=1 // loop_exit
      _
    %729 = vsyncpa [#allocation5], 1
    %s730 = scalar_lea.sflag [#allocation5], 1
    %731 = vsyncpa %s730, 1

// kernel: transformer_encoder_forward.7
$region0: #{transformer_encoder_forward.7}
  #allocation0 [shape = 'u32[]', space=smem, size = 0x4, offset = 0x4, fixed_abs, tag = 'smem constant byte address 0x4 - core index']
  #allocation1 [shape = 'u32[72,128]{1,0:T(1,128)}', space=vmem, size = 0x9000, scoped, tag = 'internal scratch']
  %s0 = inlined_call_operand.vmem [shape: f32[2,4,8,8], index: 0, kind: input, shape index: {}]
  %s1 = inlined_call_operand.vmem [shape: f32[2,4,8,8], index: 1, kind: input, shape index: {}]
  %s2 = inlined_call_operand.vmem [shape: f32[2,4,8,8], index: 2, kind: input, shape index: {}]
  %s3 = inlined_call_operand.vmem [shape: f32[2,4,8,8], index: 3, kind: output, shape index: {0}]
  %s4 = inlined_call_operand.vmem [shape: f32[2,4,8,8], index: 4, kind: output, shape index: {1}]
  %5 = xla_tuple %s3, %s4
  %s6 = sld [smem:[#allocation0]]
  $region53: #{transformer_encoder_forward.7} parent=0
    _
  %s8 = ssub.s32 1, %s6
  %s9 = scalar_select 0, %s8, %s6
  loop: start=0, step=1, limit=10
  $region2: #{transformer_encoder_forward.7} parent=0 // loop_pre_header
    _
  $region3: #{transformer_encoder_forward.7} parent=0 // loop_header
    %s11 = sphi 0, %s15
    %p12 = scmp.ge.s32.totalorder %s11, 10
    %s18 = sphi 0, %s30
    %s19 = sphi 0, %s26
    %s20 = sphi 0, %s18
    %s21 = sphi 0, %s19
    %s22 = sphi 0, %s20
    %s23 = sphi 0, %s21
    %s35 = sphi 0, %s37
    %s38 = sphi 0, %s35
    %s39 = sphi 0, %s38
    %s55 = sphi 0, %s39
    %s63 = sphi 0, %s65
    %s66 = sphi 0, %s63
    %s67 = sphi 0, %s66
    %s83 = sphi 0, %s67
    %s91 = sphi 0, %s93
    %s94 = sphi 0, %s91
    %s95 = sphi 0, %s94
    %s111 = sphi 0, %s95
    %s119 = sphi 0, %s121
    %s122 = sphi 0, %s119
    %s123 = sphi 0, %s122
    %s139 = sphi 0, %s123
    %s147 = sphi 0, %s149
    %s150 = sphi 0, %s147
    %s151 = sphi 0, %s150
    %s167 = sphi 0, %s151
  $region4: #{transformer_encoder_forward.7} parent=0 // loop_header_branch
    %14 = sbr.rel (%p12) target = $region8
  $region5: #{transformer_encoder_forward.7} parent=0 // loop_body
    %s16 = ssub.s32 %s11, 1
    %s17 = ssub.s32 %s11, 2
    %s24 = sadd.s32 1, %s19
    %p25 = scmp.ge.s32.totalorder %s24, 4
    %s26 = scalar_select %p25, 0, %s24
    %s27 = sadd.s32 1, %s18
    %s28 = scalar_select %p25, %s27, %s18
    %p29 = scmp.ge.s32.totalorder %s28, 2
    %s30 = scalar_select %p29, 0, %s28
    %s31 = ssub.s32 %s18, %s30
    %s32 = ssub.s32 %s19, %s26
    %s33 = sor.u32 %s31, %s32
    %p34 = scmp.eq.s32.totalorder %s33, 0
    %s36 = sadd.s32 %s35, 1
    %s37 = scalar_select %p34, %s35, %s36
    %p40 = pneg %p34
    %p41 = scmp.eq.s32.totalorder %s11, 7
    %p42 = por %p40, %p41
    %p43 = scmp.ne.s32.totalorder %s35, %s38
    %p44 = scmp.eq.s32.totalorder %s11, 0
    %p45 = por %p43, %p44
    %p46 = scmp.ne.s32.totalorder %s35, %s38
    %p47 = scmp.eq.s32.totalorder %s16, 7
    %p48 = por %p46, %p47
    %p49 = scmp.ne.s32.totalorder %s38, %s39
    %p50 = scmp.eq.s32.totalorder %s16, 0
    %p51 = por %p49, %p50
    %p52 = scmp.ne.s32.totalorder %s38, %s39
    %p53 = scmp.eq.s32.totalorder %s17, 7
    %p54 = por %p52, %p53
    %p56 = scmp.ne.s32.totalorder %s39, %s55
    %p57 = scmp.eq.s32.totalorder %s17, 0
    %p58 = por %p56, %p57
    %s59 = ssub.s32 %s18, %s30
    %s60 = ssub.s32 %s19, %s26
    %s61 = sor.u32 %s59, %s60
    %p62 = scmp.eq.s32.totalorder %s61, 0
    %s64 = sadd.s32 %s63, 1
    %s65 = scalar_select %p62, %s63, %s64
    %p68 = pneg %p62
    %p69 = scmp.eq.s32.totalorder %s11, 7
    %p70 = por %p68, %p69
    %p71 = scmp.ne.s32.totalorder %s63, %s66
    %p72 = scmp.eq.s32.totalorder %s11, 0
    %p73 = por %p71, %p72
    %p74 = scmp.ne.s32.totalorder %s63, %s66
    %p75 = scmp.eq.s32.totalorder %s16, 7
    %p76 = por %p74, %p75
    %p77 = scmp.ne.s32.totalorder %s66, %s67
    %p78 = scmp.eq.s32.totalorder %s16, 0
    %p79 = por %p77, %p78
    %p80 = scmp.ne.s32.totalorder %s66, %s67
    %p81 = scmp.eq.s32.totalorder %s17, 7
    %p82 = por %p80, %p81
    %p84 = scmp.ne.s32.totalorder %s67, %s83
    %p85 = scmp.eq.s32.totalorder %s17, 0
    %p86 = por %p84, %p85
    %s87 = ssub.s32 %s18, %s30
    %s88 = ssub.s32 %s19, %s26
    %s89 = sor.u32 %s87, %s88
    %p90 = scmp.eq.s32.totalorder %s89, 0
    %s92 = sadd.s32 %s91, 1
    %s93 = scalar_select %p90, %s91, %s92
    %p96 = pneg %p90
    %p97 = scmp.eq.s32.totalorder %s11, 7
    %p98 = por %p96, %p97
    %p99 = scmp.ne.s32.totalorder %s91, %s94
    %p100 = scmp.eq.s32.totalorder %s11, 0
    %p101 = por %p99, %p100
    %p102 = scmp.ne.s32.totalorder %s91, %s94
    %p103 = scmp.eq.s32.totalorder %s16, 7
    %p104 = por %p102, %p103
    %p105 = scmp.ne.s32.totalorder %s94, %s95
    %p106 = scmp.eq.s32.totalorder %s16, 0
    %p107 = por %p105, %p106
    %p108 = scmp.ne.s32.totalorder %s94, %s95
    %p109 = scmp.eq.s32.totalorder %s17, 7
    %p110 = por %p108, %p109
    %p112 = scmp.ne.s32.totalorder %s95, %s111
    %p113 = scmp.eq.s32.totalorder %s17, 0
    %p114 = por %p112, %p113
    %s115 = ssub.s32 %s18, %s30
    %s116 = ssub.s32 %s19, %s26
    %s117 = sor.u32 %s115, %s116
    %p118 = scmp.eq.s32.totalorder %s117, 0
    %s120 = sadd.s32 %s119, 1
    %s121 = scalar_select %p118, %s119, %s120
    %p124 = pneg %p118
    %p125 = scmp.eq.s32.totalorder %s11, 7
    %p126 = por %p124, %p125
    %p127 = scmp.ne.s32.totalorder %s119, %s122
    %p128 = scmp.eq.s32.totalorder %s11, 0
    %p129 = por %p127, %p128
    %p130 = scmp.ne.s32.totalorder %s119, %s122
    %p131 = scmp.eq.s32.totalorder %s16, 7
    %p132 = por %p130, %p131
    %p133 = scmp.ne.s32.totalorder %s122, %s123
    %p134 = scmp.eq.s32.totalorder %s16, 0
    %p135 = por %p133, %p134
    %p136 = scmp.ne.s32.totalorder %s122, %s123
    %p137 = scmp.eq.s32.totalorder %s17, 7
    %p138 = por %p136, %p137
    %p140 = scmp.ne.s32.totalorder %s123, %s139
    %p141 = scmp.eq.s32.totalorder %s17, 0
    %p142 = por %p140, %p141
    %s143 = ssub.s32 %s18, %s30
    %s144 = ssub.s32 %s19, %s26
    %s145 = sor.u32 %s143, %s144
    %p146 = scmp.eq.s32.totalorder %s145, 0
    %s148 = sadd.s32 %s147, 1
    %s149 = scalar_select %p146, %s147, %s148
    %p152 = pneg %p146
    %p153 = scmp.eq.s32.totalorder %s11, 7
    %p154 = por %p152, %p153
    %p155 = scmp.ne.s32.totalorder %s147, %s150
    %p156 = scmp.eq.s32.totalorder %s11, 0
    %p157 = por %p155, %p156
    %p158 = scmp.ne.s32.totalorder %s147, %s150
    %p159 = scmp.eq.s32.totalorder %s16, 7
    %p160 = por %p158, %p159
    %p161 = scmp.ne.s32.totalorder %s150, %s151
    %p162 = scmp.eq.s32.totalorder %s16, 0
    %p163 = por %p161, %p162
    %p164 = scmp.ne.s32.totalorder %s150, %s151
    %p165 = scmp.eq.s32.totalorder %s17, 7
    %p166 = por %p164, %p165
    %p168 = scmp.ne.s32.totalorder %s151, %s167
    %p169 = scmp.eq.s32.totalorder %s17, 0
    %p170 = por %p168, %p169
    %p171 = scmp.le.s32.totalorder 1, %s11
    %p172 = scmp.lt.s32.totalorder %s11, 9
    %p173 = pnand %p171, %p172
    %p174 = pneg %p173
    // Predicated region
    $region9: #{transformer_encoder_forward.7} parent=5 // pred_check
      _
    $region10: #{transformer_encoder_forward.7} parent=5 // pred_check_branch
      %176 = sbr.rel (%p173) target = $region12
    $region11: #{transformer_encoder_forward.7} parent=5 // pred_region
      %s177 = ssub.s32 %s11, 1
    $region12: #{transformer_encoder_forward.7} parent=5 // pred_fallthru
      _
    %p178 = scmp.lt.s32.totalorder %s11, 8
    // Predicated region
    $region13: #{transformer_encoder_forward.7} parent=5 // pred_check
      %p179 = pneg %p178
    $region14: #{transformer_encoder_forward.7} parent=5 // pred_check_branch
      %181 = sbr.rel (%p179) target = $region16
    $region15: #{transformer_encoder_forward.7} parent=5 // pred_region
      // Predicated region
      $region17: #{transformer_encoder_forward.7} parent=15 // pred_check
        %p182 = pneg %p45
      $region18: #{transformer_encoder_forward.7} parent=15 // pred_check_branch
        %184 = sbr.rel (%p182) target = $region20
      $region19: #{transformer_encoder_forward.7} parent=15 // pred_region
        %p185 = scmp.lt.s32.totalorder %s18, 1
        %s186 = scalar_select %p185, %s18, 1
        %p187 = scmp.lt.s32.totalorder %s19, 3
        %s188 = scalar_select %p187, %s19, 3
        %s189 = smul.addr %s186, 4
        %s190 = sadd.s32 %s188, %s189
        %s191 = smul.addr %s190, 8
        %s192 = scalar_lea.vmem %s0, %s191
      $region20: #{transformer_encoder_forward.7} parent=15 // pred_fallthru
        _
      // Predicated region
      $region21: #{transformer_encoder_forward.7} parent=15 // pred_check
        %p193 = pneg %p73
      $region22: #{transformer_encoder_forward.7} parent=15 // pred_check_branch
        %195 = sbr.rel (%p193) target = $region24
      $region23: #{transformer_encoder_forward.7} parent=15 // pred_region
        %p196 = scmp.lt.s32.totalorder %s18, 1
        %s197 = scalar_select %p196, %s18, 1
        %p198 = scmp.lt.s32.totalorder %s19, 3
        %s199 = scalar_select %p198, %s19, 3
        %s200 = smul.addr %s197, 4
        %s201 = sadd.s32 %s199, %s200
        %s202 = smul.addr %s201, 8
        %s203 = scalar_lea.vmem %s1, %s202
      $region24: #{transformer_encoder_forward.7} parent=15 // pred_fallthru
        _
      // Predicated region
      $region25: #{transformer_encoder_forward.7} parent=15 // pred_check
        %p204 = pneg %p101
      $region26: #{transformer_encoder_forward.7} parent=15 // pred_check_branch
        %206 = sbr.rel (%p204) target = $region28
      $region27: #{transformer_encoder_forward.7} parent=15 // pred_region
        %p207 = scmp.lt.s32.totalorder %s18, 1
        %s208 = scalar_select %p207, %s18, 1
        %p209 = scmp.lt.s32.totalorder %s19, 3
        %s210 = scalar_select %p209, %s19, 3
        %s211 = smul.addr %s208, 4
        %s212 = sadd.s32 %s210, %s211
        %s213 = smul.addr %s212, 8
        %s214 = scalar_lea.vmem %s2, %s213
      $region28: #{transformer_encoder_forward.7} parent=15 // pred_fallthru
        _
    $region16: #{transformer_encoder_forward.7} parent=5 // pred_fallthru
      _
    %p215 = scmp.le.s32.totalorder 1, %s11
    %p216 = scmp.lt.s32.totalorder %s11, 9
    %p217 = pnand %p215, %p216
    %p218 = pneg %p217
    // Predicated region
    $region29: #{transformer_encoder_forward.7} parent=5 // pred_check
      _
    $region30: #{transformer_encoder_forward.7} parent=5 // pred_check_branch
      %220 = sbr.rel (%p217) target = $region32
    $region31: #{transformer_encoder_forward.7} parent=5 // pred_region
      %s221 = ssub.s32 %s11, 1
      %p222 = scmp.lt.s32.totalorder %s20, 1
      %s223 = scalar_select %p222, %s20, 1
      %p224 = scmp.lt.s32.totalorder %s21, 3
      %s225 = scalar_select %p224, %s21, 3
      %s226 = smul.addr %s223, 4
      %s227 = sadd.s32 %s225, %s226
      %s228 = smul.addr %s227, 8
      %s229 = scalar_lea.vmem %s0, %s228
      %p230 = pneg %p51
      %p231 = pneg %p48
      %p232 = scmp.lt.s32.totalorder %s20, 1
      %s233 = scalar_select %p232, %s20, 1
      %p234 = scmp.lt.s32.totalorder %s21, 3
      %s235 = scalar_select %p234, %s21, 3
      %s236 = smul.addr %s233, 4
      %s237 = sadd.s32 %s235, %s236
      %s238 = smul.addr %s237, 8
      %s239 = scalar_lea.vmem %s1, %s238
      %p240 = pneg %p79
      %p241 = pneg %p76
      %p242 = scmp.lt.s32.totalorder %s20, 1
      %s243 = scalar_select %p242, %s20, 1
      %p244 = scmp.lt.s32.totalorder %s21, 3
      %s245 = scalar_select %p244, %s21, 3
      %s246 = smul.addr %s243, 4
      %s247 = sadd.s32 %s245, %s246
      %s248 = smul.addr %s247, 8
      %s249 = scalar_lea.vmem %s2, %s248
      %p250 = pneg %p107
      %p251 = pneg %p104
      %p252 = pneg %p135
      %p253 = pneg %p132
      %p254 = scmp.lt.s32.totalorder %s20, 1
      %s255 = scalar_select %p254, %s20, 1
      %p256 = scmp.lt.s32.totalorder %s21, 3
      %s257 = scalar_select %p256, %s21, 3
      %s258 = smul.addr %s255, 4
      %s259 = sadd.s32 %s257, %s258
      %s260 = smul.addr %s259, 8
      %s261 = scalar_lea.vmem %s3, %s260
      %p262 = pneg %p163
      %p263 = pneg %p160
      %p264 = scmp.lt.s32.totalorder %s20, 1
      %s265 = scalar_select %p264, %s20, 1
      %p266 = scmp.lt.s32.totalorder %s21, 3
      %s267 = scalar_select %p266, %s21, 3
      %s268 = smul.addr %s265, 4
      %s269 = sadd.s32 %s267, %s268
      %s270 = smul.addr %s269, 8
      %s271 = scalar_lea.vmem %s4, %s270
      %p272 = scmp.lt.s32.totalorder %s20, 1
      %s273 = scalar_select %p272, %s20, 1
      %p274 = scmp.lt.s32.totalorder %s21, 3
      %s275 = scalar_select %p274, %s21, 3
      %s276 = smul.addr %s273, 4
      %s277 = sadd.s32 %s275, %s276
      %s278 = smul.addr %s277, 8
      %s279 = scalar_lea.vmem %s0, %s278
      %p280 = scmp.lt.s32.totalorder %s20, 1
      %s281 = scalar_select %p280, %s20, 1
      %p282 = scmp.lt.s32.totalorder %s21, 3
      %s283 = scalar_select %p282, %s21, 3
      %s284 = smul.addr %s281, 4
      %s285 = sadd.s32 %s283, %s284
      %s286 = smul.addr %s285, 8
      %s287 = scalar_lea.vmem %s1, %s286
      %p288 = scmp.lt.s32.totalorder %s20, 1
      %s289 = scalar_select %p288, %s20, 1
      %p290 = scmp.lt.s32.totalorder %s21, 3
      %s291 = scalar_select %p290, %s21, 3
      %s292 = smul.addr %s289, 4
      %s293 = sadd.s32 %s291, %s292
      %s294 = smul.addr %s293, 8
      %s295 = scalar_lea.vmem %s2, %s294
      %p296 = scmp.lt.s32.totalorder %s20, 1
      %s297 = scalar_select %p296, %s20, 1
      %p298 = scmp.lt.s32.totalorder %s21, 3
      %s299 = scalar_select %p298, %s21, 3
      %s300 = smul.addr %s297, 4
      %s301 = sadd.s32 %s299, %s300
      %s302 = smul.addr %s301, 8
      %s303 = scalar_lea.vmem %s3, %s302
      %p304 = scmp.lt.s32.totalorder %s20, 1
      %s305 = scalar_select %p304, %s20, 1
      %p306 = scmp.lt.s32.totalorder %s21, 3
      %s307 = scalar_select %p306, %s21, 3
      %s308 = smul.addr %s305, 4
      %s309 = sadd.s32 %s307, %s308
      %s310 = smul.addr %s309, 8
      %s311 = scalar_lea.vmem %s4, %s310
      %v312 = vld [vmem:[%s279] sm:$0xff]
      %v313 = vmul.f32 %v312, 0.35355338
      %v314 = vld [vmem:[%s287] sm:$0xff]
      %v315 = vld [vmem:[%s295] sm:$0xff]
      %vm316 = vcmask 64512
      %v318 = vsel %vm316, %v313, 0
      %v321 = vsel %vm316, %v314, 0
      %323 = vmatpush.xpose.msra.mxu0 0.0
      %324 = vmatpush.xpose.msra.mxu0 0.0
      %325 = vmatpush.xpose.msra.mxu0 0.0
      %326 = vmatpush.xpose.msra.mxu0 0.0
      %327 = vmatpush.xpose.msra.mxu0 0.0
      %328 = vmatpush.xpose.msra.mxu0 0.0
      %329 = vmatpush.xpose.msra.mxu0 0.0
      %330 = vmatpush.xpose.msra.mxu0 0.0
      %331 = vmatpush.xpose.msra.mxu0 0.0
      %332 = vmatpush.xpose.msra.mxu0 0.0
      %333 = vmatpush.xpose.msra.mxu0 0.0
      %334 = vmatpush.xpose.msra.mxu0 0.0
      %335 = vmatpush.xpose.msra.mxu0 0.0
      %336 = vmatpush.xpose.msra.mxu0 0.0
      %337 = vmatpush.xpose.msra.mxu0 0.0
      %338 = vmatpush.xpose.msra.mxu0 %v321
      %339 = vmatmul.f32.gmra.mxu0 %v318
      %v340 = vpop.f32.mrf.mxu0
      %v341 = vadd.f32 0.0, %v340
      %342 = vdwg.mxu0
      %v343 = vsel %vm316, %v341, -inf
      %344 = vmax.xlane.f32.xlu0 %v343
      %v345 = vpop.xlane.xlu0 %344
      %v346 = vsub.f32 %v341, %v345
      %v347 = vmul.f32 %v346, 1.442695
      %v348 = vpow.pop %v347
      %v349 = vsel %vm316, %v348, 0.0
      %350 = vadd.xlane.f32.xlu0 %v349
      %v351 = vpop.xlane.xlu0 %350
      %v352 = vrcp.pop %v351
      %v353 = vmul.f32 %v351, %v352
      %v354 = vsub.f32 1.0, %v353
      %v355 = vmul.f32 %v352, %v354
      %v356 = vadd.f32 %v352, %v355
      %vm357 = vweird.f32 %v351
      %vm358 = vweird.f32 %v352
      %vm359 = vmor %vm357, %vm358
      %v360 = vsel %vm359, %v352, %v356
      %v361 = vand.u32 2147483647, %v351
      %vm362 = vcmp.eq.f32.partialorder %v361, 8.507059e+37
      %v363 = vand.u32 %v351, 2147483648
      %v364 = vor.u32 1.1754944e-38, %v363
      %v365 = vsel %vm362, %v364, %v360
      %v366 = vmul.f32 %v348, %v365
      %367 = vst.msk [vmem:[%s303] sm:$0xff] %vm316, %v366
      %v369 = vsel %vm316, %v366, 0
      %371 = vmatpush.msra.mxu0 0.0
      %372 = vmatpush.msra.mxu0 0.0
      %373 = vmatpush.msra.mxu0 0.0
      %374 = vmatpush.msra.mxu0 0.0
      %375 = vmatpush.msra.mxu0 0.0
      %376 = vmatpush.msra.mxu0 0.0
      %377 = vmatpush.msra.mxu0 0.0
      %378 = vmatpush.msra.mxu0 0.0
      %379 = vmatpush.msra.mxu0 0.0
      %380 = vmatpush.msra.mxu0 0.0
      %381 = vmatpush.msra.mxu0 0.0
      %382 = vmatpush.msra.mxu0 0.0
      %383 = vmatpush.msra.mxu0 0.0
      %384 = vmatpush.msra.mxu0 0.0
      %385 = vmatpush.msra.mxu0 0.0
      %386 = vmatpush.msra.mxu0 %v315
      %387 = vmatmul.f32.gmra.mxu0 %v369
      %v388 = vpop.f32.mrf.mxu0
      %v389 = vadd.f32 0.0, %v388
      %390 = vdwg.mxu0
      %391 = vst.msk [vmem:[%s311] sm:$0xff] %vm316, %v389
      %p392 = scmp.lt.s32.totalorder %s20, 1
      %s393 = scalar_select %p392, %s20, 1
      %p394 = scmp.lt.s32.totalorder %s21, 3
      %s395 = scalar_select %p394, %s21, 3
      %s396 = smul.addr %s393, 4
      %s397 = sadd.s32 %s395, %s396
      %s398 = smul.addr %s397, 8
      %s399 = scalar_lea.vmem %s3, %s398
      %p400 = scmp.lt.s32.totalorder %s20, 1
      %s401 = scalar_select %p400, %s20, 1
      %p402 = scmp.lt.s32.totalorder %s21, 3
      %s403 = scalar_select %p402, %s21, 3
      %s404 = smul.addr %s401, 4
      %s405 = sadd.s32 %s403, %s404
      %s406 = smul.addr %s405, 8
      %s407 = scalar_lea.vmem %s4, %s406
      // Predicated region
      $region33: #{transformer_encoder_forward.7} parent=31 // pred_check
        %p408 = pneg %p132
      $region34: #{transformer_encoder_forward.7} parent=31 // pred_check_branch
        %410 = sbr.rel (%p408) target = $region36
      $region35: #{transformer_encoder_forward.7} parent=31 // pred_region
        _
      $region36: #{transformer_encoder_forward.7} parent=31 // pred_fallthru
        _
      // Predicated region
      $region37: #{transformer_encoder_forward.7} parent=31 // pred_check
        %p411 = pneg %p160
      $region38: #{transformer_encoder_forward.7} parent=31 // pred_check_branch
        %413 = sbr.rel (%p411) target = $region40
      $region39: #{transformer_encoder_forward.7} parent=31 // pred_region
        _
      $region40: #{transformer_encoder_forward.7} parent=31 // pred_fallthru
        _
    $region32: #{transformer_encoder_forward.7} parent=5 // pred_fallthru
      _
    %p414 = scmp.le.s32.totalorder 2, %s11
    // Predicated region
    $region41: #{transformer_encoder_forward.7} parent=5 // pred_check
      %p415 = pneg %p414
    $region42: #{transformer_encoder_forward.7} parent=5 // pred_check_branch
      %417 = sbr.rel (%p415) target = $region44
    $region43: #{transformer_encoder_forward.7} parent=5 // pred_region
      %s418 = ssub.s32 %s11, 2
      // Predicated region
      $region45: #{transformer_encoder_forward.7} parent=43 // pred_check
        %p419 = pneg %p138
      $region46: #{transformer_encoder_forward.7} parent=43 // pred_check_branch
        %421 = sbr.rel (%p419) target = $region48
      $region47: #{transformer_encoder_forward.7} parent=43 // pred_region
        %p422 = scmp.lt.s32.totalorder %s22, 1
        %s423 = scalar_select %p422, %s22, 1
        %p424 = scmp.lt.s32.totalorder %s23, 3
        %s425 = scalar_select %p424, %s23, 3
        %s426 = smul.addr %s423, 4
        %s427 = sadd.s32 %s425, %s426
        %s428 = smul.addr %s427, 8
        %s429 = scalar_lea.vmem %s3, %s428
      $region48: #{transformer_encoder_forward.7} parent=43 // pred_fallthru
        _
      // Predicated region
      $region49: #{transformer_encoder_forward.7} parent=43 // pred_check
        %p430 = pneg %p166
      $region50: #{transformer_encoder_forward.7} parent=43 // pred_check_branch
        %432 = sbr.rel (%p430) target = $region52
      $region51: #{transformer_encoder_forward.7} parent=43 // pred_region
        %p433 = scmp.lt.s32.totalorder %s22, 1
        %s434 = scalar_select %p433, %s22, 1
        %p435 = scmp.lt.s32.totalorder %s23, 3
        %s436 = scalar_select %p435, %s23, 3
        %s437 = smul.addr %s434, 4
        %s438 = sadd.s32 %s436, %s437
        %s439 = smul.addr %s438, 8
        %s440 = scalar_lea.vmem %s4, %s439
      $region52: #{transformer_encoder_forward.7} parent=43 // pred_fallthru
        _
    $region44: #{transformer_encoder_forward.7} parent=5 // pred_fallthru
      _
  $region6: #{transformer_encoder_forward.7} parent=0 // loop_footer
    %s15 = sadd.s32 1, %s11
  $region7: #{transformer_encoder_forward.7} parent=0 // loop_footer_branch
    %10 = sbr.rel target = $region3
  $region8: #{transformer_encoder_forward.7} parent=0 // loop_exit
    _

// kernel: transformer_encoder_forward.6
$region0: #{transformer_encoder_forward.6}
  #allocation0 [shape = 'u32[]', space=smem, size = 0x4, offset = 0x4, fixed_abs, tag = 'smem constant byte address 0x4 - core index']
  #allocation1 [shape = 'u32[72,128]{1,0:T(1,128)}', space=vmem, size = 0x9000, scoped, tag = 'internal scratch']
  %s0 = inlined_call_operand.vmem [shape: f32[2,8,32], index: 0, kind: input, shape index: {}]
  %s1 = inlined_call_operand.hbm [shape: f32[32,32], index: 1, kind: input, shape index: {}]
  %s2 = inlined_call_operand.hbm [shape: f32[32,32], index: 2, kind: input, shape index: {}]
  %s3 = inlined_call_operand.hbm [shape: f32[32,32], index: 3, kind: input, shape index: {}]
  %s4 = inlined_call_operand.vmem [shape: f32[1,32], index: 4, kind: input, shape index: {}]
  %s5 = inlined_call_operand.vmem [shape: f32[1,32], index: 5, kind: input, shape index: {}]
  %s6 = inlined_call_operand.vmem [shape: f32[1,32], index: 6, kind: input, shape index: {}]
  %s7 = inlined_call_operand.vmem [shape: f32[2,8,32], index: 7, kind: output, shape index: {0}]
  %s8 = inlined_call_operand.vmem [shape: f32[2,8,32], index: 8, kind: output, shape index: {1}]
  %s9 = inlined_call_operand.vmem [shape: f32[2,8,32], index: 9, kind: output, shape index: {2}]
  %10 = xla_tuple %s7, %s8, %s9
  %s11 = sld [smem:[#allocation0]]
  $region89: #{transformer_encoder_forward.6} parent=0
    _
  %s13 = ssub.s32 1, %s11
  %s14 = scalar_select 0, %s13, %s11
  $region1: #{transformer_encoder_forward.6} parent=0
    #allocation2 [shape = 'u8[16384]{0}', space=vmem, size = 0x4000, scoped, tag = 'input window, operand 1, single buffered']
    #allocation3 [shape = 's32[2]{0}', space=sflag, size = 0x8, scoped, tag = 'scoped memory for transformer_encoder_forward.6']
    #allocation4 [shape = 'u8[16384]{0}', space=vmem, size = 0x4000, scoped, tag = 'input window, operand 2, single buffered']
    #allocation5 [shape = 's32[1]{0}', space=sflag, size = 0x4, scoped, tag = 'scoped memory for transformer_encoder_forward.6']
    #allocation6 [shape = 'u8[16384]{0}', space=vmem, size = 0x4000, scoped, tag = 'input window, operand 3, single buffered']
    %15 = vsyncpa [#allocation3], 0
    %16 = vsyncpa [#allocation5], 0
    loop: start=0, step=1, limit=4
    $region2: #{transformer_encoder_forward.6} parent=1 // loop_pre_header
      _
    $region3: #{transformer_encoder_forward.6} parent=1 // loop_header
      %s18 = sphi 0, %s22
      %p19 = scmp.ge.s32.totalorder %s18, 4
      %s28 = sphi 0, %s30
      %s31 = sphi 0, %s28
      %s32 = sphi 0, %s31
      %s48 = sphi 0, %s32
      %s52 = sphi 0, %s52
      %s54 = sphi 0, %s52
      %s55 = sphi 0, %s54
      %s69 = sphi 0, %s55
      %s73 = sphi 0, %s73
      %s75 = sphi 0, %s73
      %s76 = sphi 0, %s75
      %s90 = sphi 0, %s76
      %s94 = sphi 0, %s94
      %s96 = sphi 0, %s94
      %s97 = sphi 0, %s96
      %s111 = sphi 0, %s97
      %s115 = sphi 0, %s115
      %s117 = sphi 0, %s115
      %s118 = sphi 0, %s117
      %s132 = sphi 0, %s118
      %s136 = sphi 0, %s136
      %s138 = sphi 0, %s136
      %s139 = sphi 0, %s138
      %s153 = sphi 0, %s139
      %s157 = sphi 0, %s157
      %s159 = sphi 0, %s157
      %s160 = sphi 0, %s159
      %s174 = sphi 0, %s160
      %s180 = sphi 0, %s182
      %s183 = sphi 0, %s180
      %s184 = sphi 0, %s183
      %s200 = sphi 0, %s184
      %s206 = sphi 0, %s208
      %s209 = sphi 0, %s206
      %s210 = sphi 0, %s209
      %s226 = sphi 0, %s210
      %s232 = sphi 0, %s234
      %s235 = sphi 0, %s232
      %s236 = sphi 0, %s235
      %s252 = sphi 0, %s236
    $region4: #{transformer_encoder_forward.6} parent=1 // loop_header_branch
      %21 = sbr.rel (%p19) target = $region8
    $region5: #{transformer_encoder_forward.6} parent=1 // loop_body
      %s23 = ssub.s32 %s18, 1
      %s24 = ssub.s32 %s18, 2
      %s25 = sadd.s32 %s18, 1
      %s26 = ssub.s32 %s18, %s25
      %p27 = scmp.eq.s32.totalorder %s26, 0
      %s29 = sadd.s32 %s28, 1
      %s30 = scalar_select %p27, %s28, %s29
      %p33 = pneg %p27
      %p34 = scmp.eq.s32.totalorder %s18, 1
      %p35 = por %p33, %p34
      %p36 = scmp.ne.s32.totalorder %s28, %s31
      %p37 = scmp.eq.s32.totalorder %s18, 0
      %p38 = por %p36, %p37
      %p39 = scmp.ne.s32.totalorder %s28, %s31
      %p40 = scmp.eq.s32.totalorder %s23, 1
      %p41 = por %p39, %p40
      %p42 = scmp.ne.s32.totalorder %s31, %s32
      %p43 = scmp.eq.s32.totalorder %s23, 0
      %p44 = por %p42, %p43
      %p45 = scmp.ne.s32.totalorder %s31, %s32
      %p46 = scmp.eq.s32.totalorder %s24, 1
      %p47 = por %p45, %p46
      %p49 = scmp.ne.s32.totalorder %s32, %s48
      %p50 = scmp.eq.s32.totalorder %s24, 0
      %p51 = por %p49, %p50
      %s53 = sadd.s32 %s52, 1
      %p56 = scmp.eq.s32.totalorder %s18, 1
      %p57 = scmp.ne.s32.totalorder %s52, %s54
      %p58 = scmp.eq.s32.totalorder %s18, 0
      %p59 = por %p57, %p58
      %p60 = scmp.ne.s32.totalorder %s52, %s54
      %p61 = scmp.eq.s32.totalorder %s23, 1
      %p62 = por %p60, %p61
      %p63 = scmp.ne.s32.totalorder %s54, %s55
      %p64 = scmp.eq.s32.totalorder %s23, 0
      %p65 = por %p63, %p64
      %p66 = scmp.ne.s32.totalorder %s54, %s55
      %p67 = scmp.eq.s32.totalorder %s24, 1
      %p68 = por %p66, %p67
      %p70 = scmp.ne.s32.totalorder %s55, %s69
      %p71 = scmp.eq.s32.totalorder %s24, 0
      %p72 = por %p70, %p71
      %s74 = sadd.s32 %s73, 1
      %p77 = scmp.eq.s32.totalorder %s18, 1
      %p78 = scmp.ne.s32.totalorder %s73, %s75
      %p79 = scmp.eq.s32.totalorder %s18, 0
      %p80 = por %p78, %p79
      %p81 = scmp.ne.s32.totalorder %s73, %s75
      %p82 = scmp.eq.s32.totalorder %s23, 1
      %p83 = por %p81, %p82
      %p84 = scmp.ne.s32.totalorder %s75, %s76
      %p85 = scmp.eq.s32.totalorder %s23, 0
      %p86 = por %p84, %p85
      %p87 = scmp.ne.s32.totalorder %s75, %s76
      %p88 = scmp.eq.s32.totalorder %s24, 1
      %p89 = por %p87, %p88
      %p91 = scmp.ne.s32.totalorder %s76, %s90
      %p92 = scmp.eq.s32.totalorder %s24, 0
      %p93 = por %p91, %p92
      %s95 = sadd.s32 %s94, 1
      %p98 = scmp.eq.s32.totalorder %s18, 1
      %p99 = scmp.ne.s32.totalorder %s94, %s96
      %p100 = scmp.eq.s32.totalorder %s18, 0
      %p101 = por %p99, %p100
      %p102 = scmp.ne.s32.totalorder %s94, %s96
      %p103 = scmp.eq.s32.totalorder %s23, 1
      %p104 = por %p102, %p103
      %p105 = scmp.ne.s32.totalorder %s96, %s97
      %p106 = scmp.eq.s32.totalorder %s23, 0
      %p107 = por %p105, %p106
      %p108 = scmp.ne.s32.totalorder %s96, %s97
      %p109 = scmp.eq.s32.totalorder %s24, 1
      %p110 = por %p108, %p109
      %p112 = scmp.ne.s32.totalorder %s97, %s111
      %p113 = scmp.eq.s32.totalorder %s24, 0
      %p114 = por %p112, %p113
      %s116 = sadd.s32 %s115, 1
      %p119 = scmp.eq.s32.totalorder %s18, 1
      %p120 = scmp.ne.s32.totalorder %s115, %s117
      %p121 = scmp.eq.s32.totalorder %s18, 0
      %p122 = por %p120, %p121
      %p123 = scmp.ne.s32.totalorder %s115, %s117
      %p124 = scmp.eq.s32.totalorder %s23, 1
      %p125 = por %p123, %p124
      %p126 = scmp.ne.s32.totalorder %s117, %s118
      %p127 = scmp.eq.s32.totalorder %s23, 0
      %p128 = por %p126, %p127
      %p129 = scmp.ne.s32.totalorder %s117, %s118
      %p130 = scmp.eq.s32.totalorder %s24, 1
      %p131 = por %p129, %p130
      %p133 = scmp.ne.s32.totalorder %s118, %s132
      %p134 = scmp.eq.s32.totalorder %s24, 0
      %p135 = por %p133, %p134
      %s137 = sadd.s32 %s136, 1
      %p140 = scmp.eq.s32.totalorder %s18, 1
      %p141 = scmp.ne.s32.totalorder %s136, %s138
      %p142 = scmp.eq.s32.totalorder %s18, 0
      %p143 = por %p141, %p142
      %p144 = scmp.ne.s32.totalorder %s136, %s138
      %p145 = scmp.eq.s32.totalorder %s23, 1
      %p146 = por %p144, %p145
      %p147 = scmp.ne.s32.totalorder %s138, %s139
      %p148 = scmp.eq.s32.totalorder %s23, 0
      %p149 = por %p147, %p148
      %p150 = scmp.ne.s32.totalorder %s138, %s139
      %p151 = scmp.eq.s32.totalorder %s24, 1
      %p152 = por %p150, %p151
      %p154 = scmp.ne.s32.totalorder %s139, %s153
      %p155 = scmp.eq.s32.totalorder %s24, 0
      %p156 = por %p154, %p155
      %s158 = sadd.s32 %s157, 1
      %p161 = scmp.eq.s32.totalorder %s18, 1
      %p162 = scmp.ne.s32.totalorder %s157, %s159
      %p163 = scmp.eq.s32.totalorder %s18, 0
      %p164 = por %p162, %p163
      %p165 = scmp.ne.s32.totalorder %s157, %s159
      %p166 = scmp.eq.s32.totalorder %s23, 1
      %p167 = por %p165, %p166
      %p168 = scmp.ne.s32.totalorder %s159, %s160
      %p169 = scmp.eq.s32.totalorder %s23, 0
      %p170 = por %p168, %p169
      %p171 = scmp.ne.s32.totalorder %s159, %s160
      %p172 = scmp.eq.s32.totalorder %s24, 1
      %p173 = por %p171, %p172
      %p175 = scmp.ne.s32.totalorder %s160, %s174
      %p176 = scmp.eq.s32.totalorder %s24, 0
      %p177 = por %p175, %p176
      %s178 = ssub.s32 %s18, %s25
      %p179 = scmp.eq.s32.totalorder %s178, 0
      %s181 = sadd.s32 %s180, 1
      %s182 = scalar_select %p179, %s180, %s181
      %p185 = pneg %p179
      %p186 = scmp.eq.s32.totalorder %s18, 1
      %p187 = por %p185, %p186
      %p188 = scmp.ne.s32.totalorder %s180, %s183
      %p189 = scmp.eq.s32.totalorder %s18, 0
      %p190 = por %p188, %p189
      %p191 = scmp.ne.s32.totalorder %s180, %s183
      %p192 = scmp.eq.s32.totalorder %s23, 1
      %p193 = por %p191, %p192
      %p194 = scmp.ne.s32.totalorder %s183, %s184
      %p195 = scmp.eq.s32.totalorder %s23, 0
      %p196 = por %p194, %p195
      %p197 = scmp.ne.s32.totalorder %s183, %s184
      %p198 = scmp.eq.s32.totalorder %s24, 1
      %p199 = por %p197, %p198
      %p201 = scmp.ne.s32.totalorder %s184, %s200
      %p202 = scmp.eq.s32.totalorder %s24, 0
      %p203 = por %p201, %p202
      %s204 = ssub.s32 %s18, %s25
      %p205 = scmp.eq.s32.totalorder %s204, 0
      %s207 = sadd.s32 %s206, 1
      %s208 = scalar_select %p205, %s206, %s207
      %p211 = pneg %p205
      %p212 = scmp.eq.s32.totalorder %s18, 1
      %p213 = por %p211, %p212
      %p214 = scmp.ne.s32.totalorder %s206, %s209
      %p215 = scmp.eq.s32.totalorder %s18, 0
      %p216 = por %p214, %p215
      %p217 = scmp.ne.s32.totalorder %s206, %s209
      %p218 = scmp.eq.s32.totalorder %s23, 1
      %p219 = por %p217, %p218
      %p220 = scmp.ne.s32.totalorder %s209, %s210
      %p221 = scmp.eq.s32.totalorder %s23, 0
      %p222 = por %p220, %p221
      %p223 = scmp.ne.s32.totalorder %s209, %s210
      %p224 = scmp.eq.s32.totalorder %s24, 1
      %p225 = por %p223, %p224
      %p227 = scmp.ne.s32.totalorder %s210, %s226
      %p228 = scmp.eq.s32.totalorder %s24, 0
      %p229 = por %p227, %p228
      %s230 = ssub.s32 %s18, %s25
      %p231 = scmp.eq.s32.totalorder %s230, 0
      %s233 = sadd.s32 %s232, 1
      %s234 = scalar_select %p231, %s232, %s233
      %p237 = pneg %p231
      %p238 = scmp.eq.s32.totalorder %s18, 1
      %p239 = por %p237, %p238
      %p240 = scmp.ne.s32.totalorder %s232, %s235
      %p241 = scmp.eq.s32.totalorder %s18, 0
      %p242 = por %p240, %p241
      %p243 = scmp.ne.s32.totalorder %s232, %s235
      %p244 = scmp.eq.s32.totalorder %s23, 1
      %p245 = por %p243, %p244
      %p246 = scmp.ne.s32.totalorder %s235, %s236
      %p247 = scmp.eq.s32.totalorder %s23, 0
      %p248 = por %p246, %p247
      %p249 = scmp.ne.s32.totalorder %s235, %s236
      %p250 = scmp.eq.s32.totalorder %s24, 1
      %p251 = por %p249, %p250
      %p253 = scmp.ne.s32.totalorder %s236, %s252
      %p254 = scmp.eq.s32.totalorder %s24, 0
      %p255 = por %p253, %p254
      %p256 = scmp.le.s32.totalorder 1, %s18
      %p257 = scmp.lt.s32.totalorder %s18, 3
      %p258 = pnand %p256, %p257
      %p259 = pneg %p258
      // Predicated region
      $region9: #{transformer_encoder_forward.6} parent=5 // pred_check
        _
      $region10: #{transformer_encoder_forward.6} parent=5 // pred_check_branch
        %261 = sbr.rel (%p258) target = $region12
      $region11: #{transformer_encoder_forward.6} parent=5 // pred_region
        %s262 = ssub.s32 %s18, 1
        // Predicated region
        $region13: #{transformer_encoder_forward.6} parent=11 // pred_check
          %p263 = pneg %p65
        $region14: #{transformer_encoder_forward.6} parent=11 // pred_check_branch
          %265 = sbr.rel (%p263) target = $region16
        $region15: #{transformer_encoder_forward.6} parent=11 // pred_region
          %267 = vsyncadd [#allocation3], 0
          %s268 = sshll.u32 %s1, 4
          %s269 = int_to_ptr.hbm [resolvable:$true] %s268
          %s270 = sshll.u32 [#allocation2], 4
          %s271 = int_to_ptr.vmem [resolvable:$true] %s270
          %276 = dma.hbm_to_vmem [thread:$0]  %s269, 512, %s271, [#allocation3], 128, 128, 8
        $region16: #{transformer_encoder_forward.6} parent=11 // pred_fallthru
          _
        // Predicated region
        $region17: #{transformer_encoder_forward.6} parent=11 // pred_check
          %p277 = pneg %p86
        $region18: #{transformer_encoder_forward.6} parent=11 // pred_check_branch
          %279 = sbr.rel (%p277) target = $region20
        $region19: #{transformer_encoder_forward.6} parent=11 // pred_region
          %281 = vsyncadd [#allocation5], 0
          %s282 = sshll.u32 %s2, 4
          %s283 = int_to_ptr.hbm [resolvable:$true] %s282
          %s284 = sshll.u32 [#allocation4], 4
          %s285 = int_to_ptr.vmem [resolvable:$true] %s284
          %290 = dma.hbm_to_vmem [thread:$0]  %s283, 512, %s285, [#allocation5], 128, 128, 8
        $region20: #{transformer_encoder_forward.6} parent=11 // pred_fallthru
          _
        // Predicated region
        $region21: #{transformer_encoder_forward.6} parent=11 // pred_check
          %p291 = pneg %p107
        $region22: #{transformer_encoder_forward.6} parent=11 // pred_check_branch
          %293 = sbr.rel (%p291) target = $region24
        $region23: #{transformer_encoder_forward.6} parent=11 // pred_region
          %295 = vsyncadd [#allocation5], 0
          %s296 = sshll.u32 %s3, 4
          %s297 = int_to_ptr.hbm [resolvable:$true] %s296
          %s298 = sshll.u32 [#allocation6], 4
          %s299 = int_to_ptr.vmem [resolvable:$true] %s298
          %304 = dma.hbm_to_vmem [thread:$0]  %s297, 512, %s299, [#allocation5], 128, 128, 8
        $region24: #{transformer_encoder_forward.6} parent=11 // pred_fallthru
          _
        // Predicated region
        $region25: #{transformer_encoder_forward.6} parent=11 // pred_check
          %p305 = pneg %p128
        $region26: #{transformer_encoder_forward.6} parent=11 // pred_check_branch
          %307 = sbr.rel (%p305) target = $region28
        $region27: #{transformer_encoder_forward.6} parent=11 // pred_region
          _
        $region28: #{transformer_encoder_forward.6} parent=11 // pred_fallthru
          _
        // Predicated region
        $region29: #{transformer_encoder_forward.6} parent=11 // pred_check
          %p308 = pneg %p149
        $region30: #{transformer_encoder_forward.6} parent=11 // pred_check_branch
          %310 = sbr.rel (%p308) target = $region32
        $region31: #{transformer_encoder_forward.6} parent=11 // pred_region
          _
        $region32: #{transformer_encoder_forward.6} parent=11 // pred_fallthru
          _
        // Predicated region
        $region33: #{transformer_encoder_forward.6} parent=11 // pred_check
          %p311 = pneg %p170
        $region34: #{transformer_encoder_forward.6} parent=11 // pred_check_branch
          %313 = sbr.rel (%p311) target = $region36
        $region35: #{transformer_encoder_forward.6} parent=11 // pred_region
          _
        $region36: #{transformer_encoder_forward.6} parent=11 // pred_fallthru
          _
      $region12: #{transformer_encoder_forward.6} parent=5 // pred_fallthru
        _
      %p314 = scmp.lt.s32.totalorder %s18, 2
      // Predicated region
      $region37: #{transformer_encoder_forward.6} parent=5 // pred_check
        %p315 = pneg %p314
      $region38: #{transformer_encoder_forward.6} parent=5 // pred_check_branch
        %317 = sbr.rel (%p315) target = $region40
      $region39: #{transformer_encoder_forward.6} parent=5 // pred_region
        // Predicated region
        $region41: #{transformer_encoder_forward.6} parent=39 // pred_check
          %p318 = pneg %p38
        $region42: #{transformer_encoder_forward.6} parent=39 // pred_check_branch
          %320 = sbr.rel (%p318) target = $region44
        $region43: #{transformer_encoder_forward.6} parent=39 // pred_region
          %p321 = scmp.lt.s32.totalorder %s18, 1
          %s322 = scalar_select %p321, %s18, 1
          %s323 = smul.addr %s322, 8
          %s324 = scalar_lea.vmem %s0, %s323
        $region44: #{transformer_encoder_forward.6} parent=39 // pred_fallthru
          _
      $region40: #{transformer_encoder_forward.6} parent=5 // pred_fallthru
        _
      %p325 = scmp.le.s32.totalorder 1, %s18
      %p326 = scmp.lt.s32.totalorder %s18, 3
      %p327 = pnand %p325, %p326
      %p328 = pneg %p327
      // Predicated region
      $region45: #{transformer_encoder_forward.6} parent=5 // pred_check
        _
      $region46: #{transformer_encoder_forward.6} parent=5 // pred_check_branch
        %330 = sbr.rel (%p327) target = $region48
      $region47: #{transformer_encoder_forward.6} parent=5 // pred_region
        %s331 = ssub.s32 %s18, 1
        // Predicated region
        $region49: #{transformer_encoder_forward.6} parent=47 // pred_check
          %p332 = pneg %p65
        $region50: #{transformer_encoder_forward.6} parent=47 // pred_check_branch
          %334 = sbr.rel (%p332) target = $region52
        $region51: #{transformer_encoder_forward.6} parent=47 // pred_region
          %336 = dma.done [#allocation3], 512
        $region52: #{transformer_encoder_forward.6} parent=47 // pred_fallthru
          _
        // Predicated region
        $region53: #{transformer_encoder_forward.6} parent=47 // pred_check
          %p337 = pneg %p86
        $region54: #{transformer_encoder_forward.6} parent=47 // pred_check_branch
          %339 = sbr.rel (%p337) target = $region56
        $region55: #{transformer_encoder_forward.6} parent=47 // pred_region
          %341 = dma.done [#allocation5], 512
        $region56: #{transformer_encoder_forward.6} parent=47 // pred_fallthru
          _
        // Predicated region
        $region57: #{transformer_encoder_forward.6} parent=47 // pred_check
          %p342 = pneg %p107
        $region58: #{transformer_encoder_forward.6} parent=47 // pred_check_branch
          %344 = sbr.rel (%p342) target = $region60
        $region59: #{transformer_encoder_forward.6} parent=47 // pred_region
          %346 = dma.done [#allocation5], 512
        $region60: #{transformer_encoder_forward.6} parent=47 // pred_fallthru
          _
        %p347 = scmp.lt.s32.totalorder %s23, 1
        %s348 = scalar_select %p347, %s23, 1
        %s349 = smul.addr %s348, 8
        %s350 = scalar_lea.vmem %s0, %s349
        %p351 = pneg %p44
        %p352 = pneg %p41
        %p353 = pneg %p65
        %p354 = pneg %p62
        %p355 = pneg %p86
        %p356 = pneg %p83
        %p357 = pneg %p107
        %p358 = pneg %p104
        %p359 = pneg %p128
        %p360 = pneg %p125
        %p361 = pneg %p149
        %p362 = pneg %p146
        %p363 = pneg %p170
        %p364 = pneg %p167
        %p365 = pneg %p196
        %p366 = pneg %p193
        %p367 = scmp.lt.s32.totalorder %s23, 1
        %s368 = scalar_select %p367, %s23, 1
        %s369 = smul.addr %s368, 8
        %s370 = scalar_lea.vmem %s7, %s369
        %p371 = pneg %p222
        %p372 = pneg %p219
        %p373 = scmp.lt.s32.totalorder %s23, 1
        %s374 = scalar_select %p373, %s23, 1
        %s375 = smul.addr %s374, 8
        %s376 = scalar_lea.vmem %s8, %s375
        %p377 = pneg %p248
        %p378 = pneg %p245
        %p379 = scmp.lt.s32.totalorder %s23, 1
        %s380 = scalar_select %p379, %s23, 1
        %s381 = smul.addr %s380, 8
        %s382 = scalar_lea.vmem %s9, %s381
        %p383 = scmp.lt.s32.totalorder %s23, 1
        %s384 = scalar_select %p383, %s23, 1
        %s385 = smul.addr %s384, 8
        %s386 = scalar_lea.vmem %s0, %s385
        %p387 = scmp.lt.s32.totalorder %s23, 1
        %s388 = scalar_select %p387, %s23, 1
        %s389 = smul.addr %s388, 8
        %s390 = scalar_lea.vmem %s7, %s389
        %p391 = scmp.lt.s32.totalorder %s23, 1
        %s392 = scalar_select %p391, %s23, 1
        %s393 = smul.addr %s392, 8
        %s394 = scalar_lea.vmem %s8, %s393
        %p395 = scmp.lt.s32.totalorder %s23, 1
        %s396 = scalar_select %p395, %s23, 1
        %s397 = smul.addr %s396, 8
        %s398 = scalar_lea.vmem %s9, %s397
        %v399 = vld [vmem:[%s386] sm:$0xff]
        %v400 = vld [vmem:[#allocation2] sm:$0xff]
        %v401 = vld [vmem:[#allocation2 + $0x8] sm:$0xff]
        %v402 = vld [vmem:[#allocation2 + $0x10] sm:$0xff]
        %v403 = vld [vmem:[#allocation2 + $0x18] sm:$0xff]
        %v404 = vld [vmem:[%s4] sm:$0x1]
        %v406 = vperm.slane %v404, 0
        %vm408 = vcmask 261120
        %v410 = vsel %vm408, %v399, 0
        %412 = vmatpush.msra.mxu0 0.0
        %413 = vmatpush.msra.mxu0 0.0
        %414 = vmatpush.msra.mxu0 0.0
        %415 = vmatpush.msra.mxu0 0.0
        %416 = vmatpush.msra.mxu0 0.0
        %417 = vmatpush.msra.mxu0 0.0
        %418 = vmatpush.msra.mxu0 0.0
        %419 = vmatpush.msra.mxu0 0.0
        %420 = vmatpush.msra.mxu0 0.0
        %421 = vmatpush.msra.mxu0 0.0
        %422 = vmatpush.msra.mxu0 0.0
        %423 = vmatpush.msra.mxu0 0.0
        %424 = vmatpush.msra.mxu0 %v403
        %425 = vmatpush.msra.mxu0 %v402
        %426 = vmatpush.msra.mxu0 %v401
        %427 = vmatpush.msra.mxu0 %v400
        %428 = vmatmul.f32.gmra.mxu0 %v410
        %v429 = vpop.f32.mrf.mxu0
        %v430 = vadd.f32 %v406, %v429
        %431 = vdwg.mxu0
        %432 = vst.msk [vmem:[%s390] sm:$0xff] %vm408, %v430
        %v433 = vld [vmem:[#allocation4] sm:$0xff]
        %v434 = vld [vmem:[#allocation4 + $0x8] sm:$0xff]
        %v435 = vld [vmem:[#allocation4 + $0x10] sm:$0xff]
        %v436 = vld [vmem:[#allocation4 + $0x18] sm:$0xff]
        %v437 = vld [vmem:[%s5] sm:$0x1]
        %v439 = vperm.slane %v437, 0
        %441 = vmatpush.msra.mxu0 0.0
        %442 = vmatpush.msra.mxu0 0.0
        %443 = vmatpush.msra.mxu0 0.0
        %444 = vmatpush.msra.mxu0 0.0
        %445 = vmatpush.msra.mxu0 0.0
        %446 = vmatpush.msra.mxu0 0.0
        %447 = vmatpush.msra.mxu0 0.0
        %448 = vmatpush.msra.mxu0 0.0
        %449 = vmatpush.msra.mxu0 0.0
        %450 = vmatpush.msra.mxu0 0.0
        %451 = vmatpush.msra.mxu0 0.0
        %452 = vmatpush.msra.mxu0 0.0
        %453 = vmatpush.msra.mxu0 %v436
        %454 = vmatpush.msra.mxu0 %v435
        %455 = vmatpush.msra.mxu0 %v434
        %456 = vmatpush.msra.mxu0 %v433
        %457 = vmatmul.f32.gmra.mxu0 %v410
        %v458 = vpop.f32.mrf.mxu0
        %v459 = vadd.f32 %v439, %v458
        %460 = vdwg.mxu0
        %461 = vst.msk [vmem:[%s394] sm:$0xff] %vm408, %v459
        %v462 = vld [vmem:[#allocation6] sm:$0xff]
        %v463 = vld [vmem:[#allocation6 + $0x8] sm:$0xff]
        %v464 = vld [vmem:[#allocation6 + $0x10] sm:$0xff]
        %v465 = vld [vmem:[#allocation6 + $0x18] sm:$0xff]
        %v466 = vld [vmem:[%s6] sm:$0x1]
        %v468 = vperm.slane %v466, 0
        %470 = vmatpush.msra.mxu0 0.0
        %471 = vmatpush.msra.mxu0 0.0
        %472 = vmatpush.msra.mxu0 0.0
        %473 = vmatpush.msra.mxu0 0.0
        %474 = vmatpush.msra.mxu0 0.0
        %475 = vmatpush.msra.mxu0 0.0
        %476 = vmatpush.msra.mxu0 0.0
        %477 = vmatpush.msra.mxu0 0.0
        %478 = vmatpush.msra.mxu0 0.0
        %479 = vmatpush.msra.mxu0 0.0
        %480 = vmatpush.msra.mxu0 0.0
        %481 = vmatpush.msra.mxu0 0.0
        %482 = vmatpush.msra.mxu0 %v465
        %483 = vmatpush.msra.mxu0 %v464
        %484 = vmatpush.msra.mxu0 %v463
        %485 = vmatpush.msra.mxu0 %v462
        %486 = vmatmul.f32.gmra.mxu0 %v410
        %v487 = vpop.f32.mrf.mxu0
        %v488 = vadd.f32 %v468, %v487
        %489 = vdwg.mxu0
        %490 = vst.msk [vmem:[%s398] sm:$0xff] %vm408, %v488
        %p491 = scmp.lt.s32.totalorder %s23, 1
        %s492 = scalar_select %p491, %s23, 1
        %s493 = smul.addr %s492, 8
        %s494 = scalar_lea.vmem %s7, %s493
        %p495 = scmp.lt.s32.totalorder %s23, 1
        %s496 = scalar_select %p495, %s23, 1
        %s497 = smul.addr %s496, 8
        %s498 = scalar_lea.vmem %s8, %s497
        %p499 = scmp.lt.s32.totalorder %s23, 1
        %s500 = scalar_select %p499, %s23, 1
        %s501 = smul.addr %s500, 8
        %s502 = scalar_lea.vmem %s9, %s501
        // Predicated region
        $region61: #{transformer_encoder_forward.6} parent=47 // pred_check
          %p503 = pneg %p193
        $region62: #{transformer_encoder_forward.6} parent=47 // pred_check_branch
          %505 = sbr.rel (%p503) target = $region64
        $region63: #{transformer_encoder_forward.6} parent=47 // pred_region
          _
        $region64: #{transformer_encoder_forward.6} parent=47 // pred_fallthru
          _
        // Predicated region
        $region65: #{transformer_encoder_forward.6} parent=47 // pred_check
          %p506 = pneg %p219
        $region66: #{transformer_encoder_forward.6} parent=47 // pred_check_branch
          %508 = sbr.rel (%p506) target = $region68
        $region67: #{transformer_encoder_forward.6} parent=47 // pred_region
          _
        $region68: #{transformer_encoder_forward.6} parent=47 // pred_fallthru
          _
        // Predicated region
        $region69: #{transformer_encoder_forward.6} parent=47 // pred_check
          %p509 = pneg %p245
        $region70: #{transformer_encoder_forward.6} parent=47 // pred_check_branch
          %511 = sbr.rel (%p509) target = $region72
        $region71: #{transformer_encoder_forward.6} parent=47 // pred_region
          _
        $region72: #{transformer_encoder_forward.6} parent=47 // pred_fallthru
          _
      $region48: #{transformer_encoder_forward.6} parent=5 // pred_fallthru
        _
      %p512 = scmp.le.s32.totalorder 2, %s18
      // Predicated region
      $region73: #{transformer_encoder_forward.6} parent=5 // pred_check
        %p513 = pneg %p512
      $region74: #{transformer_encoder_forward.6} parent=5 // pred_check_branch
        %515 = sbr.rel (%p513) target = $region76
      $region75: #{transformer_encoder_forward.6} parent=5 // pred_region
        %s516 = ssub.s32 %s18, 2
        // Predicated region
        $region77: #{transformer_encoder_forward.6} parent=75 // pred_check
          %p517 = pneg %p199
        $region78: #{transformer_encoder_forward.6} parent=75 // pred_check_branch
          %519 = sbr.rel (%p517) target = $region80
        $region79: #{transformer_encoder_forward.6} parent=75 // pred_region
          %p520 = scmp.lt.s32.totalorder %s24, 1
          %s521 = scalar_select %p520, %s24, 1
          %s522 = smul.addr %s521, 8
          %s523 = scalar_lea.vmem %s7, %s522
        $region80: #{transformer_encoder_forward.6} parent=75 // pred_fallthru
          _
        // Predicated region
        $region81: #{transformer_encoder_forward.6} parent=75 // pred_check
          %p524 = pneg %p225
        $region82: #{transformer_encoder_forward.6} parent=75 // pred_check_branch
          %526 = sbr.rel (%p524) target = $region84
        $region83: #{transformer_encoder_forward.6} parent=75 // pred_region
          %p527 = scmp.lt.s32.totalorder %s24, 1
          %s528 = scalar_select %p527, %s24, 1
          %s529 = smul.addr %s528, 8
          %s530 = scalar_lea.vmem %s8, %s529
        $region84: #{transformer_encoder_forward.6} parent=75 // pred_fallthru
          _
        // Predicated region
        $region85: #{transformer_encoder_forward.6} parent=75 // pred_check
          %p531 = pneg %p251
        $region86: #{transformer_encoder_forward.6} parent=75 // pred_check_branch
          %533 = sbr.rel (%p531) target = $region88
        $region87: #{transformer_encoder_forward.6} parent=75 // pred_region
          %p534 = scmp.lt.s32.totalorder %s24, 1
          %s535 = scalar_select %p534, %s24, 1
          %s536 = smul.addr %s535, 8
          %s537 = scalar_lea.vmem %s9, %s536
        $region88: #{transformer_encoder_forward.6} parent=75 // pred_fallthru
          _
      $region76: #{transformer_encoder_forward.6} parent=5 // pred_fallthru
        _
    $region6: #{transformer_encoder_forward.6} parent=1 // loop_footer
      %s22 = sadd.s32 1, %s18
    $region7: #{transformer_encoder_forward.6} parent=1 // loop_footer_branch
      %17 = sbr.rel target = $region3
    $region8: #{transformer_encoder_forward.6} parent=1 // loop_exit
      _
    %538 = vsyncpa [#allocation3], 1
    %s539 = scalar_lea.sflag [#allocation3], 1
    %540 = vsyncpa %s539, 1
    %541 = vsyncpa [#allocation5], 1

// kernel: transformer_encoder_forward.9
$region0: #{transformer_encoder_forward.9}
  #allocation0 [shape = 'u32[]', space=smem, size = 0x4, offset = 0x4, fixed_abs, tag = 'smem constant byte address 0x4 - core index']
  #allocation1 [shape = 'u32[72,128]{1,0:T(1,128)}', space=vmem, size = 0x9000, scoped, tag = 'internal scratch']
  %s0 = inlined_call_operand.vmem [shape: f32[2,8,32], index: 0, kind: input, shape index: {}]
  %s1 = inlined_call_operand.vmem [shape: f32[32,32], index: 1, kind: input, shape index: {}]
  %s2 = inlined_call_operand.vmem [shape: f32[32,32], index: 2, kind: input, shape index: {}]
  %s3 = inlined_call_operand.vmem [shape: f32[32,32], index: 3, kind: input, shape index: {}]
  %s4 = inlined_call_operand.vmem [shape: f32[1,32], index: 4, kind: input, shape index: {}]
  %s5 = inlined_call_operand.vmem [shape: f32[1,32], index: 5, kind: input, shape index: {}]
  %s6 = inlined_call_operand.vmem [shape: f32[1,32], index: 6, kind: input, shape index: {}]
  %s7 = inlined_call_operand.vmem [shape: f32[2,8,32], index: 7, kind: output, shape index: {0}]
  %s8 = inlined_call_operand.vmem [shape: f32[2,8,32], index: 8, kind: output, shape index: {1}]
  %s9 = inlined_call_operand.vmem [shape: f32[2,8,32], index: 9, kind: output, shape index: {2}]
  %10 = xla_tuple %s7, %s8, %s9
  %s11 = sld [smem:[#allocation0]]
  $region77: #{transformer_encoder_forward.9} parent=0
    _
  %s13 = ssub.s32 1, %s11
  %s14 = scalar_select 0, %s13, %s11
  loop: start=0, step=1, limit=4
  $region2: #{transformer_encoder_forward.9} parent=0 // loop_pre_header
    _
  $region3: #{transformer_encoder_forward.9} parent=0 // loop_header
    %s16 = sphi 0, %s20
    %p17 = scmp.ge.s32.totalorder %s16, 4
    %s26 = sphi 0, %s28
    %s29 = sphi 0, %s26
    %s30 = sphi 0, %s29
    %s46 = sphi 0, %s30
    %s50 = sphi 0, %s50
    %s52 = sphi 0, %s50
    %s53 = sphi 0, %s52
    %s67 = sphi 0, %s53
    %s71 = sphi 0, %s71
    %s73 = sphi 0, %s71
    %s74 = sphi 0, %s73
    %s88 = sphi 0, %s74
    %s92 = sphi 0, %s92
    %s94 = sphi 0, %s92
    %s95 = sphi 0, %s94
    %s109 = sphi 0, %s95
    %s113 = sphi 0, %s113
    %s115 = sphi 0, %s113
    %s116 = sphi 0, %s115
    %s130 = sphi 0, %s116
    %s134 = sphi 0, %s134
    %s136 = sphi 0, %s134
    %s137 = sphi 0, %s136
    %s151 = sphi 0, %s137
    %s155 = sphi 0, %s155
    %s157 = sphi 0, %s155
    %s158 = sphi 0, %s157
    %s172 = sphi 0, %s158
    %s178 = sphi 0, %s180
    %s181 = sphi 0, %s178
    %s182 = sphi 0, %s181
    %s198 = sphi 0, %s182
    %s204 = sphi 0, %s206
    %s207 = sphi 0, %s204
    %s208 = sphi 0, %s207
    %s224 = sphi 0, %s208
    %s230 = sphi 0, %s232
    %s233 = sphi 0, %s230
    %s234 = sphi 0, %s233
    %s250 = sphi 0, %s234
  $region4: #{transformer_encoder_forward.9} parent=0 // loop_header_branch
    %19 = sbr.rel (%p17) target = $region8
  $region5: #{transformer_encoder_forward.9} parent=0 // loop_body
    %s21 = ssub.s32 %s16, 1
    %s22 = ssub.s32 %s16, 2
    %s23 = sadd.s32 %s16, 1
    %s24 = ssub.s32 %s16, %s23
    %p25 = scmp.eq.s32.totalorder %s24, 0
    %s27 = sadd.s32 %s26, 1
    %s28 = scalar_select %p25, %s26, %s27
    %p31 = pneg %p25
    %p32 = scmp.eq.s32.totalorder %s16, 1
    %p33 = por %p31, %p32
    %p34 = scmp.ne.s32.totalorder %s26, %s29
    %p35 = scmp.eq.s32.totalorder %s16, 0
    %p36 = por %p34, %p35
    %p37 = scmp.ne.s32.totalorder %s26, %s29
    %p38 = scmp.eq.s32.totalorder %s21, 1
    %p39 = por %p37, %p38
    %p40 = scmp.ne.s32.totalorder %s29, %s30
    %p41 = scmp.eq.s32.totalorder %s21, 0
    %p42 = por %p40, %p41
    %p43 = scmp.ne.s32.totalorder %s29, %s30
    %p44 = scmp.eq.s32.totalorder %s22, 1
    %p45 = por %p43, %p44
    %p47 = scmp.ne.s32.totalorder %s30, %s46
    %p48 = scmp.eq.s32.totalorder %s22, 0
    %p49 = por %p47, %p48
    %s51 = sadd.s32 %s50, 1
    %p54 = scmp.eq.s32.totalorder %s16, 1
    %p55 = scmp.ne.s32.totalorder %s50, %s52
    %p56 = scmp.eq.s32.totalorder %s16, 0
    %p57 = por %p55, %p56
    %p58 = scmp.ne.s32.totalorder %s50, %s52
    %p59 = scmp.eq.s32.totalorder %s21, 1
    %p60 = por %p58, %p59
    %p61 = scmp.ne.s32.totalorder %s52, %s53
    %p62 = scmp.eq.s32.totalorder %s21, 0
    %p63 = por %p61, %p62
    %p64 = scmp.ne.s32.totalorder %s52, %s53
    %p65 = scmp.eq.s32.totalorder %s22, 1
    %p66 = por %p64, %p65
    %p68 = scmp.ne.s32.totalorder %s53, %s67
    %p69 = scmp.eq.s32.totalorder %s22, 0
    %p70 = por %p68, %p69
    %s72 = sadd.s32 %s71, 1
    %p75 = scmp.eq.s32.totalorder %s16, 1
    %p76 = scmp.ne.s32.totalorder %s71, %s73
    %p77 = scmp.eq.s32.totalorder %s16, 0
    %p78 = por %p76, %p77
    %p79 = scmp.ne.s32.totalorder %s71, %s73
    %p80 = scmp.eq.s32.totalorder %s21, 1
    %p81 = por %p79, %p80
    %p82 = scmp.ne.s32.totalorder %s73, %s74
    %p83 = scmp.eq.s32.totalorder %s21, 0
    %p84 = por %p82, %p83
    %p85 = scmp.ne.s32.totalorder %s73, %s74
    %p86 = scmp.eq.s32.totalorder %s22, 1
    %p87 = por %p85, %p86
    %p89 = scmp.ne.s32.totalorder %s74, %s88
    %p90 = scmp.eq.s32.totalorder %s22, 0
    %p91 = por %p89, %p90
    %s93 = sadd.s32 %s92, 1
    %p96 = scmp.eq.s32.totalorder %s16, 1
    %p97 = scmp.ne.s32.totalorder %s92, %s94
    %p98 = scmp.eq.s32.totalorder %s16, 0
    %p99 = por %p97, %p98
    %p100 = scmp.ne.s32.totalorder %s92, %s94
    %p101 = scmp.eq.s32.totalorder %s21, 1
    %p102 = por %p100, %p101
    %p103 = scmp.ne.s32.totalorder %s94, %s95
    %p104 = scmp.eq.s32.totalorder %s21, 0
    %p105 = por %p103, %p104
    %p106 = scmp.ne.s32.totalorder %s94, %s95
    %p107 = scmp.eq.s32.totalorder %s22, 1
    %p108 = por %p106, %p107
    %p110 = scmp.ne.s32.totalorder %s95, %s109
    %p111 = scmp.eq.s32.totalorder %s22, 0
    %p112 = por %p110, %p111
    %s114 = sadd.s32 %s113, 1
    %p117 = scmp.eq.s32.totalorder %s16, 1
    %p118 = scmp.ne.s32.totalorder %s113, %s115
    %p119 = scmp.eq.s32.totalorder %s16, 0
    %p120 = por %p118, %p119
    %p121 = scmp.ne.s32.totalorder %s113, %s115
    %p122 = scmp.eq.s32.totalorder %s21, 1
    %p123 = por %p121, %p122
    %p124 = scmp.ne.s32.totalorder %s115, %s116
    %p125 = scmp.eq.s32.totalorder %s21, 0
    %p126 = por %p124, %p125
    %p127 = scmp.ne.s32.totalorder %s115, %s116
    %p128 = scmp.eq.s32.totalorder %s22, 1
    %p129 = por %p127, %p128
    %p131 = scmp.ne.s32.totalorder %s116, %s130
    %p132 = scmp.eq.s32.totalorder %s22, 0
    %p133 = por %p131, %p132
    %s135 = sadd.s32 %s134, 1
    %p138 = scmp.eq.s32.totalorder %s16, 1
    %p139 = scmp.ne.s32.totalorder %s134, %s136
    %p140 = scmp.eq.s32.totalorder %s16, 0
    %p141 = por %p139, %p140
    %p142 = scmp.ne.s32.totalorder %s134, %s136
    %p143 = scmp.eq.s32.totalorder %s21, 1
    %p144 = por %p142, %p143
    %p145 = scmp.ne.s32.totalorder %s136, %s137
    %p146 = scmp.eq.s32.totalorder %s21, 0
    %p147 = por %p145, %p146
    %p148 = scmp.ne.s32.totalorder %s136, %s137
    %p149 = scmp.eq.s32.totalorder %s22, 1
    %p150 = por %p148, %p149
    %p152 = scmp.ne.s32.totalorder %s137, %s151
    %p153 = scmp.eq.s32.totalorder %s22, 0
    %p154 = por %p152, %p153
    %s156 = sadd.s32 %s155, 1
    %p159 = scmp.eq.s32.totalorder %s16, 1
    %p160 = scmp.ne.s32.totalorder %s155, %s157
    %p161 = scmp.eq.s32.totalorder %s16, 0
    %p162 = por %p160, %p161
    %p163 = scmp.ne.s32.totalorder %s155, %s157
    %p164 = scmp.eq.s32.totalorder %s21, 1
    %p165 = por %p163, %p164
    %p166 = scmp.ne.s32.totalorder %s157, %s158
    %p167 = scmp.eq.s32.totalorder %s21, 0
    %p168 = por %p166, %p167
    %p169 = scmp.ne.s32.totalorder %s157, %s158
    %p170 = scmp.eq.s32.totalorder %s22, 1
    %p171 = por %p169, %p170
    %p173 = scmp.ne.s32.totalorder %s158, %s172
    %p174 = scmp.eq.s32.totalorder %s22, 0
    %p175 = por %p173, %p174
    %s176 = ssub.s32 %s16, %s23
    %p177 = scmp.eq.s32.totalorder %s176, 0
    %s179 = sadd.s32 %s178, 1
    %s180 = scalar_select %p177, %s178, %s179
    %p183 = pneg %p177
    %p184 = scmp.eq.s32.totalorder %s16, 1
    %p185 = por %p183, %p184
    %p186 = scmp.ne.s32.totalorder %s178, %s181
    %p187 = scmp.eq.s32.totalorder %s16, 0
    %p188 = por %p186, %p187
    %p189 = scmp.ne.s32.totalorder %s178, %s181
    %p190 = scmp.eq.s32.totalorder %s21, 1
    %p191 = por %p189, %p190
    %p192 = scmp.ne.s32.totalorder %s181, %s182
    %p193 = scmp.eq.s32.totalorder %s21, 0
    %p194 = por %p192, %p193
    %p195 = scmp.ne.s32.totalorder %s181, %s182
    %p196 = scmp.eq.s32.totalorder %s22, 1
    %p197 = por %p195, %p196
    %p199 = scmp.ne.s32.totalorder %s182, %s198
    %p200 = scmp.eq.s32.totalorder %s22, 0
    %p201 = por %p199, %p200
    %s202 = ssub.s32 %s16, %s23
    %p203 = scmp.eq.s32.totalorder %s202, 0
    %s205 = sadd.s32 %s204, 1
    %s206 = scalar_select %p203, %s204, %s205
    %p209 = pneg %p203
    %p210 = scmp.eq.s32.totalorder %s16, 1
    %p211 = por %p209, %p210
    %p212 = scmp.ne.s32.totalorder %s204, %s207
    %p213 = scmp.eq.s32.totalorder %s16, 0
    %p214 = por %p212, %p213
    %p215 = scmp.ne.s32.totalorder %s204, %s207
    %p216 = scmp.eq.s32.totalorder %s21, 1
    %p217 = por %p215, %p216
    %p218 = scmp.ne.s32.totalorder %s207, %s208
    %p219 = scmp.eq.s32.totalorder %s21, 0
    %p220 = por %p218, %p219
    %p221 = scmp.ne.s32.totalorder %s207, %s208
    %p222 = scmp.eq.s32.totalorder %s22, 1
    %p223 = por %p221, %p222
    %p225 = scmp.ne.s32.totalorder %s208, %s224
    %p226 = scmp.eq.s32.totalorder %s22, 0
    %p227 = por %p225, %p226
    %s228 = ssub.s32 %s16, %s23
    %p229 = scmp.eq.s32.totalorder %s228, 0
    %s231 = sadd.s32 %s230, 1
    %s232 = scalar_select %p229, %s230, %s231
    %p235 = pneg %p229
    %p236 = scmp.eq.s32.totalorder %s16, 1
    %p237 = por %p235, %p236
    %p238 = scmp.ne.s32.totalorder %s230, %s233
    %p239 = scmp.eq.s32.totalorder %s16, 0
    %p240 = por %p238, %p239
    %p241 = scmp.ne.s32.totalorder %s230, %s233
    %p242 = scmp.eq.s32.totalorder %s21, 1
    %p243 = por %p241, %p242
    %p244 = scmp.ne.s32.totalorder %s233, %s234
    %p245 = scmp.eq.s32.totalorder %s21, 0
    %p246 = por %p244, %p245
    %p247 = scmp.ne.s32.totalorder %s233, %s234
    %p248 = scmp.eq.s32.totalorder %s22, 1
    %p249 = por %p247, %p248
    %p251 = scmp.ne.s32.totalorder %s234, %s250
    %p252 = scmp.eq.s32.totalorder %s22, 0
    %p253 = por %p251, %p252
    %p254 = scmp.le.s32.totalorder 1, %s16
    %p255 = scmp.lt.s32.totalorder %s16, 3
    %p256 = pnand %p254, %p255
    %p257 = pneg %p256
    // Predicated region
    $region9: #{transformer_encoder_forward.9} parent=5 // pred_check
      _
    $region10: #{transformer_encoder_forward.9} parent=5 // pred_check_branch
      %259 = sbr.rel (%p256) target = $region12
    $region11: #{transformer_encoder_forward.9} parent=5 // pred_region
      %s260 = ssub.s32 %s16, 1
      // Predicated region
      $region13: #{transformer_encoder_forward.9} parent=11 // pred_check
        %p261 = pneg %p63
      $region14: #{transformer_encoder_forward.9} parent=11 // pred_check_branch
        %263 = sbr.rel (%p261) target = $region16
      $region15: #{transformer_encoder_forward.9} parent=11 // pred_region
        _
      $region16: #{transformer_encoder_forward.9} parent=11 // pred_fallthru
        _
      // Predicated region
      $region17: #{transformer_encoder_forward.9} parent=11 // pred_check
        %p264 = pneg %p84
      $region18: #{transformer_encoder_forward.9} parent=11 // pred_check_branch
        %266 = sbr.rel (%p264) target = $region20
      $region19: #{transformer_encoder_forward.9} parent=11 // pred_region
        _
      $region20: #{transformer_encoder_forward.9} parent=11 // pred_fallthru
        _
      // Predicated region
      $region21: #{transformer_encoder_forward.9} parent=11 // pred_check
        %p267 = pneg %p105
      $region22: #{transformer_encoder_forward.9} parent=11 // pred_check_branch
        %269 = sbr.rel (%p267) target = $region24
      $region23: #{transformer_encoder_forward.9} parent=11 // pred_region
        _
      $region24: #{transformer_encoder_forward.9} parent=11 // pred_fallthru
        _
      // Predicated region
      $region25: #{transformer_encoder_forward.9} parent=11 // pred_check
        %p270 = pneg %p126
      $region26: #{transformer_encoder_forward.9} parent=11 // pred_check_branch
        %272 = sbr.rel (%p270) target = $region28
      $region27: #{transformer_encoder_forward.9} parent=11 // pred_region
        _
      $region28: #{transformer_encoder_forward.9} parent=11 // pred_fallthru
        _
      // Predicated region
      $region29: #{transformer_encoder_forward.9} parent=11 // pred_check
        %p273 = pneg %p147
      $region30: #{transformer_encoder_forward.9} parent=11 // pred_check_branch
        %275 = sbr.rel (%p273) target = $region32
      $region31: #{transformer_encoder_forward.9} parent=11 // pred_region
        _
      $region32: #{transformer_encoder_forward.9} parent=11 // pred_fallthru
        _
      // Predicated region
      $region33: #{transformer_encoder_forward.9} parent=11 // pred_check
        %p276 = pneg %p168
      $region34: #{transformer_encoder_forward.9} parent=11 // pred_check_branch
        %278 = sbr.rel (%p276) target = $region36
      $region35: #{transformer_encoder_forward.9} parent=11 // pred_region
        _
      $region36: #{transformer_encoder_forward.9} parent=11 // pred_fallthru
        _
    $region12: #{transformer_encoder_forward.9} parent=5 // pred_fallthru
      _
    %p279 = scmp.lt.s32.totalorder %s16, 2
    // Predicated region
    $region37: #{transformer_encoder_forward.9} parent=5 // pred_check
      %p280 = pneg %p279
    $region38: #{transformer_encoder_forward.9} parent=5 // pred_check_branch
      %282 = sbr.rel (%p280) target = $region40
    $region39: #{transformer_encoder_forward.9} parent=5 // pred_region
      // Predicated region
      $region41: #{transformer_encoder_forward.9} parent=39 // pred_check
        %p283 = pneg %p36
      $region42: #{transformer_encoder_forward.9} parent=39 // pred_check_branch
        %285 = sbr.rel (%p283) target = $region44
      $region43: #{transformer_encoder_forward.9} parent=39 // pred_region
        %p286 = scmp.lt.s32.totalorder %s16, 1
        %s287 = scalar_select %p286, %s16, 1
        %s288 = smul.addr %s287, 8
        %s289 = scalar_lea.vmem %s0, %s288
      $region44: #{transformer_encoder_forward.9} parent=39 // pred_fallthru
        _
    $region40: #{transformer_encoder_forward.9} parent=5 // pred_fallthru
      _
    %p290 = scmp.le.s32.totalorder 1, %s16
    %p291 = scmp.lt.s32.totalorder %s16, 3
    %p292 = pnand %p290, %p291
    %p293 = pneg %p292
    // Predicated region
    $region45: #{transformer_encoder_forward.9} parent=5 // pred_check
      _
    $region46: #{transformer_encoder_forward.9} parent=5 // pred_check_branch
      %295 = sbr.rel (%p292) target = $region48
    $region47: #{transformer_encoder_forward.9} parent=5 // pred_region
      %s296 = ssub.s32 %s16, 1
      %p297 = scmp.lt.s32.totalorder %s21, 1
      %s298 = scalar_select %p297, %s21, 1
      %s299 = smul.addr %s298, 8
      %s300 = scalar_lea.vmem %s0, %s299
      %p301 = pneg %p42
      %p302 = pneg %p39
      %p303 = pneg %p63
      %p304 = pneg %p60
      %p305 = pneg %p84
      %p306 = pneg %p81
      %p307 = pneg %p105
      %p308 = pneg %p102
      %p309 = pneg %p126
      %p310 = pneg %p123
      %p311 = pneg %p147
      %p312 = pneg %p144
      %p313 = pneg %p168
      %p314 = pneg %p165
      %p315 = pneg %p194
      %p316 = pneg %p191
      %p317 = scmp.lt.s32.totalorder %s21, 1
      %s318 = scalar_select %p317, %s21, 1
      %s319 = smul.addr %s318, 8
      %s320 = scalar_lea.vmem %s7, %s319
      %p321 = pneg %p220
      %p322 = pneg %p217
      %p323 = scmp.lt.s32.totalorder %s21, 1
      %s324 = scalar_select %p323, %s21, 1
      %s325 = smul.addr %s324, 8
      %s326 = scalar_lea.vmem %s8, %s325
      %p327 = pneg %p246
      %p328 = pneg %p243
      %p329 = scmp.lt.s32.totalorder %s21, 1
      %s330 = scalar_select %p329, %s21, 1
      %s331 = smul.addr %s330, 8
      %s332 = scalar_lea.vmem %s9, %s331
      %p333 = scmp.lt.s32.totalorder %s21, 1
      %s334 = scalar_select %p333, %s21, 1
      %s335 = smul.addr %s334, 8
      %s336 = scalar_lea.vmem %s0, %s335
      %p337 = scmp.lt.s32.totalorder %s21, 1
      %s338 = scalar_select %p337, %s21, 1
      %s339 = smul.addr %s338, 8
      %s340 = scalar_lea.vmem %s7, %s339
      %p341 = scmp.lt.s32.totalorder %s21, 1
      %s342 = scalar_select %p341, %s21, 1
      %s343 = smul.addr %s342, 8
      %s344 = scalar_lea.vmem %s8, %s343
      %p345 = scmp.lt.s32.totalorder %s21, 1
      %s346 = scalar_select %p345, %s21, 1
      %s347 = smul.addr %s346, 8
      %s348 = scalar_lea.vmem %s9, %s347
      %v349 = vld [vmem:[%s336] sm:$0xff]
      %v350 = vld [vmem:[%s1] sm:$0xff]
      %v351 = vld [vmem:[%s1 + $0x8] sm:$0xff]
      %v352 = vld [vmem:[%s1 + $0x10] sm:$0xff]
      %v353 = vld [vmem:[%s1 + $0x18] sm:$0xff]
      %v354 = vld [vmem:[%s4] sm:$0x1]
      %v356 = vperm.slane %v354, 0
      %vm358 = vcmask 261120
      %v360 = vsel %vm358, %v349, 0
      %362 = vmatpush.msra.mxu0 0.0
      %363 = vmatpush.msra.mxu0 0.0
      %364 = vmatpush.msra.mxu0 0.0
      %365 = vmatpush.msra.mxu0 0.0
      %366 = vmatpush.msra.mxu0 0.0
      %367 = vmatpush.msra.mxu0 0.0
      %368 = vmatpush.msra.mxu0 0.0
      %369 = vmatpush.msra.mxu0 0.0
      %370 = vmatpush.msra.mxu0 0.0
      %371 = vmatpush.msra.mxu0 0.0
      %372 = vmatpush.msra.mxu0 0.0
      %373 = vmatpush.msra.mxu0 0.0
      %374 = vmatpush.msra.mxu0 %v353
      %375 = vmatpush.msra.mxu0 %v352
      %376 = vmatpush.msra.mxu0 %v351
      %377 = vmatpush.msra.mxu0 %v350
      %378 = vmatmul.f32.gmra.mxu0 %v360
      %v379 = vpop.f32.mrf.mxu0
      %v380 = vadd.f32 %v356, %v379
      %381 = vdwg.mxu0
      %382 = vst.msk [vmem:[%s340] sm:$0xff] %vm358, %v380
      %v383 = vld [vmem:[%s2] sm:$0xff]
      %v384 = vld [vmem:[%s2 + $0x8] sm:$0xff]
      %v385 = vld [vmem:[%s2 + $0x10] sm:$0xff]
      %v386 = vld [vmem:[%s2 + $0x18] sm:$0xff]
      %v387 = vld [vmem:[%s5] sm:$0x1]
      %v389 = vperm.slane %v387, 0
      %391 = vmatpush.msra.mxu0 0.0
      %392 = vmatpush.msra.mxu0 0.0
      %393 = vmatpush.msra.mxu0 0.0
      %394 = vmatpush.msra.mxu0 0.0
      %395 = vmatpush.msra.mxu0 0.0
      %396 = vmatpush.msra.mxu0 0.0
      %397 = vmatpush.msra.mxu0 0.0
      %398 = vmatpush.msra.mxu0 0.0
      %399 = vmatpush.msra.mxu0 0.0
      %400 = vmatpush.msra.mxu0 0.0
      %401 = vmatpush.msra.mxu0 0.0
      %402 = vmatpush.msra.mxu0 0.0
      %403 = vmatpush.msra.mxu0 %v386
      %404 = vmatpush.msra.mxu0 %v385
      %405 = vmatpush.msra.mxu0 %v384
      %406 = vmatpush.msra.mxu0 %v383
      %407 = vmatmul.f32.gmra.mxu0 %v360
      %v408 = vpop.f32.mrf.mxu0
      %v409 = vadd.f32 %v389, %v408
      %410 = vdwg.mxu0
      %411 = vst.msk [vmem:[%s344] sm:$0xff] %vm358, %v409
      %v412 = vld [vmem:[%s3] sm:$0xff]
      %v413 = vld [vmem:[%s3 + $0x8] sm:$0xff]
      %v414 = vld [vmem:[%s3 + $0x10] sm:$0xff]
      %v415 = vld [vmem:[%s3 + $0x18] sm:$0xff]
      %v416 = vld [vmem:[%s6] sm:$0x1]
      %v418 = vperm.slane %v416, 0
      %420 = vmatpush.msra.mxu0 0.0
      %421 = vmatpush.msra.mxu0 0.0
      %422 = vmatpush.msra.mxu0 0.0
      %423 = vmatpush.msra.mxu0 0.0
      %424 = vmatpush.msra.mxu0 0.0
      %425 = vmatpush.msra.mxu0 0.0
      %426 = vmatpush.msra.mxu0 0.0
      %427 = vmatpush.msra.mxu0 0.0
      %428 = vmatpush.msra.mxu0 0.0
      %429 = vmatpush.msra.mxu0 0.0
      %430 = vmatpush.msra.mxu0 0.0
      %431 = vmatpush.msra.mxu0 0.0
      %432 = vmatpush.msra.mxu0 %v415
      %433 = vmatpush.msra.mxu0 %v414
      %434 = vmatpush.msra.mxu0 %v413
      %435 = vmatpush.msra.mxu0 %v412
      %436 = vmatmul.f32.gmra.mxu0 %v360
      %v437 = vpop.f32.mrf.mxu0
      %v438 = vadd.f32 %v418, %v437
      %439 = vdwg.mxu0
      %440 = vst.msk [vmem:[%s348] sm:$0xff] %vm358, %v438
      %p441 = scmp.lt.s32.totalorder %s21, 1
      %s442 = scalar_select %p441, %s21, 1
      %s443 = smul.addr %s442, 8
      %s444 = scalar_lea.vmem %s7, %s443
      %p445 = scmp.lt.s32.totalorder %s21, 1
      %s446 = scalar_select %p445, %s21, 1
      %s447 = smul.addr %s446, 8
      %s448 = scalar_lea.vmem %s8, %s447
      %p449 = scmp.lt.s32.totalorder %s21, 1
      %s450 = scalar_select %p449, %s21, 1
      %s451 = smul.addr %s450, 8
      %s452 = scalar_lea.vmem %s9, %s451
      // Predicated region
      $region49: #{transformer_encoder_forward.9} parent=47 // pred_check
        %p453 = pneg %p191
      $region50: #{transformer_encoder_forward.9} parent=47 // pred_check_branch
        %455 = sbr.rel (%p453) target = $region52
      $region51: #{transformer_encoder_forward.9} parent=47 // pred_region
        _
      $region52: #{transformer_encoder_forward.9} parent=47 // pred_fallthru
        _
      // Predicated region
      $region53: #{transformer_encoder_forward.9} parent=47 // pred_check
        %p456 = pneg %p217
      $region54: #{transformer_encoder_forward.9} parent=47 // pred_check_branch
        %458 = sbr.rel (%p456) target = $region56
      $region55: #{transformer_encoder_forward.9} parent=47 // pred_region
        _
      $region56: #{transformer_encoder_forward.9} parent=47 // pred_fallthru
        _
      // Predicated region
      $region57: #{transformer_encoder_forward.9} parent=47 // pred_check
        %p459 = pneg %p243
      $region58: #{transformer_encoder_forward.9} parent=47 // pred_check_branch
        %461 = sbr.rel (%p459) target = $region60
      $region59: #{transformer_encoder_forward.9} parent=47 // pred_region
        _
      $region60: #{transformer_encoder_forward.9} parent=47 // pred_fallthru
        _
    $region48: #{transformer_encoder_forward.9} parent=5 // pred_fallthru
      _
    %p462 = scmp.le.s32.totalorder 2, %s16
    // Predicated region
    $region61: #{transformer_encoder_forward.9} parent=5 // pred_check
      %p463 = pneg %p462
    $region62: #{transformer_encoder_forward.9} parent=5 // pred_check_branch
      %465 = sbr.rel (%p463) target = $region64
    $region63: #{transformer_encoder_forward.9} parent=5 // pred_region
      %s466 = ssub.s32 %s16, 2
      // Predicated region
      $region65: #{transformer_encoder_forward.9} parent=63 // pred_check
        %p467 = pneg %p197
      $region66: #{transformer_encoder_forward.9} parent=63 // pred_check_branch
        %469 = sbr.rel (%p467) target = $region68
      $region67: #{transformer_encoder_forward.9} parent=63 // pred_region
        %p470 = scmp.lt.s32.totalorder %s22, 1
        %s471 = scalar_select %p470, %s22, 1
        %s472 = smul.addr %s471, 8
        %s473 = scalar_lea.vmem %s7, %s472
      $region68: #{transformer_encoder_forward.9} parent=63 // pred_fallthru
        _
      // Predicated region
      $region69: #{transformer_encoder_forward.9} parent=63 // pred_check
        %p474 = pneg %p223
      $region70: #{transformer_encoder_forward.9} parent=63 // pred_check_branch
        %476 = sbr.rel (%p474) target = $region72
      $region71: #{transformer_encoder_forward.9} parent=63 // pred_region
        %p477 = scmp.lt.s32.totalorder %s22, 1
        %s478 = scalar_select %p477, %s22, 1
        %s479 = smul.addr %s478, 8
        %s480 = scalar_lea.vmem %s8, %s479
      $region72: #{transformer_encoder_forward.9} parent=63 // pred_fallthru
        _
      // Predicated region
      $region73: #{transformer_encoder_forward.9} parent=63 // pred_check
        %p481 = pneg %p249
      $region74: #{transformer_encoder_forward.9} parent=63 // pred_check_branch
        %483 = sbr.rel (%p481) target = $region76
      $region75: #{transformer_encoder_forward.9} parent=63 // pred_region
        %p484 = scmp.lt.s32.totalorder %s22, 1
        %s485 = scalar_select %p484, %s22, 1
        %s486 = smul.addr %s485, 8
        %s487 = scalar_lea.vmem %s9, %s486
      $region76: #{transformer_encoder_forward.9} parent=63 // pred_fallthru
        _
    $region64: #{transformer_encoder_forward.9} parent=5 // pred_fallthru
      _
  $region6: #{transformer_encoder_forward.9} parent=0 // loop_footer
    %s20 = sadd.s32 1, %s16
  $region7: #{transformer_encoder_forward.9} parent=0 // loop_footer_branch
    %15 = sbr.rel target = $region3
  $region8: #{transformer_encoder_forward.9} parent=0 // loop_exit
    _

// kernel: transformer_encoder_forward.8
$region0: #{transformer_encoder_forward.8}
  #allocation0 [shape = 'u32[]', space=smem, size = 0x4, offset = 0x4, fixed_abs, tag = 'smem constant byte address 0x4 - core index']
  #allocation1 [shape = 'u32[72,128]{1,0:T(1,128)}', space=vmem, size = 0x9000, scoped, tag = 'internal scratch']
  #allocation2 [shape = 'f32[8,32]{1,0:T(8,128)}', space=vmem, size = 0x1000, scoped, tag = 'scratch operand']
  #allocation3 [shape = 'f32[8,32]{1,0:T(8,128)}', space=vmem, size = 0x1000, scoped, tag = 'scratch operand']
  %s0 = inlined_call_operand.vmem [shape: f32[2,8,32], index: 0, kind: input, shape index: {}]
  %s1 = inlined_call_operand.vmem [shape: f32[2,8,32], index: 1, kind: input, shape index: {}]
  %s2 = inlined_call_operand.vmem [shape: f32[32,32], index: 2, kind: input, shape index: {}]
  %s3 = inlined_call_operand.vmem [shape: f32[1,32], index: 3, kind: input, shape index: {}]
  %s4 = inlined_call_operand.vmem [shape: f32[1,32], index: 4, kind: input, shape index: {}]
  %s5 = inlined_call_operand.vmem [shape: f32[1,32], index: 5, kind: input, shape index: {}]
  %s6 = inlined_call_operand.vmem [shape: f32[32,128], index: 6, kind: input, shape index: {}]
  %s7 = inlined_call_operand.vmem [shape: f32[1,128], index: 7, kind: input, shape index: {}]
  %s8 = inlined_call_operand.vmem [shape: f32[128,32], index: 8, kind: input, shape index: {}]
  %s9 = inlined_call_operand.vmem [shape: f32[1,32], index: 9, kind: input, shape index: {}]
  %s10 = inlined_call_operand.vmem [shape: f32[1,32], index: 10, kind: input, shape index: {}]
  %s11 = inlined_call_operand.vmem [shape: f32[1,32], index: 11, kind: input, shape index: {}]
  %s12 = inlined_call_operand.vmem [shape: f32[2,8,32], index: 12, kind: output, shape index: {}]
  %s13 = sld [smem:[#allocation0]]
  $region89: #{transformer_encoder_forward.8} parent=0
    _
  %s15 = ssub.s32 1, %s13
  %s16 = scalar_select 0, %s15, %s13
  loop: start=0, step=1, limit=4
  $region2: #{transformer_encoder_forward.8} parent=0 // loop_pre_header
    _
  $region3: #{transformer_encoder_forward.8} parent=0 // loop_header
    %s18 = sphi 0, %s22
    %p19 = scmp.ge.s32.totalorder %s18, 4
    %s25 = sphi 0, %s37
    %s26 = sphi 0, %s33
    %s27 = sphi 0, %s25
    %s28 = sphi 0, %s26
    %s29 = sphi 0, %s27
    %s30 = sphi 0, %s28
    %s40 = sphi 0, %s42
    %s43 = sphi 0, %s40
    %s44 = sphi 0, %s43
    %s60 = sphi 0, %s44
    %s66 = sphi 0, %s68
    %s69 = sphi 0, %s66
    %s70 = sphi 0, %s69
    %s86 = sphi 0, %s70
    %s90 = sphi 0, %s90
    %s92 = sphi 0, %s90
    %s93 = sphi 0, %s92
    %s107 = sphi 0, %s93
    %s111 = sphi 0, %s111
    %s113 = sphi 0, %s111
    %s114 = sphi 0, %s113
    %s128 = sphi 0, %s114
    %s132 = sphi 0, %s132
    %s134 = sphi 0, %s132
    %s135 = sphi 0, %s134
    %s149 = sphi 0, %s135
    %s153 = sphi 0, %s153
    %s155 = sphi 0, %s153
    %s156 = sphi 0, %s155
    %s170 = sphi 0, %s156
    %s176 = sphi 0, %s178
    %s179 = sphi 0, %s176
    %s180 = sphi 0, %s179
    %s196 = sphi 0, %s180
    %s202 = sphi 0, %s204
    %s205 = sphi 0, %s202
    %s206 = sphi 0, %s205
    %s222 = sphi 0, %s206
    %s228 = sphi 0, %s230
    %s231 = sphi 0, %s228
    %s232 = sphi 0, %s231
    %s248 = sphi 0, %s232
    %s252 = sphi 0, %s252
    %s254 = sphi 0, %s252
    %s255 = sphi 0, %s254
    %s269 = sphi 0, %s255
    %s273 = sphi 0, %s273
    %s275 = sphi 0, %s273
    %s276 = sphi 0, %s275
    %s290 = sphi 0, %s276
    %s294 = sphi 0, %s294
    %s296 = sphi 0, %s294
    %s297 = sphi 0, %s296
    %s311 = sphi 0, %s297
    %s317 = sphi 0, %s319
    %s320 = sphi 0, %s317
    %s321 = sphi 0, %s320
    %s337 = sphi 0, %s321
  $region4: #{transformer_encoder_forward.8} parent=0 // loop_header_branch
    %21 = sbr.rel (%p19) target = $region8
  $region5: #{transformer_encoder_forward.8} parent=0 // loop_body
    %s23 = ssub.s32 %s18, 1
    %s24 = ssub.s32 %s18, 2
    %s31 = sadd.s32 1, %s26
    %p32 = scmp.ge.s32.totalorder %s31, 1
    %s33 = scalar_select %p32, 0, %s31
    %s34 = sadd.s32 1, %s25
    %s35 = scalar_select %p32, %s34, %s25
    %p36 = scmp.ge.s32.totalorder %s35, 2
    %s37 = scalar_select %p36, 0, %s35
    %s38 = ssub.s32 %s25, %s37
    %p39 = scmp.eq.s32.totalorder %s38, 0
    %s41 = sadd.s32 %s40, 1
    %s42 = scalar_select %p39, %s40, %s41
    %p45 = pneg %p39
    %p46 = scmp.eq.s32.totalorder %s18, 1
    %p47 = por %p45, %p46
    %p48 = scmp.ne.s32.totalorder %s40, %s43
    %p49 = scmp.eq.s32.totalorder %s18, 0
    %p50 = por %p48, %p49
    %p51 = scmp.ne.s32.totalorder %s40, %s43
    %p52 = scmp.eq.s32.totalorder %s23, 1
    %p53 = por %p51, %p52
    %p54 = scmp.ne.s32.totalorder %s43, %s44
    %p55 = scmp.eq.s32.totalorder %s23, 0
    %p56 = por %p54, %p55
    %p57 = scmp.ne.s32.totalorder %s43, %s44
    %p58 = scmp.eq.s32.totalorder %s24, 1
    %p59 = por %p57, %p58
    %p61 = scmp.ne.s32.totalorder %s44, %s60
    %p62 = scmp.eq.s32.totalorder %s24, 0
    %p63 = por %p61, %p62
    %s64 = ssub.s32 %s25, %s37
    %p65 = scmp.eq.s32.totalorder %s64, 0
    %s67 = sadd.s32 %s66, 1
    %s68 = scalar_select %p65, %s66, %s67
    %p71 = pneg %p65
    %p72 = scmp.eq.s32.totalorder %s18, 1
    %p73 = por %p71, %p72
    %p74 = scmp.ne.s32.totalorder %s66, %s69
    %p75 = scmp.eq.s32.totalorder %s18, 0
    %p76 = por %p74, %p75
    %p77 = scmp.ne.s32.totalorder %s66, %s69
    %p78 = scmp.eq.s32.totalorder %s23, 1
    %p79 = por %p77, %p78
    %p80 = scmp.ne.s32.totalorder %s69, %s70
    %p81 = scmp.eq.s32.totalorder %s23, 0
    %p82 = por %p80, %p81
    %p83 = scmp.ne.s32.totalorder %s69, %s70
    %p84 = scmp.eq.s32.totalorder %s24, 1
    %p85 = por %p83, %p84
    %p87 = scmp.ne.s32.totalorder %s70, %s86
    %p88 = scmp.eq.s32.totalorder %s24, 0
    %p89 = por %p87, %p88
    %s91 = sadd.s32 %s90, 1
    %p94 = scmp.eq.s32.totalorder %s18, 1
    %p95 = scmp.ne.s32.totalorder %s90, %s92
    %p96 = scmp.eq.s32.totalorder %s18, 0
    %p97 = por %p95, %p96
    %p98 = scmp.ne.s32.totalorder %s90, %s92
    %p99 = scmp.eq.s32.totalorder %s23, 1
    %p100 = por %p98, %p99
    %p101 = scmp.ne.s32.totalorder %s92, %s93
    %p102 = scmp.eq.s32.totalorder %s23, 0
    %p103 = por %p101, %p102
    %p104 = scmp.ne.s32.totalorder %s92, %s93
    %p105 = scmp.eq.s32.totalorder %s24, 1
    %p106 = por %p104, %p105
    %p108 = scmp.ne.s32.totalorder %s93, %s107
    %p109 = scmp.eq.s32.totalorder %s24, 0
    %p110 = por %p108, %p109
    %s112 = sadd.s32 %s111, 1
    %p115 = scmp.eq.s32.totalorder %s18, 1
    %p116 = scmp.ne.s32.totalorder %s111, %s113
    %p117 = scmp.eq.s32.totalorder %s18, 0
    %p118 = por %p116, %p117
    %p119 = scmp.ne.s32.totalorder %s111, %s113
    %p120 = scmp.eq.s32.totalorder %s23, 1
    %p121 = por %p119, %p120
    %p122 = scmp.ne.s32.totalorder %s113, %s114
    %p123 = scmp.eq.s32.totalorder %s23, 0
    %p124 = por %p122, %p123
    %p125 = scmp.ne.s32.totalorder %s113, %s114
    %p126 = scmp.eq.s32.totalorder %s24, 1
    %p127 = por %p125, %p126
    %p129 = scmp.ne.s32.totalorder %s114, %s128
    %p130 = scmp.eq.s32.totalorder %s24, 0
    %p131 = por %p129, %p130
    %s133 = sadd.s32 %s132, 1
    %p136 = scmp.eq.s32.totalorder %s18, 1
    %p137 = scmp.ne.s32.totalorder %s132, %s134
    %p138 = scmp.eq.s32.totalorder %s18, 0
    %p139 = por %p137, %p138
    %p140 = scmp.ne.s32.totalorder %s132, %s134
    %p141 = scmp.eq.s32.totalorder %s23, 1
    %p142 = por %p140, %p141
    %p143 = scmp.ne.s32.totalorder %s134, %s135
    %p144 = scmp.eq.s32.totalorder %s23, 0
    %p145 = por %p143, %p144
    %p146 = scmp.ne.s32.totalorder %s134, %s135
    %p147 = scmp.eq.s32.totalorder %s24, 1
    %p148 = por %p146, %p147
    %p150 = scmp.ne.s32.totalorder %s135, %s149
    %p151 = scmp.eq.s32.totalorder %s24, 0
    %p152 = por %p150, %p151
    %s154 = sadd.s32 %s153, 1
    %p157 = scmp.eq.s32.totalorder %s18, 1
    %p158 = scmp.ne.s32.totalorder %s153, %s155
    %p159 = scmp.eq.s32.totalorder %s18, 0
    %p160 = por %p158, %p159
    %p161 = scmp.ne.s32.totalorder %s153, %s155
    %p162 = scmp.eq.s32.totalorder %s23, 1
    %p163 = por %p161, %p162
    %p164 = scmp.ne.s32.totalorder %s155, %s156
    %p165 = scmp.eq.s32.totalorder %s23, 0
    %p166 = por %p164, %p165
    %p167 = scmp.ne.s32.totalorder %s155, %s156
    %p168 = scmp.eq.s32.totalorder %s24, 1
    %p169 = por %p167, %p168
    %p171 = scmp.ne.s32.totalorder %s156, %s170
    %p172 = scmp.eq.s32.totalorder %s24, 0
    %p173 = por %p171, %p172
    %s174 = ssub.s32 %s26, %s33
    %p175 = scmp.eq.s32.totalorder %s174, 0
    %s177 = sadd.s32 %s176, 1
    %s178 = scalar_select %p175, %s176, %s177
    %p181 = pneg %p175
    %p182 = scmp.eq.s32.totalorder %s18, 1
    %p183 = por %p181, %p182
    %p184 = scmp.ne.s32.totalorder %s176, %s179
    %p185 = scmp.eq.s32.totalorder %s18, 0
    %p186 = por %p184, %p185
    %p187 = scmp.ne.s32.totalorder %s176, %s179
    %p188 = scmp.eq.s32.totalorder %s23, 1
    %p189 = por %p187, %p188
    %p190 = scmp.ne.s32.totalorder %s179, %s180
    %p191 = scmp.eq.s32.totalorder %s23, 0
    %p192 = por %p190, %p191
    %p193 = scmp.ne.s32.totalorder %s179, %s180
    %p194 = scmp.eq.s32.totalorder %s24, 1
    %p195 = por %p193, %p194
    %p197 = scmp.ne.s32.totalorder %s180, %s196
    %p198 = scmp.eq.s32.totalorder %s24, 0
    %p199 = por %p197, %p198
    %s200 = ssub.s32 %s26, %s33
    %p201 = scmp.eq.s32.totalorder %s200, 0
    %s203 = sadd.s32 %s202, 1
    %s204 = scalar_select %p201, %s202, %s203
    %p207 = pneg %p201
    %p208 = scmp.eq.s32.totalorder %s18, 1
    %p209 = por %p207, %p208
    %p210 = scmp.ne.s32.totalorder %s202, %s205
    %p211 = scmp.eq.s32.totalorder %s18, 0
    %p212 = por %p210, %p211
    %p213 = scmp.ne.s32.totalorder %s202, %s205
    %p214 = scmp.eq.s32.totalorder %s23, 1
    %p215 = por %p213, %p214
    %p216 = scmp.ne.s32.totalorder %s205, %s206
    %p217 = scmp.eq.s32.totalorder %s23, 0
    %p218 = por %p216, %p217
    %p219 = scmp.ne.s32.totalorder %s205, %s206
    %p220 = scmp.eq.s32.totalorder %s24, 1
    %p221 = por %p219, %p220
    %p223 = scmp.ne.s32.totalorder %s206, %s222
    %p224 = scmp.eq.s32.totalorder %s24, 0
    %p225 = por %p223, %p224
    %s226 = ssub.s32 %s26, %s33
    %p227 = scmp.eq.s32.totalorder %s226, 0
    %s229 = sadd.s32 %s228, 1
    %s230 = scalar_select %p227, %s228, %s229
    %p233 = pneg %p227
    %p234 = scmp.eq.s32.totalorder %s18, 1
    %p235 = por %p233, %p234
    %p236 = scmp.ne.s32.totalorder %s228, %s231
    %p237 = scmp.eq.s32.totalorder %s18, 0
    %p238 = por %p236, %p237
    %p239 = scmp.ne.s32.totalorder %s228, %s231
    %p240 = scmp.eq.s32.totalorder %s23, 1
    %p241 = por %p239, %p240
    %p242 = scmp.ne.s32.totalorder %s231, %s232
    %p243 = scmp.eq.s32.totalorder %s23, 0
    %p244 = por %p242, %p243
    %p245 = scmp.ne.s32.totalorder %s231, %s232
    %p246 = scmp.eq.s32.totalorder %s24, 1
    %p247 = por %p245, %p246
    %p249 = scmp.ne.s32.totalorder %s232, %s248
    %p250 = scmp.eq.s32.totalorder %s24, 0
    %p251 = por %p249, %p250
    %s253 = sadd.s32 %s252, 1
    %p256 = scmp.eq.s32.totalorder %s18, 1
    %p257 = scmp.ne.s32.totalorder %s252, %s254
    %p258 = scmp.eq.s32.totalorder %s18, 0
    %p259 = por %p257, %p258
    %p260 = scmp.ne.s32.totalorder %s252, %s254
    %p261 = scmp.eq.s32.totalorder %s23, 1
    %p262 = por %p260, %p261
    %p263 = scmp.ne.s32.totalorder %s254, %s255
    %p264 = scmp.eq.s32.totalorder %s23, 0
    %p265 = por %p263, %p264
    %p266 = scmp.ne.s32.totalorder %s254, %s255
    %p267 = scmp.eq.s32.totalorder %s24, 1
    %p268 = por %p266, %p267
    %p270 = scmp.ne.s32.totalorder %s255, %s269
    %p271 = scmp.eq.s32.totalorder %s24, 0
    %p272 = por %p270, %p271
    %s274 = sadd.s32 %s273, 1
    %p277 = scmp.eq.s32.totalorder %s18, 1
    %p278 = scmp.ne.s32.totalorder %s273, %s275
    %p279 = scmp.eq.s32.totalorder %s18, 0
    %p280 = por %p278, %p279
    %p281 = scmp.ne.s32.totalorder %s273, %s275
    %p282 = scmp.eq.s32.totalorder %s23, 1
    %p283 = por %p281, %p282
    %p284 = scmp.ne.s32.totalorder %s275, %s276
    %p285 = scmp.eq.s32.totalorder %s23, 0
    %p286 = por %p284, %p285
    %p287 = scmp.ne.s32.totalorder %s275, %s276
    %p288 = scmp.eq.s32.totalorder %s24, 1
    %p289 = por %p287, %p288
    %p291 = scmp.ne.s32.totalorder %s276, %s290
    %p292 = scmp.eq.s32.totalorder %s24, 0
    %p293 = por %p291, %p292
    %s295 = sadd.s32 %s294, 1
    %p298 = scmp.eq.s32.totalorder %s18, 1
    %p299 = scmp.ne.s32.totalorder %s294, %s296
    %p300 = scmp.eq.s32.totalorder %s18, 0
    %p301 = por %p299, %p300
    %p302 = scmp.ne.s32.totalorder %s294, %s296
    %p303 = scmp.eq.s32.totalorder %s23, 1
    %p304 = por %p302, %p303
    %p305 = scmp.ne.s32.totalorder %s296, %s297
    %p306 = scmp.eq.s32.totalorder %s23, 0
    %p307 = por %p305, %p306
    %p308 = scmp.ne.s32.totalorder %s296, %s297
    %p309 = scmp.eq.s32.totalorder %s24, 1
    %p310 = por %p308, %p309
    %p312 = scmp.ne.s32.totalorder %s297, %s311
    %p313 = scmp.eq.s32.totalorder %s24, 0
    %p314 = por %p312, %p313
    %s315 = ssub.s32 %s25, %s37
    %p316 = scmp.eq.s32.totalorder %s315, 0
    %s318 = sadd.s32 %s317, 1
    %s319 = scalar_select %p316, %s317, %s318
    %p322 = pneg %p316
    %p323 = scmp.eq.s32.totalorder %s18, 1
    %p324 = por %p322, %p323
    %p325 = scmp.ne.s32.totalorder %s317, %s320
    %p326 = scmp.eq.s32.totalorder %s18, 0
    %p327 = por %p325, %p326
    %p328 = scmp.ne.s32.totalorder %s317, %s320
    %p329 = scmp.eq.s32.totalorder %s23, 1
    %p330 = por %p328, %p329
    %p331 = scmp.ne.s32.totalorder %s320, %s321
    %p332 = scmp.eq.s32.totalorder %s23, 0
    %p333 = por %p331, %p332
    %p334 = scmp.ne.s32.totalorder %s320, %s321
    %p335 = scmp.eq.s32.totalorder %s24, 1
    %p336 = por %p334, %p335
    %p338 = scmp.ne.s32.totalorder %s321, %s337
    %p339 = scmp.eq.s32.totalorder %s24, 0
    %p340 = por %p338, %p339
    %p341 = scmp.le.s32.totalorder 1, %s18
    %p342 = scmp.lt.s32.totalorder %s18, 3
    %p343 = pnand %p341, %p342
    %p344 = pneg %p343
    // Predicated region
    $region9: #{transformer_encoder_forward.8} parent=5 // pred_check
      _
    $region10: #{transformer_encoder_forward.8} parent=5 // pred_check_branch
      %346 = sbr.rel (%p343) target = $region12
    $region11: #{transformer_encoder_forward.8} parent=5 // pred_region
      %s347 = ssub.s32 %s18, 1
      // Predicated region
      $region13: #{transformer_encoder_forward.8} parent=11 // pred_check
        %p348 = pneg %p103
      $region14: #{transformer_encoder_forward.8} parent=11 // pred_check_branch
        %350 = sbr.rel (%p348) target = $region16
      $region15: #{transformer_encoder_forward.8} parent=11 // pred_region
        _
      $region16: #{transformer_encoder_forward.8} parent=11 // pred_fallthru
        _
      // Predicated region
      $region17: #{transformer_encoder_forward.8} parent=11 // pred_check
        %p351 = pneg %p124
      $region18: #{transformer_encoder_forward.8} parent=11 // pred_check_branch
        %353 = sbr.rel (%p351) target = $region20
      $region19: #{transformer_encoder_forward.8} parent=11 // pred_region
        _
      $region20: #{transformer_encoder_forward.8} parent=11 // pred_fallthru
        _
      // Predicated region
      $region21: #{transformer_encoder_forward.8} parent=11 // pred_check
        %p354 = pneg %p145
      $region22: #{transformer_encoder_forward.8} parent=11 // pred_check_branch
        %356 = sbr.rel (%p354) target = $region24
      $region23: #{transformer_encoder_forward.8} parent=11 // pred_region
        _
      $region24: #{transformer_encoder_forward.8} parent=11 // pred_fallthru
        _
      // Predicated region
      $region25: #{transformer_encoder_forward.8} parent=11 // pred_check
        %p357 = pneg %p166
      $region26: #{transformer_encoder_forward.8} parent=11 // pred_check_branch
        %359 = sbr.rel (%p357) target = $region28
      $region27: #{transformer_encoder_forward.8} parent=11 // pred_region
        _
      $region28: #{transformer_encoder_forward.8} parent=11 // pred_fallthru
        _
      // Predicated region
      $region29: #{transformer_encoder_forward.8} parent=11 // pred_check
        %p360 = pneg %p192
      $region30: #{transformer_encoder_forward.8} parent=11 // pred_check_branch
        %362 = sbr.rel (%p360) target = $region32
      $region31: #{transformer_encoder_forward.8} parent=11 // pred_region
        %p363 = scmp.lt.s32.totalorder %s28, 0
        %s364 = scalar_select %p363, %s28, 0
        %s365 = smul.addr %s364, 8
        %s366 = scalar_lea.vmem %s6, %s365
      $region32: #{transformer_encoder_forward.8} parent=11 // pred_fallthru
        _
      // Predicated region
      $region33: #{transformer_encoder_forward.8} parent=11 // pred_check
        %p367 = pneg %p218
      $region34: #{transformer_encoder_forward.8} parent=11 // pred_check_branch
        %369 = sbr.rel (%p367) target = $region36
      $region35: #{transformer_encoder_forward.8} parent=11 // pred_region
        %p370 = scmp.lt.s32.totalorder %s28, 0
        %s371 = scalar_select %p370, %s28, 0
        %s372 = scalar_lea.vmem %s7, %s371
      $region36: #{transformer_encoder_forward.8} parent=11 // pred_fallthru
        _
      // Predicated region
      $region37: #{transformer_encoder_forward.8} parent=11 // pred_check
        %p373 = pneg %p244
      $region38: #{transformer_encoder_forward.8} parent=11 // pred_check_branch
        %375 = sbr.rel (%p373) target = $region40
      $region39: #{transformer_encoder_forward.8} parent=11 // pred_region
        %s376 = smul.u32 16, %s28
        %p377 = scmp.lt.s32.totalorder %s376, 15
        %s378 = scalar_select %p377, %s376, 15
        %s379 = smul.addr %s378, 8
        %s380 = scalar_lea.vmem %s8, %s379
        %s381 = smul.u32 16, %s28
      $region40: #{transformer_encoder_forward.8} parent=11 // pred_fallthru
        _
      // Predicated region
      $region41: #{transformer_encoder_forward.8} parent=11 // pred_check
        %p382 = pneg %p265
      $region42: #{transformer_encoder_forward.8} parent=11 // pred_check_branch
        %384 = sbr.rel (%p382) target = $region44
      $region43: #{transformer_encoder_forward.8} parent=11 // pred_region
        _
      $region44: #{transformer_encoder_forward.8} parent=11 // pred_fallthru
        _
      // Predicated region
      $region45: #{transformer_encoder_forward.8} parent=11 // pred_check
        %p385 = pneg %p286
      $region46: #{transformer_encoder_forward.8} parent=11 // pred_check_branch
        %387 = sbr.rel (%p385) target = $region48
      $region47: #{transformer_encoder_forward.8} parent=11 // pred_region
        _
      $region48: #{transformer_encoder_forward.8} parent=11 // pred_fallthru
        _
      // Predicated region
      $region49: #{transformer_encoder_forward.8} parent=11 // pred_check
        %p388 = pneg %p307
      $region50: #{transformer_encoder_forward.8} parent=11 // pred_check_branch
        %390 = sbr.rel (%p388) target = $region52
      $region51: #{transformer_encoder_forward.8} parent=11 // pred_region
        _
      $region52: #{transformer_encoder_forward.8} parent=11 // pred_fallthru
        _
    $region12: #{transformer_encoder_forward.8} parent=5 // pred_fallthru
      _
    %p391 = scmp.lt.s32.totalorder %s18, 2
    // Predicated region
    $region53: #{transformer_encoder_forward.8} parent=5 // pred_check
      %p392 = pneg %p391
    $region54: #{transformer_encoder_forward.8} parent=5 // pred_check_branch
      %394 = sbr.rel (%p392) target = $region56
    $region55: #{transformer_encoder_forward.8} parent=5 // pred_region
      // Predicated region
      $region57: #{transformer_encoder_forward.8} parent=55 // pred_check
        %p395 = pneg %p50
      $region58: #{transformer_encoder_forward.8} parent=55 // pred_check_branch
        %397 = sbr.rel (%p395) target = $region60
      $region59: #{transformer_encoder_forward.8} parent=55 // pred_region
        %p398 = scmp.lt.s32.totalorder %s25, 1
        %s399 = scalar_select %p398, %s25, 1
        %s400 = smul.addr %s399, 8
        %s401 = scalar_lea.vmem %s0, %s400
      $region60: #{transformer_encoder_forward.8} parent=55 // pred_fallthru
        _
      // Predicated region
      $region61: #{transformer_encoder_forward.8} parent=55 // pred_check
        %p402 = pneg %p76
      $region62: #{transformer_encoder_forward.8} parent=55 // pred_check_branch
        %404 = sbr.rel (%p402) target = $region64
      $region63: #{transformer_encoder_forward.8} parent=55 // pred_region
        %p405 = scmp.lt.s32.totalorder %s25, 1
        %s406 = scalar_select %p405, %s25, 1
        %s407 = smul.addr %s406, 8
        %s408 = scalar_lea.vmem %s1, %s407
      $region64: #{transformer_encoder_forward.8} parent=55 // pred_fallthru
        _
    $region56: #{transformer_encoder_forward.8} parent=5 // pred_fallthru
      _
    %p409 = scmp.le.s32.totalorder 1, %s18
    %p410 = scmp.lt.s32.totalorder %s18, 3
    %p411 = pnand %p409, %p410
    %p412 = pneg %p411
    // Predicated region
    $region65: #{transformer_encoder_forward.8} parent=5 // pred_check
      _
    $region66: #{transformer_encoder_forward.8} parent=5 // pred_check_branch
      %414 = sbr.rel (%p411) target = $region68
    $region67: #{transformer_encoder_forward.8} parent=5 // pred_region
      %s415 = ssub.s32 %s18, 1
      %p416 = scmp.lt.s32.totalorder %s27, 1
      %s417 = scalar_select %p416, %s27, 1
      %s418 = smul.addr %s417, 8
      %s419 = scalar_lea.vmem %s0, %s418
      %p420 = pneg %p56
      %p421 = pneg %p53
      %p422 = scmp.lt.s32.totalorder %s27, 1
      %s423 = scalar_select %p422, %s27, 1
      %s424 = smul.addr %s423, 8
      %s425 = scalar_lea.vmem %s1, %s424
      %p426 = pneg %p82
      %p427 = pneg %p79
      %p428 = pneg %p103
      %p429 = pneg %p100
      %p430 = pneg %p124
      %p431 = pneg %p121
      %p432 = pneg %p145
      %p433 = pneg %p142
      %p434 = pneg %p166
      %p435 = pneg %p163
      %p436 = scmp.lt.s32.totalorder %s28, 0
      %s437 = scalar_select %p436, %s28, 0
      %s438 = smul.addr %s437, 8
      %s439 = scalar_lea.vmem %s6, %s438
      %p440 = pneg %p192
      %p441 = pneg %p189
      %p442 = scmp.lt.s32.totalorder %s28, 0
      %s443 = scalar_select %p442, %s28, 0
      %s444 = scalar_lea.vmem %s7, %s443
      %p445 = pneg %p218
      %p446 = pneg %p215
      %s447 = smul.u32 16, %s28
      %p448 = scmp.lt.s32.totalorder %s447, 15
      %s449 = scalar_select %p448, %s447, 15
      %s450 = smul.addr %s449, 8
      %s451 = scalar_lea.vmem %s8, %s450
      %p452 = pneg %p244
      %p453 = pneg %p241
      %p454 = pneg %p265
      %p455 = pneg %p262
      %p456 = pneg %p286
      %p457 = pneg %p283
      %p458 = pneg %p307
      %p459 = pneg %p304
      %p460 = pneg %p333
      %p461 = pneg %p330
      %p462 = scmp.lt.s32.totalorder %s27, 1
      %s463 = scalar_select %p462, %s27, 1
      %s464 = smul.addr %s463, 8
      %s465 = scalar_lea.vmem %s12, %s464
      %p466 = scmp.lt.s32.totalorder %s27, 1
      %s467 = scalar_select %p466, %s27, 1
      %s468 = smul.addr %s467, 8
      %s469 = scalar_lea.vmem %s0, %s468
      %p470 = scmp.lt.s32.totalorder %s27, 1
      %s471 = scalar_select %p470, %s27, 1
      %s472 = smul.addr %s471, 8
      %s473 = scalar_lea.vmem %s1, %s472
      %p474 = scmp.lt.s32.totalorder %s28, 0
      %s475 = scalar_select %p474, %s28, 0
      %s476 = smul.addr %s475, 8
      %s477 = scalar_lea.vmem %s6, %s476
      %p478 = scmp.lt.s32.totalorder %s28, 0
      %s479 = scalar_select %p478, %s28, 0
      %s480 = scalar_lea.vmem %s7, %s479
      %s481 = smul.u32 16, %s28
      %p482 = scmp.lt.s32.totalorder %s481, 15
      %s483 = scalar_select %p482, %s481, 15
      %s484 = smul.addr %s483, 8
      %s485 = scalar_lea.vmem %s8, %s484
      %s486 = smul.u32 16, %s28
      %p487 = scmp.lt.s32.totalorder %s27, 1
      %s488 = scalar_select %p487, %s27, 1
      %s489 = smul.addr %s488, 8
      %s490 = scalar_lea.vmem %s12, %s489
      %p491 = scmp.eq.s32.totalorder %s28, 0
      // Predicated region
      $region69: #{transformer_encoder_forward.8} parent=67 // pred_check
        %p492 = pneg %p491
      $region70: #{transformer_encoder_forward.8} parent=67 // pred_check_branch
        %494 = sbr.rel (%p492) target = $region72
      $region71: #{transformer_encoder_forward.8} parent=67 // pred_region
        %v495 = vld [vmem:[%s473] sm:$0xff]
        %v496 = vld [vmem:[%s2] sm:$0xff]
        %v497 = vld [vmem:[%s2 + $0x8] sm:$0xff]
        %v498 = vld [vmem:[%s2 + $0x10] sm:$0xff]
        %v499 = vld [vmem:[%s2 + $0x18] sm:$0xff]
        %v500 = vld [vmem:[%s3] sm:$0x1]
        %v502 = vperm.slane %v500, 0
        %vm504 = vcmask 261120
        %v506 = vsel %vm504, %v495, 0
        %508 = vmatpush.msra.mxu0 0.0
        %509 = vmatpush.msra.mxu0 0.0
        %510 = vmatpush.msra.mxu0 0.0
        %511 = vmatpush.msra.mxu0 0.0
        %512 = vmatpush.msra.mxu0 0.0
        %513 = vmatpush.msra.mxu0 0.0
        %514 = vmatpush.msra.mxu0 0.0
        %515 = vmatpush.msra.mxu0 0.0
        %516 = vmatpush.msra.mxu0 0.0
        %517 = vmatpush.msra.mxu0 0.0
        %518 = vmatpush.msra.mxu0 0.0
        %519 = vmatpush.msra.mxu0 0.0
        %520 = vmatpush.msra.mxu0 %v499
        %521 = vmatpush.msra.mxu0 %v498
        %522 = vmatpush.msra.mxu0 %v497
        %523 = vmatpush.msra.mxu0 %v496
        %524 = vmatmul.f32.gmra.mxu0 %v506
        %v525 = vpop.f32.mrf.mxu0
        %v526 = vadd.f32 %v502, %v525
        %527 = vdwg.mxu0
        %v528 = vld [vmem:[%s469] sm:$0xff]
        %v529 = vadd.f32 %v528, %v526
        %v530 = vld [vmem:[%s4] sm:$0x1]
        %v531 = vld [vmem:[%s5] sm:$0x1]
        %v532 = vsel %vm504, %v529, 0.0
        %533 = vadd.xlane.f32.xlu0 %v532
        %v534 = vpop.xlane.xlu0 %533
        %v535 = vrcp.pop 32.0
        %v536 = vmul.f32 32.0, %v535
        %v537 = vsub.f32 1.0, %v536
        %v538 = vmul.f32 %v535, %v537
        %v539 = vadd.f32 %v535, %v538
        %vm540 = vweird.f32 %v535
        %v541 = vsel %vm540, %v535, %v539
        %v542 = vmul.f32 %v534, %v541
        %v543 = vsub.f32 %v529, %v542
        %v544 = vmul.f32 %v543, %v543
        %v545 = vsel %vm504, %v544, 0.0
        %546 = vadd.xlane.f32.xlu0 %v545
        %v547 = vpop.xlane.xlu0 %546
        %v548 = vmul.f32 %v547, %v541
        %v549 = vadd.f32 %v548, 1e-05
        %v550 = vrsqrt.pop %v549
        %v551 = vmul.f32 %v550, %v549
        %v552 = vmul.f32 %v551, %v550
        %v553 = vmul.f32 0.5, %v552
        %v554 = vsub.f32 1.5, %v553
        %v555 = vmul.f32 %v550, %v554
        %vm556 = vweird.f32 %v549
        %vm557 = vweird.f32 %v550
        %vm558 = vmor %vm556, %vm557
        %v559 = vsel %vm558, %v550, %v555
        %v560 = vmul.f32 %v543, %v559
        %v562 = vperm.slane %v530, 0
        %v564 = vmul.f32 %v560, %v562
        %v566 = vperm.slane %v531, 0
        %v568 = vadd.f32 %v564, %v566
        %569 = vst.msk [vmem:[#allocation2] sm:$0xff] %vm504, %v568
        %570 = vst.msk [vmem:[#allocation3] sm:$0xff] %vm504, 0.0
      $region72: #{transformer_encoder_forward.8} parent=67 // pred_fallthru
        _
      %v571 = vld [vmem:[#allocation2] sm:$0xff]
      %v572 = vld [vmem:[%s477] sm:$0xff]
      %v573 = vld [vmem:[%s477 + $0x8] sm:$0xff]
      %v574 = vld [vmem:[%s477 + $0x10] sm:$0xff]
      %v575 = vld [vmem:[%s477 + $0x18] sm:$0xff]
      %v576 = vld [vmem:[%s480] sm:$0x1]
      %v578 = vperm.slane %v576, 0
      %vm580 = vcmask 261120
      %v582 = vsel %vm580, %v571, 0
      %584 = vmatpush.msra.mxu0 0.0
      %585 = vmatpush.msra.mxu0 0.0
      %586 = vmatpush.msra.mxu0 0.0
      %587 = vmatpush.msra.mxu0 0.0
      %588 = vmatpush.msra.mxu0 0.0
      %589 = vmatpush.msra.mxu0 0.0
      %590 = vmatpush.msra.mxu0 0.0
      %591 = vmatpush.msra.mxu0 0.0
      %592 = vmatpush.msra.mxu0 0.0
      %593 = vmatpush.msra.mxu0 0.0
      %594 = vmatpush.msra.mxu0 0.0
      %595 = vmatpush.msra.mxu0 0.0
      %596 = vmatpush.msra.mxu0 %v575
      %597 = vmatpush.msra.mxu0 %v574
      %598 = vmatpush.msra.mxu0 %v573
      %599 = vmatpush.msra.mxu0 %v572
      %600 = vmatmul.f32.gmra.mxu0 %v582
      %v601 = vpop.f32.mrf.mxu0
      %v602 = vadd.f32 %v578, %v601
      %603 = vdwg.mxu0
      %v604 = vmax.f32 %v602, 0.0
      %v605 = vld [vmem:[#allocation3] sm:$0xff]
      %v606 = vld [vmem:[%s485] sm:$0xff]
      %v607 = vld [vmem:[%s485 + $0x8] sm:$0xff]
      %v608 = vld [vmem:[%s485 + $0x10] sm:$0xff]
      %v609 = vld [vmem:[%s485 + $0x18] sm:$0xff]
      %v610 = vld [vmem:[%s485 + $0x20] sm:$0xff]
      %v611 = vld [vmem:[%s485 + $0x28] sm:$0xff]
      %v612 = vld [vmem:[%s485 + $0x30] sm:$0xff]
      %v613 = vld [vmem:[%s485 + $0x38] sm:$0xff]
      %v614 = vld [vmem:[%s485 + $0x40] sm:$0xff]
      %v615 = vld [vmem:[%s485 + $0x48] sm:$0xff]
      %v616 = vld [vmem:[%s485 + $0x50] sm:$0xff]
      %v617 = vld [vmem:[%s485 + $0x58] sm:$0xff]
      %v618 = vld [vmem:[%s485 + $0x60] sm:$0xff]
      %v619 = vld [vmem:[%s485 + $0x68] sm:$0xff]
      %v620 = vld [vmem:[%s485 + $0x70] sm:$0xff]
      %v621 = vld [vmem:[%s485 + $0x78] sm:$0xff]
      %622 = vmatpush.msra.mxu0 %v621
      %623 = vmatpush.msra.mxu0 %v620
      %624 = vmatpush.msra.mxu0 %v619
      %625 = vmatpush.msra.mxu0 %v618
      %626 = vmatpush.msra.mxu0 %v617
      %627 = vmatpush.msra.mxu0 %v616
      %628 = vmatpush.msra.mxu0 %v615
      %629 = vmatpush.msra.mxu0 %v614
      %630 = vmatpush.msra.mxu0 %v613
      %631 = vmatpush.msra.mxu0 %v612
      %632 = vmatpush.msra.mxu0 %v611
      %633 = vmatpush.msra.mxu0 %v610
      %634 = vmatpush.msra.mxu0 %v609
      %635 = vmatpush.msra.mxu0 %v608
      %636 = vmatpush.msra.mxu0 %v607
      %637 = vmatpush.msra.mxu0 %v606
      %638 = vmatmul.f32.gmra.mxu0 %v604
      %v639 = vpop.f32.mrf.mxu0
      %v640 = vadd.f32 0.0, %v639
      %641 = vdwg.mxu0
      %v642 = vadd.f32 %v605, %v640
      %643 = vst.msk [vmem:[#allocation3] sm:$0xff] %vm580, %v642
      // Predicated region
      $region73: #{transformer_encoder_forward.8} parent=67 // pred_check
        %p644 = pneg %p491
      $region74: #{transformer_encoder_forward.8} parent=67 // pred_check_branch
        %646 = sbr.rel (%p644) target = $region76
      $region75: #{transformer_encoder_forward.8} parent=67 // pred_region
        %v647 = vld [vmem:[#allocation2] sm:$0xff]
        %v648 = vld [vmem:[#allocation3] sm:$0xff]
        %v649 = vadd.f32 %v647, %v648
        %v650 = vld [vmem:[%s9] sm:$0x1]
        %v652 = vperm.slane %v650, 0
        %v654 = vadd.f32 %v649, %v652
        %v655 = vld [vmem:[%s10] sm:$0x1]
        %v656 = vld [vmem:[%s11] sm:$0x1]
        %v657 = vsel %vm580, %v654, 0.0
        %658 = vadd.xlane.f32.xlu0 %v657
        %v659 = vpop.xlane.xlu0 %658
        %v660 = vrcp.pop 32.0
        %v661 = vmul.f32 32.0, %v660
        %v662 = vsub.f32 1.0, %v661
        %v663 = vmul.f32 %v660, %v662
        %v664 = vadd.f32 %v660, %v663
        %vm665 = vweird.f32 %v660
        %v666 = vsel %vm665, %v660, %v664
        %v667 = vmul.f32 %v659, %v666
        %v668 = vsub.f32 %v654, %v667
        %v669 = vmul.f32 %v668, %v668
        %v670 = vsel %vm580, %v669, 0.0
        %671 = vadd.xlane.f32.xlu0 %v670
        %v672 = vpop.xlane.xlu0 %671
        %v673 = vmul.f32 %v672, %v666
        %v674 = vadd.f32 %v673, 1e-05
        %v675 = vrsqrt.pop %v674
        %v676 = vmul.f32 %v675, %v674
        %v677 = vmul.f32 %v676, %v675
        %v678 = vmul.f32 0.5, %v677
        %v679 = vsub.f32 1.5, %v678
        %v680 = vmul.f32 %v675, %v679
        %vm681 = vweird.f32 %v674
        %vm682 = vweird.f32 %v675
        %vm683 = vmor %vm681, %vm682
        %v684 = vsel %vm683, %v675, %v680
        %v685 = vmul.f32 %v668, %v684
        %v687 = vperm.slane %v655, 0
        %v689 = vmul.f32 %v685, %v687
        %v691 = vperm.slane %v656, 0
        %v693 = vadd.f32 %v689, %v691
        %694 = vst.msk [vmem:[%s490] sm:$0xff] %vm580, %v693
      $region76: #{transformer_encoder_forward.8} parent=67 // pred_fallthru
        _
      %p695 = scmp.lt.s32.totalorder %s27, 1
      %s696 = scalar_select %p695, %s27, 1
      %s697 = smul.addr %s696, 8
      %s698 = scalar_lea.vmem %s12, %s697
      // Predicated region
      $region77: #{transformer_encoder_forward.8} parent=67 // pred_check
        %p699 = pneg %p330
      $region78: #{transformer_encoder_forward.8} parent=67 // pred_check_branch
        %701 = sbr.rel (%p699) target = $region80
      $region79: #{transformer_encoder_forward.8} parent=67 // pred_region
        _
      $region80: #{transformer_encoder_forward.8} parent=67 // pred_fallthru
        _
    $region68: #{transformer_encoder_forward.8} parent=5 // pred_fallthru
      _
    %p702 = scmp.le.s32.totalorder 2, %s18
    // Predicated region
    $region81: #{transformer_encoder_forward.8} parent=5 // pred_check
      %p703 = pneg %p702
    $region82: #{transformer_encoder_forward.8} parent=5 // pred_check_branch
      %705 = sbr.rel (%p703) target = $region84
    $region83: #{transformer_encoder_forward.8} parent=5 // pred_region
      %s706 = ssub.s32 %s18, 2
      // Predicated region
      $region85: #{transformer_encoder_forward.8} parent=83 // pred_check
        %p707 = pneg %p336
      $region86: #{transformer_encoder_forward.8} parent=83 // pred_check_branch
        %709 = sbr.rel (%p707) target = $region88
      $region87: #{transformer_encoder_forward.8} parent=83 // pred_region
        %p710 = scmp.lt.s32.totalorder %s29, 1
        %s711 = scalar_select %p710, %s29, 1
        %s712 = smul.addr %s711, 8
        %s713 = scalar_lea.vmem %s12, %s712
      $region88: #{transformer_encoder_forward.8} parent=83 // pred_fallthru
        _
    $region84: #{transformer_encoder_forward.8} parent=5 // pred_fallthru
      _
  $region6: #{transformer_encoder_forward.8} parent=0 // loop_footer
    %s22 = sadd.s32 1, %s18
  $region7: #{transformer_encoder_forward.8} parent=0 // loop_footer_branch
    %17 = sbr.rel target = $region3
  $region8: #{transformer_encoder_forward.8} parent=0 // loop_exit
    _

// kernel: transformer_encoder_forward.11
$region0: #{transformer_encoder_forward.11}
  #allocation0 [shape = 'u32[]', space=smem, size = 0x4, offset = 0x4, fixed_abs, tag = 'smem constant byte address 0x4 - core index']
  #allocation1 [shape = 'u32[72,128]{1,0:T(1,128)}', space=vmem, size = 0x9000, scoped, tag = 'internal scratch']
  #allocation2 [shape = 'f32[8,32]{1,0:T(8,128)}', space=vmem, size = 0x1000, scoped, tag = 'scratch operand']
  #allocation3 [shape = 'f32[8,32]{1,0:T(8,128)}', space=vmem, size = 0x1000, scoped, tag = 'scratch operand']
  %s0 = inlined_call_operand.vmem [shape: f32[2,8,32], index: 0, kind: input, shape index: {}]
  %s1 = inlined_call_operand.vmem [shape: f32[2,8,32], index: 1, kind: input, shape index: {}]
  %s2 = inlined_call_operand.vmem [shape: f32[32,32], index: 2, kind: input, shape index: {}]
  %s3 = inlined_call_operand.vmem [shape: f32[1,32], index: 3, kind: input, shape index: {}]
  %s4 = inlined_call_operand.vmem [shape: f32[1,32], index: 4, kind: input, shape index: {}]
  %s5 = inlined_call_operand.vmem [shape: f32[1,32], index: 5, kind: input, shape index: {}]
  %s6 = inlined_call_operand.vmem [shape: f32[32,128], index: 6, kind: input, shape index: {}]
  %s7 = inlined_call_operand.vmem [shape: f32[1,128], index: 7, kind: input, shape index: {}]
  %s8 = inlined_call_operand.vmem [shape: f32[128,32], index: 8, kind: input, shape index: {}]
  %s9 = inlined_call_operand.vmem [shape: f32[1,32], index: 9, kind: input, shape index: {}]
  %s10 = inlined_call_operand.vmem [shape: f32[1,32], index: 10, kind: input, shape index: {}]
  %s11 = inlined_call_operand.vmem [shape: f32[1,32], index: 11, kind: input, shape index: {}]
  %s12 = inlined_call_operand.hbm [shape: f32[2,8,32], index: 12, kind: output, shape index: {}]
  %s13 = sld [smem:[#allocation0]]
  $region89: #{transformer_encoder_forward.11} parent=0
    _
  %s15 = ssub.s32 1, %s13
  %s16 = scalar_select 0, %s15, %s13
  $region1: #{transformer_encoder_forward.11} parent=0
    #allocation4 [shape = 'u8[8192]{0}', space=vmem, size = 0x2000, scoped, tag = 'output window, operand 0']
    #allocation5 [shape = 's32[2]{0}', space=sflag, size = 0x8, scoped, tag = 'scoped memory for transformer_encoder_forward.11']
    %17 = vsyncpa [#allocation5], 0
    %s18 = scalar_lea.sflag [#allocation5], 1
    %19 = vsyncpa %s18, 0
    loop: start=0, step=1, limit=4
    $region2: #{transformer_encoder_forward.11} parent=1 // loop_pre_header
      _
    $region3: #{transformer_encoder_forward.11} parent=1 // loop_header
      %s21 = sphi 0, %s25
      %p22 = scmp.ge.s32.totalorder %s21, 4
      %s28 = sphi 0, %s40
      %s29 = sphi 0, %s36
      %s30 = sphi 0, %s28
      %s31 = sphi 0, %s29
      %s32 = sphi 0, %s30
      %s33 = sphi 0, %s31
      %s43 = sphi 0, %s45
      %s46 = sphi 0, %s43
      %s47 = sphi 0, %s46
      %s63 = sphi 0, %s47
      %s69 = sphi 0, %s71
      %s72 = sphi 0, %s69
      %s73 = sphi 0, %s72
      %s89 = sphi 0, %s73
      %s93 = sphi 0, %s93
      %s95 = sphi 0, %s93
      %s96 = sphi 0, %s95
      %s110 = sphi 0, %s96
      %s114 = sphi 0, %s114
      %s116 = sphi 0, %s114
      %s117 = sphi 0, %s116
      %s131 = sphi 0, %s117
      %s135 = sphi 0, %s135
      %s137 = sphi 0, %s135
      %s138 = sphi 0, %s137
      %s152 = sphi 0, %s138
      %s156 = sphi 0, %s156
      %s158 = sphi 0, %s156
      %s159 = sphi 0, %s158
      %s173 = sphi 0, %s159
      %s179 = sphi 0, %s181
      %s182 = sphi 0, %s179
      %s183 = sphi 0, %s182
      %s199 = sphi 0, %s183
      %s205 = sphi 0, %s207
      %s208 = sphi 0, %s205
      %s209 = sphi 0, %s208
      %s225 = sphi 0, %s209
      %s231 = sphi 0, %s233
      %s234 = sphi 0, %s231
      %s235 = sphi 0, %s234
      %s251 = sphi 0, %s235
      %s255 = sphi 0, %s255
      %s257 = sphi 0, %s255
      %s258 = sphi 0, %s257
      %s272 = sphi 0, %s258
      %s276 = sphi 0, %s276
      %s278 = sphi 0, %s276
      %s279 = sphi 0, %s278
      %s293 = sphi 0, %s279
      %s297 = sphi 0, %s297
      %s299 = sphi 0, %s297
      %s300 = sphi 0, %s299
      %s314 = sphi 0, %s300
      %s320 = sphi 0, %s322
      %s323 = sphi 0, %s320
      %s324 = sphi 0, %s323
      %s340 = sphi 0, %s324
    $region4: #{transformer_encoder_forward.11} parent=1 // loop_header_branch
      %24 = sbr.rel (%p22) target = $region8
    $region5: #{transformer_encoder_forward.11} parent=1 // loop_body
      %s26 = ssub.s32 %s21, 1
      %s27 = ssub.s32 %s21, 2
      %s34 = sadd.s32 1, %s29
      %p35 = scmp.ge.s32.totalorder %s34, 1
      %s36 = scalar_select %p35, 0, %s34
      %s37 = sadd.s32 1, %s28
      %s38 = scalar_select %p35, %s37, %s28
      %p39 = scmp.ge.s32.totalorder %s38, 2
      %s40 = scalar_select %p39, 0, %s38
      %s41 = ssub.s32 %s28, %s40
      %p42 = scmp.eq.s32.totalorder %s41, 0
      %s44 = sadd.s32 %s43, 1
      %s45 = scalar_select %p42, %s43, %s44
      %p48 = pneg %p42
      %p49 = scmp.eq.s32.totalorder %s21, 1
      %p50 = por %p48, %p49
      %p51 = scmp.ne.s32.totalorder %s43, %s46
      %p52 = scmp.eq.s32.totalorder %s21, 0
      %p53 = por %p51, %p52
      %p54 = scmp.ne.s32.totalorder %s43, %s46
      %p55 = scmp.eq.s32.totalorder %s26, 1
      %p56 = por %p54, %p55
      %p57 = scmp.ne.s32.totalorder %s46, %s47
      %p58 = scmp.eq.s32.totalorder %s26, 0
      %p59 = por %p57, %p58
      %p60 = scmp.ne.s32.totalorder %s46, %s47
      %p61 = scmp.eq.s32.totalorder %s27, 1
      %p62 = por %p60, %p61
      %p64 = scmp.ne.s32.totalorder %s47, %s63
      %p65 = scmp.eq.s32.totalorder %s27, 0
      %p66 = por %p64, %p65
      %s67 = ssub.s32 %s28, %s40
      %p68 = scmp.eq.s32.totalorder %s67, 0
      %s70 = sadd.s32 %s69, 1
      %s71 = scalar_select %p68, %s69, %s70
      %p74 = pneg %p68
      %p75 = scmp.eq.s32.totalorder %s21, 1
      %p76 = por %p74, %p75
      %p77 = scmp.ne.s32.totalorder %s69, %s72
      %p78 = scmp.eq.s32.totalorder %s21, 0
      %p79 = por %p77, %p78
      %p80 = scmp.ne.s32.totalorder %s69, %s72
      %p81 = scmp.eq.s32.totalorder %s26, 1
      %p82 = por %p80, %p81
      %p83 = scmp.ne.s32.totalorder %s72, %s73
      %p84 = scmp.eq.s32.totalorder %s26, 0
      %p85 = por %p83, %p84
      %p86 = scmp.ne.s32.totalorder %s72, %s73
      %p87 = scmp.eq.s32.totalorder %s27, 1
      %p88 = por %p86, %p87
      %p90 = scmp.ne.s32.totalorder %s73, %s89
      %p91 = scmp.eq.s32.totalorder %s27, 0
      %p92 = por %p90, %p91
      %s94 = sadd.s32 %s93, 1
      %p97 = scmp.eq.s32.totalorder %s21, 1
      %p98 = scmp.ne.s32.totalorder %s93, %s95
      %p99 = scmp.eq.s32.totalorder %s21, 0
      %p100 = por %p98, %p99
      %p101 = scmp.ne.s32.totalorder %s93, %s95
      %p102 = scmp.eq.s32.totalorder %s26, 1
      %p103 = por %p101, %p102
      %p104 = scmp.ne.s32.totalorder %s95, %s96
      %p105 = scmp.eq.s32.totalorder %s26, 0
      %p106 = por %p104, %p105
      %p107 = scmp.ne.s32.totalorder %s95, %s96
      %p108 = scmp.eq.s32.totalorder %s27, 1
      %p109 = por %p107, %p108
      %p111 = scmp.ne.s32.totalorder %s96, %s110
      %p112 = scmp.eq.s32.totalorder %s27, 0
      %p113 = por %p111, %p112
      %s115 = sadd.s32 %s114, 1
      %p118 = scmp.eq.s32.totalorder %s21, 1
      %p119 = scmp.ne.s32.totalorder %s114, %s116
      %p120 = scmp.eq.s32.totalorder %s21, 0
      %p121 = por %p119, %p120
      %p122 = scmp.ne.s32.totalorder %s114, %s116
      %p123 = scmp.eq.s32.totalorder %s26, 1
      %p124 = por %p122, %p123
      %p125 = scmp.ne.s32.totalorder %s116, %s117
      %p126 = scmp.eq.s32.totalorder %s26, 0
      %p127 = por %p125, %p126
      %p128 = scmp.ne.s32.totalorder %s116, %s117
      %p129 = scmp.eq.s32.totalorder %s27, 1
      %p130 = por %p128, %p129
      %p132 = scmp.ne.s32.totalorder %s117, %s131
      %p133 = scmp.eq.s32.totalorder %s27, 0
      %p134 = por %p132, %p133
      %s136 = sadd.s32 %s135, 1
      %p139 = scmp.eq.s32.totalorder %s21, 1
      %p140 = scmp.ne.s32.totalorder %s135, %s137
      %p141 = scmp.eq.s32.totalorder %s21, 0
      %p142 = por %p140, %p141
      %p143 = scmp.ne.s32.totalorder %s135, %s137
      %p144 = scmp.eq.s32.totalorder %s26, 1
      %p145 = por %p143, %p144
      %p146 = scmp.ne.s32.totalorder %s137, %s138
      %p147 = scmp.eq.s32.totalorder %s26, 0
      %p148 = por %p146, %p147
      %p149 = scmp.ne.s32.totalorder %s137, %s138
      %p150 = scmp.eq.s32.totalorder %s27, 1
      %p151 = por %p149, %p150
      %p153 = scmp.ne.s32.totalorder %s138, %s152
      %p154 = scmp.eq.s32.totalorder %s27, 0
      %p155 = por %p153, %p154
      %s157 = sadd.s32 %s156, 1
      %p160 = scmp.eq.s32.totalorder %s21, 1
      %p161 = scmp.ne.s32.totalorder %s156, %s158
      %p162 = scmp.eq.s32.totalorder %s21, 0
      %p163 = por %p161, %p162
      %p164 = scmp.ne.s32.totalorder %s156, %s158
      %p165 = scmp.eq.s32.totalorder %s26, 1
      %p166 = por %p164, %p165
      %p167 = scmp.ne.s32.totalorder %s158, %s159
      %p168 = scmp.eq.s32.totalorder %s26, 0
      %p169 = por %p167, %p168
      %p170 = scmp.ne.s32.totalorder %s158, %s159
      %p171 = scmp.eq.s32.totalorder %s27, 1
      %p172 = por %p170, %p171
      %p174 = scmp.ne.s32.totalorder %s159, %s173
      %p175 = scmp.eq.s32.totalorder %s27, 0
      %p176 = por %p174, %p175
      %s177 = ssub.s32 %s29, %s36
      %p178 = scmp.eq.s32.totalorder %s177, 0
      %s180 = sadd.s32 %s179, 1
      %s181 = scalar_select %p178, %s179, %s180
      %p184 = pneg %p178
      %p185 = scmp.eq.s32.totalorder %s21, 1
      %p186 = por %p184, %p185
      %p187 = scmp.ne.s32.totalorder %s179, %s182
      %p188 = scmp.eq.s32.totalorder %s21, 0
      %p189 = por %p187, %p188
      %p190 = scmp.ne.s32.totalorder %s179, %s182
      %p191 = scmp.eq.s32.totalorder %s26, 1
      %p192 = por %p190, %p191
      %p193 = scmp.ne.s32.totalorder %s182, %s183
      %p194 = scmp.eq.s32.totalorder %s26, 0
      %p195 = por %p193, %p194
      %p196 = scmp.ne.s32.totalorder %s182, %s183
      %p197 = scmp.eq.s32.totalorder %s27, 1
      %p198 = por %p196, %p197
      %p200 = scmp.ne.s32.totalorder %s183, %s199
      %p201 = scmp.eq.s32.totalorder %s27, 0
      %p202 = por %p200, %p201
      %s203 = ssub.s32 %s29, %s36
      %p204 = scmp.eq.s32.totalorder %s203, 0
      %s206 = sadd.s32 %s205, 1
      %s207 = scalar_select %p204, %s205, %s206
      %p210 = pneg %p204
      %p211 = scmp.eq.s32.totalorder %s21, 1
      %p212 = por %p210, %p211
      %p213 = scmp.ne.s32.totalorder %s205, %s208
      %p214 = scmp.eq.s32.totalorder %s21, 0
      %p215 = por %p213, %p214
      %p216 = scmp.ne.s32.totalorder %s205, %s208
      %p217 = scmp.eq.s32.totalorder %s26, 1
      %p218 = por %p216, %p217
      %p219 = scmp.ne.s32.totalorder %s208, %s209
      %p220 = scmp.eq.s32.totalorder %s26, 0
      %p221 = por %p219, %p220
      %p222 = scmp.ne.s32.totalorder %s208, %s209
      %p223 = scmp.eq.s32.totalorder %s27, 1
      %p224 = por %p222, %p223
      %p226 = scmp.ne.s32.totalorder %s209, %s225
      %p227 = scmp.eq.s32.totalorder %s27, 0
      %p228 = por %p226, %p227
      %s229 = ssub.s32 %s29, %s36
      %p230 = scmp.eq.s32.totalorder %s229, 0
      %s232 = sadd.s32 %s231, 1
      %s233 = scalar_select %p230, %s231, %s232
      %p236 = pneg %p230
      %p237 = scmp.eq.s32.totalorder %s21, 1
      %p238 = por %p236, %p237
      %p239 = scmp.ne.s32.totalorder %s231, %s234
      %p240 = scmp.eq.s32.totalorder %s21, 0
      %p241 = por %p239, %p240
      %p242 = scmp.ne.s32.totalorder %s231, %s234
      %p243 = scmp.eq.s32.totalorder %s26, 1
      %p244 = por %p242, %p243
      %p245 = scmp.ne.s32.totalorder %s234, %s235
      %p246 = scmp.eq.s32.totalorder %s26, 0
      %p247 = por %p245, %p246
      %p248 = scmp.ne.s32.totalorder %s234, %s235
      %p249 = scmp.eq.s32.totalorder %s27, 1
      %p250 = por %p248, %p249
      %p252 = scmp.ne.s32.totalorder %s235, %s251
      %p253 = scmp.eq.s32.totalorder %s27, 0
      %p254 = por %p252, %p253
      %s256 = sadd.s32 %s255, 1
      %p259 = scmp.eq.s32.totalorder %s21, 1
      %p260 = scmp.ne.s32.totalorder %s255, %s257
      %p261 = scmp.eq.s32.totalorder %s21, 0
      %p262 = por %p260, %p261
      %p263 = scmp.ne.s32.totalorder %s255, %s257
      %p264 = scmp.eq.s32.totalorder %s26, 1
      %p265 = por %p263, %p264
      %p266 = scmp.ne.s32.totalorder %s257, %s258
      %p267 = scmp.eq.s32.totalorder %s26, 0
      %p268 = por %p266, %p267
      %p269 = scmp.ne.s32.totalorder %s257, %s258
      %p270 = scmp.eq.s32.totalorder %s27, 1
      %p271 = por %p269, %p270
      %p273 = scmp.ne.s32.totalorder %s258, %s272
      %p274 = scmp.eq.s32.totalorder %s27, 0
      %p275 = por %p273, %p274
      %s277 = sadd.s32 %s276, 1
      %p280 = scmp.eq.s32.totalorder %s21, 1
      %p281 = scmp.ne.s32.totalorder %s276, %s278
      %p282 = scmp.eq.s32.totalorder %s21, 0
      %p283 = por %p281, %p282
      %p284 = scmp.ne.s32.totalorder %s276, %s278
      %p285 = scmp.eq.s32.totalorder %s26, 1
      %p286 = por %p284, %p285
      %p287 = scmp.ne.s32.totalorder %s278, %s279
      %p288 = scmp.eq.s32.totalorder %s26, 0
      %p289 = por %p287, %p288
      %p290 = scmp.ne.s32.totalorder %s278, %s279
      %p291 = scmp.eq.s32.totalorder %s27, 1
      %p292 = por %p290, %p291
      %p294 = scmp.ne.s32.totalorder %s279, %s293
      %p295 = scmp.eq.s32.totalorder %s27, 0
      %p296 = por %p294, %p295
      %s298 = sadd.s32 %s297, 1
      %p301 = scmp.eq.s32.totalorder %s21, 1
      %p302 = scmp.ne.s32.totalorder %s297, %s299
      %p303 = scmp.eq.s32.totalorder %s21, 0
      %p304 = por %p302, %p303
      %p305 = scmp.ne.s32.totalorder %s297, %s299
      %p306 = scmp.eq.s32.totalorder %s26, 1
      %p307 = por %p305, %p306
      %p308 = scmp.ne.s32.totalorder %s299, %s300
      %p309 = scmp.eq.s32.totalorder %s26, 0
      %p310 = por %p308, %p309
      %p311 = scmp.ne.s32.totalorder %s299, %s300
      %p312 = scmp.eq.s32.totalorder %s27, 1
      %p313 = por %p311, %p312
      %p315 = scmp.ne.s32.totalorder %s300, %s314
      %p316 = scmp.eq.s32.totalorder %s27, 0
      %p317 = por %p315, %p316
      %s318 = ssub.s32 %s28, %s40
      %p319 = scmp.eq.s32.totalorder %s318, 0
      %s321 = sadd.s32 %s320, 1
      %s322 = scalar_select %p319, %s320, %s321
      %p325 = pneg %p319
      %p326 = scmp.eq.s32.totalorder %s21, 1
      %p327 = por %p325, %p326
      %p328 = scmp.ne.s32.totalorder %s320, %s323
      %p329 = scmp.eq.s32.totalorder %s21, 0
      %p330 = por %p328, %p329
      %p331 = scmp.ne.s32.totalorder %s320, %s323
      %p332 = scmp.eq.s32.totalorder %s26, 1
      %p333 = por %p331, %p332
      %p334 = scmp.ne.s32.totalorder %s323, %s324
      %p335 = scmp.eq.s32.totalorder %s26, 0
      %p336 = por %p334, %p335
      %p337 = scmp.ne.s32.totalorder %s323, %s324
      %p338 = scmp.eq.s32.totalorder %s27, 1
      %p339 = por %p337, %p338
      %p341 = scmp.ne.s32.totalorder %s324, %s340
      %p342 = scmp.eq.s32.totalorder %s27, 0
      %p343 = por %p341, %p342
      %p344 = scmp.le.s32.totalorder 1, %s21
      %p345 = scmp.lt.s32.totalorder %s21, 3
      %p346 = pnand %p344, %p345
      %p347 = pneg %p346
      // Predicated region
      $region9: #{transformer_encoder_forward.11} parent=5 // pred_check
        _
      $region10: #{transformer_encoder_forward.11} parent=5 // pred_check_branch
        %349 = sbr.rel (%p346) target = $region12
      $region11: #{transformer_encoder_forward.11} parent=5 // pred_region
        %s350 = ssub.s32 %s21, 1
        // Predicated region
        $region13: #{transformer_encoder_forward.11} parent=11 // pred_check
          %p351 = pneg %p106
        $region14: #{transformer_encoder_forward.11} parent=11 // pred_check_branch
          %353 = sbr.rel (%p351) target = $region16
        $region15: #{transformer_encoder_forward.11} parent=11 // pred_region
          _
        $region16: #{transformer_encoder_forward.11} parent=11 // pred_fallthru
          _
        // Predicated region
        $region17: #{transformer_encoder_forward.11} parent=11 // pred_check
          %p354 = pneg %p127
        $region18: #{transformer_encoder_forward.11} parent=11 // pred_check_branch
          %356 = sbr.rel (%p354) target = $region20
        $region19: #{transformer_encoder_forward.11} parent=11 // pred_region
          _
        $region20: #{transformer_encoder_forward.11} parent=11 // pred_fallthru
          _
        // Predicated region
        $region21: #{transformer_encoder_forward.11} parent=11 // pred_check
          %p357 = pneg %p148
        $region22: #{transformer_encoder_forward.11} parent=11 // pred_check_branch
          %359 = sbr.rel (%p357) target = $region24
        $region23: #{transformer_encoder_forward.11} parent=11 // pred_region
          _
        $region24: #{transformer_encoder_forward.11} parent=11 // pred_fallthru
          _
        // Predicated region
        $region25: #{transformer_encoder_forward.11} parent=11 // pred_check
          %p360 = pneg %p169
        $region26: #{transformer_encoder_forward.11} parent=11 // pred_check_branch
          %362 = sbr.rel (%p360) target = $region28
        $region27: #{transformer_encoder_forward.11} parent=11 // pred_region
          _
        $region28: #{transformer_encoder_forward.11} parent=11 // pred_fallthru
          _
        // Predicated region
        $region29: #{transformer_encoder_forward.11} parent=11 // pred_check
          %p363 = pneg %p195
        $region30: #{transformer_encoder_forward.11} parent=11 // pred_check_branch
          %365 = sbr.rel (%p363) target = $region32
        $region31: #{transformer_encoder_forward.11} parent=11 // pred_region
          %p366 = scmp.lt.s32.totalorder %s31, 0
          %s367 = scalar_select %p366, %s31, 0
          %s368 = smul.addr %s367, 8
          %s369 = scalar_lea.vmem %s6, %s368
        $region32: #{transformer_encoder_forward.11} parent=11 // pred_fallthru
          _
        // Predicated region
        $region33: #{transformer_encoder_forward.11} parent=11 // pred_check
          %p370 = pneg %p221
        $region34: #{transformer_encoder_forward.11} parent=11 // pred_check_branch
          %372 = sbr.rel (%p370) target = $region36
        $region35: #{transformer_encoder_forward.11} parent=11 // pred_region
          %p373 = scmp.lt.s32.totalorder %s31, 0
          %s374 = scalar_select %p373, %s31, 0
          %s375 = scalar_lea.vmem %s7, %s374
        $region36: #{transformer_encoder_forward.11} parent=11 // pred_fallthru
          _
        // Predicated region
        $region37: #{transformer_encoder_forward.11} parent=11 // pred_check
          %p376 = pneg %p247
        $region38: #{transformer_encoder_forward.11} parent=11 // pred_check_branch
          %378 = sbr.rel (%p376) target = $region40
        $region39: #{transformer_encoder_forward.11} parent=11 // pred_region
          %s379 = smul.u32 16, %s31
          %p380 = scmp.lt.s32.totalorder %s379, 15
          %s381 = scalar_select %p380, %s379, 15
          %s382 = smul.addr %s381, 8
          %s383 = scalar_lea.vmem %s8, %s382
          %s384 = smul.u32 16, %s31
        $region40: #{transformer_encoder_forward.11} parent=11 // pred_fallthru
          _
        // Predicated region
        $region41: #{transformer_encoder_forward.11} parent=11 // pred_check
          %p385 = pneg %p268
        $region42: #{transformer_encoder_forward.11} parent=11 // pred_check_branch
          %387 = sbr.rel (%p385) target = $region44
        $region43: #{transformer_encoder_forward.11} parent=11 // pred_region
          _
        $region44: #{transformer_encoder_forward.11} parent=11 // pred_fallthru
          _
        // Predicated region
        $region45: #{transformer_encoder_forward.11} parent=11 // pred_check
          %p388 = pneg %p289
        $region46: #{transformer_encoder_forward.11} parent=11 // pred_check_branch
          %390 = sbr.rel (%p388) target = $region48
        $region47: #{transformer_encoder_forward.11} parent=11 // pred_region
          _
        $region48: #{transformer_encoder_forward.11} parent=11 // pred_fallthru
          _
        // Predicated region
        $region49: #{transformer_encoder_forward.11} parent=11 // pred_check
          %p391 = pneg %p310
        $region50: #{transformer_encoder_forward.11} parent=11 // pred_check_branch
          %393 = sbr.rel (%p391) target = $region52
        $region51: #{transformer_encoder_forward.11} parent=11 // pred_region
          _
        $region52: #{transformer_encoder_forward.11} parent=11 // pred_fallthru
          _
      $region12: #{transformer_encoder_forward.11} parent=5 // pred_fallthru
        _
      %p394 = scmp.lt.s32.totalorder %s21, 2
      // Predicated region
      $region53: #{transformer_encoder_forward.11} parent=5 // pred_check
        %p395 = pneg %p394
      $region54: #{transformer_encoder_forward.11} parent=5 // pred_check_branch
        %397 = sbr.rel (%p395) target = $region56
      $region55: #{transformer_encoder_forward.11} parent=5 // pred_region
        // Predicated region
        $region57: #{transformer_encoder_forward.11} parent=55 // pred_check
          %p398 = pneg %p53
        $region58: #{transformer_encoder_forward.11} parent=55 // pred_check_branch
          %400 = sbr.rel (%p398) target = $region60
        $region59: #{transformer_encoder_forward.11} parent=55 // pred_region
          %p401 = scmp.lt.s32.totalorder %s28, 1
          %s402 = scalar_select %p401, %s28, 1
          %s403 = smul.addr %s402, 8
          %s404 = scalar_lea.vmem %s0, %s403
        $region60: #{transformer_encoder_forward.11} parent=55 // pred_fallthru
          _
        // Predicated region
        $region61: #{transformer_encoder_forward.11} parent=55 // pred_check
          %p405 = pneg %p79
        $region62: #{transformer_encoder_forward.11} parent=55 // pred_check_branch
          %407 = sbr.rel (%p405) target = $region64
        $region63: #{transformer_encoder_forward.11} parent=55 // pred_region
          %p408 = scmp.lt.s32.totalorder %s28, 1
          %s409 = scalar_select %p408, %s28, 1
          %s410 = smul.addr %s409, 8
          %s411 = scalar_lea.vmem %s1, %s410
        $region64: #{transformer_encoder_forward.11} parent=55 // pred_fallthru
          _
      $region56: #{transformer_encoder_forward.11} parent=5 // pred_fallthru
        _
      %p412 = scmp.le.s32.totalorder 1, %s21
      %p413 = scmp.lt.s32.totalorder %s21, 3
      %p414 = pnand %p412, %p413
      %p415 = pneg %p414
      // Predicated region
      $region65: #{transformer_encoder_forward.11} parent=5 // pred_check
        _
      $region66: #{transformer_encoder_forward.11} parent=5 // pred_check_branch
        %417 = sbr.rel (%p414) target = $region68
      $region67: #{transformer_encoder_forward.11} parent=5 // pred_region
        %s418 = ssub.s32 %s21, 1
        %p419 = scmp.lt.s32.totalorder %s30, 1
        %s420 = scalar_select %p419, %s30, 1
        %s421 = smul.addr %s420, 8
        %s422 = scalar_lea.vmem %s0, %s421
        %p423 = pneg %p59
        %p424 = pneg %p56
        %p425 = scmp.lt.s32.totalorder %s30, 1
        %s426 = scalar_select %p425, %s30, 1
        %s427 = smul.addr %s426, 8
        %s428 = scalar_lea.vmem %s1, %s427
        %p429 = pneg %p85
        %p430 = pneg %p82
        %p431 = pneg %p106
        %p432 = pneg %p103
        %p433 = pneg %p127
        %p434 = pneg %p124
        %p435 = pneg %p148
        %p436 = pneg %p145
        %p437 = pneg %p169
        %p438 = pneg %p166
        %p439 = scmp.lt.s32.totalorder %s31, 0
        %s440 = scalar_select %p439, %s31, 0
        %s441 = smul.addr %s440, 8
        %s442 = scalar_lea.vmem %s6, %s441
        %p443 = pneg %p195
        %p444 = pneg %p192
        %p445 = scmp.lt.s32.totalorder %s31, 0
        %s446 = scalar_select %p445, %s31, 0
        %s447 = scalar_lea.vmem %s7, %s446
        %p448 = pneg %p221
        %p449 = pneg %p218
        %s450 = smul.u32 16, %s31
        %p451 = scmp.lt.s32.totalorder %s450, 15
        %s452 = scalar_select %p451, %s450, 15
        %s453 = smul.addr %s452, 8
        %s454 = scalar_lea.vmem %s8, %s453
        %p455 = pneg %p247
        %p456 = pneg %p244
        %p457 = pneg %p268
        %p458 = pneg %p265
        %p459 = pneg %p289
        %p460 = pneg %p286
        %p461 = pneg %p310
        %p462 = pneg %p307
        %p463 = pneg %p336
        %p464 = pneg %p333
        %s465 = sand.u32 %s323, 1
        %s466 = scalar_lea.sflag [#allocation5], %s465
        %s467 = sand.u32 %s323, 1
        %s468 = smul.addr %s467, 8
        %s469 = scalar_lea.vmem [#allocation4], %s468
        %p470 = scmp.lt.s32.totalorder %s30, 1
        %s471 = scalar_select %p470, %s30, 1
        %s472 = smul.addr %s471, 8
        %s473 = scalar_lea.vmem %s0, %s472
        %p474 = scmp.lt.s32.totalorder %s30, 1
        %s475 = scalar_select %p474, %s30, 1
        %s476 = smul.addr %s475, 8
        %s477 = scalar_lea.vmem %s1, %s476
        %p478 = scmp.lt.s32.totalorder %s31, 0
        %s479 = scalar_select %p478, %s31, 0
        %s480 = smul.addr %s479, 8
        %s481 = scalar_lea.vmem %s6, %s480
        %p482 = scmp.lt.s32.totalorder %s31, 0
        %s483 = scalar_select %p482, %s31, 0
        %s484 = scalar_lea.vmem %s7, %s483
        %s485 = smul.u32 16, %s31
        %p486 = scmp.lt.s32.totalorder %s485, 15
        %s487 = scalar_select %p486, %s485, 15
        %s488 = smul.addr %s487, 8
        %s489 = scalar_lea.vmem %s8, %s488
        %s490 = smul.u32 16, %s31
        %p491 = scmp.eq.s32.totalorder %s31, 0
        // Predicated region
        $region69: #{transformer_encoder_forward.11} parent=67 // pred_check
          %p492 = pneg %p491
        $region70: #{transformer_encoder_forward.11} parent=67 // pred_check_branch
          %494 = sbr.rel (%p492) target = $region72
        $region71: #{transformer_encoder_forward.11} parent=67 // pred_region
          %v495 = vld [vmem:[%s477] sm:$0xff]
          %v496 = vld [vmem:[%s2] sm:$0xff]
          %v497 = vld [vmem:[%s2 + $0x8] sm:$0xff]
          %v498 = vld [vmem:[%s2 + $0x10] sm:$0xff]
          %v499 = vld [vmem:[%s2 + $0x18] sm:$0xff]
          %v500 = vld [vmem:[%s3] sm:$0x1]
          %v502 = vperm.slane %v500, 0
          %vm504 = vcmask 261120
          %v506 = vsel %vm504, %v495, 0
          %508 = vmatpush.msra.mxu0 0.0
          %509 = vmatpush.msra.mxu0 0.0
          %510 = vmatpush.msra.mxu0 0.0
          %511 = vmatpush.msra.mxu0 0.0
          %512 = vmatpush.msra.mxu0 0.0
          %513 = vmatpush.msra.mxu0 0.0
          %514 = vmatpush.msra.mxu0 0.0
          %515 = vmatpush.msra.mxu0 0.0
          %516 = vmatpush.msra.mxu0 0.0
          %517 = vmatpush.msra.mxu0 0.0
          %518 = vmatpush.msra.mxu0 0.0
          %519 = vmatpush.msra.mxu0 0.0
          %520 = vmatpush.msra.mxu0 %v499
          %521 = vmatpush.msra.mxu0 %v498
          %522 = vmatpush.msra.mxu0 %v497
          %523 = vmatpush.msra.mxu0 %v496
          %524 = vmatmul.f32.gmra.mxu0 %v506
          %v525 = vpop.f32.mrf.mxu0
          %v526 = vadd.f32 %v502, %v525
          %527 = vdwg.mxu0
          %v528 = vld [vmem:[%s473] sm:$0xff]
          %v529 = vadd.f32 %v528, %v526
          %v530 = vld [vmem:[%s4] sm:$0x1]
          %v531 = vld [vmem:[%s5] sm:$0x1]
          %v532 = vsel %vm504, %v529, 0.0
          %533 = vadd.xlane.f32.xlu0 %v532
          %v534 = vpop.xlane.xlu0 %533
          %v535 = vrcp.pop 32.0
          %v536 = vmul.f32 32.0, %v535
          %v537 = vsub.f32 1.0, %v536
          %v538 = vmul.f32 %v535, %v537
          %v539 = vadd.f32 %v535, %v538
          %vm540 = vweird.f32 %v535
          %v541 = vsel %vm540, %v535, %v539
          %v542 = vmul.f32 %v534, %v541
          %v543 = vsub.f32 %v529, %v542
          %v544 = vmul.f32 %v543, %v543
          %v545 = vsel %vm504, %v544, 0.0
          %546 = vadd.xlane.f32.xlu0 %v545
          %v547 = vpop.xlane.xlu0 %546
          %v548 = vmul.f32 %v547, %v541
          %v549 = vadd.f32 %v548, 1e-05
          %v550 = vrsqrt.pop %v549
          %v551 = vmul.f32 %v550, %v549
          %v552 = vmul.f32 %v551, %v550
          %v553 = vmul.f32 0.5, %v552
          %v554 = vsub.f32 1.5, %v553
          %v555 = vmul.f32 %v550, %v554
          %vm556 = vweird.f32 %v549
          %vm557 = vweird.f32 %v550
          %vm558 = vmor %vm556, %vm557
          %v559 = vsel %vm558, %v550, %v555
          %v560 = vmul.f32 %v543, %v559
          %v562 = vperm.slane %v530, 0
          %v564 = vmul.f32 %v560, %v562
          %v566 = vperm.slane %v531, 0
          %v568 = vadd.f32 %v564, %v566
          %569 = vst.msk [vmem:[#allocation2] sm:$0xff] %vm504, %v568
          %570 = vst.msk [vmem:[#allocation3] sm:$0xff] %vm504, 0.0
        $region72: #{transformer_encoder_forward.11} parent=67 // pred_fallthru
          _
        %v571 = vld [vmem:[#allocation2] sm:$0xff]
        %v572 = vld [vmem:[%s481] sm:$0xff]
        %v573 = vld [vmem:[%s481 + $0x8] sm:$0xff]
        %v574 = vld [vmem:[%s481 + $0x10] sm:$0xff]
        %v575 = vld [vmem:[%s481 + $0x18] sm:$0xff]
        %v576 = vld [vmem:[%s484] sm:$0x1]
        %v578 = vperm.slane %v576, 0
        %vm580 = vcmask 261120
        %v582 = vsel %vm580, %v571, 0
        %584 = vmatpush.msra.mxu0 0.0
        %585 = vmatpush.msra.mxu0 0.0
        %586 = vmatpush.msra.mxu0 0.0
        %587 = vmatpush.msra.mxu0 0.0
        %588 = vmatpush.msra.mxu0 0.0
        %589 = vmatpush.msra.mxu0 0.0
        %590 = vmatpush.msra.mxu0 0.0
        %591 = vmatpush.msra.mxu0 0.0
        %592 = vmatpush.msra.mxu0 0.0
        %593 = vmatpush.msra.mxu0 0.0
        %594 = vmatpush.msra.mxu0 0.0
        %595 = vmatpush.msra.mxu0 0.0
        %596 = vmatpush.msra.mxu0 %v575
        %597 = vmatpush.msra.mxu0 %v574
        %598 = vmatpush.msra.mxu0 %v573
        %599 = vmatpush.msra.mxu0 %v572
        %600 = vmatmul.f32.gmra.mxu0 %v582
        %v601 = vpop.f32.mrf.mxu0
        %v602 = vadd.f32 %v578, %v601
        %603 = vdwg.mxu0
        %v604 = vmax.f32 %v602, 0.0
        %v605 = vld [vmem:[#allocation3] sm:$0xff]
        %v606 = vld [vmem:[%s489] sm:$0xff]
        %v607 = vld [vmem:[%s489 + $0x8] sm:$0xff]
        %v608 = vld [vmem:[%s489 + $0x10] sm:$0xff]
        %v609 = vld [vmem:[%s489 + $0x18] sm:$0xff]
        %v610 = vld [vmem:[%s489 + $0x20] sm:$0xff]
        %v611 = vld [vmem:[%s489 + $0x28] sm:$0xff]
        %v612 = vld [vmem:[%s489 + $0x30] sm:$0xff]
        %v613 = vld [vmem:[%s489 + $0x38] sm:$0xff]
        %v614 = vld [vmem:[%s489 + $0x40] sm:$0xff]
        %v615 = vld [vmem:[%s489 + $0x48] sm:$0xff]
        %v616 = vld [vmem:[%s489 + $0x50] sm:$0xff]
        %v617 = vld [vmem:[%s489 + $0x58] sm:$0xff]
        %v618 = vld [vmem:[%s489 + $0x60] sm:$0xff]
        %v619 = vld [vmem:[%s489 + $0x68] sm:$0xff]
        %v620 = vld [vmem:[%s489 + $0x70] sm:$0xff]
        %v621 = vld [vmem:[%s489 + $0x78] sm:$0xff]
        %622 = vmatpush.msra.mxu0 %v621
        %623 = vmatpush.msra.mxu0 %v620
        %624 = vmatpush.msra.mxu0 %v619
        %625 = vmatpush.msra.mxu0 %v618
        %626 = vmatpush.msra.mxu0 %v617
        %627 = vmatpush.msra.mxu0 %v616
        %628 = vmatpush.msra.mxu0 %v615
        %629 = vmatpush.msra.mxu0 %v614
        %630 = vmatpush.msra.mxu0 %v613
        %631 = vmatpush.msra.mxu0 %v612
        %632 = vmatpush.msra.mxu0 %v611
        %633 = vmatpush.msra.mxu0 %v610
        %634 = vmatpush.msra.mxu0 %v609
        %635 = vmatpush.msra.mxu0 %v608
        %636 = vmatpush.msra.mxu0 %v607
        %637 = vmatpush.msra.mxu0 %v606
        %638 = vmatmul.f32.gmra.mxu0 %v604
        %v639 = vpop.f32.mrf.mxu0
        %v640 = vadd.f32 0.0, %v639
        %641 = vdwg.mxu0
        %v642 = vadd.f32 %v605, %v640
        %643 = vst.msk [vmem:[#allocation3] sm:$0xff] %vm580, %v642
        // Predicated region
        $region73: #{transformer_encoder_forward.11} parent=67 // pred_check
          %p644 = pneg %p491
        $region74: #{transformer_encoder_forward.11} parent=67 // pred_check_branch
          %646 = sbr.rel (%p644) target = $region76
        $region75: #{transformer_encoder_forward.11} parent=67 // pred_region
          %v647 = vld [vmem:[#allocation2] sm:$0xff]
          %v648 = vld [vmem:[#allocation3] sm:$0xff]
          %v649 = vadd.f32 %v647, %v648
          %v650 = vld [vmem:[%s9] sm:$0x1]
          %v652 = vperm.slane %v650, 0
          %v654 = vadd.f32 %v649, %v652
          %v655 = vld [vmem:[%s10] sm:$0x1]
          %v656 = vld [vmem:[%s11] sm:$0x1]
          %v657 = vsel %vm580, %v654, 0.0
          %658 = vadd.xlane.f32.xlu0 %v657
          %v659 = vpop.xlane.xlu0 %658
          %v660 = vrcp.pop 32.0
          %v661 = vmul.f32 32.0, %v660
          %v662 = vsub.f32 1.0, %v661
          %v663 = vmul.f32 %v660, %v662
          %v664 = vadd.f32 %v660, %v663
          %vm665 = vweird.f32 %v660
          %v666 = vsel %vm665, %v660, %v664
          %v667 = vmul.f32 %v659, %v666
          %v668 = vsub.f32 %v654, %v667
          %v669 = vmul.f32 %v668, %v668
          %v670 = vsel %vm580, %v669, 0.0
          %671 = vadd.xlane.f32.xlu0 %v670
          %v672 = vpop.xlane.xlu0 %671
          %v673 = vmul.f32 %v672, %v666
          %v674 = vadd.f32 %v673, 1e-05
          %v675 = vrsqrt.pop %v674
          %v676 = vmul.f32 %v675, %v674
          %v677 = vmul.f32 %v676, %v675
          %v678 = vmul.f32 0.5, %v677
          %v679 = vsub.f32 1.5, %v678
          %v680 = vmul.f32 %v675, %v679
          %vm681 = vweird.f32 %v674
          %vm682 = vweird.f32 %v675
          %vm683 = vmor %vm681, %vm682
          %v684 = vsel %vm683, %v675, %v680
          %v685 = vmul.f32 %v668, %v684
          %v687 = vperm.slane %v655, 0
          %v689 = vmul.f32 %v685, %v687
          %v691 = vperm.slane %v656, 0
          %v693 = vadd.f32 %v689, %v691
          %694 = vst.msk [vmem:[%s469] sm:$0xff] %vm580, %v693
        $region76: #{transformer_encoder_forward.11} parent=67 // pred_fallthru
          _
        %s695 = sand.u32 %s323, 1
        %s696 = scalar_lea.sflag [#allocation5], %s695
        %s697 = sand.u32 %s323, 1
        %s698 = smul.addr %s697, 8
        %s699 = scalar_lea.vmem [#allocation4], %s698
        // Predicated region
        $region77: #{transformer_encoder_forward.11} parent=67 // pred_check
          %p700 = pneg %p333
        $region78: #{transformer_encoder_forward.11} parent=67 // pred_check_branch
          %702 = sbr.rel (%p700) target = $region80
        $region79: #{transformer_encoder_forward.11} parent=67 // pred_region
          %704 = vsyncadd %s696, 0
          %s705 = smul.addr %s30, 8
          %s706 = scalar_lea.hbm %s12, %s705
          %s708 = sshll.u32 %s699, 4
          %s709 = int_to_ptr.vmem [resolvable:$true] %s708
          %s710 = sshll.u32 %s706, 4
          %s711 = int_to_ptr.hbm [resolvable:$true] %s710
          %713 = dma.vmem_to_hbm [thread:$0]  %s709, 128, %s711, %s696
        $region80: #{transformer_encoder_forward.11} parent=67 // pred_fallthru
          _
      $region68: #{transformer_encoder_forward.11} parent=5 // pred_fallthru
        _
      %p714 = scmp.le.s32.totalorder 2, %s21
      // Predicated region
      $region81: #{transformer_encoder_forward.11} parent=5 // pred_check
        %p715 = pneg %p714
      $region82: #{transformer_encoder_forward.11} parent=5 // pred_check_branch
        %717 = sbr.rel (%p715) target = $region84
      $region83: #{transformer_encoder_forward.11} parent=5 // pred_region
        %s718 = ssub.s32 %s21, 2
        // Predicated region
        $region85: #{transformer_encoder_forward.11} parent=83 // pred_check
          %p719 = pneg %p339
        $region86: #{transformer_encoder_forward.11} parent=83 // pred_check_branch
          %721 = sbr.rel (%p719) target = $region88
        $region87: #{transformer_encoder_forward.11} parent=83 // pred_region
          %s722 = sand.u32 %s324, 1
          %s723 = scalar_lea.sflag [#allocation5], %s722
          %s724 = sand.u32 %s324, 1
          %s725 = smul.addr %s724, 8
          %s726 = scalar_lea.vmem [#allocation4], %s725
          %728 = dma.done %s723, 128
        $region88: #{transformer_encoder_forward.11} parent=83 // pred_fallthru
          _
      $region84: #{transformer_encoder_forward.11} parent=5 // pred_fallthru
        _
    $region6: #{transformer_encoder_forward.11} parent=1 // loop_footer
      %s25 = sadd.s32 1, %s21
    $region7: #{transformer_encoder_forward.11} parent=1 // loop_footer_branch
      %20 = sbr.rel target = $region3
    $region8: #{transformer_encoder_forward.11} parent=1 // loop_exit
      _
    %729 = vsyncpa [#allocation5], 1
    %s730 = scalar_lea.sflag [#allocation5], 1
    %731 = vsyncpa %s730, 1

</llo_original>
